<compile_context>
chip_gen: v7x
topology: tpu7x:2x2x1
jax: 0.10.0
libtpu: 0.0.40
codegen_flags: <defaults>
</compile_context>

<pallas_src>
import functools
import math

import jax
import jax.numpy as jnp
from jax import lax
from jax.experimental import pallas as pl
from jax.experimental.pallas import tpu as pltpu

_F32 = jnp.float32
_BF16 = jnp.bfloat16


def _layer_norm(x, w, b, eps=1e-5):
    mu = jnp.mean(x, axis=-1, keepdims=True)
    xc = x - mu
    var = jnp.mean(xc * xc, axis=-1, keepdims=True)
    return xc * lax.rsqrt(var + eps) * w + b


def fused_adapter_kernel(x_ref, emb_wt_ref, emb_b_ref, pseudo_ref,
                         wq_ref, bq_ref, wk_ref, bk_ref, wv_ref, bv_ref,
                         wo_ref, bo_ref, ln1w_ref, ln1b_ref,
                         w1_ref, b1_ref, w2_ref, b2_ref, ln2w_ref, ln2b_ref,
                         o_ref, seq_ref, *, nhead, batch, prefix):
    """One grid step == one TransformerEncoderLayer; step 0 also builds the sequence."""
    l = pl.program_id(0)
    B, P = batch, prefix
    BP, D = seq_ref.shape
    Dh = D // nhead

    # ---- layer 0: Linear(input) + (P-1) copies of the pseudo-word embedding ---------
    @pl.when(l == 0)
    def _init():
        emb = (jnp.dot(x_ref[...], emb_wt_ref[...],
                       preferred_element_type=_F32) + emb_b_ref[...])        # (B, D)
        seq_ref[...] = jnp.broadcast_to(pseudo_ref[...], (BP, D))
        for b in range(B):                     # static; token 0 of each batch row
            seq_ref[b * P:b * P + 1, :] = emb[b:b + 1, :]

    x2d = seq_ref[...]                         # (BP, D) f32, resident in VMEM
    x_bf = x2d.astype(_BF16)

    # ---- multi-head self attention ---------------------------------------------------
    # Per-head weights were pre-split host-side (wq/wk/wv/wo: (H, Dh, D) bf16, D in the
    # lane axis); heads are merged by accumulating per-head out-projections, so there is
    # no lane-axis slicing of activations and no lane concat.  1/sqrt(Dh) is folded into
    # wq/bq at prep time.
    nt = (((1,), (1,)), ((), ()))              # contract over D; keep lanes dense
    bq = bq_ref[...]                           # (H, Dh) f32
    bk = bk_ref[...]
    bv = bv_ref[...]
    attn_out = jnp.zeros((BP, D), _F32)
    for h in range(nhead):                     # static unroll
        q = lax.dot_general(x_bf, wq_ref[h], nt,
                            preferred_element_type=_F32) + bq[h:h + 1, :]
        k = lax.dot_general(x_bf, wk_ref[h], nt,
                            preferred_element_type=_F32) + bk[h:h + 1, :]
        v = lax.dot_general(x_bf, wv_ref[h], nt,
                            preferred_element_type=_F32) + bv[h:h + 1, :]
        q3 = q.reshape(B, P, Dh)               # leading-dim split only; lane dim untouched
        k3 = k.reshape(B, P, Dh)
        v3 = v.reshape(B, P, Dh)
        s = jnp.einsum('bqd,bkd->bqk', q3, k3, preferred_element_type=_F32)
        m = jnp.max(s, axis=-1, keepdims=True)
        e = jnp.exp(s - m)
        p = e * pl.reciprocal(jnp.sum(e, axis=-1, keepdims=True), approx=True)
        o = jnp.einsum('bqk,bkd->bqd', p, v3, preferred_element_type=_F32)
        attn_out = attn_out + jnp.dot(o.reshape(BP, Dh).astype(_BF16), wo_ref[h],
                                      preferred_element_type=_F32)
    attn_out = attn_out + bo_ref[...]
    x1 = _layer_norm(x2d + attn_out, ln1w_ref[...], ln1b_ref[...])

    # ---- feed-forward (ReLU); w1 (D,FF) and w2 (D,FF) are both lane-dense bf16 --------
    h1 = jnp.maximum(
        jnp.dot(x1.astype(_BF16), w1_ref[...], preferred_element_type=_F32) + b1_ref[...],
        0.0)
    ff = lax.dot_general(h1.astype(_BF16), w2_ref[...], nt,
                         preferred_element_type=_F32) + b2_ref[...]
    x2 = _layer_norm(x1 + ff, ln2w_ref[...], ln2b_ref[...])

    seq_ref[...] = x2                          # stays resident for the next layer

    @pl.when(l == pl.num_programs(0) - 1)
    def _final():
        o_ref[...] = x2


def prepare_params(params, *, nhead):
    """One-time: transpose / head-split / scale-fold / bf16-cast and stack along L."""
    D = params['emb_w'].shape[0]
    assert D % nhead == 0, (D, nhead)
    Dh = D // nhead
    scale = 1.0 / math.sqrt(Dh)

    def stack(fn, dtype=_F32):
        return jnp.stack([jnp.asarray(fn(lp), _F32)
                          for lp in params['layers']]).astype(dtype)

    def per_head(w):                           # (D, D) rows=out feats -> (H, Dh, D)
        return w.reshape(nhead, Dh, D)

    return {
        'emb_wt': params['emb_w'].T.astype(_F32),                 # (in, D)
        'emb_b': params['emb_b'][None, :].astype(_F32),           # (1, D)
        'pseudo': params['pseudo'][None, :].astype(_F32),         # (1, D)
        # attention projections: per-head, D kept in the lane axis, bf16
        'wq': stack(lambda lp: per_head(lp['in_proj_w'][:D] * scale), _BF16),  # (L,H,Dh,D)
        'bq': stack(lambda lp: (lp['in_proj_b'][:D] * scale).reshape(nhead, Dh)),  # (L,H,Dh)
        'wk': stack(lambda lp: per_head(lp['in_proj_w'][D:2 * D]), _BF16),
        'bk': stack(lambda lp: lp['in_proj_b'][D:2 * D].reshape(nhead, Dh)),
        'wv': stack(lambda lp: per_head(lp['in_proj_w'][2 * D:]), _BF16),
        'bv': stack(lambda lp: lp['in_proj_b'][2 * D:].reshape(nhead, Dh)),
        'wo': stack(lambda lp: lp['out_proj_w'].T.reshape(nhead, Dh, D), _BF16),  # (L,H,Dh,D)
        'bo': stack(lambda lp: lp['out_proj_b'][None, :]),        # (L, 1, D)
        'ln1w': stack(lambda lp: lp['ln1_w'][None, :]),
        'ln1b': stack(lambda lp: lp['ln1_b'][None, :]),
        'w1': stack(lambda lp: lp['lin1_w'].T, _BF16),            # (L, D, FF)
        'b1': stack(lambda lp: lp['lin1_b'][None, :]),            # (L, 1, FF)
        'w2': stack(lambda lp: lp['lin2_w'], _BF16),              # (L, D, FF) NOT transposed
        'b2': stack(lambda lp: lp['lin2_b'][None, :]),
        'ln2w': stack(lambda lp: lp['ln2_w'][None, :]),
        'ln2b': stack(lambda lp: lp['ln2_b'][None, :]),
    }


def _vmem_budget_bytes(prepared, B, P, D, FF, L):
    """Explicit VMEM budget: double-buffered per-layer weight set + activations + slack."""
    stacked = ['wq', 'bq', 'wk', 'bk', 'wv', 'bv', 'wo', 'bo',
               'ln1w', 'ln1b', 'w1', 'b1', 'w2', 'b2', 'ln2w', 'ln2b']
    per_layer = sum(int(prepared[k].nbytes) // L for k in stacked)
    fixed = sum(int(prepared[k].nbytes) for k in ('emb_wt', 'emb_b', 'pseudo'))
    need = 2 * per_layer + fixed + 4 * B * P * D * 4 + B * P * FF * 4
    need += 8 << 20                            # headroom for padding / internal scratch
    # Cap at 48 MiB so the budget also fits v7x's 64 MiB physical VMEM; at realistic
    # d_model exceed this only together with FF-chunked streaming of w1/w2.
    return int(min(max(need, 32 << 20), 48 << 20))


def transformer_based_adapter(prepared, x, *, prefix_length, nhead):
    B, input_size = x.shape
    D = prepared['emb_wt'].shape[1]
    FF = prepared['w1'].shape[2]
    L = prepared['wq'].shape[0]
    P = prefix_length
    H = nhead
    Dh = D // H

    def full_spec(shape):                      # same (resident) block for every step
        return pl.BlockSpec(shape, lambda l: (0,) * len(shape))

    def layer_spec(shape):                     # select layer l's slice, squeeze L axis
        return pl.BlockSpec((None,) + shape, lambda l: (l,) + (0,) * len(shape))

    in_specs = [
        full_spec((B, input_size)),
        full_spec((input_size, D)),
        full_spec((1, D)),
        full_spec((1, D)),
        layer_spec((H, Dh, D)), layer_spec((H, Dh)),   # wq, bq
        layer_spec((H, Dh, D)), layer_spec((H, Dh)),   # wk, bk
        layer_spec((H, Dh, D)), layer_spec((H, Dh)),   # wv, bv
        layer_spec((H, Dh, D)), layer_spec((1, D)),    # wo, bo
        layer_spec((1, D)), layer_spec((1, D)),        # ln1 w, b
        layer_spec((D, FF)), layer_spec((1, FF)),      # lin1 w, b
        layer_spec((D, FF)), layer_spec((1, D)),       # lin2 w (lane-dense), b
        layer_spec((1, D)), layer_spec((1, D)),        # ln2 w, b
    ]

    out2d = pl.pallas_call(
        functools.partial(fused_adapter_kernel, nhead=nhead, batch=B, prefix=P),
        out_shape=jax.ShapeDtypeStruct((B * P, D), _F32),
        grid_spec=pltpu.PrefetchScalarGridSpec(
            num_scalar_prefetch=0,
            grid=(L,),
            in_specs=in_specs,
            out_specs=pl.BlockSpec((B * P, D), lambda l: (0, 0)),
            scratch_shapes=[pltpu.VMEM((B * P, D), _F32)],   # flat lane-dense slab
        ),
        compiler_params=pltpu.CompilerParams(
            dimension_semantics=("arbitrary",),
            vmem_limit_bytes=_vmem_budget_bytes(prepared, B, P, D, FF, L),
        ),
    )(x.astype(_F32),
      prepared['emb_wt'], prepared['emb_b'], prepared['pseudo'],
      prepared['wq'], prepared['bq'], prepared['wk'], prepared['bk'],
      prepared['wv'], prepared['bv'], prepared['wo'], prepared['bo'],
      prepared['ln1w'], prepared['ln1b'],
      prepared['w1'], prepared['b1'], prepared['w2'], prepared['b2'],
      prepared['ln2w'], prepared['ln2b'])

    return out2d.reshape(B, P, D)


def init_params(key, *, input_size, d_model, nhead, num_layers, dim_ff):
    def nrm(k, shape, scale=0.02):
        return scale * jax.random.normal(k, shape, jnp.float32)

    keys = jax.random.split(key, 2 + num_layers)
    params = {
        'emb_w': nrm(keys[0], (d_model, input_size)),
        'emb_b': nrm(keys[1], (d_model,)),
        'pseudo': jnp.zeros((d_model,), jnp.float32),  # Parameter(torch.zeros(d_model))
        'layers': [],
    }
    for li in range(num_layers):
        lk = jax.random.split(keys[2 + li], 8)
        params['layers'].append({
            'in_proj_w': nrm(lk[0], (3 * d_model, d_model)),
            'in_proj_b': nrm(lk[1], (3 * d_model,)),
            'out_proj_w': nrm(lk[2], (d_model, d_model)),
            'out_proj_b': nrm(lk[3], (d_model,)),
            'lin1_w': nrm(lk[4], (dim_ff, d_model)),
            'lin1_b': nrm(lk[5], (dim_ff,)),
            'lin2_w': nrm(lk[6], (d_model, dim_ff)),
            'lin2_b': nrm(lk[7], (d_model,)),
            'ln1_w': jnp.ones((d_model,), jnp.float32),
            'ln1_b': jnp.zeros((d_model,), jnp.float32),
            'ln2_w': jnp.ones((d_model,), jnp.float32),
            'ln2_b': jnp.zeros((d_model,), jnp.float32),
        })
    return params


if __name__ == "__main__":
    B = 2
    input_size = 16
    prefix_length = 8
    d_model = 32
    nhead = 8            # PyTorch default
    num_layers = 2       # constructor arg (default 6); kept small for the demo
    dim_ff = 2048        # TransformerEncoderLayer default dim_feedforward

    key = jax.random.PRNGKey(0)
    kp, kx = jax.random.split(key)
    params = init_params(kp, input_size=input_size, d_model=d_model,
                         nhead=nhead, num_layers=num_layers, dim_ff=dim_ff)
    prepared = prepare_params(params, nhead=nhead)
    x = jax.random.normal(kx, (B, input_size), jnp.float32)

    out = transformer_based_adapter(prepared, x, prefix_length=prefix_length, nhead=nhead)
    out = jax.block_until_ready(out)

    assert out.shape == (B, prefix_length, d_model), out.shape
    assert bool(jnp.all(jnp.isfinite(out)))
    print("KERNEL_OK")
</pallas_src>

<mosaic_0001>
module attributes {stable_mosaic.version = 11 : i64} {
  func.func @fused_adapter_kernel(%arg0: i32, %arg1: memref<2x16xf32, #tpu.memory_space<vmem>>, %arg2: memref<16x32xf32, #tpu.memory_space<vmem>>, %arg3: memref<1x32xf32, #tpu.memory_space<vmem>>, %arg4: memref<1x32xf32, #tpu.memory_space<vmem>>, %arg5: memref<1x8x4x32xbf16, #tpu.memory_space<vmem>>, %arg6: memref<1x8x4xf32, #tpu.memory_space<vmem>>, %arg7: memref<1x8x4x32xbf16, #tpu.memory_space<vmem>>, %arg8: memref<1x8x4xf32, #tpu.memory_space<vmem>>, %arg9: memref<1x8x4x32xbf16, #tpu.memory_space<vmem>>, %arg10: memref<1x8x4xf32, #tpu.memory_space<vmem>>, %arg11: memref<1x8x4x32xbf16, #tpu.memory_space<vmem>>, %arg12: memref<1x1x32xf32, #tpu.memory_space<vmem>>, %arg13: memref<1x1x32xf32, #tpu.memory_space<vmem>>, %arg14: memref<1x1x32xf32, #tpu.memory_space<vmem>>, %arg15: memref<1x32x2048xbf16, #tpu.memory_space<vmem>>, %arg16: memref<1x1x2048xf32, #tpu.memory_space<vmem>>, %arg17: memref<1x32x2048xbf16, #tpu.memory_space<vmem>>, %arg18: memref<1x1x32xf32, #tpu.memory_space<vmem>>, %arg19: memref<1x1x32xf32, #tpu.memory_space<vmem>>, %arg20: memref<1x1x32xf32, #tpu.memory_space<vmem>>, %arg21: memref<16x32xf32, #tpu.memory_space<vmem>>, %arg22: memref<16x32xf32, #tpu.memory_space<vmem>>) attributes {dimension_semantics = [#tpu.dimension_semantics<arbitrary>], iteration_bounds = array<i64: 2>, scalar_prefetch = 0 : i64, scratch_operands = 1 : i64, tpu.core_type = #tpu.core_type<tc>, window_params = [{pipeline_mode = #tpu.pipeline_mode<synchronous>, transform_indices = @transform_0, window_bounds = array<i64: 2, 16>}, {pipeline_mode = #tpu.pipeline_mode<synchronous>, transform_indices = @transform_1, window_bounds = array<i64: 16, 32>}, {pipeline_mode = #tpu.pipeline_mode<synchronous>, transform_indices = @transform_2, window_bounds = array<i64: 1, 32>}, {pipeline_mode = #tpu.pipeline_mode<synchronous>, transform_indices = @transform_3, window_bounds = array<i64: 1, 32>}, {transform_indices = @transform_4, window_bounds = array<i64: 1, 8, 4, 32>}, {transform_indices = @transform_5, window_bounds = array<i64: 1, 8, 4>}, {transform_indices = @transform_6, window_bounds = array<i64: 1, 8, 4, 32>}, {transform_indices = @transform_7, window_bounds = array<i64: 1, 8, 4>}, {transform_indices = @transform_8, window_bounds = array<i64: 1, 8, 4, 32>}, {transform_indices = @transform_9, window_bounds = array<i64: 1, 8, 4>}, {transform_indices = @transform_10, window_bounds = array<i64: 1, 8, 4, 32>}, {transform_indices = @transform_11, window_bounds = array<i64: 1, 1, 32>}, {transform_indices = @transform_12, window_bounds = array<i64: 1, 1, 32>}, {transform_indices = @transform_13, window_bounds = array<i64: 1, 1, 32>}, {transform_indices = @transform_14, window_bounds = array<i64: 1, 32, 2048>}, {transform_indices = @transform_15, window_bounds = array<i64: 1, 1, 2048>}, {transform_indices = @transform_16, window_bounds = array<i64: 1, 32, 2048>}, {transform_indices = @transform_17, window_bounds = array<i64: 1, 1, 32>}, {transform_indices = @transform_18, window_bounds = array<i64: 1, 1, 32>}, {transform_indices = @transform_19, window_bounds = array<i64: 1, 1, 32>}, {pipeline_mode = #tpu.pipeline_mode<synchronous>, transform_indices = @transform_20, window_bounds = array<i64: 16, 32>}]} {
    %c0_i32 = arith.constant 0 : i32
    %0 = arith.cmpi eq, %arg0, %c0_i32 : i32
    %1 = arith.extui %0 : i1 to i32
    %c0_i32_0 = arith.constant 0 : i32
    %2 = arith.cmpi ne, %1, %c0_i32_0 : i32
    scf.if %2 {
      %c0_239 = arith.constant 0 : index
      %c0_240 = arith.constant 0 : index
      %400 = vector.load %arg1[%c0_239, %c0_240] : memref<2x16xf32, #tpu.memory_space<vmem>>, vector<2x16xf32>
      %c0_241 = arith.constant 0 : index
      %c0_242 = arith.constant 0 : index
      %401 = vector.load %arg2[%c0_241, %c0_242] : memref<16x32xf32, #tpu.memory_space<vmem>>, vector<16x32xf32>
      %cst_243 = arith.constant dense<0.000000e+00> : vector<2x32xf32>
      %402 = tpu.matmul %400, %401, %cst_243 {dimension_numbers = #tpu.dot_dimension_numbers<[1], [0], [0], [1], [0, 0, 1, 1], [], []>} : vector<2x16xf32>, vector<16x32xf32>, vector<2x32xf32> -> vector<2x32xf32>
      %c0_244 = arith.constant 0 : index
      %c0_245 = arith.constant 0 : index
      %403 = vector.load %arg3[%c0_244, %c0_245] : memref<1x32xf32, #tpu.memory_space<vmem>>, vector<1x32xf32>
      %404 = vector.broadcast %403 : vector<1x32xf32> to vector<2x32xf32>
      %405 = arith.addf %402, %404 : vector<2x32xf32>
      %c0_246 = arith.constant 0 : index
      %c0_247 = arith.constant 0 : index
      %406 = vector.load %arg4[%c0_246, %c0_247] : memref<1x32xf32, #tpu.memory_space<vmem>>, vector<1x32xf32>
      %407 = vector.shape_cast %406 : vector<1x32xf32> to vector<1x32xf32>
      %408 = vector.broadcast %407 : vector<1x32xf32> to vector<16x32xf32>
      %c0_248 = arith.constant 0 : index
      %c0_249 = arith.constant 0 : index
      %409 = vector.load %arg22[%c0_248, %c0_249] : memref<16x32xf32, #tpu.memory_space<vmem>>, vector<16x32xf32>
      tpu.vector_store %arg22[%c0_248, %c0_249], %408 {strides = array<i32>} : memref<16x32xf32, #tpu.memory_space<vmem>>, vector<16x32xf32>,
      %410 = vector.extract_strided_slice %405 {offsets = [0, 0], sizes = [1, 32], strides = [1, 1]} : vector<2x32xf32> to vector<1x32xf32>
      %c0_250 = arith.constant 0 : index
      %c0_251 = arith.constant 0 : index
      %411 = vector.load %arg22[%c0_250, %c0_251] : memref<16x32xf32, #tpu.memory_space<vmem>>, vector<1x32xf32>
      tpu.vector_store %arg22[%c0_250, %c0_251], %410 {strides = array<i32>} : memref<16x32xf32, #tpu.memory_space<vmem>>, vector<1x32xf32>,
      %412 = vector.extract_strided_slice %405 {offsets = [1, 0], sizes = [1, 32], strides = [1, 1]} : vector<2x32xf32> to vector<1x32xf32>
      %c8 = arith.constant 8 : index
      %c0_252 = arith.constant 0 : index
      %413 = vector.load %arg22[%c8, %c0_252] : memref<16x32xf32, #tpu.memory_space<vmem>>, vector<1x32xf32>
      tpu.vector_store %arg22[%c8, %c0_252], %412 {strides = array<i32>} : memref<16x32xf32, #tpu.memory_space<vmem>>, vector<1x32xf32>,
    } else {
    }
    %c0 = arith.constant 0 : index
    %c0_1 = arith.constant 0 : index
    %3 = vector.load %arg22[%c0, %c0_1] : memref<16x32xf32, #tpu.memory_space<vmem>>, vector<16x32xf32>
    %4 = arith.truncf %3 : vector<16x32xf32> to vector<16x32xbf16>
    %c0_2 = arith.constant 0 : index
    %c0_3 = arith.constant 0 : index
    %c0_4 = arith.constant 0 : index
    %5 = vector.load %arg6[%c0_2, %c0_3, %c0_4] : memref<1x8x4xf32, #tpu.memory_space<vmem>>, vector<1x8x4xf32>
    %6 = vector.shape_cast %5 : vector<1x8x4xf32> to vector<8x4xf32>
    %c0_5 = arith.constant 0 : index
    %c0_6 = arith.constant 0 : index
    %c0_7 = arith.constant 0 : index
    %7 = vector.load %arg8[%c0_5, %c0_6, %c0_7] : memref<1x8x4xf32, #tpu.memory_space<vmem>>, vector<1x8x4xf32>
    %8 = vector.shape_cast %7 : vector<1x8x4xf32> to vector<8x4xf32>
    %c0_8 = arith.constant 0 : index
    %c0_9 = arith.constant 0 : index
    %c0_10 = arith.constant 0 : index
    %9 = vector.load %arg10[%c0_8, %c0_9, %c0_10] : memref<1x8x4xf32, #tpu.memory_space<vmem>>, vector<1x8x4xf32>
    %10 = vector.shape_cast %9 : vector<1x8x4xf32> to vector<8x4xf32>
    %cst = arith.constant 0.000000e+00 : f32
    %11 = vector.broadcast %cst : f32 to vector<16x32xf32>
    %c0_11 = arith.constant 0 : index
    %c0_12 = arith.constant 0 : index
    %c0_13 = arith.constant 0 : index
    %c0_14 = arith.constant 0 : index
    %12 = vector.load %arg5[%c0_11, %c0_12, %c0_13, %c0_14] : memref<1x8x4x32xbf16, #tpu.memory_space<vmem>>, vector<1x1x4x32xbf16>
    %13 = vector.shape_cast %12 : vector<1x1x4x32xbf16> to vector<4x32xbf16>
    %cst_15 = arith.constant dense<0.000000e+00> : vector<16x4xf32>
    %14 = tpu.matmul %4, %13, %cst_15 {dimension_numbers = #tpu.dot_dimension_numbers<[1], [1], [0], [0], [0, 0, 1, 0], [], []>} : vector<16x32xbf16>, vector<4x32xbf16>, vector<16x4xf32> -> vector<16x4xf32>
    %15 = vector.extract_strided_slice %6 {offsets = [0, 0], sizes = [1, 4], strides = [1, 1]} : vector<8x4xf32> to vector<1x4xf32>
    %16 = vector.broadcast %15 : vector<1x4xf32> to vector<16x4xf32>
    %17 = arith.addf %14, %16 : vector<16x4xf32>
    %c0_16 = arith.constant 0 : index
    %c0_17 = arith.constant 0 : index
    %c0_18 = arith.constant 0 : index
    %c0_19 = arith.constant 0 : index
    %18 = vector.load %arg7[%c0_16, %c0_17, %c0_18, %c0_19] : memref<1x8x4x32xbf16, #tpu.memory_space<vmem>>, vector<1x1x4x32xbf16>
    %19 = vector.shape_cast %18 : vector<1x1x4x32xbf16> to vector<4x32xbf16>
    %cst_20 = arith.constant dense<0.000000e+00> : vector<16x4xf32>
    %20 = tpu.matmul %4, %19, %cst_20 {dimension_numbers = #tpu.dot_dimension_numbers<[1], [1], [0], [0], [0, 0, 1, 0], [], []>} : vector<16x32xbf16>, vector<4x32xbf16>, vector<16x4xf32> -> vector<16x4xf32>
    %21 = vector.extract_strided_slice %8 {offsets = [0, 0], sizes = [1, 4], strides = [1, 1]} : vector<8x4xf32> to vector<1x4xf32>
    %22 = vector.broadcast %21 : vector<1x4xf32> to vector<16x4xf32>
    %23 = arith.addf %20, %22 : vector<16x4xf32>
    %c0_21 = arith.constant 0 : index
    %c0_22 = arith.constant 0 : index
    %c0_23 = arith.constant 0 : index
    %c0_24 = arith.constant 0 : index
    %24 = vector.load %arg9[%c0_21, %c0_22, %c0_23, %c0_24] : memref<1x8x4x32xbf16, #tpu.memory_space<vmem>>, vector<1x1x4x32xbf16>
    %25 = vector.shape_cast %24 : vector<1x1x4x32xbf16> to vector<4x32xbf16>
    %cst_25 = arith.constant dense<0.000000e+00> : vector<16x4xf32>
    %26 = tpu.matmul %4, %25, %cst_25 {dimension_numbers = #tpu.dot_dimension_numbers<[1], [1], [0], [0], [0, 0, 1, 0], [], []>} : vector<16x32xbf16>, vector<4x32xbf16>, vector<16x4xf32> -> vector<16x4xf32>
    %27 = vector.extract_strided_slice %10 {offsets = [0, 0], sizes = [1, 4], strides = [1, 1]} : vector<8x4xf32> to vector<1x4xf32>
    %28 = vector.broadcast %27 : vector<1x4xf32> to vector<16x4xf32>
    %29 = arith.addf %26, %28 : vector<16x4xf32>
    %30 = vector.shape_cast %17 : vector<16x4xf32> to vector<2x8x4xf32>
    %31 = vector.shape_cast %23 : vector<16x4xf32> to vector<2x8x4xf32>
    %32 = vector.shape_cast %29 : vector<16x4xf32> to vector<2x8x4xf32>
    "tpu.trace_start"() <{level = 10 : i32, message = "bqd,bkd->bqk"}> : () -> ()
    %cst_26 = arith.constant dense<0.000000e+00> : vector<2x8x8xf32>
    %33 = tpu.matmul %30, %31, %cst_26 {dimension_numbers = #tpu.dot_dimension_numbers<[2], [2], [1], [1], [0, 0, 0, 1, 1, 1], [0], [0]>} : vector<2x8x4xf32>, vector<2x8x4xf32>, vector<2x8x8xf32> -> vector<2x8x8xf32>
    "tpu.trace_stop"() : () -> ()
    %cst_27 = arith.constant dense<0xFF800000> : vector<2x8xf32>
    %34 = vector.multi_reduction <maximumf>, %33, %cst_27 [2] : vector<2x8x8xf32> to vector<2x8xf32>
    %35 = vector.shape_cast %34 : vector<2x8xf32> to vector<2x8x1xf32>
    %36 = vector.broadcast %35 : vector<2x8x1xf32> to vector<2x8x8xf32>
    %37 = arith.subf %33, %36 : vector<2x8x8xf32>
    %38 = math.exp %37 : vector<2x8x8xf32>
    %cst_28 = arith.constant dense<0.000000e+00> : vector<2x8xf32>
    %39 = vector.multi_reduction <add>, %38, %cst_28 [2] : vector<2x8x8xf32> to vector<2x8xf32>
    %40 = vector.shape_cast %39 : vector<2x8xf32> to vector<2x8x1xf32>
    %41 = tpu.reciprocal %40 {approx = true} : vector<2x8x1xf32> -> vector<2x8x1xf32>
    %42 = vector.broadcast %41 : vector<2x8x1xf32> to vector<2x8x8xf32>
    %43 = arith.mulf %38, %42 : vector<2x8x8xf32>
    "tpu.trace_start"() <{level = 10 : i32, message = "bqk,bkd->bqd"}> : () -> ()
    %cst_29 = arith.constant dense<0.000000e+00> : vector<2x8x4xf32>
    %44 = tpu.matmul %43, %32, %cst_29 {dimension_numbers = #tpu.dot_dimension_numbers<[2], [1], [1], [2], [0, 0, 0, 1, 1, 2], [0], [0]>} : vector<2x8x8xf32>, vector<2x8x4xf32>, vector<2x8x4xf32> -> vector<2x8x4xf32>
    "tpu.trace_stop"() : () -> ()
    %45 = vector.shape_cast %44 : vector<2x8x4xf32> to vector<16x4xf32>
    %46 = arith.truncf %45 : vector<16x4xf32> to vector<16x4xbf16>
    %c0_30 = arith.constant 0 : index
    %c0_31 = arith.constant 0 : index
    %c0_32 = arith.constant 0 : index
    %c0_33 = arith.constant 0 : index
    %47 = vector.load %arg11[%c0_30, %c0_31, %c0_32, %c0_33] : memref<1x8x4x32xbf16, #tpu.memory_space<vmem>>, vector<1x1x4x32xbf16>
    %48 = vector.shape_cast %47 : vector<1x1x4x32xbf16> to vector<4x32xbf16>
    %cst_34 = arith.constant dense<0.000000e+00> : vector<16x32xf32>
    %49 = tpu.matmul %46, %48, %cst_34 {dimension_numbers = #tpu.dot_dimension_numbers<[1], [0], [0], [1], [0, 0, 1, 1], [], []>} : vector<16x4xbf16>, vector<4x32xbf16>, vector<16x32xf32> -> vector<16x32xf32>
    %50 = arith.addf %11, %49 : vector<16x32xf32>
    %c0_35 = arith.constant 0 : index
    %c1 = arith.constant 1 : index
    %c0_36 = arith.constant 0 : index
    %c0_37 = arith.constant 0 : index
    %51 = vector.load %arg5[%c0_35, %c1, %c0_36, %c0_37] : memref<1x8x4x32xbf16, #tpu.memory_space<vmem>>, vector<1x1x4x32xbf16>
    %52 = vector.shape_cast %51 : vector<1x1x4x32xbf16> to vector<4x32xbf16>
    %cst_38 = arith.constant dense<0.000000e+00> : vector<16x4xf32>
    %53 = tpu.matmul %4, %52, %cst_38 {dimension_numbers = #tpu.dot_dimension_numbers<[1], [1], [0], [0], [0, 0, 1, 0], [], []>} : vector<16x32xbf16>, vector<4x32xbf16>, vector<16x4xf32> -> vector<16x4xf32>
    %54 = vector.extract_strided_slice %6 {offsets = [1, 0], sizes = [1, 4], strides = [1, 1]} : vector<8x4xf32> to vector<1x4xf32>
    %55 = vector.broadcast %54 : vector<1x4xf32> to vector<16x4xf32>
    %56 = arith.addf %53, %55 : vector<16x4xf32>
    %c0_39 = arith.constant 0 : index
    %c1_40 = arith.constant 1 : index
    %c0_41 = arith.constant 0 : index
    %c0_42 = arith.constant 0 : index
    %57 = vector.load %arg7[%c0_39, %c1_40, %c0_41, %c0_42] : memref<1x8x4x32xbf16, #tpu.memory_space<vmem>>, vector<1x1x4x32xbf16>
    %58 = vector.shape_cast %57 : vector<1x1x4x32xbf16> to vector<4x32xbf16>
    %cst_43 = arith.constant dense<0.000000e+00> : vector<16x4xf32>
    %59 = tpu.matmul %4, %58, %cst_43 {dimension_numbers = #tpu.dot_dimension_numbers<[1], [1], [0], [0], [0, 0, 1, 0], [], []>} : vector<16x32xbf16>, vector<4x32xbf16>, vector<16x4xf32> -> vector<16x4xf32>
    %60 = vector.extract_strided_slice %8 {offsets = [1, 0], sizes = [1, 4], strides = [1, 1]} : vector<8x4xf32> to vector<1x4xf32>
    %61 = vector.broadcast %60 : vector<1x4xf32> to vector<16x4xf32>
    %62 = arith.addf %59, %61 : vector<16x4xf32>
    %c0_44 = arith.constant 0 : index
    %c1_45 = arith.constant 1 : index
    %c0_46 = arith.constant 0 : index
    %c0_47 = arith.constant 0 : index
    %63 = vector.load %arg9[%c0_44, %c1_45, %c0_46, %c0_47] : memref<1x8x4x32xbf16, #tpu.memory_space<vmem>>, vector<1x1x4x32xbf16>
    %64 = vector.shape_cast %63 : vector<1x1x4x32xbf16> to vector<4x32xbf16>
    %cst_48 = arith.constant dense<0.000000e+00> : vector<16x4xf32>
    %65 = tpu.matmul %4, %64, %cst_48 {dimension_numbers = #tpu.dot_dimension_numbers<[1], [1], [0], [0], [0, 0, 1, 0], [], []>} : vector<16x32xbf16>, vector<4x32xbf16>, vector<16x4xf32> -> vector<16x4xf32>
    %66 = vector.extract_strided_slice %10 {offsets = [1, 0], sizes = [1, 4], strides = [1, 1]} : vector<8x4xf32> to vector<1x4xf32>
    %67 = vector.broadcast %66 : vector<1x4xf32> to vector<16x4xf32>
    %68 = arith.addf %65, %67 : vector<16x4xf32>
    %69 = vector.shape_cast %56 : vector<16x4xf32> to vector<2x8x4xf32>
    %70 = vector.shape_cast %62 : vector<16x4xf32> to vector<2x8x4xf32>
    %71 = vector.shape_cast %68 : vector<16x4xf32> to vector<2x8x4xf32>
    "tpu.trace_start"() <{level = 10 : i32, message = "bqd,bkd->bqk"}> : () -> ()
    %cst_49 = arith.constant dense<0.000000e+00> : vector<2x8x8xf32>
    %72 = tpu.matmul %69, %70, %cst_49 {dimension_numbers = #tpu.dot_dimension_numbers<[2], [2], [1], [1], [0, 0, 0, 1, 1, 1], [0], [0]>} : vector<2x8x4xf32>, vector<2x8x4xf32>, vector<2x8x8xf32> -> vector<2x8x8xf32>
    "tpu.trace_stop"() : () -> ()
    %cst_50 = arith.constant dense<0xFF800000> : vector<2x8xf32>
    %73 = vector.multi_reduction <maximumf>, %72, %cst_50 [2] : vector<2x8x8xf32> to vector<2x8xf32>
    %74 = vector.shape_cast %73 : vector<2x8xf32> to vector<2x8x1xf32>
    %75 = vector.broadcast %74 : vector<2x8x1xf32> to vector<2x8x8xf32>
    %76 = arith.subf %72, %75 : vector<2x8x8xf32>
    %77 = math.exp %76 : vector<2x8x8xf32>
    %cst_51 = arith.constant dense<0.000000e+00> : vector<2x8xf32>
    %78 = vector.multi_reduction <add>, %77, %cst_51 [2] : vector<2x8x8xf32> to vector<2x8xf32>
    %79 = vector.shape_cast %78 : vector<2x8xf32> to vector<2x8x1xf32>
    %80 = tpu.reciprocal %79 {approx = true} : vector<2x8x1xf32> -> vector<2x8x1xf32>
    %81 = vector.broadcast %80 : vector<2x8x1xf32> to vector<2x8x8xf32>
    %82 = arith.mulf %77, %81 : vector<2x8x8xf32>
    "tpu.trace_start"() <{level = 10 : i32, message = "bqk,bkd->bqd"}> : () -> ()
    %cst_52 = arith.constant dense<0.000000e+00> : vector<2x8x4xf32>
    %83 = tpu.matmul %82, %71, %cst_52 {dimension_numbers = #tpu.dot_dimension_numbers<[2], [1], [1], [2], [0, 0, 0, 1, 1, 2], [0], [0]>} : vector<2x8x8xf32>, vector<2x8x4xf32>, vector<2x8x4xf32> -> vector<2x8x4xf32>
    "tpu.trace_stop"() : () -> ()
    %84 = vector.shape_cast %83 : vector<2x8x4xf32> to vector<16x4xf32>
    %85 = arith.truncf %84 : vector<16x4xf32> to vector<16x4xbf16>
    %c0_53 = arith.constant 0 : index
    %c1_54 = arith.constant 1 : index
    %c0_55 = arith.constant 0 : index
    %c0_56 = arith.constant 0 : index
    %86 = vector.load %arg11[%c0_53, %c1_54, %c0_55, %c0_56] : memref<1x8x4x32xbf16, #tpu.memory_space<vmem>>, vector<1x1x4x32xbf16>
    %87 = vector.shape_cast %86 : vector<1x1x4x32xbf16> to vector<4x32xbf16>
    %cst_57 = arith.constant dense<0.000000e+00> : vector<16x32xf32>
    %88 = tpu.matmul %85, %87, %cst_57 {dimension_numbers = #tpu.dot_dimension_numbers<[1], [0], [0], [1], [0, 0, 1, 1], [], []>} : vector<16x4xbf16>, vector<4x32xbf16>, vector<16x32xf32> -> vector<16x32xf32>
    %89 = arith.addf %50, %88 : vector<16x32xf32>
    %c0_58 = arith.constant 0 : index
    %c2 = arith.constant 2 : index
    %c0_59 = arith.constant 0 : index
    %c0_60 = arith.constant 0 : index
    %90 = vector.load %arg5[%c0_58, %c2, %c0_59, %c0_60] : memref<1x8x4x32xbf16, #tpu.memory_space<vmem>>, vector<1x1x4x32xbf16>
    %91 = vector.shape_cast %90 : vector<1x1x4x32xbf16> to vector<4x32xbf16>
    %cst_61 = arith.constant dense<0.000000e+00> : vector<16x4xf32>
    %92 = tpu.matmul %4, %91, %cst_61 {dimension_numbers = #tpu.dot_dimension_numbers<[1], [1], [0], [0], [0, 0, 1, 0], [], []>} : vector<16x32xbf16>, vector<4x32xbf16>, vector<16x4xf32> -> vector<16x4xf32>
    %93 = vector.extract_strided_slice %6 {offsets = [2, 0], sizes = [1, 4], strides = [1, 1]} : vector<8x4xf32> to vector<1x4xf32>
    %94 = vector.broadcast %93 : vector<1x4xf32> to vector<16x4xf32>
    %95 = arith.addf %92, %94 : vector<16x4xf32>
    %c0_62 = arith.constant 0 : index
    %c2_63 = arith.constant 2 : index
    %c0_64 = arith.constant 0 : index
    %c0_65 = arith.constant 0 : index
    %96 = vector.load %arg7[%c0_62, %c2_63, %c0_64, %c0_65] : memref<1x8x4x32xbf16, #tpu.memory_space<vmem>>, vector<1x1x4x32xbf16>
    %97 = vector.shape_cast %96 : vector<1x1x4x32xbf16> to vector<4x32xbf16>
    %cst_66 = arith.constant dense<0.000000e+00> : vector<16x4xf32>
    %98 = tpu.matmul %4, %97, %cst_66 {dimension_numbers = #tpu.dot_dimension_numbers<[1], [1], [0], [0], [0, 0, 1, 0], [], []>} : vector<16x32xbf16>, vector<4x32xbf16>, vector<16x4xf32> -> vector<16x4xf32>
    %99 = vector.extract_strided_slice %8 {offsets = [2, 0], sizes = [1, 4], strides = [1, 1]} : vector<8x4xf32> to vector<1x4xf32>
    %100 = vector.broadcast %99 : vector<1x4xf32> to vector<16x4xf32>
    %101 = arith.addf %98, %100 : vector<16x4xf32>
    %c0_67 = arith.constant 0 : index
    %c2_68 = arith.constant 2 : index
    %c0_69 = arith.constant 0 : index
    %c0_70 = arith.constant 0 : index
    %102 = vector.load %arg9[%c0_67, %c2_68, %c0_69, %c0_70] : memref<1x8x4x32xbf16, #tpu.memory_space<vmem>>, vector<1x1x4x32xbf16>
    %103 = vector.shape_cast %102 : vector<1x1x4x32xbf16> to vector<4x32xbf16>
    %cst_71 = arith.constant dense<0.000000e+00> : vector<16x4xf32>
    %104 = tpu.matmul %4, %103, %cst_71 {dimension_numbers = #tpu.dot_dimension_numbers<[1], [1], [0], [0], [0, 0, 1, 0], [], []>} : vector<16x32xbf16>, vector<4x32xbf16>, vector<16x4xf32> -> vector<16x4xf32>
    %105 = vector.extract_strided_slice %10 {offsets = [2, 0], sizes = [1, 4], strides = [1, 1]} : vector<8x4xf32> to vector<1x4xf32>
    %106 = vector.broadcast %105 : vector<1x4xf32> to vector<16x4xf32>
    %107 = arith.addf %104, %106 : vector<16x4xf32>
    %108 = vector.shape_cast %95 : vector<16x4xf32> to vector<2x8x4xf32>
    %109 = vector.shape_cast %101 : vector<16x4xf32> to vector<2x8x4xf32>
    %110 = vector.shape_cast %107 : vector<16x4xf32> to vector<2x8x4xf32>
    "tpu.trace_start"() <{level = 10 : i32, message = "bqd,bkd->bqk"}> : () -> ()
    %cst_72 = arith.constant dense<0.000000e+00> : vector<2x8x8xf32>
    %111 = tpu.matmul %108, %109, %cst_72 {dimension_numbers = #tpu.dot_dimension_numbers<[2], [2], [1], [1], [0, 0, 0, 1, 1, 1], [0], [0]>} : vector<2x8x4xf32>, vector<2x8x4xf32>, vector<2x8x8xf32> -> vector<2x8x8xf32>
    "tpu.trace_stop"() : () -> ()
    %cst_73 = arith.constant dense<0xFF800000> : vector<2x8xf32>
    %112 = vector.multi_reduction <maximumf>, %111, %cst_73 [2] : vector<2x8x8xf32> to vector<2x8xf32>
    %113 = vector.shape_cast %112 : vector<2x8xf32> to vector<2x8x1xf32>
    %114 = vector.broadcast %113 : vector<2x8x1xf32> to vector<2x8x8xf32>
    %115 = arith.subf %111, %114 : vector<2x8x8xf32>
    %116 = math.exp %115 : vector<2x8x8xf32>
    %cst_74 = arith.constant dense<0.000000e+00> : vector<2x8xf32>
    %117 = vector.multi_reduction <add>, %116, %cst_74 [2] : vector<2x8x8xf32> to vector<2x8xf32>
    %118 = vector.shape_cast %117 : vector<2x8xf32> to vector<2x8x1xf32>
    %119 = tpu.reciprocal %118 {approx = true} : vector<2x8x1xf32> -> vector<2x8x1xf32>
    %120 = vector.broadcast %119 : vector<2x8x1xf32> to vector<2x8x8xf32>
    %121 = arith.mulf %116, %120 : vector<2x8x8xf32>
    "tpu.trace_start"() <{level = 10 : i32, message = "bqk,bkd->bqd"}> : () -> ()
    %cst_75 = arith.constant dense<0.000000e+00> : vector<2x8x4xf32>
    %122 = tpu.matmul %121, %110, %cst_75 {dimension_numbers = #tpu.dot_dimension_numbers<[2], [1], [1], [2], [0, 0, 0, 1, 1, 2], [0], [0]>} : vector<2x8x8xf32>, vector<2x8x4xf32>, vector<2x8x4xf32> -> vector<2x8x4xf32>
    "tpu.trace_stop"() : () -> ()
    %123 = vector.shape_cast %122 : vector<2x8x4xf32> to vector<16x4xf32>
    %124 = arith.truncf %123 : vector<16x4xf32> to vector<16x4xbf16>
    %c0_76 = arith.constant 0 : index
    %c2_77 = arith.constant 2 : index
    %c0_78 = arith.constant 0 : index
    %c0_79 = arith.constant 0 : index
    %125 = vector.load %arg11[%c0_76, %c2_77, %c0_78, %c0_79] : memref<1x8x4x32xbf16, #tpu.memory_space<vmem>>, vector<1x1x4x32xbf16>
    %126 = vector.shape_cast %125 : vector<1x1x4x32xbf16> to vector<4x32xbf16>
    %cst_80 = arith.constant dense<0.000000e+00> : vector<16x32xf32>
    %127 = tpu.matmul %124, %126, %cst_80 {dimension_numbers = #tpu.dot_dimension_numbers<[1], [0], [0], [1], [0, 0, 1, 1], [], []>} : vector<16x4xbf16>, vector<4x32xbf16>, vector<16x32xf32> -> vector<16x32xf32>
    %128 = arith.addf %89, %127 : vector<16x32xf32>
    %c0_81 = arith.constant 0 : index
    %c3 = arith.constant 3 : index
    %c0_82 = arith.constant 0 : index
    %c0_83 = arith.constant 0 : index
    %129 = vector.load %arg5[%c0_81, %c3, %c0_82, %c0_83] : memref<1x8x4x32xbf16, #tpu.memory_space<vmem>>, vector<1x1x4x32xbf16>
    %130 = vector.shape_cast %129 : vector<1x1x4x32xbf16> to vector<4x32xbf16>
    %cst_84 = arith.constant dense<0.000000e+00> : vector<16x4xf32>
    %131 = tpu.matmul %4, %130, %cst_84 {dimension_numbers = #tpu.dot_dimension_numbers<[1], [1], [0], [0], [0, 0, 1, 0], [], []>} : vector<16x32xbf16>, vector<4x32xbf16>, vector<16x4xf32> -> vector<16x4xf32>
    %132 = vector.extract_strided_slice %6 {offsets = [3, 0], sizes = [1, 4], strides = [1, 1]} : vector<8x4xf32> to vector<1x4xf32>
    %133 = vector.broadcast %132 : vector<1x4xf32> to vector<16x4xf32>
    %134 = arith.addf %131, %133 : vector<16x4xf32>
    %c0_85 = arith.constant 0 : index
    %c3_86 = arith.constant 3 : index
    %c0_87 = arith.constant 0 : index
    %c0_88 = arith.constant 0 : index
    %135 = vector.load %arg7[%c0_85, %c3_86, %c0_87, %c0_88] : memref<1x8x4x32xbf16, #tpu.memory_space<vmem>>, vector<1x1x4x32xbf16>
    %136 = vector.shape_cast %135 : vector<1x1x4x32xbf16> to vector<4x32xbf16>
    %cst_89 = arith.constant dense<0.000000e+00> : vector<16x4xf32>
    %137 = tpu.matmul %4, %136, %cst_89 {dimension_numbers = #tpu.dot_dimension_numbers<[1], [1], [0], [0], [0, 0, 1, 0], [], []>} : vector<16x32xbf16>, vector<4x32xbf16>, vector<16x4xf32> -> vector<16x4xf32>
    %138 = vector.extract_strided_slice %8 {offsets = [3, 0], sizes = [1, 4], strides = [1, 1]} : vector<8x4xf32> to vector<1x4xf32>
    %139 = vector.broadcast %138 : vector<1x4xf32> to vector<16x4xf32>
    %140 = arith.addf %137, %139 : vector<16x4xf32>
    %c0_90 = arith.constant 0 : index
    %c3_91 = arith.constant 3 : index
    %c0_92 = arith.constant 0 : index
    %c0_93 = arith.constant 0 : index
    %141 = vector.load %arg9[%c0_90, %c3_91, %c0_92, %c0_93] : memref<1x8x4x32xbf16, #tpu.memory_space<vmem>>, vector<1x1x4x32xbf16>
    %142 = vector.shape_cast %141 : vector<1x1x4x32xbf16> to vector<4x32xbf16>
    %cst_94 = arith.constant dense<0.000000e+00> : vector<16x4xf32>
    %143 = tpu.matmul %4, %142, %cst_94 {dimension_numbers = #tpu.dot_dimension_numbers<[1], [1], [0], [0], [0, 0, 1, 0], [], []>} : vector<16x32xbf16>, vector<4x32xbf16>, vector<16x4xf32> -> vector<16x4xf32>
    %144 = vector.extract_strided_slice %10 {offsets = [3, 0], sizes = [1, 4], strides = [1, 1]} : vector<8x4xf32> to vector<1x4xf32>
    %145 = vector.broadcast %144 : vector<1x4xf32> to vector<16x4xf32>
    %146 = arith.addf %143, %145 : vector<16x4xf32>
    %147 = vector.shape_cast %134 : vector<16x4xf32> to vector<2x8x4xf32>
    %148 = vector.shape_cast %140 : vector<16x4xf32> to vector<2x8x4xf32>
    %149 = vector.shape_cast %146 : vector<16x4xf32> to vector<2x8x4xf32>
    "tpu.trace_start"() <{level = 10 : i32, message = "bqd,bkd->bqk"}> : () -> ()
    %cst_95 = arith.constant dense<0.000000e+00> : vector<2x8x8xf32>
    %150 = tpu.matmul %147, %148, %cst_95 {dimension_numbers = #tpu.dot_dimension_numbers<[2], [2], [1], [1], [0, 0, 0, 1, 1, 1], [0], [0]>} : vector<2x8x4xf32>, vector<2x8x4xf32>, vector<2x8x8xf32> -> vector<2x8x8xf32>
    "tpu.trace_stop"() : () -> ()
    %cst_96 = arith.constant dense<0xFF800000> : vector<2x8xf32>
    %151 = vector.multi_reduction <maximumf>, %150, %cst_96 [2] : vector<2x8x8xf32> to vector<2x8xf32>
    %152 = vector.shape_cast %151 : vector<2x8xf32> to vector<2x8x1xf32>
    %153 = vector.broadcast %152 : vector<2x8x1xf32> to vector<2x8x8xf32>
    %154 = arith.subf %150, %153 : vector<2x8x8xf32>
    %155 = math.exp %154 : vector<2x8x8xf32>
    %cst_97 = arith.constant dense<0.000000e+00> : vector<2x8xf32>
    %156 = vector.multi_reduction <add>, %155, %cst_97 [2] : vector<2x8x8xf32> to vector<2x8xf32>
    %157 = vector.shape_cast %156 : vector<2x8xf32> to vector<2x8x1xf32>
    %158 = tpu.reciprocal %157 {approx = true} : vector<2x8x1xf32> -> vector<2x8x1xf32>
    %159 = vector.broadcast %158 : vector<2x8x1xf32> to vector<2x8x8xf32>
    %160 = arith.mulf %155, %159 : vector<2x8x8xf32>
    "tpu.trace_start"() <{level = 10 : i32, message = "bqk,bkd->bqd"}> : () -> ()
    %cst_98 = arith.constant dense<0.000000e+00> : vector<2x8x4xf32>
    %161 = tpu.matmul %160, %149, %cst_98 {dimension_numbers = #tpu.dot_dimension_numbers<[2], [1], [1], [2], [0, 0, 0, 1, 1, 2], [0], [0]>} : vector<2x8x8xf32>, vector<2x8x4xf32>, vector<2x8x4xf32> -> vector<2x8x4xf32>
    "tpu.trace_stop"() : () -> ()
    %162 = vector.shape_cast %161 : vector<2x8x4xf32> to vector<16x4xf32>
    %163 = arith.truncf %162 : vector<16x4xf32> to vector<16x4xbf16>
    %c0_99 = arith.constant 0 : index
    %c3_100 = arith.constant 3 : index
    %c0_101 = arith.constant 0 : index
    %c0_102 = arith.constant 0 : index
    %164 = vector.load %arg11[%c0_99, %c3_100, %c0_101, %c0_102] : memref<1x8x4x32xbf16, #tpu.memory_space<vmem>>, vector<1x1x4x32xbf16>
    %165 = vector.shape_cast %164 : vector<1x1x4x32xbf16> to vector<4x32xbf16>
    %cst_103 = arith.constant dense<0.000000e+00> : vector<16x32xf32>
    %166 = tpu.matmul %163, %165, %cst_103 {dimension_numbers = #tpu.dot_dimension_numbers<[1], [0], [0], [1], [0, 0, 1, 1], [], []>} : vector<16x4xbf16>, vector<4x32xbf16>, vector<16x32xf32> -> vector<16x32xf32>
    %167 = arith.addf %128, %166 : vector<16x32xf32>
    %c0_104 = arith.constant 0 : index
    %c4 = arith.constant 4 : index
    %c0_105 = arith.constant 0 : index
    %c0_106 = arith.constant 0 : index
    %168 = vector.load %arg5[%c0_104, %c4, %c0_105, %c0_106] : memref<1x8x4x32xbf16, #tpu.memory_space<vmem>>, vector<1x1x4x32xbf16>
    %169 = vector.shape_cast %168 : vector<1x1x4x32xbf16> to vector<4x32xbf16>
    %cst_107 = arith.constant dense<0.000000e+00> : vector<16x4xf32>
    %170 = tpu.matmul %4, %169, %cst_107 {dimension_numbers = #tpu.dot_dimension_numbers<[1], [1], [0], [0], [0, 0, 1, 0], [], []>} : vector<16x32xbf16>, vector<4x32xbf16>, vector<16x4xf32> -> vector<16x4xf32>
    %171 = vector.extract_strided_slice %6 {offsets = [4, 0], sizes = [1, 4], strides = [1, 1]} : vector<8x4xf32> to vector<1x4xf32>
    %172 = vector.broadcast %171 : vector<1x4xf32> to vector<16x4xf32>
    %173 = arith.addf %170, %172 : vector<16x4xf32>
    %c0_108 = arith.constant 0 : index
    %c4_109 = arith.constant 4 : index
    %c0_110 = arith.constant 0 : index
    %c0_111 = arith.constant 0 : index
    %174 = vector.load %arg7[%c0_108, %c4_109, %c0_110, %c0_111] : memref<1x8x4x32xbf16, #tpu.memory_space<vmem>>, vector<1x1x4x32xbf16>
    %175 = vector.shape_cast %174 : vector<1x1x4x32xbf16> to vector<4x32xbf16>
    %cst_112 = arith.constant dense<0.000000e+00> : vector<16x4xf32>
    %176 = tpu.matmul %4, %175, %cst_112 {dimension_numbers = #tpu.dot_dimension_numbers<[1], [1], [0], [0], [0, 0, 1, 0], [], []>} : vector<16x32xbf16>, vector<4x32xbf16>, vector<16x4xf32> -> vector<16x4xf32>
    %177 = vector.extract_strided_slice %8 {offsets = [4, 0], sizes = [1, 4], strides = [1, 1]} : vector<8x4xf32> to vector<1x4xf32>
    %178 = vector.broadcast %177 : vector<1x4xf32> to vector<16x4xf32>
    %179 = arith.addf %176, %178 : vector<16x4xf32>
    %c0_113 = arith.constant 0 : index
    %c4_114 = arith.constant 4 : index
    %c0_115 = arith.constant 0 : index
    %c0_116 = arith.constant 0 : index
    %180 = vector.load %arg9[%c0_113, %c4_114, %c0_115, %c0_116] : memref<1x8x4x32xbf16, #tpu.memory_space<vmem>>, vector<1x1x4x32xbf16>
    %181 = vector.shape_cast %180 : vector<1x1x4x32xbf16> to vector<4x32xbf16>
    %cst_117 = arith.constant dense<0.000000e+00> : vector<16x4xf32>
    %182 = tpu.matmul %4, %181, %cst_117 {dimension_numbers = #tpu.dot_dimension_numbers<[1], [1], [0], [0], [0, 0, 1, 0], [], []>} : vector<16x32xbf16>, vector<4x32xbf16>, vector<16x4xf32> -> vector<16x4xf32>
    %183 = vector.extract_strided_slice %10 {offsets = [4, 0], sizes = [1, 4], strides = [1, 1]} : vector<8x4xf32> to vector<1x4xf32>
    %184 = vector.broadcast %183 : vector<1x4xf32> to vector<16x4xf32>
    %185 = arith.addf %182, %184 : vector<16x4xf32>
    %186 = vector.shape_cast %173 : vector<16x4xf32> to vector<2x8x4xf32>
    %187 = vector.shape_cast %179 : vector<16x4xf32> to vector<2x8x4xf32>
    %188 = vector.shape_cast %185 : vector<16x4xf32> to vector<2x8x4xf32>
    "tpu.trace_start"() <{level = 10 : i32, message = "bqd,bkd->bqk"}> : () -> ()
    %cst_118 = arith.constant dense<0.000000e+00> : vector<2x8x8xf32>
    %189 = tpu.matmul %186, %187, %cst_118 {dimension_numbers = #tpu.dot_dimension_numbers<[2], [2], [1], [1], [0, 0, 0, 1, 1, 1], [0], [0]>} : vector<2x8x4xf32>, vector<2x8x4xf32>, vector<2x8x8xf32> -> vector<2x8x8xf32>
    "tpu.trace_stop"() : () -> ()
    %cst_119 = arith.constant dense<0xFF800000> : vector<2x8xf32>
    %190 = vector.multi_reduction <maximumf>, %189, %cst_119 [2] : vector<2x8x8xf32> to vector<2x8xf32>
    %191 = vector.shape_cast %190 : vector<2x8xf32> to vector<2x8x1xf32>
    %192 = vector.broadcast %191 : vector<2x8x1xf32> to vector<2x8x8xf32>
    %193 = arith.subf %189, %192 : vector<2x8x8xf32>
    %194 = math.exp %193 : vector<2x8x8xf32>
    %cst_120 = arith.constant dense<0.000000e+00> : vector<2x8xf32>
    %195 = vector.multi_reduction <add>, %194, %cst_120 [2] : vector<2x8x8xf32> to vector<2x8xf32>
    %196 = vector.shape_cast %195 : vector<2x8xf32> to vector<2x8x1xf32>
    %197 = tpu.reciprocal %196 {approx = true} : vector<2x8x1xf32> -> vector<2x8x1xf32>
    %198 = vector.broadcast %197 : vector<2x8x1xf32> to vector<2x8x8xf32>
    %199 = arith.mulf %194, %198 : vector<2x8x8xf32>
    "tpu.trace_start"() <{level = 10 : i32, message = "bqk,bkd->bqd"}> : () -> ()
    %cst_121 = arith.constant dense<0.000000e+00> : vector<2x8x4xf32>
    %200 = tpu.matmul %199, %188, %cst_121 {dimension_numbers = #tpu.dot_dimension_numbers<[2], [1], [1], [2], [0, 0, 0, 1, 1, 2], [0], [0]>} : vector<2x8x8xf32>, vector<2x8x4xf32>, vector<2x8x4xf32> -> vector<2x8x4xf32>
    "tpu.trace_stop"() : () -> ()
    %201 = vector.shape_cast %200 : vector<2x8x4xf32> to vector<16x4xf32>
    %202 = arith.truncf %201 : vector<16x4xf32> to vector<16x4xbf16>
    %c0_122 = arith.constant 0 : index
    %c4_123 = arith.constant 4 : index
    %c0_124 = arith.constant 0 : index
    %c0_125 = arith.constant 0 : index
    %203 = vector.load %arg11[%c0_122, %c4_123, %c0_124, %c0_125] : memref<1x8x4x32xbf16, #tpu.memory_space<vmem>>, vector<1x1x4x32xbf16>
    %204 = vector.shape_cast %203 : vector<1x1x4x32xbf16> to vector<4x32xbf16>
    %cst_126 = arith.constant dense<0.000000e+00> : vector<16x32xf32>
    %205 = tpu.matmul %202, %204, %cst_126 {dimension_numbers = #tpu.dot_dimension_numbers<[1], [0], [0], [1], [0, 0, 1, 1], [], []>} : vector<16x4xbf16>, vector<4x32xbf16>, vector<16x32xf32> -> vector<16x32xf32>
    %206 = arith.addf %167, %205 : vector<16x32xf32>
    %c0_127 = arith.constant 0 : index
    %c5 = arith.constant 5 : index
    %c0_128 = arith.constant 0 : index
    %c0_129 = arith.constant 0 : index
    %207 = vector.load %arg5[%c0_127, %c5, %c0_128, %c0_129] : memref<1x8x4x32xbf16, #tpu.memory_space<vmem>>, vector<1x1x4x32xbf16>
    %208 = vector.shape_cast %207 : vector<1x1x4x32xbf16> to vector<4x32xbf16>
    %cst_130 = arith.constant dense<0.000000e+00> : vector<16x4xf32>
    %209 = tpu.matmul %4, %208, %cst_130 {dimension_numbers = #tpu.dot_dimension_numbers<[1], [1], [0], [0], [0, 0, 1, 0], [], []>} : vector<16x32xbf16>, vector<4x32xbf16>, vector<16x4xf32> -> vector<16x4xf32>
    %210 = vector.extract_strided_slice %6 {offsets = [5, 0], sizes = [1, 4], strides = [1, 1]} : vector<8x4xf32> to vector<1x4xf32>
    %211 = vector.broadcast %210 : vector<1x4xf32> to vector<16x4xf32>
    %212 = arith.addf %209, %211 : vector<16x4xf32>
    %c0_131 = arith.constant 0 : index
    %c5_132 = arith.constant 5 : index
    %c0_133 = arith.constant 0 : index
    %c0_134 = arith.constant 0 : index
    %213 = vector.load %arg7[%c0_131, %c5_132, %c0_133, %c0_134] : memref<1x8x4x32xbf16, #tpu.memory_space<vmem>>, vector<1x1x4x32xbf16>
    %214 = vector.shape_cast %213 : vector<1x1x4x32xbf16> to vector<4x32xbf16>
    %cst_135 = arith.constant dense<0.000000e+00> : vector<16x4xf32>
    %215 = tpu.matmul %4, %214, %cst_135 {dimension_numbers = #tpu.dot_dimension_numbers<[1], [1], [0], [0], [0, 0, 1, 0], [], []>} : vector<16x32xbf16>, vector<4x32xbf16>, vector<16x4xf32> -> vector<16x4xf32>
    %216 = vector.extract_strided_slice %8 {offsets = [5, 0], sizes = [1, 4], strides = [1, 1]} : vector<8x4xf32> to vector<1x4xf32>
    %217 = vector.broadcast %216 : vector<1x4xf32> to vector<16x4xf32>
    %218 = arith.addf %215, %217 : vector<16x4xf32>
    %c0_136 = arith.constant 0 : index
    %c5_137 = arith.constant 5 : index
    %c0_138 = arith.constant 0 : index
    %c0_139 = arith.constant 0 : index
    %219 = vector.load %arg9[%c0_136, %c5_137, %c0_138, %c0_139] : memref<1x8x4x32xbf16, #tpu.memory_space<vmem>>, vector<1x1x4x32xbf16>
    %220 = vector.shape_cast %219 : vector<1x1x4x32xbf16> to vector<4x32xbf16>
    %cst_140 = arith.constant dense<0.000000e+00> : vector<16x4xf32>
    %221 = tpu.matmul %4, %220, %cst_140 {dimension_numbers = #tpu.dot_dimension_numbers<[1], [1], [0], [0], [0, 0, 1, 0], [], []>} : vector<16x32xbf16>, vector<4x32xbf16>, vector<16x4xf32> -> vector<16x4xf32>
    %222 = vector.extract_strided_slice %10 {offsets = [5, 0], sizes = [1, 4], strides = [1, 1]} : vector<8x4xf32> to vector<1x4xf32>
    %223 = vector.broadcast %222 : vector<1x4xf32> to vector<16x4xf32>
    %224 = arith.addf %221, %223 : vector<16x4xf32>
    %225 = vector.shape_cast %212 : vector<16x4xf32> to vector<2x8x4xf32>
    %226 = vector.shape_cast %218 : vector<16x4xf32> to vector<2x8x4xf32>
    %227 = vector.shape_cast %224 : vector<16x4xf32> to vector<2x8x4xf32>
    "tpu.trace_start"() <{level = 10 : i32, message = "bqd,bkd->bqk"}> : () -> ()
    %cst_141 = arith.constant dense<0.000000e+00> : vector<2x8x8xf32>
    %228 = tpu.matmul %225, %226, %cst_141 {dimension_numbers = #tpu.dot_dimension_numbers<[2], [2], [1], [1], [0, 0, 0, 1, 1, 1], [0], [0]>} : vector<2x8x4xf32>, vector<2x8x4xf32>, vector<2x8x8xf32> -> vector<2x8x8xf32>
    "tpu.trace_stop"() : () -> ()
    %cst_142 = arith.constant dense<0xFF800000> : vector<2x8xf32>
    %229 = vector.multi_reduction <maximumf>, %228, %cst_142 [2] : vector<2x8x8xf32> to vector<2x8xf32>
    %230 = vector.shape_cast %229 : vector<2x8xf32> to vector<2x8x1xf32>
    %231 = vector.broadcast %230 : vector<2x8x1xf32> to vector<2x8x8xf32>
    %232 = arith.subf %228, %231 : vector<2x8x8xf32>
    %233 = math.exp %232 : vector<2x8x8xf32>
    %cst_143 = arith.constant dense<0.000000e+00> : vector<2x8xf32>
    %234 = vector.multi_reduction <add>, %233, %cst_143 [2] : vector<2x8x8xf32> to vector<2x8xf32>
    %235 = vector.shape_cast %234 : vector<2x8xf32> to vector<2x8x1xf32>
    %236 = tpu.reciprocal %235 {approx = true} : vector<2x8x1xf32> -> vector<2x8x1xf32>
    %237 = vector.broadcast %236 : vector<2x8x1xf32> to vector<2x8x8xf32>
    %238 = arith.mulf %233, %237 : vector<2x8x8xf32>
    "tpu.trace_start"() <{level = 10 : i32, message = "bqk,bkd->bqd"}> : () -> ()
    %cst_144 = arith.constant dense<0.000000e+00> : vector<2x8x4xf32>
    %239 = tpu.matmul %238, %227, %cst_144 {dimension_numbers = #tpu.dot_dimension_numbers<[2], [1], [1], [2], [0, 0, 0, 1, 1, 2], [0], [0]>} : vector<2x8x8xf32>, vector<2x8x4xf32>, vector<2x8x4xf32> -> vector<2x8x4xf32>
    "tpu.trace_stop"() : () -> ()
    %240 = vector.shape_cast %239 : vector<2x8x4xf32> to vector<16x4xf32>
    %241 = arith.truncf %240 : vector<16x4xf32> to vector<16x4xbf16>
    %c0_145 = arith.constant 0 : index
    %c5_146 = arith.constant 5 : index
    %c0_147 = arith.constant 0 : index
    %c0_148 = arith.constant 0 : index
    %242 = vector.load %arg11[%c0_145, %c5_146, %c0_147, %c0_148] : memref<1x8x4x32xbf16, #tpu.memory_space<vmem>>, vector<1x1x4x32xbf16>
    %243 = vector.shape_cast %242 : vector<1x1x4x32xbf16> to vector<4x32xbf16>
    %cst_149 = arith.constant dense<0.000000e+00> : vector<16x32xf32>
    %244 = tpu.matmul %241, %243, %cst_149 {dimension_numbers = #tpu.dot_dimension_numbers<[1], [0], [0], [1], [0, 0, 1, 1], [], []>} : vector<16x4xbf16>, vector<4x32xbf16>, vector<16x32xf32> -> vector<16x32xf32>
    %245 = arith.addf %206, %244 : vector<16x32xf32>
    %c0_150 = arith.constant 0 : index
    %c6 = arith.constant 6 : index
    %c0_151 = arith.constant 0 : index
    %c0_152 = arith.constant 0 : index
    %246 = vector.load %arg5[%c0_150, %c6, %c0_151, %c0_152] : memref<1x8x4x32xbf16, #tpu.memory_space<vmem>>, vector<1x1x4x32xbf16>
    %247 = vector.shape_cast %246 : vector<1x1x4x32xbf16> to vector<4x32xbf16>
    %cst_153 = arith.constant dense<0.000000e+00> : vector<16x4xf32>
    %248 = tpu.matmul %4, %247, %cst_153 {dimension_numbers = #tpu.dot_dimension_numbers<[1], [1], [0], [0], [0, 0, 1, 0], [], []>} : vector<16x32xbf16>, vector<4x32xbf16>, vector<16x4xf32> -> vector<16x4xf32>
    %249 = vector.extract_strided_slice %6 {offsets = [6, 0], sizes = [1, 4], strides = [1, 1]} : vector<8x4xf32> to vector<1x4xf32>
    %250 = vector.broadcast %249 : vector<1x4xf32> to vector<16x4xf32>
    %251 = arith.addf %248, %250 : vector<16x4xf32>
    %c0_154 = arith.constant 0 : index
    %c6_155 = arith.constant 6 : index
    %c0_156 = arith.constant 0 : index
    %c0_157 = arith.constant 0 : index
    %252 = vector.load %arg7[%c0_154, %c6_155, %c0_156, %c0_157] : memref<1x8x4x32xbf16, #tpu.memory_space<vmem>>, vector<1x1x4x32xbf16>
    %253 = vector.shape_cast %252 : vector<1x1x4x32xbf16> to vector<4x32xbf16>
    %cst_158 = arith.constant dense<0.000000e+00> : vector<16x4xf32>
    %254 = tpu.matmul %4, %253, %cst_158 {dimension_numbers = #tpu.dot_dimension_numbers<[1], [1], [0], [0], [0, 0, 1, 0], [], []>} : vector<16x32xbf16>, vector<4x32xbf16>, vector<16x4xf32> -> vector<16x4xf32>
    %255 = vector.extract_strided_slice %8 {offsets = [6, 0], sizes = [1, 4], strides = [1, 1]} : vector<8x4xf32> to vector<1x4xf32>
    %256 = vector.broadcast %255 : vector<1x4xf32> to vector<16x4xf32>
    %257 = arith.addf %254, %256 : vector<16x4xf32>
    %c0_159 = arith.constant 0 : index
    %c6_160 = arith.constant 6 : index
    %c0_161 = arith.constant 0 : index
    %c0_162 = arith.constant 0 : index
    %258 = vector.load %arg9[%c0_159, %c6_160, %c0_161, %c0_162] : memref<1x8x4x32xbf16, #tpu.memory_space<vmem>>, vector<1x1x4x32xbf16>
    %259 = vector.shape_cast %258 : vector<1x1x4x32xbf16> to vector<4x32xbf16>
    %cst_163 = arith.constant dense<0.000000e+00> : vector<16x4xf32>
    %260 = tpu.matmul %4, %259, %cst_163 {dimension_numbers = #tpu.dot_dimension_numbers<[1], [1], [0], [0], [0, 0, 1, 0], [], []>} : vector<16x32xbf16>, vector<4x32xbf16>, vector<16x4xf32> -> vector<16x4xf32>
    %261 = vector.extract_strided_slice %10 {offsets = [6, 0], sizes = [1, 4], strides = [1, 1]} : vector<8x4xf32> to vector<1x4xf32>
    %262 = vector.broadcast %261 : vector<1x4xf32> to vector<16x4xf32>
    %263 = arith.addf %260, %262 : vector<16x4xf32>
    %264 = vector.shape_cast %251 : vector<16x4xf32> to vector<2x8x4xf32>
    %265 = vector.shape_cast %257 : vector<16x4xf32> to vector<2x8x4xf32>
    %266 = vector.shape_cast %263 : vector<16x4xf32> to vector<2x8x4xf32>
    "tpu.trace_start"() <{level = 10 : i32, message = "bqd,bkd->bqk"}> : () -> ()
    %cst_164 = arith.constant dense<0.000000e+00> : vector<2x8x8xf32>
    %267 = tpu.matmul %264, %265, %cst_164 {dimension_numbers = #tpu.dot_dimension_numbers<[2], [2], [1], [1], [0, 0, 0, 1, 1, 1], [0], [0]>} : vector<2x8x4xf32>, vector<2x8x4xf32>, vector<2x8x8xf32> -> vector<2x8x8xf32>
    "tpu.trace_stop"() : () -> ()
    %cst_165 = arith.constant dense<0xFF800000> : vector<2x8xf32>
    %268 = vector.multi_reduction <maximumf>, %267, %cst_165 [2] : vector<2x8x8xf32> to vector<2x8xf32>
    %269 = vector.shape_cast %268 : vector<2x8xf32> to vector<2x8x1xf32>
    %270 = vector.broadcast %269 : vector<2x8x1xf32> to vector<2x8x8xf32>
    %271 = arith.subf %267, %270 : vector<2x8x8xf32>
    %272 = math.exp %271 : vector<2x8x8xf32>
    %cst_166 = arith.constant dense<0.000000e+00> : vector<2x8xf32>
    %273 = vector.multi_reduction <add>, %272, %cst_166 [2] : vector<2x8x8xf32> to vector<2x8xf32>
    %274 = vector.shape_cast %273 : vector<2x8xf32> to vector<2x8x1xf32>
    %275 = tpu.reciprocal %274 {approx = true} : vector<2x8x1xf32> -> vector<2x8x1xf32>
    %276 = vector.broadcast %275 : vector<2x8x1xf32> to vector<2x8x8xf32>
    %277 = arith.mulf %272, %276 : vector<2x8x8xf32>
    "tpu.trace_start"() <{level = 10 : i32, message = "bqk,bkd->bqd"}> : () -> ()
    %cst_167 = arith.constant dense<0.000000e+00> : vector<2x8x4xf32>
    %278 = tpu.matmul %277, %266, %cst_167 {dimension_numbers = #tpu.dot_dimension_numbers<[2], [1], [1], [2], [0, 0, 0, 1, 1, 2], [0], [0]>} : vector<2x8x8xf32>, vector<2x8x4xf32>, vector<2x8x4xf32> -> vector<2x8x4xf32>
    "tpu.trace_stop"() : () -> ()
    %279 = vector.shape_cast %278 : vector<2x8x4xf32> to vector<16x4xf32>
    %280 = arith.truncf %279 : vector<16x4xf32> to vector<16x4xbf16>
    %c0_168 = arith.constant 0 : index
    %c6_169 = arith.constant 6 : index
    %c0_170 = arith.constant 0 : index
    %c0_171 = arith.constant 0 : index
    %281 = vector.load %arg11[%c0_168, %c6_169, %c0_170, %c0_171] : memref<1x8x4x32xbf16, #tpu.memory_space<vmem>>, vector<1x1x4x32xbf16>
    %282 = vector.shape_cast %281 : vector<1x1x4x32xbf16> to vector<4x32xbf16>
    %cst_172 = arith.constant dense<0.000000e+00> : vector<16x32xf32>
    %283 = tpu.matmul %280, %282, %cst_172 {dimension_numbers = #tpu.dot_dimension_numbers<[1], [0], [0], [1], [0, 0, 1, 1], [], []>} : vector<16x4xbf16>, vector<4x32xbf16>, vector<16x32xf32> -> vector<16x32xf32>
    %284 = arith.addf %245, %283 : vector<16x32xf32>
    %c0_173 = arith.constant 0 : index
    %c7 = arith.constant 7 : index
    %c0_174 = arith.constant 0 : index
    %c0_175 = arith.constant 0 : index
    %285 = vector.load %arg5[%c0_173, %c7, %c0_174, %c0_175] : memref<1x8x4x32xbf16, #tpu.memory_space<vmem>>, vector<1x1x4x32xbf16>
    %286 = vector.shape_cast %285 : vector<1x1x4x32xbf16> to vector<4x32xbf16>
    %cst_176 = arith.constant dense<0.000000e+00> : vector<16x4xf32>
    %287 = tpu.matmul %4, %286, %cst_176 {dimension_numbers = #tpu.dot_dimension_numbers<[1], [1], [0], [0], [0, 0, 1, 0], [], []>} : vector<16x32xbf16>, vector<4x32xbf16>, vector<16x4xf32> -> vector<16x4xf32>
    %288 = vector.extract_strided_slice %6 {offsets = [7, 0], sizes = [1, 4], strides = [1, 1]} : vector<8x4xf32> to vector<1x4xf32>
    %289 = vector.broadcast %288 : vector<1x4xf32> to vector<16x4xf32>
    %290 = arith.addf %287, %289 : vector<16x4xf32>
    %c0_177 = arith.constant 0 : index
    %c7_178 = arith.constant 7 : index
    %c0_179 = arith.constant 0 : index
    %c0_180 = arith.constant 0 : index
    %291 = vector.load %arg7[%c0_177, %c7_178, %c0_179, %c0_180] : memref<1x8x4x32xbf16, #tpu.memory_space<vmem>>, vector<1x1x4x32xbf16>
    %292 = vector.shape_cast %291 : vector<1x1x4x32xbf16> to vector<4x32xbf16>
    %cst_181 = arith.constant dense<0.000000e+00> : vector<16x4xf32>
    %293 = tpu.matmul %4, %292, %cst_181 {dimension_numbers = #tpu.dot_dimension_numbers<[1], [1], [0], [0], [0, 0, 1, 0], [], []>} : vector<16x32xbf16>, vector<4x32xbf16>, vector<16x4xf32> -> vector<16x4xf32>
    %294 = vector.extract_strided_slice %8 {offsets = [7, 0], sizes = [1, 4], strides = [1, 1]} : vector<8x4xf32> to vector<1x4xf32>
    %295 = vector.broadcast %294 : vector<1x4xf32> to vector<16x4xf32>
    %296 = arith.addf %293, %295 : vector<16x4xf32>
    %c0_182 = arith.constant 0 : index
    %c7_183 = arith.constant 7 : index
    %c0_184 = arith.constant 0 : index
    %c0_185 = arith.constant 0 : index
    %297 = vector.load %arg9[%c0_182, %c7_183, %c0_184, %c0_185] : memref<1x8x4x32xbf16, #tpu.memory_space<vmem>>, vector<1x1x4x32xbf16>
    %298 = vector.shape_cast %297 : vector<1x1x4x32xbf16> to vector<4x32xbf16>
    %cst_186 = arith.constant dense<0.000000e+00> : vector<16x4xf32>
    %299 = tpu.matmul %4, %298, %cst_186 {dimension_numbers = #tpu.dot_dimension_numbers<[1], [1], [0], [0], [0, 0, 1, 0], [], []>} : vector<16x32xbf16>, vector<4x32xbf16>, vector<16x4xf32> -> vector<16x4xf32>
    %300 = vector.extract_strided_slice %10 {offsets = [7, 0], sizes = [1, 4], strides = [1, 1]} : vector<8x4xf32> to vector<1x4xf32>
    %301 = vector.broadcast %300 : vector<1x4xf32> to vector<16x4xf32>
    %302 = arith.addf %299, %301 : vector<16x4xf32>
    %303 = vector.shape_cast %290 : vector<16x4xf32> to vector<2x8x4xf32>
    %304 = vector.shape_cast %296 : vector<16x4xf32> to vector<2x8x4xf32>
    %305 = vector.shape_cast %302 : vector<16x4xf32> to vector<2x8x4xf32>
    "tpu.trace_start"() <{level = 10 : i32, message = "bqd,bkd->bqk"}> : () -> ()
    %cst_187 = arith.constant dense<0.000000e+00> : vector<2x8x8xf32>
    %306 = tpu.matmul %303, %304, %cst_187 {dimension_numbers = #tpu.dot_dimension_numbers<[2], [2], [1], [1], [0, 0, 0, 1, 1, 1], [0], [0]>} : vector<2x8x4xf32>, vector<2x8x4xf32>, vector<2x8x8xf32> -> vector<2x8x8xf32>
    "tpu.trace_stop"() : () -> ()
    %cst_188 = arith.constant dense<0xFF800000> : vector<2x8xf32>
    %307 = vector.multi_reduction <maximumf>, %306, %cst_188 [2] : vector<2x8x8xf32> to vector<2x8xf32>
    %308 = vector.shape_cast %307 : vector<2x8xf32> to vector<2x8x1xf32>
    %309 = vector.broadcast %308 : vector<2x8x1xf32> to vector<2x8x8xf32>
    %310 = arith.subf %306, %309 : vector<2x8x8xf32>
    %311 = math.exp %310 : vector<2x8x8xf32>
    %cst_189 = arith.constant dense<0.000000e+00> : vector<2x8xf32>
    %312 = vector.multi_reduction <add>, %311, %cst_189 [2] : vector<2x8x8xf32> to vector<2x8xf32>
    %313 = vector.shape_cast %312 : vector<2x8xf32> to vector<2x8x1xf32>
    %314 = tpu.reciprocal %313 {approx = true} : vector<2x8x1xf32> -> vector<2x8x1xf32>
    %315 = vector.broadcast %314 : vector<2x8x1xf32> to vector<2x8x8xf32>
    %316 = arith.mulf %311, %315 : vector<2x8x8xf32>
    "tpu.trace_start"() <{level = 10 : i32, message = "bqk,bkd->bqd"}> : () -> ()
    %cst_190 = arith.constant dense<0.000000e+00> : vector<2x8x4xf32>
    %317 = tpu.matmul %316, %305, %cst_190 {dimension_numbers = #tpu.dot_dimension_numbers<[2], [1], [1], [2], [0, 0, 0, 1, 1, 2], [0], [0]>} : vector<2x8x8xf32>, vector<2x8x4xf32>, vector<2x8x4xf32> -> vector<2x8x4xf32>
    "tpu.trace_stop"() : () -> ()
    %318 = vector.shape_cast %317 : vector<2x8x4xf32> to vector<16x4xf32>
    %319 = arith.truncf %318 : vector<16x4xf32> to vector<16x4xbf16>
    %c0_191 = arith.constant 0 : index
    %c7_192 = arith.constant 7 : index
    %c0_193 = arith.constant 0 : index
    %c0_194 = arith.constant 0 : index
    %320 = vector.load %arg11[%c0_191, %c7_192, %c0_193, %c0_194] : memref<1x8x4x32xbf16, #tpu.memory_space<vmem>>, vector<1x1x4x32xbf16>
    %321 = vector.shape_cast %320 : vector<1x1x4x32xbf16> to vector<4x32xbf16>
    %cst_195 = arith.constant dense<0.000000e+00> : vector<16x32xf32>
    %322 = tpu.matmul %319, %321, %cst_195 {dimension_numbers = #tpu.dot_dimension_numbers<[1], [0], [0], [1], [0, 0, 1, 1], [], []>} : vector<16x4xbf16>, vector<4x32xbf16>, vector<16x32xf32> -> vector<16x32xf32>
    %323 = arith.addf %284, %322 : vector<16x32xf32>
    %c0_196 = arith.constant 0 : index
    %c0_197 = arith.constant 0 : index
    %c0_198 = arith.constant 0 : index
    %324 = vector.load %arg12[%c0_196, %c0_197, %c0_198] : memref<1x1x32xf32, #tpu.memory_space<vmem>>, vector<1x1x32xf32>
    %325 = vector.shape_cast %324 : vector<1x1x32xf32> to vector<1x32xf32>
    %326 = vector.broadcast %325 : vector<1x32xf32> to vector<16x32xf32>
    %327 = arith.addf %323, %326 : vector<16x32xf32>
    %328 = arith.addf %3, %327 : vector<16x32xf32>
    %c0_199 = arith.constant 0 : index
    %c0_200 = arith.constant 0 : index
    %c0_201 = arith.constant 0 : index
    %329 = vector.load %arg13[%c0_199, %c0_200, %c0_201] : memref<1x1x32xf32, #tpu.memory_space<vmem>>, vector<1x1x32xf32>
    %330 = vector.shape_cast %329 : vector<1x1x32xf32> to vector<1x32xf32>
    %c0_202 = arith.constant 0 : index
    %c0_203 = arith.constant 0 : index
    %c0_204 = arith.constant 0 : index
    %331 = vector.load %arg14[%c0_202, %c0_203, %c0_204] : memref<1x1x32xf32, #tpu.memory_space<vmem>>, vector<1x1x32xf32>
    %332 = vector.shape_cast %331 : vector<1x1x32xf32> to vector<1x32xf32>
    %cst_205 = arith.constant dense<0.000000e+00> : vector<16xf32>
    %333 = vector.multi_reduction <add>, %328, %cst_205 [1] : vector<16x32xf32> to vector<16xf32>
    %334 = vector.shape_cast %333 : vector<16xf32> to vector<16x1xf32>
    %cst_206 = arith.constant 3.200000e+01 : f32
    %335 = vector.broadcast %cst_206 : f32 to vector<16x1xf32>
    %336 = arith.divf %334, %335 : vector<16x1xf32>
    %337 = vector.broadcast %336 : vector<16x1xf32> to vector<16x32xf32>
    %338 = arith.subf %328, %337 : vector<16x32xf32>
    %339 = arith.mulf %338, %338 : vector<16x32xf32>
    %cst_207 = arith.constant dense<0.000000e+00> : vector<16xf32>
    %340 = vector.multi_reduction <add>, %339, %cst_207 [1] : vector<16x32xf32> to vector<16xf32>
    %341 = vector.shape_cast %340 : vector<16xf32> to vector<16x1xf32>
    %cst_208 = arith.constant 3.200000e+01 : f32
    %342 = vector.broadcast %cst_208 : f32 to vector<16x1xf32>
    %343 = arith.divf %341, %342 : vector<16x1xf32>
    %cst_209 = arith.constant 9.99999974E-6 : f32
    %344 = vector.broadcast %cst_209 : f32 to vector<16x1xf32>
    %345 = arith.addf %343, %344 : vector<16x1xf32>
    %346 = math.rsqrt %345 : vector<16x1xf32>
    %347 = vector.broadcast %346 : vector<16x1xf32> to vector<16x32xf32>
    %348 = arith.mulf %338, %347 : vector<16x32xf32>
    %349 = vector.broadcast %330 : vector<1x32xf32> to vector<16x32xf32>
    %350 = arith.mulf %348, %349 : vector<16x32xf32>
    %351 = vector.broadcast %332 : vector<1x32xf32> to vector<16x32xf32>
    %352 = arith.addf %350, %351 : vector<16x32xf32>
    %353 = arith.truncf %352 : vector<16x32xf32> to vector<16x32xbf16>
    %c0_210 = arith.constant 0 : index
    %c0_211 = arith.constant 0 : index
    %c0_212 = arith.constant 0 : index
    %354 = vector.load %arg15[%c0_210, %c0_211, %c0_212] : memref<1x32x2048xbf16, #tpu.memory_space<vmem>>, vector<1x32x2048xbf16>
    %355 = vector.shape_cast %354 : vector<1x32x2048xbf16> to vector<32x2048xbf16>
    %cst_213 = arith.constant dense<0.000000e+00> : vector<16x2048xf32>
    %356 = tpu.matmul %353, %355, %cst_213 {dimension_numbers = #tpu.dot_dimension_numbers<[1], [0], [0], [1], [0, 0, 1, 1], [], []>} : vector<16x32xbf16>, vector<32x2048xbf16>, vector<16x2048xf32> -> vector<16x2048xf32>
    %c0_214 = arith.constant 0 : index
    %c0_215 = arith.constant 0 : index
    %c0_216 = arith.constant 0 : index
    %357 = vector.load %arg16[%c0_214, %c0_215, %c0_216] : memref<1x1x2048xf32, #tpu.memory_space<vmem>>, vector<1x1x2048xf32>
    %358 = vector.shape_cast %357 : vector<1x1x2048xf32> to vector<1x2048xf32>
    %359 = vector.broadcast %358 : vector<1x2048xf32> to vector<16x2048xf32>
    %360 = arith.addf %356, %359 : vector<16x2048xf32>
    %cst_217 = arith.constant 0.000000e+00 : f32
    %361 = vector.broadcast %cst_217 : f32 to vector<16x2048xf32>
    %362 = arith.maximumf %360, %361 : vector<16x2048xf32>
    %363 = arith.truncf %362 : vector<16x2048xf32> to vector<16x2048xbf16>
    %c0_218 = arith.constant 0 : index
    %c0_219 = arith.constant 0 : index
    %c0_220 = arith.constant 0 : index
    %364 = vector.load %arg17[%c0_218, %c0_219, %c0_220] : memref<1x32x2048xbf16, #tpu.memory_space<vmem>>, vector<1x32x2048xbf16>
    %365 = vector.shape_cast %364 : vector<1x32x2048xbf16> to vector<32x2048xbf16>
    %cst_221 = arith.constant dense<0.000000e+00> : vector<16x32xf32>
    %366 = tpu.matmul %363, %365, %cst_221 {dimension_numbers = #tpu.dot_dimension_numbers<[1], [1], [0], [0], [0, 0, 1, 0], [], []>} : vector<16x2048xbf16>, vector<32x2048xbf16>, vector<16x32xf32> -> vector<16x32xf32>
    %c0_222 = arith.constant 0 : index
    %c0_223 = arith.constant 0 : index
    %c0_224 = arith.constant 0 : index
    %367 = vector.load %arg18[%c0_222, %c0_223, %c0_224] : memref<1x1x32xf32, #tpu.memory_space<vmem>>, vector<1x1x32xf32>
    %368 = vector.shape_cast %367 : vector<1x1x32xf32> to vector<1x32xf32>
    %369 = vector.broadcast %368 : vector<1x32xf32> to vector<16x32xf32>
    %370 = arith.addf %366, %369 : vector<16x32xf32>
    %371 = arith.addf %352, %370 : vector<16x32xf32>
    %c0_225 = arith.constant 0 : index
    %c0_226 = arith.constant 0 : index
    %c0_227 = arith.constant 0 : index
    %372 = vector.load %arg19[%c0_225, %c0_226, %c0_227] : memref<1x1x32xf32, #tpu.memory_space<vmem>>, vector<1x1x32xf32>
    %373 = vector.shape_cast %372 : vector<1x1x32xf32> to vector<1x32xf32>
    %c0_228 = arith.constant 0 : index
    %c0_229 = arith.constant 0 : index
    %c0_230 = arith.constant 0 : index
    %374 = vector.load %arg20[%c0_228, %c0_229, %c0_230] : memref<1x1x32xf32, #tpu.memory_space<vmem>>, vector<1x1x32xf32>
    %375 = vector.shape_cast %374 : vector<1x1x32xf32> to vector<1x32xf32>
    %cst_231 = arith.constant dense<0.000000e+00> : vector<16xf32>
    %376 = vector.multi_reduction <add>, %371, %cst_231 [1] : vector<16x32xf32> to vector<16xf32>
    %377 = vector.shape_cast %376 : vector<16xf32> to vector<16x1xf32>
    %cst_232 = arith.constant 3.200000e+01 : f32
    %378 = vector.broadcast %cst_232 : f32 to vector<16x1xf32>
    %379 = arith.divf %377, %378 : vector<16x1xf32>
    %380 = vector.broadcast %379 : vector<16x1xf32> to vector<16x32xf32>
    %381 = arith.subf %371, %380 : vector<16x32xf32>
    %382 = arith.mulf %381, %381 : vector<16x32xf32>
    %cst_233 = arith.constant dense<0.000000e+00> : vector<16xf32>
    %383 = vector.multi_reduction <add>, %382, %cst_233 [1] : vector<16x32xf32> to vector<16xf32>
    %384 = vector.shape_cast %383 : vector<16xf32> to vector<16x1xf32>
    %cst_234 = arith.constant 3.200000e+01 : f32
    %385 = vector.broadcast %cst_234 : f32 to vector<16x1xf32>
    %386 = arith.divf %384, %385 : vector<16x1xf32>
    %cst_235 = arith.constant 9.99999974E-6 : f32
    %387 = vector.broadcast %cst_235 : f32 to vector<16x1xf32>
    %388 = arith.addf %386, %387 : vector<16x1xf32>
    %389 = math.rsqrt %388 : vector<16x1xf32>
    %390 = vector.broadcast %389 : vector<16x1xf32> to vector<16x32xf32>
    %391 = arith.mulf %381, %390 : vector<16x32xf32>
    %392 = vector.broadcast %373 : vector<1x32xf32> to vector<16x32xf32>
    %393 = arith.mulf %391, %392 : vector<16x32xf32>
    %394 = vector.broadcast %375 : vector<1x32xf32> to vector<16x32xf32>
    %395 = arith.addf %393, %394 : vector<16x32xf32>
    %c0_236 = arith.constant 0 : index
    %c0_237 = arith.constant 0 : index
    %396 = vector.load %arg22[%c0_236, %c0_237] : memref<16x32xf32, #tpu.memory_space<vmem>>, vector<16x32xf32>
    tpu.vector_store %arg22[%c0_236, %c0_237], %395 {strides = array<i32>} : memref<16x32xf32, #tpu.memory_space<vmem>>, vector<16x32xf32>,
    %c1_i32 = arith.constant 1 : i32
    %397 = arith.cmpi eq, %arg0, %c1_i32 : i32
    %398 = arith.extui %397 : i1 to i32
    %c0_i32_238 = arith.constant 0 : i32
    %399 = arith.cmpi ne, %398, %c0_i32_238 : i32
    scf.if %399 {
      %c0_239 = arith.constant 0 : index
      %c0_240 = arith.constant 0 : index
      %400 = vector.load %arg21[%c0_239, %c0_240] : memref<16x32xf32, #tpu.memory_space<vmem>>, vector<16x32xf32>
      tpu.vector_store %arg21[%c0_239, %c0_240], %395 {strides = array<i32>} : memref<16x32xf32, #tpu.memory_space<vmem>>, vector<16x32xf32>,
    } else {
    }
    return
  }
  func.func @transform_0(%arg0: i32) -> (i32, i32) {
    %c0_i32 = arith.constant 0 : i32
    %c0_i32_0 = arith.constant 0 : i32
    %c0_i32_1 = arith.constant 0 : i32
    return %c0_i32, %c0_i32_0 : i32, i32
  }
  func.func @transform_1(%arg0: i32) -> (i32, i32) {
    %c0_i32 = arith.constant 0 : i32
    %c0_i32_0 = arith.constant 0 : i32
    %c0_i32_1 = arith.constant 0 : i32
    return %c0_i32, %c0_i32_0 : i32, i32
  }
  func.func @transform_2(%arg0: i32) -> (i32, i32) {
    %c0_i32 = arith.constant 0 : i32
    %c0_i32_0 = arith.constant 0 : i32
    %c0_i32_1 = arith.constant 0 : i32
    return %c0_i32, %c0_i32_0 : i32, i32
  }
  func.func @transform_3(%arg0: i32) -> (i32, i32) {
    %c0_i32 = arith.constant 0 : i32
    %c0_i32_0 = arith.constant 0 : i32
    %c0_i32_1 = arith.constant 0 : i32
    return %c0_i32, %c0_i32_0 : i32, i32
  }
  func.func @transform_4(%arg0: i32) -> (i32, i32, i32, i32) {
    %c0_i32 = arith.constant 0 : i32
    %c0_i32_0 = arith.constant 0 : i32
    %c0_i32_1 = arith.constant 0 : i32
    %c0_i32_2 = arith.constant 0 : i32
    return %arg0, %c0_i32, %c0_i32_0, %c0_i32_1 : i32, i32, i32, i32
  }
  func.func @transform_5(%arg0: i32) -> (i32, i32, i32) {
    %c0_i32 = arith.constant 0 : i32
    %c0_i32_0 = arith.constant 0 : i32
    %c0_i32_1 = arith.constant 0 : i32
    return %arg0, %c0_i32, %c0_i32_0 : i32, i32, i32
  }
  func.func @transform_6(%arg0: i32) -> (i32, i32, i32, i32) {
    %c0_i32 = arith.constant 0 : i32
    %c0_i32_0 = arith.constant 0 : i32
    %c0_i32_1 = arith.constant 0 : i32
    %c0_i32_2 = arith.constant 0 : i32
    return %arg0, %c0_i32, %c0_i32_0, %c0_i32_1 : i32, i32, i32, i32
  }
  func.func @transform_7(%arg0: i32) -> (i32, i32, i32) {
    %c0_i32 = arith.constant 0 : i32
    %c0_i32_0 = arith.constant 0 : i32
    %c0_i32_1 = arith.constant 0 : i32
    return %arg0, %c0_i32, %c0_i32_0 : i32, i32, i32
  }
  func.func @transform_8(%arg0: i32) -> (i32, i32, i32, i32) {
    %c0_i32 = arith.constant 0 : i32
    %c0_i32_0 = arith.constant 0 : i32
    %c0_i32_1 = arith.constant 0 : i32
    %c0_i32_2 = arith.constant 0 : i32
    return %arg0, %c0_i32, %c0_i32_0, %c0_i32_1 : i32, i32, i32, i32
  }
  func.func @transform_9(%arg0: i32) -> (i32, i32, i32) {
    %c0_i32 = arith.constant 0 : i32
    %c0_i32_0 = arith.constant 0 : i32
    %c0_i32_1 = arith.constant 0 : i32
    return %arg0, %c0_i32, %c0_i32_0 : i32, i32, i32
  }
  func.func @transform_10(%arg0: i32) -> (i32, i32, i32, i32) {
    %c0_i32 = arith.constant 0 : i32
    %c0_i32_0 = arith.constant 0 : i32
    %c0_i32_1 = arith.constant 0 : i32
    %c0_i32_2 = arith.constant 0 : i32
    return %arg0, %c0_i32, %c0_i32_0, %c0_i32_1 : i32, i32, i32, i32
  }
  func.func @transform_11(%arg0: i32) -> (i32, i32, i32) {
    %c0_i32 = arith.constant 0 : i32
    %c0_i32_0 = arith.constant 0 : i32
    %c0_i32_1 = arith.constant 0 : i32
    return %arg0, %c0_i32, %c0_i32_0 : i32, i32, i32
  }
  func.func @transform_12(%arg0: i32) -> (i32, i32, i32) {
    %c0_i32 = arith.constant 0 : i32
    %c0_i32_0 = arith.constant 0 : i32
    %c0_i32_1 = arith.constant 0 : i32
    return %arg0, %c0_i32, %c0_i32_0 : i32, i32, i32
  }
  func.func @transform_13(%arg0: i32) -> (i32, i32, i32) {
    %c0_i32 = arith.constant 0 : i32
    %c0_i32_0 = arith.constant 0 : i32
    %c0_i32_1 = arith.constant 0 : i32
    return %arg0, %c0_i32, %c0_i32_0 : i32, i32, i32
  }
  func.func @transform_14(%arg0: i32) -> (i32, i32, i32) {
    %c0_i32 = arith.constant 0 : i32
    %c0_i32_0 = arith.constant 0 : i32
    %c0_i32_1 = arith.constant 0 : i32
    return %arg0, %c0_i32, %c0_i32_0 : i32, i32, i32
  }
  func.func @transform_15(%arg0: i32) -> (i32, i32, i32) {
    %c0_i32 = arith.constant 0 : i32
    %c0_i32_0 = arith.constant 0 : i32
    %c0_i32_1 = arith.constant 0 : i32
    return %arg0, %c0_i32, %c0_i32_0 : i32, i32, i32
  }
  func.func @transform_16(%arg0: i32) -> (i32, i32, i32) {
    %c0_i32 = arith.constant 0 : i32
    %c0_i32_0 = arith.constant 0 : i32
    %c0_i32_1 = arith.constant 0 : i32
    return %arg0, %c0_i32, %c0_i32_0 : i32, i32, i32
  }
  func.func @transform_17(%arg0: i32) -> (i32, i32, i32) {
    %c0_i32 = arith.constant 0 : i32
    %c0_i32_0 = arith.constant 0 : i32
    %c0_i32_1 = arith.constant 0 : i32
    return %arg0, %c0_i32, %c0_i32_0 : i32, i32, i32
  }
  func.func @transform_18(%arg0: i32) -> (i32, i32, i32) {
    %c0_i32 = arith.constant 0 : i32
    %c0_i32_0 = arith.constant 0 : i32
    %c0_i32_1 = arith.constant 0 : i32
    return %arg0, %c0_i32, %c0_i32_0 : i32, i32, i32
  }
  func.func @transform_19(%arg0: i32) -> (i32, i32, i32) {
    %c0_i32 = arith.constant 0 : i32
    %c0_i32_0 = arith.constant 0 : i32
    %c0_i32_1 = arith.constant 0 : i32
    return %arg0, %c0_i32, %c0_i32_0 : i32, i32, i32
  }
  func.func @transform_20(%arg0: i32) -> (i32, i32) {
    %c0_i32 = arith.constant 0 : i32
    %c0_i32_0 = arith.constant 0 : i32
    %c0_i32_1 = arith.constant 0 : i32
    return %c0_i32, %c0_i32_0 : i32, i32
  }
}

</mosaic_0001>

<llo_original>
// kernel: tpu_custom_call.1
$region0: #{tpu_custom_call.1}
  #allocation0 [shape = 'u32[]', space=smem, size = 0x4, offset = 0x4, fixed_abs, tag = 'smem constant byte address 0x4 - core index']
  #allocation1 [shape = 'u32[144,128]{1,0:T(1,128)}', space=vmem, size = 0x12000, scoped, tag = 'internal scratch']
  #allocation2 [shape = 'f32[16,32]{1,0:T(8,128)}', space=vmem, size = 0x2000, scoped, tag = 'scratch operand']
  %s0 = inlined_call_operand.hbm [shape: f32[2,16], index: 0, kind: input, shape index: {}]
  %s1 = inlined_call_operand.hbm [shape: f32[16,32], index: 1, kind: input, shape index: {}]
  %s2 = inlined_call_operand.hbm [shape: f32[1,32], index: 2, kind: input, shape index: {}]
  %s3 = inlined_call_operand.hbm [shape: f32[1,32], index: 3, kind: input, shape index: {}]
  %s4 = inlined_call_operand.vmem [shape: bf16[2,8,4,32], index: 4, kind: input, shape index: {}]
  %s5 = inlined_call_operand.vmem [shape: f32[2,8,4], index: 5, kind: input, shape index: {}]
  %s6 = inlined_call_operand.vmem [shape: bf16[2,8,4,32], index: 6, kind: input, shape index: {}]
  %s7 = inlined_call_operand.vmem [shape: f32[2,8,4], index: 7, kind: input, shape index: {}]
  %s8 = inlined_call_operand.vmem [shape: bf16[2,8,4,32], index: 8, kind: input, shape index: {}]
  %s9 = inlined_call_operand.vmem [shape: f32[2,8,4], index: 9, kind: input, shape index: {}]
  %s10 = inlined_call_operand.hbm [shape: bf16[2,8,4,32], index: 10, kind: input, shape index: {}]
  %s11 = inlined_call_operand.hbm [shape: f32[2,1,32], index: 11, kind: input, shape index: {}]
  %s12 = inlined_call_operand.hbm [shape: f32[2,1,32], index: 12, kind: input, shape index: {}]
  %s13 = inlined_call_operand.hbm [shape: f32[2,1,32], index: 13, kind: input, shape index: {}]
  %s14 = inlined_call_operand.hbm [shape: bf16[2,32,2048], index: 14, kind: input, shape index: {}]
  %s15 = inlined_call_operand.vmem [shape: f32[2,1,2048], index: 15, kind: input, shape index: {}]
  %s16 = inlined_call_operand.hbm [shape: bf16[2,32,2048], index: 16, kind: input, shape index: {}]
  %s17 = inlined_call_operand.vmem [shape: f32[2,1,32], index: 17, kind: input, shape index: {}]
  %s18 = inlined_call_operand.vmem [shape: f32[2,1,32], index: 18, kind: input, shape index: {}]
  %s19 = inlined_call_operand.vmem [shape: f32[2,1,32], index: 19, kind: input, shape index: {}]
  %s20 = inlined_call_operand.hbm [shape: f32[16,32], index: 20, kind: output, shape index: {}]
  %s21 = sld [smem:[#allocation0]]
  $region161: #{tpu_custom_call.1} parent=0
    _
  %s23 = ssub.s32 1, %s21
  %s24 = scalar_select 0, %s23, %s21
  $region1: #{tpu_custom_call.1} parent=0
    #allocation3 [shape = 'u8[1024]{0}', space=vmem, size = 0x400, scoped, tag = 'input window, operand 0, single buffered']
    #allocation4 [shape = 's32[2]{0}', space=sflag, size = 0x8, scoped, tag = 'scoped memory for tpu_custom_call.1']
    #allocation5 [shape = 's32[2]{0}', space=sflag, size = 0x8, scoped, tag = 'scoped memory for tpu_custom_call.1']
    #allocation6 [shape = 'u8[8192]{0}', space=vmem, size = 0x2000, scoped, tag = 'input window, operand 1, single buffered']
    #allocation7 [shape = 's32[1]{0}', space=sflag, size = 0x4, scoped, tag = 'scoped memory for tpu_custom_call.1']
    #allocation8 [shape = 'u8[512]{0}', space=vmem, size = 0x400, scoped, tag = 'input window, operand 2, single buffered']
    #allocation9 [shape = 'u8[512]{0}', space=vmem, size = 0x400, scoped, tag = 'input window, operand 3, single buffered']
    #allocation10 [shape = 's32[1]{0}', space=sflag, size = 0x4, scoped, tag = 'scoped memory for tpu_custom_call.1']
    #allocation11 [shape = 'u8[16384]{0}', space=vmem, size = 0x4000, scoped, tag = 'input window, operand 10']
    #allocation12 [shape = 'u8[1024]{0}', space=vmem, size = 0x400, scoped, tag = 'input window, operand 11']
    #allocation13 [shape = 'u8[1024]{0}', space=vmem, size = 0x400, scoped, tag = 'input window, operand 12']
    #allocation14 [shape = 'u8[1024]{0}', space=vmem, size = 0x400, scoped, tag = 'input window, operand 13']
    #allocation15 [shape = 'u8[262144]{0}', space=vmem, size = 0x40000, scoped, tag = 'input window, operand 14']
    #allocation16 [shape = 'u8[262144]{0}', space=vmem, size = 0x40000, scoped, tag = 'input window, operand 16']
    #allocation17 [shape = 'u8[8192]{0}', space=vmem, size = 0x2000, scoped, tag = 'output window, operand 0, single buffered']
    %25 = vsyncpa [#allocation4], 0
    %26 = vsyncpa [#allocation7], 0
    %27 = vsyncpa [#allocation10], 0
    %28 = vsyncpa [#allocation5], 0
    loop: start=0, step=1, limit=4
    $region2: #{tpu_custom_call.1} parent=1 // loop_pre_header
      _
    $region3: #{tpu_custom_call.1} parent=1 // loop_header
      %s30 = sphi 0, %s34
      %p31 = scmp.ge.s32.totalorder %s30, 4
      %s38 = sphi 0, %s38
      %s40 = sphi 0, %s38
      %s41 = sphi 0, %s40
      %s55 = sphi 0, %s41
      %s59 = sphi 0, %s59
      %s61 = sphi 0, %s59
      %s62 = sphi 0, %s61
      %s76 = sphi 0, %s62
      %s80 = sphi 0, %s80
      %s82 = sphi 0, %s80
      %s83 = sphi 0, %s82
      %s97 = sphi 0, %s83
      %s101 = sphi 0, %s101
      %s103 = sphi 0, %s101
      %s104 = sphi 0, %s103
      %s118 = sphi 0, %s104
      %s124 = sphi 0, %s126
      %s127 = sphi 0, %s124
      %s128 = sphi 0, %s127
      %s144 = sphi 0, %s128
      %s150 = sphi 0, %s152
      %s153 = sphi 0, %s150
      %s154 = sphi 0, %s153
      %s170 = sphi 0, %s154
      %s176 = sphi 0, %s178
      %s179 = sphi 0, %s176
      %s180 = sphi 0, %s179
      %s196 = sphi 0, %s180
      %s202 = sphi 0, %s204
      %s205 = sphi 0, %s202
      %s206 = sphi 0, %s205
      %s222 = sphi 0, %s206
      %s228 = sphi 0, %s230
      %s231 = sphi 0, %s228
      %s232 = sphi 0, %s231
      %s248 = sphi 0, %s232
      %s254 = sphi 0, %s256
      %s257 = sphi 0, %s254
      %s258 = sphi 0, %s257
      %s274 = sphi 0, %s258
      %s280 = sphi 0, %s282
      %s283 = sphi 0, %s280
      %s284 = sphi 0, %s283
      %s300 = sphi 0, %s284
      %s306 = sphi 0, %s308
      %s309 = sphi 0, %s306
      %s310 = sphi 0, %s309
      %s326 = sphi 0, %s310
      %s332 = sphi 0, %s334
      %s335 = sphi 0, %s332
      %s336 = sphi 0, %s335
      %s352 = sphi 0, %s336
      %s358 = sphi 0, %s360
      %s361 = sphi 0, %s358
      %s362 = sphi 0, %s361
      %s378 = sphi 0, %s362
      %s384 = sphi 0, %s386
      %s387 = sphi 0, %s384
      %s388 = sphi 0, %s387
      %s404 = sphi 0, %s388
      %s410 = sphi 0, %s412
      %s413 = sphi 0, %s410
      %s414 = sphi 0, %s413
      %s430 = sphi 0, %s414
      %s436 = sphi 0, %s438
      %s439 = sphi 0, %s436
      %s440 = sphi 0, %s439
      %s456 = sphi 0, %s440
      %s462 = sphi 0, %s464
      %s465 = sphi 0, %s462
      %s466 = sphi 0, %s465
      %s482 = sphi 0, %s466
      %s488 = sphi 0, %s490
      %s491 = sphi 0, %s488
      %s492 = sphi 0, %s491
      %s508 = sphi 0, %s492
      %s514 = sphi 0, %s516
      %s517 = sphi 0, %s514
      %s518 = sphi 0, %s517
      %s534 = sphi 0, %s518
      %s538 = sphi 0, %s538
      %s540 = sphi 0, %s538
      %s541 = sphi 0, %s540
      %s555 = sphi 0, %s541
    $region4: #{tpu_custom_call.1} parent=1 // loop_header_branch
      %33 = sbr.rel (%p31) target = $region8
    $region5: #{tpu_custom_call.1} parent=1 // loop_body
      %s35 = ssub.s32 %s30, 1
      %s36 = ssub.s32 %s30, 2
      %s37 = sadd.s32 %s30, 1
      %s39 = sadd.s32 %s38, 1
      %p42 = scmp.eq.s32.totalorder %s30, 1
      %p43 = scmp.ne.s32.totalorder %s38, %s40
      %p44 = scmp.eq.s32.totalorder %s30, 0
      %p45 = por %p43, %p44
      %p46 = scmp.ne.s32.totalorder %s38, %s40
      %p47 = scmp.eq.s32.totalorder %s35, 1
      %p48 = por %p46, %p47
      %p49 = scmp.ne.s32.totalorder %s40, %s41
      %p50 = scmp.eq.s32.totalorder %s35, 0
      %p51 = por %p49, %p50
      %p52 = scmp.ne.s32.totalorder %s40, %s41
      %p53 = scmp.eq.s32.totalorder %s36, 1
      %p54 = por %p52, %p53
      %p56 = scmp.ne.s32.totalorder %s41, %s55
      %p57 = scmp.eq.s32.totalorder %s36, 0
      %p58 = por %p56, %p57
      %s60 = sadd.s32 %s59, 1
      %p63 = scmp.eq.s32.totalorder %s30, 1
      %p64 = scmp.ne.s32.totalorder %s59, %s61
      %p65 = scmp.eq.s32.totalorder %s30, 0
      %p66 = por %p64, %p65
      %p67 = scmp.ne.s32.totalorder %s59, %s61
      %p68 = scmp.eq.s32.totalorder %s35, 1
      %p69 = por %p67, %p68
      %p70 = scmp.ne.s32.totalorder %s61, %s62
      %p71 = scmp.eq.s32.totalorder %s35, 0
      %p72 = por %p70, %p71
      %p73 = scmp.ne.s32.totalorder %s61, %s62
      %p74 = scmp.eq.s32.totalorder %s36, 1
      %p75 = por %p73, %p74
      %p77 = scmp.ne.s32.totalorder %s62, %s76
      %p78 = scmp.eq.s32.totalorder %s36, 0
      %p79 = por %p77, %p78
      %s81 = sadd.s32 %s80, 1
      %p84 = scmp.eq.s32.totalorder %s30, 1
      %p85 = scmp.ne.s32.totalorder %s80, %s82
      %p86 = scmp.eq.s32.totalorder %s30, 0
      %p87 = por %p85, %p86
      %p88 = scmp.ne.s32.totalorder %s80, %s82
      %p89 = scmp.eq.s32.totalorder %s35, 1
      %p90 = por %p88, %p89
      %p91 = scmp.ne.s32.totalorder %s82, %s83
      %p92 = scmp.eq.s32.totalorder %s35, 0
      %p93 = por %p91, %p92
      %p94 = scmp.ne.s32.totalorder %s82, %s83
      %p95 = scmp.eq.s32.totalorder %s36, 1
      %p96 = por %p94, %p95
      %p98 = scmp.ne.s32.totalorder %s83, %s97
      %p99 = scmp.eq.s32.totalorder %s36, 0
      %p100 = por %p98, %p99
      %s102 = sadd.s32 %s101, 1
      %p105 = scmp.eq.s32.totalorder %s30, 1
      %p106 = scmp.ne.s32.totalorder %s101, %s103
      %p107 = scmp.eq.s32.totalorder %s30, 0
      %p108 = por %p106, %p107
      %p109 = scmp.ne.s32.totalorder %s101, %s103
      %p110 = scmp.eq.s32.totalorder %s35, 1
      %p111 = por %p109, %p110
      %p112 = scmp.ne.s32.totalorder %s103, %s104
      %p113 = scmp.eq.s32.totalorder %s35, 0
      %p114 = por %p112, %p113
      %p115 = scmp.ne.s32.totalorder %s103, %s104
      %p116 = scmp.eq.s32.totalorder %s36, 1
      %p117 = por %p115, %p116
      %p119 = scmp.ne.s32.totalorder %s104, %s118
      %p120 = scmp.eq.s32.totalorder %s36, 0
      %p121 = por %p119, %p120
      %s122 = ssub.s32 %s30, %s37
      %p123 = scmp.eq.s32.totalorder %s122, 0
      %s125 = sadd.s32 %s124, 1
      %s126 = scalar_select %p123, %s124, %s125
      %p129 = pneg %p123
      %p130 = scmp.eq.s32.totalorder %s30, 1
      %p131 = por %p129, %p130
      %p132 = scmp.ne.s32.totalorder %s124, %s127
      %p133 = scmp.eq.s32.totalorder %s30, 0
      %p134 = por %p132, %p133
      %p135 = scmp.ne.s32.totalorder %s124, %s127
      %p136 = scmp.eq.s32.totalorder %s35, 1
      %p137 = por %p135, %p136
      %p138 = scmp.ne.s32.totalorder %s127, %s128
      %p139 = scmp.eq.s32.totalorder %s35, 0
      %p140 = por %p138, %p139
      %p141 = scmp.ne.s32.totalorder %s127, %s128
      %p142 = scmp.eq.s32.totalorder %s36, 1
      %p143 = por %p141, %p142
      %p145 = scmp.ne.s32.totalorder %s128, %s144
      %p146 = scmp.eq.s32.totalorder %s36, 0
      %p147 = por %p145, %p146
      %s148 = ssub.s32 %s30, %s37
      %p149 = scmp.eq.s32.totalorder %s148, 0
      %s151 = sadd.s32 %s150, 1
      %s152 = scalar_select %p149, %s150, %s151
      %p155 = pneg %p149
      %p156 = scmp.eq.s32.totalorder %s30, 1
      %p157 = por %p155, %p156
      %p158 = scmp.ne.s32.totalorder %s150, %s153
      %p159 = scmp.eq.s32.totalorder %s30, 0
      %p160 = por %p158, %p159
      %p161 = scmp.ne.s32.totalorder %s150, %s153
      %p162 = scmp.eq.s32.totalorder %s35, 1
      %p163 = por %p161, %p162
      %p164 = scmp.ne.s32.totalorder %s153, %s154
      %p165 = scmp.eq.s32.totalorder %s35, 0
      %p166 = por %p164, %p165
      %p167 = scmp.ne.s32.totalorder %s153, %s154
      %p168 = scmp.eq.s32.totalorder %s36, 1
      %p169 = por %p167, %p168
      %p171 = scmp.ne.s32.totalorder %s154, %s170
      %p172 = scmp.eq.s32.totalorder %s36, 0
      %p173 = por %p171, %p172
      %s174 = ssub.s32 %s30, %s37
      %p175 = scmp.eq.s32.totalorder %s174, 0
      %s177 = sadd.s32 %s176, 1
      %s178 = scalar_select %p175, %s176, %s177
      %p181 = pneg %p175
      %p182 = scmp.eq.s32.totalorder %s30, 1
      %p183 = por %p181, %p182
      %p184 = scmp.ne.s32.totalorder %s176, %s179
      %p185 = scmp.eq.s32.totalorder %s30, 0
      %p186 = por %p184, %p185
      %p187 = scmp.ne.s32.totalorder %s176, %s179
      %p188 = scmp.eq.s32.totalorder %s35, 1
      %p189 = por %p187, %p188
      %p190 = scmp.ne.s32.totalorder %s179, %s180
      %p191 = scmp.eq.s32.totalorder %s35, 0
      %p192 = por %p190, %p191
      %p193 = scmp.ne.s32.totalorder %s179, %s180
      %p194 = scmp.eq.s32.totalorder %s36, 1
      %p195 = por %p193, %p194
      %p197 = scmp.ne.s32.totalorder %s180, %s196
      %p198 = scmp.eq.s32.totalorder %s36, 0
      %p199 = por %p197, %p198
      %s200 = ssub.s32 %s30, %s37
      %p201 = scmp.eq.s32.totalorder %s200, 0
      %s203 = sadd.s32 %s202, 1
      %s204 = scalar_select %p201, %s202, %s203
      %p207 = pneg %p201
      %p208 = scmp.eq.s32.totalorder %s30, 1
      %p209 = por %p207, %p208
      %p210 = scmp.ne.s32.totalorder %s202, %s205
      %p211 = scmp.eq.s32.totalorder %s30, 0
      %p212 = por %p210, %p211
      %p213 = scmp.ne.s32.totalorder %s202, %s205
      %p214 = scmp.eq.s32.totalorder %s35, 1
      %p215 = por %p213, %p214
      %p216 = scmp.ne.s32.totalorder %s205, %s206
      %p217 = scmp.eq.s32.totalorder %s35, 0
      %p218 = por %p216, %p217
      %p219 = scmp.ne.s32.totalorder %s205, %s206
      %p220 = scmp.eq.s32.totalorder %s36, 1
      %p221 = por %p219, %p220
      %p223 = scmp.ne.s32.totalorder %s206, %s222
      %p224 = scmp.eq.s32.totalorder %s36, 0
      %p225 = por %p223, %p224
      %s226 = ssub.s32 %s30, %s37
      %p227 = scmp.eq.s32.totalorder %s226, 0
      %s229 = sadd.s32 %s228, 1
      %s230 = scalar_select %p227, %s228, %s229
      %p233 = pneg %p227
      %p234 = scmp.eq.s32.totalorder %s30, 1
      %p235 = por %p233, %p234
      %p236 = scmp.ne.s32.totalorder %s228, %s231
      %p237 = scmp.eq.s32.totalorder %s30, 0
      %p238 = por %p236, %p237
      %p239 = scmp.ne.s32.totalorder %s228, %s231
      %p240 = scmp.eq.s32.totalorder %s35, 1
      %p241 = por %p239, %p240
      %p242 = scmp.ne.s32.totalorder %s231, %s232
      %p243 = scmp.eq.s32.totalorder %s35, 0
      %p244 = por %p242, %p243
      %p245 = scmp.ne.s32.totalorder %s231, %s232
      %p246 = scmp.eq.s32.totalorder %s36, 1
      %p247 = por %p245, %p246
      %p249 = scmp.ne.s32.totalorder %s232, %s248
      %p250 = scmp.eq.s32.totalorder %s36, 0
      %p251 = por %p249, %p250
      %s252 = ssub.s32 %s30, %s37
      %p253 = scmp.eq.s32.totalorder %s252, 0
      %s255 = sadd.s32 %s254, 1
      %s256 = scalar_select %p253, %s254, %s255
      %p259 = pneg %p253
      %p260 = scmp.eq.s32.totalorder %s30, 1
      %p261 = por %p259, %p260
      %p262 = scmp.ne.s32.totalorder %s254, %s257
      %p263 = scmp.eq.s32.totalorder %s30, 0
      %p264 = por %p262, %p263
      %p265 = scmp.ne.s32.totalorder %s254, %s257
      %p266 = scmp.eq.s32.totalorder %s35, 1
      %p267 = por %p265, %p266
      %p268 = scmp.ne.s32.totalorder %s257, %s258
      %p269 = scmp.eq.s32.totalorder %s35, 0
      %p270 = por %p268, %p269
      %p271 = scmp.ne.s32.totalorder %s257, %s258
      %p272 = scmp.eq.s32.totalorder %s36, 1
      %p273 = por %p271, %p272
      %p275 = scmp.ne.s32.totalorder %s258, %s274
      %p276 = scmp.eq.s32.totalorder %s36, 0
      %p277 = por %p275, %p276
      %s278 = ssub.s32 %s30, %s37
      %p279 = scmp.eq.s32.totalorder %s278, 0
      %s281 = sadd.s32 %s280, 1
      %s282 = scalar_select %p279, %s280, %s281
      %p285 = pneg %p279
      %p286 = scmp.eq.s32.totalorder %s30, 1
      %p287 = por %p285, %p286
      %p288 = scmp.ne.s32.totalorder %s280, %s283
      %p289 = scmp.eq.s32.totalorder %s30, 0
      %p290 = por %p288, %p289
      %p291 = scmp.ne.s32.totalorder %s280, %s283
      %p292 = scmp.eq.s32.totalorder %s35, 1
      %p293 = por %p291, %p292
      %p294 = scmp.ne.s32.totalorder %s283, %s284
      %p295 = scmp.eq.s32.totalorder %s35, 0
      %p296 = por %p294, %p295
      %p297 = scmp.ne.s32.totalorder %s283, %s284
      %p298 = scmp.eq.s32.totalorder %s36, 1
      %p299 = por %p297, %p298
      %p301 = scmp.ne.s32.totalorder %s284, %s300
      %p302 = scmp.eq.s32.totalorder %s36, 0
      %p303 = por %p301, %p302
      %s304 = ssub.s32 %s30, %s37
      %p305 = scmp.eq.s32.totalorder %s304, 0
      %s307 = sadd.s32 %s306, 1
      %s308 = scalar_select %p305, %s306, %s307
      %p311 = pneg %p305
      %p312 = scmp.eq.s32.totalorder %s30, 1
      %p313 = por %p311, %p312
      %p314 = scmp.ne.s32.totalorder %s306, %s309
      %p315 = scmp.eq.s32.totalorder %s30, 0
      %p316 = por %p314, %p315
      %p317 = scmp.ne.s32.totalorder %s306, %s309
      %p318 = scmp.eq.s32.totalorder %s35, 1
      %p319 = por %p317, %p318
      %p320 = scmp.ne.s32.totalorder %s309, %s310
      %p321 = scmp.eq.s32.totalorder %s35, 0
      %p322 = por %p320, %p321
      %p323 = scmp.ne.s32.totalorder %s309, %s310
      %p324 = scmp.eq.s32.totalorder %s36, 1
      %p325 = por %p323, %p324
      %p327 = scmp.ne.s32.totalorder %s310, %s326
      %p328 = scmp.eq.s32.totalorder %s36, 0
      %p329 = por %p327, %p328
      %s330 = ssub.s32 %s30, %s37
      %p331 = scmp.eq.s32.totalorder %s330, 0
      %s333 = sadd.s32 %s332, 1
      %s334 = scalar_select %p331, %s332, %s333
      %p337 = pneg %p331
      %p338 = scmp.eq.s32.totalorder %s30, 1
      %p339 = por %p337, %p338
      %p340 = scmp.ne.s32.totalorder %s332, %s335
      %p341 = scmp.eq.s32.totalorder %s30, 0
      %p342 = por %p340, %p341
      %p343 = scmp.ne.s32.totalorder %s332, %s335
      %p344 = scmp.eq.s32.totalorder %s35, 1
      %p345 = por %p343, %p344
      %p346 = scmp.ne.s32.totalorder %s335, %s336
      %p347 = scmp.eq.s32.totalorder %s35, 0
      %p348 = por %p346, %p347
      %p349 = scmp.ne.s32.totalorder %s335, %s336
      %p350 = scmp.eq.s32.totalorder %s36, 1
      %p351 = por %p349, %p350
      %p353 = scmp.ne.s32.totalorder %s336, %s352
      %p354 = scmp.eq.s32.totalorder %s36, 0
      %p355 = por %p353, %p354
      %s356 = ssub.s32 %s30, %s37
      %p357 = scmp.eq.s32.totalorder %s356, 0
      %s359 = sadd.s32 %s358, 1
      %s360 = scalar_select %p357, %s358, %s359
      %p363 = pneg %p357
      %p364 = scmp.eq.s32.totalorder %s30, 1
      %p365 = por %p363, %p364
      %p366 = scmp.ne.s32.totalorder %s358, %s361
      %p367 = scmp.eq.s32.totalorder %s30, 0
      %p368 = por %p366, %p367
      %p369 = scmp.ne.s32.totalorder %s358, %s361
      %p370 = scmp.eq.s32.totalorder %s35, 1
      %p371 = por %p369, %p370
      %p372 = scmp.ne.s32.totalorder %s361, %s362
      %p373 = scmp.eq.s32.totalorder %s35, 0
      %p374 = por %p372, %p373
      %p375 = scmp.ne.s32.totalorder %s361, %s362
      %p376 = scmp.eq.s32.totalorder %s36, 1
      %p377 = por %p375, %p376
      %p379 = scmp.ne.s32.totalorder %s362, %s378
      %p380 = scmp.eq.s32.totalorder %s36, 0
      %p381 = por %p379, %p380
      %s382 = ssub.s32 %s30, %s37
      %p383 = scmp.eq.s32.totalorder %s382, 0
      %s385 = sadd.s32 %s384, 1
      %s386 = scalar_select %p383, %s384, %s385
      %p389 = pneg %p383
      %p390 = scmp.eq.s32.totalorder %s30, 1
      %p391 = por %p389, %p390
      %p392 = scmp.ne.s32.totalorder %s384, %s387
      %p393 = scmp.eq.s32.totalorder %s30, 0
      %p394 = por %p392, %p393
      %p395 = scmp.ne.s32.totalorder %s384, %s387
      %p396 = scmp.eq.s32.totalorder %s35, 1
      %p397 = por %p395, %p396
      %p398 = scmp.ne.s32.totalorder %s387, %s388
      %p399 = scmp.eq.s32.totalorder %s35, 0
      %p400 = por %p398, %p399
      %p401 = scmp.ne.s32.totalorder %s387, %s388
      %p402 = scmp.eq.s32.totalorder %s36, 1
      %p403 = por %p401, %p402
      %p405 = scmp.ne.s32.totalorder %s388, %s404
      %p406 = scmp.eq.s32.totalorder %s36, 0
      %p407 = por %p405, %p406
      %s408 = ssub.s32 %s30, %s37
      %p409 = scmp.eq.s32.totalorder %s408, 0
      %s411 = sadd.s32 %s410, 1
      %s412 = scalar_select %p409, %s410, %s411
      %p415 = pneg %p409
      %p416 = scmp.eq.s32.totalorder %s30, 1
      %p417 = por %p415, %p416
      %p418 = scmp.ne.s32.totalorder %s410, %s413
      %p419 = scmp.eq.s32.totalorder %s30, 0
      %p420 = por %p418, %p419
      %p421 = scmp.ne.s32.totalorder %s410, %s413
      %p422 = scmp.eq.s32.totalorder %s35, 1
      %p423 = por %p421, %p422
      %p424 = scmp.ne.s32.totalorder %s413, %s414
      %p425 = scmp.eq.s32.totalorder %s35, 0
      %p426 = por %p424, %p425
      %p427 = scmp.ne.s32.totalorder %s413, %s414
      %p428 = scmp.eq.s32.totalorder %s36, 1
      %p429 = por %p427, %p428
      %p431 = scmp.ne.s32.totalorder %s414, %s430
      %p432 = scmp.eq.s32.totalorder %s36, 0
      %p433 = por %p431, %p432
      %s434 = ssub.s32 %s30, %s37
      %p435 = scmp.eq.s32.totalorder %s434, 0
      %s437 = sadd.s32 %s436, 1
      %s438 = scalar_select %p435, %s436, %s437
      %p441 = pneg %p435
      %p442 = scmp.eq.s32.totalorder %s30, 1
      %p443 = por %p441, %p442
      %p444 = scmp.ne.s32.totalorder %s436, %s439
      %p445 = scmp.eq.s32.totalorder %s30, 0
      %p446 = por %p444, %p445
      %p447 = scmp.ne.s32.totalorder %s436, %s439
      %p448 = scmp.eq.s32.totalorder %s35, 1
      %p449 = por %p447, %p448
      %p450 = scmp.ne.s32.totalorder %s439, %s440
      %p451 = scmp.eq.s32.totalorder %s35, 0
      %p452 = por %p450, %p451
      %p453 = scmp.ne.s32.totalorder %s439, %s440
      %p454 = scmp.eq.s32.totalorder %s36, 1
      %p455 = por %p453, %p454
      %p457 = scmp.ne.s32.totalorder %s440, %s456
      %p458 = scmp.eq.s32.totalorder %s36, 0
      %p459 = por %p457, %p458
      %s460 = ssub.s32 %s30, %s37
      %p461 = scmp.eq.s32.totalorder %s460, 0
      %s463 = sadd.s32 %s462, 1
      %s464 = scalar_select %p461, %s462, %s463
      %p467 = pneg %p461
      %p468 = scmp.eq.s32.totalorder %s30, 1
      %p469 = por %p467, %p468
      %p470 = scmp.ne.s32.totalorder %s462, %s465
      %p471 = scmp.eq.s32.totalorder %s30, 0
      %p472 = por %p470, %p471
      %p473 = scmp.ne.s32.totalorder %s462, %s465
      %p474 = scmp.eq.s32.totalorder %s35, 1
      %p475 = por %p473, %p474
      %p476 = scmp.ne.s32.totalorder %s465, %s466
      %p477 = scmp.eq.s32.totalorder %s35, 0
      %p478 = por %p476, %p477
      %p479 = scmp.ne.s32.totalorder %s465, %s466
      %p480 = scmp.eq.s32.totalorder %s36, 1
      %p481 = por %p479, %p480
      %p483 = scmp.ne.s32.totalorder %s466, %s482
      %p484 = scmp.eq.s32.totalorder %s36, 0
      %p485 = por %p483, %p484
      %s486 = ssub.s32 %s30, %s37
      %p487 = scmp.eq.s32.totalorder %s486, 0
      %s489 = sadd.s32 %s488, 1
      %s490 = scalar_select %p487, %s488, %s489
      %p493 = pneg %p487
      %p494 = scmp.eq.s32.totalorder %s30, 1
      %p495 = por %p493, %p494
      %p496 = scmp.ne.s32.totalorder %s488, %s491
      %p497 = scmp.eq.s32.totalorder %s30, 0
      %p498 = por %p496, %p497
      %p499 = scmp.ne.s32.totalorder %s488, %s491
      %p500 = scmp.eq.s32.totalorder %s35, 1
      %p501 = por %p499, %p500
      %p502 = scmp.ne.s32.totalorder %s491, %s492
      %p503 = scmp.eq.s32.totalorder %s35, 0
      %p504 = por %p502, %p503
      %p505 = scmp.ne.s32.totalorder %s491, %s492
      %p506 = scmp.eq.s32.totalorder %s36, 1
      %p507 = por %p505, %p506
      %p509 = scmp.ne.s32.totalorder %s492, %s508
      %p510 = scmp.eq.s32.totalorder %s36, 0
      %p511 = por %p509, %p510
      %s512 = ssub.s32 %s30, %s37
      %p513 = scmp.eq.s32.totalorder %s512, 0
      %s515 = sadd.s32 %s514, 1
      %s516 = scalar_select %p513, %s514, %s515
      %p519 = pneg %p513
      %p520 = scmp.eq.s32.totalorder %s30, 1
      %p521 = por %p519, %p520
      %p522 = scmp.ne.s32.totalorder %s514, %s517
      %p523 = scmp.eq.s32.totalorder %s30, 0
      %p524 = por %p522, %p523
      %p525 = scmp.ne.s32.totalorder %s514, %s517
      %p526 = scmp.eq.s32.totalorder %s35, 1
      %p527 = por %p525, %p526
      %p528 = scmp.ne.s32.totalorder %s517, %s518
      %p529 = scmp.eq.s32.totalorder %s35, 0
      %p530 = por %p528, %p529
      %p531 = scmp.ne.s32.totalorder %s517, %s518
      %p532 = scmp.eq.s32.totalorder %s36, 1
      %p533 = por %p531, %p532
      %p535 = scmp.ne.s32.totalorder %s518, %s534
      %p536 = scmp.eq.s32.totalorder %s36, 0
      %p537 = por %p535, %p536
      %s539 = sadd.s32 %s538, 1
      %p542 = scmp.eq.s32.totalorder %s30, 1
      %p543 = scmp.ne.s32.totalorder %s538, %s540
      %p544 = scmp.eq.s32.totalorder %s30, 0
      %p545 = por %p543, %p544
      %p546 = scmp.ne.s32.totalorder %s538, %s540
      %p547 = scmp.eq.s32.totalorder %s35, 1
      %p548 = por %p546, %p547
      %p549 = scmp.ne.s32.totalorder %s540, %s541
      %p550 = scmp.eq.s32.totalorder %s35, 0
      %p551 = por %p549, %p550
      %p552 = scmp.ne.s32.totalorder %s540, %s541
      %p553 = scmp.eq.s32.totalorder %s36, 1
      %p554 = por %p552, %p553
      %p556 = scmp.ne.s32.totalorder %s541, %s555
      %p557 = scmp.eq.s32.totalorder %s36, 0
      %p558 = por %p556, %p557
      %p559 = scmp.le.s32.totalorder 1, %s30
      %p560 = scmp.lt.s32.totalorder %s30, 3
      %p561 = pnand %p559, %p560
      %p562 = pneg %p561
      // Predicated region
      $region9: #{tpu_custom_call.1} parent=5 // pred_check
        _
      $region10: #{tpu_custom_call.1} parent=5 // pred_check_branch
        %564 = sbr.rel (%p561) target = $region12
      $region11: #{tpu_custom_call.1} parent=5 // pred_region
        %s565 = ssub.s32 %s30, 1
        // Predicated region
        $region13: #{tpu_custom_call.1} parent=11 // pred_check
          %p566 = pneg %p51
        $region14: #{tpu_custom_call.1} parent=11 // pred_check_branch
          %568 = sbr.rel (%p566) target = $region16
        $region15: #{tpu_custom_call.1} parent=11 // pred_region
          %s570 = ssub.s32 32, 32
          %571 = vsyncadd [#allocation4], %s570
          %s573 = sshll.u32 [#allocation3], 4
          %s574 = int_to_ptr.vmem [resolvable:$true] %s573
          %576 = dma.hbm_to_vmem [thread:$0]  %s0, 32, %s574, [#allocation4]
        $region16: #{tpu_custom_call.1} parent=11 // pred_fallthru
          _
        // Predicated region
        $region17: #{tpu_custom_call.1} parent=11 // pred_check
          %p577 = pneg %p72
        $region18: #{tpu_custom_call.1} parent=11 // pred_check_branch
          %579 = sbr.rel (%p577) target = $region20
        $region19: #{tpu_custom_call.1} parent=11 // pred_region
          %s581 = ssub.s32 256, 256
          %582 = vsyncadd [#allocation7], %s581
          %s583 = sshll.u32 [#allocation6], 4
          %s584 = int_to_ptr.vmem [resolvable:$true] %s583
          %589 = dma.hbm_to_vmem [thread:$0]  %s1, 256, %s584, [#allocation7], 128, 128, 8
        $region20: #{tpu_custom_call.1} parent=11 // pred_fallthru
          _
        // Predicated region
        $region21: #{tpu_custom_call.1} parent=11 // pred_check
          %p590 = pneg %p93
        $region22: #{tpu_custom_call.1} parent=11 // pred_check_branch
          %592 = sbr.rel (%p590) target = $region24
        $region23: #{tpu_custom_call.1} parent=11 // pred_region
          %s594 = ssub.s32 16, 16
          %595 = vsyncadd [#allocation7], %s594
          %s597 = sshll.u32 [#allocation8], 4
          %s598 = int_to_ptr.vmem [resolvable:$true] %s597
          %600 = dma.hbm_to_vmem [thread:$0]  %s2, 16, %s598, [#allocation7]
        $region24: #{tpu_custom_call.1} parent=11 // pred_fallthru
          _
        // Predicated region
        $region25: #{tpu_custom_call.1} parent=11 // pred_check
          %p601 = pneg %p114
        $region26: #{tpu_custom_call.1} parent=11 // pred_check_branch
          %603 = sbr.rel (%p601) target = $region28
        $region27: #{tpu_custom_call.1} parent=11 // pred_region
          %s605 = ssub.s32 16, 16
          %606 = vsyncadd [#allocation10], %s605
          %s608 = sshll.u32 [#allocation9], 4
          %s609 = int_to_ptr.vmem [resolvable:$true] %s608
          %611 = dma.hbm_to_vmem [thread:$0]  %s3, 16, %s609, [#allocation10]
        $region28: #{tpu_custom_call.1} parent=11 // pred_fallthru
          _
      $region12: #{tpu_custom_call.1} parent=5 // pred_fallthru
        _
      %p612 = scmp.lt.s32.totalorder %s30, 2
      // Predicated region
      $region29: #{tpu_custom_call.1} parent=5 // pred_check
        %p613 = pneg %p612
      $region30: #{tpu_custom_call.1} parent=5 // pred_check_branch
        %615 = sbr.rel (%p613) target = $region32
      $region31: #{tpu_custom_call.1} parent=5 // pred_region
        // Predicated region
        $region33: #{tpu_custom_call.1} parent=31 // pred_check
          %p616 = pneg %p134
        $region34: #{tpu_custom_call.1} parent=31 // pred_check_branch
          %618 = sbr.rel (%p616) target = $region36
        $region35: #{tpu_custom_call.1} parent=31 // pred_region
          %p619 = scmp.lt.s32.totalorder %s30, 1
          %s620 = scalar_select %p619, %s30, 1
          %s621 = smul.addr %s620, 8
          %s622 = smul.addr %s621, 2
          %s623 = scalar_lea.vmem %s4, %s622
        $region36: #{tpu_custom_call.1} parent=31 // pred_fallthru
          _
        // Predicated region
        $region37: #{tpu_custom_call.1} parent=31 // pred_check
          %p624 = pneg %p160
        $region38: #{tpu_custom_call.1} parent=31 // pred_check_branch
          %626 = sbr.rel (%p624) target = $region40
        $region39: #{tpu_custom_call.1} parent=31 // pred_region
          %p627 = scmp.lt.s32.totalorder %s30, 1
          %s628 = scalar_select %p627, %s30, 1
          %s629 = smul.addr %s628, 8
          %s630 = scalar_lea.vmem %s5, %s629
        $region40: #{tpu_custom_call.1} parent=31 // pred_fallthru
          _
        // Predicated region
        $region41: #{tpu_custom_call.1} parent=31 // pred_check
          %p631 = pneg %p186
        $region42: #{tpu_custom_call.1} parent=31 // pred_check_branch
          %633 = sbr.rel (%p631) target = $region44
        $region43: #{tpu_custom_call.1} parent=31 // pred_region
          %p634 = scmp.lt.s32.totalorder %s30, 1
          %s635 = scalar_select %p634, %s30, 1
          %s636 = smul.addr %s635, 8
          %s637 = smul.addr %s636, 2
          %s638 = scalar_lea.vmem %s6, %s637
        $region44: #{tpu_custom_call.1} parent=31 // pred_fallthru
          _
        // Predicated region
        $region45: #{tpu_custom_call.1} parent=31 // pred_check
          %p639 = pneg %p212
        $region46: #{tpu_custom_call.1} parent=31 // pred_check_branch
          %641 = sbr.rel (%p639) target = $region48
        $region47: #{tpu_custom_call.1} parent=31 // pred_region
          %p642 = scmp.lt.s32.totalorder %s30, 1
          %s643 = scalar_select %p642, %s30, 1
          %s644 = smul.addr %s643, 8
          %s645 = scalar_lea.vmem %s7, %s644
        $region48: #{tpu_custom_call.1} parent=31 // pred_fallthru
          _
        // Predicated region
        $region49: #{tpu_custom_call.1} parent=31 // pred_check
          %p646 = pneg %p238
        $region50: #{tpu_custom_call.1} parent=31 // pred_check_branch
          %648 = sbr.rel (%p646) target = $region52
        $region51: #{tpu_custom_call.1} parent=31 // pred_region
          %p649 = scmp.lt.s32.totalorder %s30, 1
          %s650 = scalar_select %p649, %s30, 1
          %s651 = smul.addr %s650, 8
          %s652 = smul.addr %s651, 2
          %s653 = scalar_lea.vmem %s8, %s652
        $region52: #{tpu_custom_call.1} parent=31 // pred_fallthru
          _
        // Predicated region
        $region53: #{tpu_custom_call.1} parent=31 // pred_check
          %p654 = pneg %p264
        $region54: #{tpu_custom_call.1} parent=31 // pred_check_branch
          %656 = sbr.rel (%p654) target = $region56
        $region55: #{tpu_custom_call.1} parent=31 // pred_region
          %p657 = scmp.lt.s32.totalorder %s30, 1
          %s658 = scalar_select %p657, %s30, 1
          %s659 = smul.addr %s658, 8
          %s660 = scalar_lea.vmem %s9, %s659
        $region56: #{tpu_custom_call.1} parent=31 // pred_fallthru
          _
        // Predicated region
        $region57: #{tpu_custom_call.1} parent=31 // pred_check
          %p661 = pneg %p290
        $region58: #{tpu_custom_call.1} parent=31 // pred_check_branch
          %663 = sbr.rel (%p661) target = $region60
        $region59: #{tpu_custom_call.1} parent=31 // pred_region
          %s664 = sand.u32 %s30, 1
          %s665 = scalar_lea.sflag [#allocation4], %s664
          %s666 = sand.u32 %s280, 1
          %s667 = smul.addr %s666, 16
          %s668 = scalar_lea.vmem [#allocation11], %s667
          %s670 = ssub.s32 256, 256
          %671 = vsyncadd %s665, %s670
          %s672 = smul.addr %s30, 8
          %s673 = smul.addr %s672, 32
          %s674 = scalar_lea.hbm %s10, %s673
          %s675 = sshll.u32 %s668, 4
          %s676 = int_to_ptr.vmem [resolvable:$true] %s675
          %681 = dma.hbm_to_vmem [thread:$0]  %s674, 256, %s676, %s665, 32, 32, 2
        $region60: #{tpu_custom_call.1} parent=31 // pred_fallthru
          _
        // Predicated region
        $region61: #{tpu_custom_call.1} parent=31 // pred_check
          %p682 = pneg %p316
        $region62: #{tpu_custom_call.1} parent=31 // pred_check_branch
          %684 = sbr.rel (%p682) target = $region64
        $region63: #{tpu_custom_call.1} parent=31 // pred_region
          %s685 = sand.u32 %s30, 1
          %s686 = scalar_lea.sflag [#allocation4], %s685
          %s687 = sand.u32 %s306, 1
          %s688 = scalar_lea.vmem [#allocation12], %s687
          %s690 = ssub.s32 16, 16
          %691 = vsyncadd %s686, %s690
          %s692 = smul.addr %s30, 16
          %s693 = scalar_lea.hbm %s11, %s692
          %s695 = sshll.u32 %s688, 4
          %s696 = int_to_ptr.vmem [resolvable:$true] %s695
          %698 = dma.hbm_to_vmem [thread:$0]  %s693, 16, %s696, %s686
        $region64: #{tpu_custom_call.1} parent=31 // pred_fallthru
          _
        // Predicated region
        $region65: #{tpu_custom_call.1} parent=31 // pred_check
          %p699 = pneg %p342
        $region66: #{tpu_custom_call.1} parent=31 // pred_check_branch
          %701 = sbr.rel (%p699) target = $region68
        $region67: #{tpu_custom_call.1} parent=31 // pred_region
          %s702 = sand.u32 %s30, 1
          %s703 = scalar_lea.sflag [#allocation4], %s702
          %s704 = sand.u32 %s332, 1
          %s705 = scalar_lea.vmem [#allocation13], %s704
          %s707 = ssub.s32 16, 16
          %708 = vsyncadd %s703, %s707
          %s709 = smul.addr %s30, 16
          %s710 = scalar_lea.hbm %s12, %s709
          %s712 = sshll.u32 %s705, 4
          %s713 = int_to_ptr.vmem [resolvable:$true] %s712
          %715 = dma.hbm_to_vmem [thread:$0]  %s710, 16, %s713, %s703
        $region68: #{tpu_custom_call.1} parent=31 // pred_fallthru
          _
        // Predicated region
        $region69: #{tpu_custom_call.1} parent=31 // pred_check
          %p716 = pneg %p368
        $region70: #{tpu_custom_call.1} parent=31 // pred_check_branch
          %718 = sbr.rel (%p716) target = $region72
        $region71: #{tpu_custom_call.1} parent=31 // pred_region
          %s719 = sand.u32 %s30, 1
          %s720 = scalar_lea.sflag [#allocation4], %s719
          %s721 = sand.u32 %s358, 1
          %s722 = scalar_lea.vmem [#allocation14], %s721
          %s724 = ssub.s32 16, 16
          %725 = vsyncadd %s720, %s724
          %s726 = smul.addr %s30, 16
          %s727 = scalar_lea.hbm %s13, %s726
          %s729 = sshll.u32 %s722, 4
          %s730 = int_to_ptr.vmem [resolvable:$true] %s729
          %732 = dma.hbm_to_vmem [thread:$0]  %s727, 16, %s730, %s720
        $region72: #{tpu_custom_call.1} parent=31 // pred_fallthru
          _
        // Predicated region
        $region73: #{tpu_custom_call.1} parent=31 // pred_check
          %p733 = pneg %p394
        $region74: #{tpu_custom_call.1} parent=31 // pred_check_branch
          %735 = sbr.rel (%p733) target = $region76
        $region75: #{tpu_custom_call.1} parent=31 // pred_region
          %s736 = sand.u32 %s30, 1
          %s737 = scalar_lea.sflag [#allocation4], %s736
          %s738 = sand.u32 %s384, 1
          %s739 = smul.addr %s738, 256
          %s740 = scalar_lea.vmem [#allocation15], %s739
          %s742 = ssub.s32 4096, 4096
          %743 = vsyncadd %s737, %s742
          %s744 = smul.addr %s30, 64
          %s745 = smul.addr %s744, 64
          %s746 = scalar_lea.hbm %s14, %s745
          %s747 = sshll.u32 %s740, 4
          %s748 = int_to_ptr.vmem [resolvable:$true] %s747
          %753 = dma.hbm_to_vmem [thread:$0]  %s746, 4096, %s748, %s737, 1024, 1024, 64
        $region76: #{tpu_custom_call.1} parent=31 // pred_fallthru
          _
        // Predicated region
        $region77: #{tpu_custom_call.1} parent=31 // pred_check
          %p754 = pneg %p420
        $region78: #{tpu_custom_call.1} parent=31 // pred_check_branch
          %756 = sbr.rel (%p754) target = $region80
        $region79: #{tpu_custom_call.1} parent=31 // pred_region
          %p757 = scmp.lt.s32.totalorder %s30, 1
          %s758 = scalar_select %p757, %s30, 1
          %s759 = smul.addr %s758, 16
          %s760 = scalar_lea.vmem %s15, %s759
        $region80: #{tpu_custom_call.1} parent=31 // pred_fallthru
          _
        // Predicated region
        $region81: #{tpu_custom_call.1} parent=31 // pred_check
          %p761 = pneg %p446
        $region82: #{tpu_custom_call.1} parent=31 // pred_check_branch
          %763 = sbr.rel (%p761) target = $region84
        $region83: #{tpu_custom_call.1} parent=31 // pred_region
          %s764 = sand.u32 %s30, 1
          %s765 = scalar_lea.sflag [#allocation4], %s764
          %s766 = sand.u32 %s436, 1
          %s767 = smul.addr %s766, 256
          %s768 = scalar_lea.vmem [#allocation16], %s767
          %s770 = ssub.s32 4096, 4096
          %771 = vsyncadd %s765, %s770
          %s772 = smul.addr %s30, 64
          %s773 = smul.addr %s772, 64
          %s774 = scalar_lea.hbm %s16, %s773
          %s775 = sshll.u32 %s768, 4
          %s776 = int_to_ptr.vmem [resolvable:$true] %s775
          %781 = dma.hbm_to_vmem [thread:$0]  %s774, 4096, %s776, %s765, 1024, 1024, 64
        $region84: #{tpu_custom_call.1} parent=31 // pred_fallthru
          _
        // Predicated region
        $region85: #{tpu_custom_call.1} parent=31 // pred_check
          %p782 = pneg %p472
        $region86: #{tpu_custom_call.1} parent=31 // pred_check_branch
          %784 = sbr.rel (%p782) target = $region88
        $region87: #{tpu_custom_call.1} parent=31 // pred_region
          %p785 = scmp.lt.s32.totalorder %s30, 1
          %s786 = scalar_select %p785, %s30, 1
          %s787 = scalar_lea.vmem %s17, %s786
        $region88: #{tpu_custom_call.1} parent=31 // pred_fallthru
          _
        // Predicated region
        $region89: #{tpu_custom_call.1} parent=31 // pred_check
          %p788 = pneg %p498
        $region90: #{tpu_custom_call.1} parent=31 // pred_check_branch
          %790 = sbr.rel (%p788) target = $region92
        $region91: #{tpu_custom_call.1} parent=31 // pred_region
          %p791 = scmp.lt.s32.totalorder %s30, 1
          %s792 = scalar_select %p791, %s30, 1
          %s793 = scalar_lea.vmem %s18, %s792
        $region92: #{tpu_custom_call.1} parent=31 // pred_fallthru
          _
        // Predicated region
        $region93: #{tpu_custom_call.1} parent=31 // pred_check
          %p794 = pneg %p524
        $region94: #{tpu_custom_call.1} parent=31 // pred_check_branch
          %796 = sbr.rel (%p794) target = $region96
        $region95: #{tpu_custom_call.1} parent=31 // pred_region
          %p797 = scmp.lt.s32.totalorder %s30, 1
          %s798 = scalar_select %p797, %s30, 1
          %s799 = scalar_lea.vmem %s19, %s798
        $region96: #{tpu_custom_call.1} parent=31 // pred_fallthru
          _
      $region32: #{tpu_custom_call.1} parent=5 // pred_fallthru
        _
      %p800 = scmp.le.s32.totalorder 1, %s30
      %p801 = scmp.lt.s32.totalorder %s30, 3
      %p802 = pnand %p800, %p801
      %p803 = pneg %p802
      // Predicated region
      $region97: #{tpu_custom_call.1} parent=5 // pred_check
        _
      $region98: #{tpu_custom_call.1} parent=5 // pred_check_branch
        %805 = sbr.rel (%p802) target = $region100
      $region99: #{tpu_custom_call.1} parent=5 // pred_region
        %s806 = ssub.s32 %s30, 1
        // Predicated region
        $region101: #{tpu_custom_call.1} parent=99 // pred_check
          %p807 = pneg %p51
        $region102: #{tpu_custom_call.1} parent=99 // pred_check_branch
          %809 = sbr.rel (%p807) target = $region104
        $region103: #{tpu_custom_call.1} parent=99 // pred_region
          %810 = dma.done [#allocation4], 32
        $region104: #{tpu_custom_call.1} parent=99 // pred_fallthru
          _
        // Predicated region
        $region105: #{tpu_custom_call.1} parent=99 // pred_check
          %p811 = pneg %p72
        $region106: #{tpu_custom_call.1} parent=99 // pred_check_branch
          %813 = sbr.rel (%p811) target = $region108
        $region107: #{tpu_custom_call.1} parent=99 // pred_region
          %814 = dma.done [#allocation7], 256
        $region108: #{tpu_custom_call.1} parent=99 // pred_fallthru
          _
        // Predicated region
        $region109: #{tpu_custom_call.1} parent=99 // pred_check
          %p815 = pneg %p93
        $region110: #{tpu_custom_call.1} parent=99 // pred_check_branch
          %817 = sbr.rel (%p815) target = $region112
        $region111: #{tpu_custom_call.1} parent=99 // pred_region
          %818 = dma.done [#allocation7], 16
        $region112: #{tpu_custom_call.1} parent=99 // pred_fallthru
          _
        // Predicated region
        $region113: #{tpu_custom_call.1} parent=99 // pred_check
          %p819 = pneg %p114
        $region114: #{tpu_custom_call.1} parent=99 // pred_check_branch
          %821 = sbr.rel (%p819) target = $region116
        $region115: #{tpu_custom_call.1} parent=99 // pred_region
          %822 = dma.done [#allocation10], 16
        $region116: #{tpu_custom_call.1} parent=99 // pred_fallthru
          _
        %s823 = sand.u32 %s35, 1
        %s824 = scalar_lea.sflag [#allocation4], %s823
        %s825 = sand.u32 %s283, 1
        %s826 = smul.addr %s825, 16
        %s827 = scalar_lea.vmem [#allocation11], %s826
        // Predicated region
        $region117: #{tpu_custom_call.1} parent=99 // pred_check
          %p828 = pneg %p296
        $region118: #{tpu_custom_call.1} parent=99 // pred_check_branch
          %830 = sbr.rel (%p828) target = $region120
        $region119: #{tpu_custom_call.1} parent=99 // pred_region
          %831 = dma.done %s824, 256
        $region120: #{tpu_custom_call.1} parent=99 // pred_fallthru
          _
        %s832 = sand.u32 %s35, 1
        %s833 = scalar_lea.sflag [#allocation4], %s832
        %s834 = sand.u32 %s309, 1
        %s835 = scalar_lea.vmem [#allocation12], %s834
        // Predicated region
        $region121: #{tpu_custom_call.1} parent=99 // pred_check
          %p836 = pneg %p322
        $region122: #{tpu_custom_call.1} parent=99 // pred_check_branch
          %838 = sbr.rel (%p836) target = $region124
        $region123: #{tpu_custom_call.1} parent=99 // pred_region
          %839 = dma.done %s833, 16
        $region124: #{tpu_custom_call.1} parent=99 // pred_fallthru
          _
        %s840 = sand.u32 %s35, 1
        %s841 = scalar_lea.sflag [#allocation4], %s840
        %s842 = sand.u32 %s335, 1
        %s843 = scalar_lea.vmem [#allocation13], %s842
        // Predicated region
        $region125: #{tpu_custom_call.1} parent=99 // pred_check
          %p844 = pneg %p348
        $region126: #{tpu_custom_call.1} parent=99 // pred_check_branch
          %846 = sbr.rel (%p844) target = $region128
        $region127: #{tpu_custom_call.1} parent=99 // pred_region
          %847 = dma.done %s841, 16
        $region128: #{tpu_custom_call.1} parent=99 // pred_fallthru
          _
        %s848 = sand.u32 %s35, 1
        %s849 = scalar_lea.sflag [#allocation4], %s848
        %s850 = sand.u32 %s361, 1
        %s851 = scalar_lea.vmem [#allocation14], %s850
        // Predicated region
        $region129: #{tpu_custom_call.1} parent=99 // pred_check
          %p852 = pneg %p374
        $region130: #{tpu_custom_call.1} parent=99 // pred_check_branch
          %854 = sbr.rel (%p852) target = $region132
        $region131: #{tpu_custom_call.1} parent=99 // pred_region
          %855 = dma.done %s849, 16
        $region132: #{tpu_custom_call.1} parent=99 // pred_fallthru
          _
        %s856 = sand.u32 %s35, 1
        %s857 = scalar_lea.sflag [#allocation4], %s856
        %s858 = sand.u32 %s387, 1
        %s859 = smul.addr %s858, 256
        %s860 = scalar_lea.vmem [#allocation15], %s859
        // Predicated region
        $region133: #{tpu_custom_call.1} parent=99 // pred_check
          %p861 = pneg %p400
        $region134: #{tpu_custom_call.1} parent=99 // pred_check_branch
          %863 = sbr.rel (%p861) target = $region136
        $region135: #{tpu_custom_call.1} parent=99 // pred_region
          %864 = dma.done %s857, 4096
        $region136: #{tpu_custom_call.1} parent=99 // pred_fallthru
          _
        %s865 = sand.u32 %s35, 1
        %s866 = scalar_lea.sflag [#allocation4], %s865
        %s867 = sand.u32 %s439, 1
        %s868 = smul.addr %s867, 256
        %s869 = scalar_lea.vmem [#allocation16], %s868
        // Predicated region
        $region137: #{tpu_custom_call.1} parent=99 // pred_check
          %p870 = pneg %p452
        $region138: #{tpu_custom_call.1} parent=99 // pred_check_branch
          %872 = sbr.rel (%p870) target = $region140
        $region139: #{tpu_custom_call.1} parent=99 // pred_region
          %873 = dma.done %s866, 4096
        $region140: #{tpu_custom_call.1} parent=99 // pred_fallthru
          _
        %p874 = pneg %p51
        %p875 = pneg %p48
        %p876 = pneg %p72
        %p877 = pneg %p69
        %p878 = pneg %p93
        %p879 = pneg %p90
        %p880 = pneg %p114
        %p881 = pneg %p111
        %p882 = scmp.lt.s32.totalorder %s35, 1
        %s883 = scalar_select %p882, %s35, 1
        %s884 = smul.addr %s883, 8
        %s885 = smul.addr %s884, 2
        %s886 = scalar_lea.vmem %s4, %s885
        %p887 = pneg %p140
        %p888 = pneg %p137
        %p889 = scmp.lt.s32.totalorder %s35, 1
        %s890 = scalar_select %p889, %s35, 1
        %s891 = smul.addr %s890, 8
        %s892 = scalar_lea.vmem %s5, %s891
        %p893 = pneg %p166
        %p894 = pneg %p163
        %p895 = scmp.lt.s32.totalorder %s35, 1
        %s896 = scalar_select %p895, %s35, 1
        %s897 = smul.addr %s896, 8
        %s898 = smul.addr %s897, 2
        %s899 = scalar_lea.vmem %s6, %s898
        %p900 = pneg %p192
        %p901 = pneg %p189
        %p902 = scmp.lt.s32.totalorder %s35, 1
        %s903 = scalar_select %p902, %s35, 1
        %s904 = smul.addr %s903, 8
        %s905 = scalar_lea.vmem %s7, %s904
        %p906 = pneg %p218
        %p907 = pneg %p215
        %p908 = scmp.lt.s32.totalorder %s35, 1
        %s909 = scalar_select %p908, %s35, 1
        %s910 = smul.addr %s909, 8
        %s911 = smul.addr %s910, 2
        %s912 = scalar_lea.vmem %s8, %s911
        %p913 = pneg %p244
        %p914 = pneg %p241
        %p915 = scmp.lt.s32.totalorder %s35, 1
        %s916 = scalar_select %p915, %s35, 1
        %s917 = smul.addr %s916, 8
        %s918 = scalar_lea.vmem %s9, %s917
        %p919 = pneg %p270
        %p920 = pneg %p267
        %s921 = sand.u32 %s35, 1
        %s922 = scalar_lea.sflag [#allocation4], %s921
        %s923 = sand.u32 %s283, 1
        %s924 = smul.addr %s923, 16
        %s925 = scalar_lea.vmem [#allocation11], %s924
        %p926 = pneg %p296
        %p927 = pneg %p293
        %s928 = sand.u32 %s35, 1
        %s929 = scalar_lea.sflag [#allocation4], %s928
        %s930 = sand.u32 %s309, 1
        %s931 = scalar_lea.vmem [#allocation12], %s930
        %p932 = pneg %p322
        %p933 = pneg %p319
        %s934 = sand.u32 %s35, 1
        %s935 = scalar_lea.sflag [#allocation4], %s934
        %s936 = sand.u32 %s335, 1
        %s937 = scalar_lea.vmem [#allocation13], %s936
        %p938 = pneg %p348
        %p939 = pneg %p345
        %s940 = sand.u32 %s35, 1
        %s941 = scalar_lea.sflag [#allocation4], %s940
        %s942 = sand.u32 %s361, 1
        %s943 = scalar_lea.vmem [#allocation14], %s942
        %p944 = pneg %p374
        %p945 = pneg %p371
        %s946 = sand.u32 %s35, 1
        %s947 = scalar_lea.sflag [#allocation4], %s946
        %s948 = sand.u32 %s387, 1
        %s949 = smul.addr %s948, 256
        %s950 = scalar_lea.vmem [#allocation15], %s949
        %p951 = pneg %p400
        %p952 = pneg %p397
        %p953 = scmp.lt.s32.totalorder %s35, 1
        %s954 = scalar_select %p953, %s35, 1
        %s955 = smul.addr %s954, 16
        %s956 = scalar_lea.vmem %s15, %s955
        %p957 = pneg %p426
        %p958 = pneg %p423
        %s959 = sand.u32 %s35, 1
        %s960 = scalar_lea.sflag [#allocation4], %s959
        %s961 = sand.u32 %s439, 1
        %s962 = smul.addr %s961, 256
        %s963 = scalar_lea.vmem [#allocation16], %s962
        %p964 = pneg %p452
        %p965 = pneg %p449
        %p966 = scmp.lt.s32.totalorder %s35, 1
        %s967 = scalar_select %p966, %s35, 1
        %s968 = scalar_lea.vmem %s17, %s967
        %p969 = pneg %p478
        %p970 = pneg %p475
        %p971 = scmp.lt.s32.totalorder %s35, 1
        %s972 = scalar_select %p971, %s35, 1
        %s973 = scalar_lea.vmem %s18, %s972
        %p974 = pneg %p504
        %p975 = pneg %p501
        %p976 = scmp.lt.s32.totalorder %s35, 1
        %s977 = scalar_select %p976, %s35, 1
        %s978 = scalar_lea.vmem %s19, %s977
        %p979 = pneg %p530
        %p980 = pneg %p527
        %p981 = pneg %p551
        %p982 = pneg %p548
        %p983 = scmp.lt.s32.totalorder %s35, 1
        %s984 = scalar_select %p983, %s35, 1
        %s985 = smul.addr %s984, 8
        %s986 = smul.addr %s985, 2
        %s987 = scalar_lea.vmem %s4, %s986
        %p988 = scmp.lt.s32.totalorder %s35, 1
        %s989 = scalar_select %p988, %s35, 1
        %s990 = smul.addr %s989, 8
        %s991 = scalar_lea.vmem %s5, %s990
        %p992 = scmp.lt.s32.totalorder %s35, 1
        %s993 = scalar_select %p992, %s35, 1
        %s994 = smul.addr %s993, 8
        %s995 = smul.addr %s994, 2
        %s996 = scalar_lea.vmem %s6, %s995
        %p997 = scmp.lt.s32.totalorder %s35, 1
        %s998 = scalar_select %p997, %s35, 1
        %s999 = smul.addr %s998, 8
        %s1000 = scalar_lea.vmem %s7, %s999
        %p1001 = scmp.lt.s32.totalorder %s35, 1
        %s1002 = scalar_select %p1001, %s35, 1
        %s1003 = smul.addr %s1002, 8
        %s1004 = smul.addr %s1003, 2
        %s1005 = scalar_lea.vmem %s8, %s1004
        %p1006 = scmp.lt.s32.totalorder %s35, 1
        %s1007 = scalar_select %p1006, %s35, 1
        %s1008 = smul.addr %s1007, 8
        %s1009 = scalar_lea.vmem %s9, %s1008
        %p1010 = scmp.lt.s32.totalorder %s35, 1
        %s1011 = scalar_select %p1010, %s35, 1
        %s1012 = smul.addr %s1011, 16
        %s1013 = scalar_lea.vmem %s15, %s1012
        %p1014 = scmp.lt.s32.totalorder %s35, 1
        %s1015 = scalar_select %p1014, %s35, 1
        %s1016 = scalar_lea.vmem %s17, %s1015
        %p1017 = scmp.lt.s32.totalorder %s35, 1
        %s1018 = scalar_select %p1017, %s35, 1
        %s1019 = scalar_lea.vmem %s18, %s1018
        %p1020 = scmp.lt.s32.totalorder %s35, 1
        %s1021 = scalar_select %p1020, %s35, 1
        %s1022 = scalar_lea.vmem %s19, %s1021
        %p1024 = scmp.eq.s32.totalorder %s35, 0
        // Predicated region
        $region141: #{tpu_custom_call.1} parent=99 // pred_check
          %p1025 = pneg %p1024
        $region142: #{tpu_custom_call.1} parent=99 // pred_check_branch
          %1027 = sbr.rel (%p1025) target = $region144
        $region143: #{tpu_custom_call.1} parent=99 // pred_region
          %v1028 = vld [vmem:[#allocation3] sm:$0x3]
          %v1029 = vld [vmem:[#allocation6] sm:$0xff]
          %v1030 = vld [vmem:[#allocation6 + $0x8] sm:$0xff]
          %v1031 = vld [vmem:[#allocation8] sm:$0x1]
          %v1033 = vlaneseq
          %v1034 = vshrl.u32 %v1033, 7
          %v1035 = vsub.s32 0, %v1034
          %v1036 = vrot.slane %v1031, %v1035
          %vm1038 = vcmask 130048
          %v1040 = vsel %vm1038, %v1028, 0
          %1042 = vmatprep.subr.mxu0 0.0
          %1043 = vmatpush1.msra.mxu0 %v1029
          %1044 = vmatprep.subr.mxu0 0.0
          %1045 = vmatpush1.msra.mxu0 %v1030
          %1046 = vmatprep.subr.mxu0 0.0
          %1047 = vmatpush1.msra.mxu0 0.0
          %1048 = vmatprep.subr.mxu0 0.0
          %1049 = vmatpush1.msra.mxu0 0.0
          %1050 = vmatprep.subr.mxu0 0.0
          %1051 = vmatpush1.msra.mxu0 0.0
          %1052 = vmatprep.subr.mxu0 0.0
          %1053 = vmatpush1.msra.mxu0 0.0
          %1054 = vmatprep.subr.mxu0 0.0
          %1055 = vmatpush1.msra.mxu0 0.0
          %1056 = vmatprep.subr.mxu0 0.0
          %1057 = vmatpush1.msra.mxu0 0.0
          %1058 = vmatprep.subr.mxu0 0.0
          %1059 = vmatpush1.msra.mxu0 0.0
          %1060 = vmatprep.subr.mxu0 0.0
          %1061 = vmatpush1.msra.mxu0 0.0
          %1062 = vmatprep.subr.mxu0 0.0
          %1063 = vmatpush1.msra.mxu0 0.0
          %1064 = vmatprep.subr.mxu0 0.0
          %1065 = vmatpush1.msra.mxu0 0.0
          %1066 = vmatprep.subr.mxu0 0.0
          %1067 = vmatpush1.msra.mxu0 0.0
          %1068 = vmatprep.subr.mxu0 0.0
          %1069 = vmatpush1.msra.mxu0 0.0
          %1070 = vmatprep.subr.mxu0 0.0
          %1071 = vmatpush1.msra.mxu0 0.0
          %1072 = vmatprep.subr.mxu0 0.0
          %1073 = vmatpush1.msra.mxu0 0.0
          %1074 = vmatprep.subr.mxu0 0.0
          %1075 = vmatpush1.msra.mxu0 0.0
          %1076 = vmatprep.subr.mxu0 0.0
          %1077 = vmatpush1.msra.mxu0 0.0
          %1078 = vmatprep.subr.mxu0 0.0
          %1079 = vmatpush1.msra.mxu0 0.0
          %1080 = vmatprep.subr.mxu0 0.0
          %1081 = vmatpush1.msra.mxu0 0.0
          %1082 = vmatprep.subr.mxu0 0.0
          %1083 = vmatpush1.msra.mxu0 0.0
          %1084 = vmatprep.subr.mxu0 0.0
          %1085 = vmatpush1.msra.mxu0 0.0
          %1086 = vmatprep.subr.mxu0 0.0
          %1087 = vmatpush1.msra.mxu0 0.0
          %1088 = vmatprep.subr.mxu0 0.0
          %1089 = vmatpush1.msra.mxu0 0.0
          %1090 = vmatprep.subr.mxu0 0.0
          %1091 = vmatpush1.msra.mxu0 0.0
          %1092 = vmatprep.subr.mxu0 0.0
          %1093 = vmatpush1.msra.mxu0 0.0
          %1094 = vmatprep.subr.mxu0 0.0
          %1095 = vmatpush1.msra.mxu0 0.0
          %1096 = vmatprep.subr.mxu0 0.0
          %1097 = vmatpush1.msra.mxu0 0.0
          %1098 = vmatprep.subr.mxu0 0.0
          %1099 = vmatpush1.msra.mxu0 0.0
          %1100 = vmatprep.subr.mxu0 0.0
          %1101 = vmatpush1.msra.mxu0 0.0
          %1102 = vmatprep.subr.mxu0 0.0
          %1103 = vmatpush1.msra.mxu0 0.0
          %1104 = vmatprep.subr.mxu0 0.0
          %1105 = vmatpush1.msra.mxu0 0.0
          %1106 = vmatprep.mubr.f32.mxu0 0.0
          %1107 = vmatmul.mubr.f32.gmra.mrb[0].mxu0 %v1040
          %v1108 = vpop.f32.mrb[0].mxu0
          %v1109 = vadd.f32 %v1036, %v1108
          %v1110 = vpop.f32.mrb[0].mxu0
          %1111 = vdwg.mxu0
          %v1112 = vld [vmem:[#allocation9] sm:$0x1]
          %v1114 = vlaneseq
          %v1115 = vshrl.u32 %v1114, 7
          %v1116 = vsub.s32 0, %v1115
          %v1117 = vrot.slane %v1112, %v1116
          %vm1119 = vcmask 261120
          %1120 = vst.msk [vmem:[#allocation2] sm:$0xff] %vm1119, %v1117
          %1121 = vst.msk [vmem:[#allocation2 + $0x8] sm:$0xff] %vm1119, %v1117
          %vm1122 = vcmask 253952
          %1123 = vst.msk [vmem:[#allocation2] sm:$0x1] %vm1122, %v1109
          %vm1124 = vcmask 254977
          %1125 = vst.msk [vmem:[#allocation2 + $0x7] sm:$0x2] %vm1124, %v1109
        $region144: #{tpu_custom_call.1} parent=99 // pred_fallthru
          _
        %v1126 = vld [vmem:[#allocation2] sm:$0xff]
        %v1127 = vld [vmem:[#allocation2 + $0x8] sm:$0xff]
        %v1128 = vpack.c.bf16 %v1127, %v1126
        %v1129 = vld [vmem:[%s991] sm:$0xff]
        %v1130 = vld [vmem:[%s1000] sm:$0xff]
        %v1131 = vld [vmem:[%s1009] sm:$0xff]
        %v1132 = vld [vmem:[%s987] sm:$0x3]
        %v1133 = vlaneseq
        %v1134 = vshrl.u32 %v1133, 7
        %v1135 = vsub.s32 0, %v1134
        %v1136 = vrot.slane %v1129, %v1135
        %vm1137 = vcmask 261120
        %v1139 = vsel %vm1137, %v1128, 0
        %v1142 = vsel %vm1137, %v1132, 0
        %1144 = vmatprep.subr.bf16.mxu0 0
        %1145 = vmatpush1.bf16.xpose.msra.mxu0 %v1142
        %1146 = vmatprep.subr.bf16.mxu0 0
        %1147 = vmatpush1.bf16.xpose.msra.mxu0 0
        %1148 = vmatprep.subr.bf16.mxu0 0
        %1149 = vmatpush1.bf16.xpose.msra.mxu0 0
        %1150 = vmatprep.subr.bf16.mxu0 0
        %1151 = vmatpush1.bf16.xpose.msra.mxu0 0
        %1152 = vmatprep.subr.bf16.mxu0 0
        %1153 = vmatpush1.bf16.xpose.msra.mxu0 0
        %1154 = vmatprep.subr.bf16.mxu0 0
        %1155 = vmatpush1.bf16.xpose.msra.mxu0 0
        %1156 = vmatprep.subr.bf16.mxu0 0
        %1157 = vmatpush1.bf16.xpose.msra.mxu0 0
        %1158 = vmatprep.subr.bf16.mxu0 0
        %1159 = vmatpush1.bf16.xpose.msra.mxu0 0
        %1160 = vmatprep.subr.bf16.mxu0 0
        %1161 = vmatpush1.bf16.xpose.msra.mxu0 0
        %1162 = vmatprep.subr.bf16.mxu0 0
        %1163 = vmatpush1.bf16.xpose.msra.mxu0 0
        %1164 = vmatprep.subr.bf16.mxu0 0
        %1165 = vmatpush1.bf16.xpose.msra.mxu0 0
        %1166 = vmatprep.subr.bf16.mxu0 0
        %1167 = vmatpush1.bf16.xpose.msra.mxu0 0
        %1168 = vmatprep.subr.bf16.mxu0 0
        %1169 = vmatpush1.bf16.xpose.msra.mxu0 0
        %1170 = vmatprep.subr.bf16.mxu0 0
        %1171 = vmatpush1.bf16.xpose.msra.mxu0 0
        %1172 = vmatprep.subr.bf16.mxu0 0
        %1173 = vmatpush1.bf16.xpose.msra.mxu0 0
        %1174 = vmatprep.subr.bf16.mxu0 0
        %1175 = vmatpush1.bf16.xpose.msra.mxu0 0
        %1176 = vmatprep.mubr.bf16.mxu0 0
        %1177 = vmatmul.mubr.bf16.gmra.mrb[0].mxu0 %v1139
        %v1178 = vpop.f32.mrb[0].mxu0
        %v1179 = vadd.f32 %v1136, %v1178
        %v1180 = vpop.f32.mrb[0].mxu0
        %v1181 = vpop.f32.mrb[0].mxu0
        %v1182 = vadd.f32 %v1136, %v1181
        %v1183 = vpop.f32.mrb[0].mxu0
        %1184 = vdwg.mxu0
        %v1185 = vld [vmem:[%s996] sm:$0x3]
        %v1186 = vlaneseq
        %v1187 = vshrl.u32 %v1186, 7
        %v1188 = vsub.s32 0, %v1187
        %v1189 = vrot.slane %v1130, %v1188
        %v1191 = vsel %vm1137, %v1185, 0
        %1193 = vmatprep.subr.bf16.mxu0 0
        %1194 = vmatpush1.bf16.xpose.msra.mxu0 %v1191
        %1195 = vmatprep.subr.bf16.mxu0 0
        %1196 = vmatpush1.bf16.xpose.msra.mxu0 0
        %1197 = vmatprep.subr.bf16.mxu0 0
        %1198 = vmatpush1.bf16.xpose.msra.mxu0 0
        %1199 = vmatprep.subr.bf16.mxu0 0
        %1200 = vmatpush1.bf16.xpose.msra.mxu0 0
        %1201 = vmatprep.subr.bf16.mxu0 0
        %1202 = vmatpush1.bf16.xpose.msra.mxu0 0
        %1203 = vmatprep.subr.bf16.mxu0 0
        %1204 = vmatpush1.bf16.xpose.msra.mxu0 0
        %1205 = vmatprep.subr.bf16.mxu0 0
        %1206 = vmatpush1.bf16.xpose.msra.mxu0 0
        %1207 = vmatprep.subr.bf16.mxu0 0
        %1208 = vmatpush1.bf16.xpose.msra.mxu0 0
        %1209 = vmatprep.subr.bf16.mxu0 0
        %1210 = vmatpush1.bf16.xpose.msra.mxu0 0
        %1211 = vmatprep.subr.bf16.mxu0 0
        %1212 = vmatpush1.bf16.xpose.msra.mxu0 0
        %1213 = vmatprep.subr.bf16.mxu0 0
        %1214 = vmatpush1.bf16.xpose.msra.mxu0 0
        %1215 = vmatprep.subr.bf16.mxu0 0
        %1216 = vmatpush1.bf16.xpose.msra.mxu0 0
        %1217 = vmatprep.subr.bf16.mxu0 0
        %1218 = vmatpush1.bf16.xpose.msra.mxu0 0
        %1219 = vmatprep.subr.bf16.mxu0 0
        %1220 = vmatpush1.bf16.xpose.msra.mxu0 0
        %1221 = vmatprep.subr.bf16.mxu0 0
        %1222 = vmatpush1.bf16.xpose.msra.mxu0 0
        %1223 = vmatprep.subr.bf16.mxu0 0
        %1224 = vmatpush1.bf16.xpose.msra.mxu0 0
        %1225 = vmatprep.mubr.bf16.mxu0 0
        %1226 = vmatmul.mubr.bf16.gmra.mrb[0].mxu0 %v1139
        %v1227 = vpop.f32.mrb[0].mxu0
        %v1228 = vadd.f32 %v1189, %v1227
        %v1229 = vpop.f32.mrb[0].mxu0
        %v1230 = vpop.f32.mrb[0].mxu0
        %v1231 = vadd.f32 %v1189, %v1230
        %v1232 = vpop.f32.mrb[0].mxu0
        %1233 = vdwg.mxu0
        %v1234 = vld [vmem:[%s1005] sm:$0x3]
        %v1235 = vlaneseq
        %v1236 = vshrl.u32 %v1235, 7
        %v1237 = vsub.s32 0, %v1236
        %v1238 = vrot.slane %v1131, %v1237
        %v1240 = vsel %vm1137, %v1234, 0
        %1242 = vmatprep.subr.bf16.mxu0 0
        %1243 = vmatpush1.bf16.xpose.msra.mxu0 %v1240
        %1244 = vmatprep.subr.bf16.mxu0 0
        %1245 = vmatpush1.bf16.xpose.msra.mxu0 0
        %1246 = vmatprep.subr.bf16.mxu0 0
        %1247 = vmatpush1.bf16.xpose.msra.mxu0 0
        %1248 = vmatprep.subr.bf16.mxu0 0
        %1249 = vmatpush1.bf16.xpose.msra.mxu0 0
        %1250 = vmatprep.subr.bf16.mxu0 0
        %1251 = vmatpush1.bf16.xpose.msra.mxu0 0
        %1252 = vmatprep.subr.bf16.mxu0 0
        %1253 = vmatpush1.bf16.xpose.msra.mxu0 0
        %1254 = vmatprep.subr.bf16.mxu0 0
        %1255 = vmatpush1.bf16.xpose.msra.mxu0 0
        %1256 = vmatprep.subr.bf16.mxu0 0
        %1257 = vmatpush1.bf16.xpose.msra.mxu0 0
        %1258 = vmatprep.subr.bf16.mxu0 0
        %1259 = vmatpush1.bf16.xpose.msra.mxu0 0
        %1260 = vmatprep.subr.bf16.mxu0 0
        %1261 = vmatpush1.bf16.xpose.msra.mxu0 0
        %1262 = vmatprep.subr.bf16.mxu0 0
        %1263 = vmatpush1.bf16.xpose.msra.mxu0 0
        %1264 = vmatprep.subr.bf16.mxu0 0
        %1265 = vmatpush1.bf16.xpose.msra.mxu0 0
        %1266 = vmatprep.subr.bf16.mxu0 0
        %1267 = vmatpush1.bf16.xpose.msra.mxu0 0
        %1268 = vmatprep.subr.bf16.mxu0 0
        %1269 = vmatpush1.bf16.xpose.msra.mxu0 0
        %1270 = vmatprep.subr.bf16.mxu0 0
        %1271 = vmatpush1.bf16.xpose.msra.mxu0 0
        %1272 = vmatprep.subr.bf16.mxu0 0
        %1273 = vmatpush1.bf16.xpose.msra.mxu0 0
        %1274 = vmatprep.mubr.bf16.mxu0 0
        %1275 = vmatmul.mubr.bf16.gmra.mrb[0].mxu0 %v1139
        %v1276 = vpop.f32.mrb[0].mxu0
        %v1277 = vadd.f32 %v1238, %v1276
        %v1278 = vpop.f32.mrb[0].mxu0
        %v1279 = vpop.f32.mrb[0].mxu0
        %v1280 = vadd.f32 %v1238, %v1279
        %v1281 = vpop.f32.mrb[0].mxu0
        %1282 = vdwg.mxu0
        %vm1283 = vcmask 31744
        %v1285 = vsel %vm1283, %v1179, 0
        %v1288 = vsel %vm1283, %v1228, 0
        %1290 = vmatprep.subr.mxu0 0.0
        %1291 = vmatpush1.xpose.msra.mxu0 %v1288
        %1292 = vmatprep.subr.mxu0 0.0
        %1293 = vmatpush1.xpose.msra.mxu0 0.0
        %1294 = vmatprep.subr.mxu0 0.0
        %1295 = vmatpush1.xpose.msra.mxu0 0.0
        %1296 = vmatprep.subr.mxu0 0.0
        %1297 = vmatpush1.xpose.msra.mxu0 0.0
        %1298 = vmatprep.subr.mxu0 0.0
        %1299 = vmatpush1.xpose.msra.mxu0 0.0
        %1300 = vmatprep.subr.mxu0 0.0
        %1301 = vmatpush1.xpose.msra.mxu0 0.0
        %1302 = vmatprep.subr.mxu0 0.0
        %1303 = vmatpush1.xpose.msra.mxu0 0.0
        %1304 = vmatprep.subr.mxu0 0.0
        %1305 = vmatpush1.xpose.msra.mxu0 0.0
        %1306 = vmatprep.subr.mxu0 0.0
        %1307 = vmatpush1.xpose.msra.mxu0 0.0
        %1308 = vmatprep.subr.mxu0 0.0
        %1309 = vmatpush1.xpose.msra.mxu0 0.0
        %1310 = vmatprep.subr.mxu0 0.0
        %1311 = vmatpush1.xpose.msra.mxu0 0.0
        %1312 = vmatprep.subr.mxu0 0.0
        %1313 = vmatpush1.xpose.msra.mxu0 0.0
        %1314 = vmatprep.subr.mxu0 0.0
        %1315 = vmatpush1.xpose.msra.mxu0 0.0
        %1316 = vmatprep.subr.mxu0 0.0
        %1317 = vmatpush1.xpose.msra.mxu0 0.0
        %1318 = vmatprep.subr.mxu0 0.0
        %1319 = vmatpush1.xpose.msra.mxu0 0.0
        %1320 = vmatprep.subr.mxu0 0.0
        %1321 = vmatpush1.xpose.msra.mxu0 0.0
        %1322 = vmatprep.subr.mxu0 0.0
        %1323 = vmatpush1.xpose.msra.mxu0 0.0
        %1324 = vmatprep.subr.mxu0 0.0
        %1325 = vmatpush1.xpose.msra.mxu0 0.0
        %1326 = vmatprep.subr.mxu0 0.0
        %1327 = vmatpush1.xpose.msra.mxu0 0.0
        %1328 = vmatprep.subr.mxu0 0.0
        %1329 = vmatpush1.xpose.msra.mxu0 0.0
        %1330 = vmatprep.subr.mxu0 0.0
        %1331 = vmatpush1.xpose.msra.mxu0 0.0
        %1332 = vmatprep.subr.mxu0 0.0
        %1333 = vmatpush1.xpose.msra.mxu0 0.0
        %1334 = vmatprep.subr.mxu0 0.0
        %1335 = vmatpush1.xpose.msra.mxu0 0.0
        %1336 = vmatprep.subr.mxu0 0.0
        %1337 = vmatpush1.xpose.msra.mxu0 0.0
        %1338 = vmatprep.subr.mxu0 0.0
        %1339 = vmatpush1.xpose.msra.mxu0 0.0
        %1340 = vmatprep.subr.mxu0 0.0
        %1341 = vmatpush1.xpose.msra.mxu0 0.0
        %1342 = vmatprep.subr.mxu0 0.0
        %1343 = vmatpush1.xpose.msra.mxu0 0.0
        %1344 = vmatprep.subr.mxu0 0.0
        %1345 = vmatpush1.xpose.msra.mxu0 0.0
        %1346 = vmatprep.subr.mxu0 0.0
        %1347 = vmatpush1.xpose.msra.mxu0 0.0
        %1348 = vmatprep.subr.mxu0 0.0
        %1349 = vmatpush1.xpose.msra.mxu0 0.0
        %1350 = vmatprep.subr.mxu0 0.0
        %1351 = vmatpush1.xpose.msra.mxu0 0.0
        %1352 = vmatprep.subr.mxu0 0.0
        %1353 = vmatpush1.xpose.msra.mxu0 0.0
        %1354 = vmatprep.mubr.f32.mxu0 0.0
        %1355 = vmatmul.mubr.f32.gmra.mrb[0].mxu0 %v1285
        %v1356 = vpop.f32.mrb[0].mxu0
        %v1357 = vadd.f32 0.0, %v1356
        %v1358 = vpop.f32.mrb[0].mxu0
        %1359 = vdwg.mxu0
        %v1361 = vsel %vm1283, %v1182, 0
        %v1364 = vsel %vm1283, %v1231, 0
        %1366 = vmatprep.subr.mxu0 0.0
        %1367 = vmatpush1.xpose.msra.mxu0 %v1364
        %1368 = vmatprep.subr.mxu0 0.0
        %1369 = vmatpush1.xpose.msra.mxu0 0.0
        %1370 = vmatprep.subr.mxu0 0.0
        %1371 = vmatpush1.xpose.msra.mxu0 0.0
        %1372 = vmatprep.subr.mxu0 0.0
        %1373 = vmatpush1.xpose.msra.mxu0 0.0
        %1374 = vmatprep.subr.mxu0 0.0
        %1375 = vmatpush1.xpose.msra.mxu0 0.0
        %1376 = vmatprep.subr.mxu0 0.0
        %1377 = vmatpush1.xpose.msra.mxu0 0.0
        %1378 = vmatprep.subr.mxu0 0.0
        %1379 = vmatpush1.xpose.msra.mxu0 0.0
        %1380 = vmatprep.subr.mxu0 0.0
        %1381 = vmatpush1.xpose.msra.mxu0 0.0
        %1382 = vmatprep.subr.mxu0 0.0
        %1383 = vmatpush1.xpose.msra.mxu0 0.0
        %1384 = vmatprep.subr.mxu0 0.0
        %1385 = vmatpush1.xpose.msra.mxu0 0.0
        %1386 = vmatprep.subr.mxu0 0.0
        %1387 = vmatpush1.xpose.msra.mxu0 0.0
        %1388 = vmatprep.subr.mxu0 0.0
        %1389 = vmatpush1.xpose.msra.mxu0 0.0
        %1390 = vmatprep.subr.mxu0 0.0
        %1391 = vmatpush1.xpose.msra.mxu0 0.0
        %1392 = vmatprep.subr.mxu0 0.0
        %1393 = vmatpush1.xpose.msra.mxu0 0.0
        %1394 = vmatprep.subr.mxu0 0.0
        %1395 = vmatpush1.xpose.msra.mxu0 0.0
        %1396 = vmatprep.subr.mxu0 0.0
        %1397 = vmatpush1.xpose.msra.mxu0 0.0
        %1398 = vmatprep.subr.mxu0 0.0
        %1399 = vmatpush1.xpose.msra.mxu0 0.0
        %1400 = vmatprep.subr.mxu0 0.0
        %1401 = vmatpush1.xpose.msra.mxu0 0.0
        %1402 = vmatprep.subr.mxu0 0.0
        %1403 = vmatpush1.xpose.msra.mxu0 0.0
        %1404 = vmatprep.subr.mxu0 0.0
        %1405 = vmatpush1.xpose.msra.mxu0 0.0
        %1406 = vmatprep.subr.mxu0 0.0
        %1407 = vmatpush1.xpose.msra.mxu0 0.0
        %1408 = vmatprep.subr.mxu0 0.0
        %1409 = vmatpush1.xpose.msra.mxu0 0.0
        %1410 = vmatprep.subr.mxu0 0.0
        %1411 = vmatpush1.xpose.msra.mxu0 0.0
        %1412 = vmatprep.subr.mxu0 0.0
        %1413 = vmatpush1.xpose.msra.mxu0 0.0
        %1414 = vmatprep.subr.mxu0 0.0
        %1415 = vmatpush1.xpose.msra.mxu0 0.0
        %1416 = vmatprep.subr.mxu0 0.0
        %1417 = vmatpush1.xpose.msra.mxu0 0.0
        %1418 = vmatprep.subr.mxu0 0.0
        %1419 = vmatpush1.xpose.msra.mxu0 0.0
        %1420 = vmatprep.subr.mxu0 0.0
        %1421 = vmatpush1.xpose.msra.mxu0 0.0
        %1422 = vmatprep.subr.mxu0 0.0
        %1423 = vmatpush1.xpose.msra.mxu0 0.0
        %1424 = vmatprep.subr.mxu0 0.0
        %1425 = vmatpush1.xpose.msra.mxu0 0.0
        %1426 = vmatprep.subr.mxu0 0.0
        %1427 = vmatpush1.xpose.msra.mxu0 0.0
        %1428 = vmatprep.subr.mxu0 0.0
        %1429 = vmatpush1.xpose.msra.mxu0 0.0
        %1430 = vmatprep.mubr.f32.mxu0 0.0
        %1431 = vmatmul.mubr.f32.gmra.mrb[0].mxu0 %v1361
        %v1432 = vpop.f32.mrb[0].mxu0
        %v1433 = vadd.f32 0.0, %v1432
        %v1434 = vpop.f32.mrb[0].mxu0
        %1435 = vdwg.mxu0
        %vm1436 = vcmask 64512
        %v1437 = vsel %vm1436, %v1357, -inf
        %1438 = vmax.xlane.f32.xlu0 %v1437
        %v1439 = vpop.xlane.xlu0 %1438
        %v1440 = vsel %vm1436, %v1433, -inf
        %1441 = vmax.xlane.f32.xlu0 %v1440
        %v1442 = vpop.xlane.xlu0 %1441
        %v1443 = vsub.f32 %v1357, %v1439
        %v1444 = vsub.f32 %v1433, %v1442
        %v1445 = vmul.f32 %v1443, 1.442695
        %v1446 = vpow.pop %v1445
        %v1447 = vmul.f32 %v1444, 1.442695
        %v1448 = vpow.pop %v1447
        %v1449 = vsel %vm1436, %v1446, 0.0
        %1450 = vadd.xlane.f32.xlu0 %v1449
        %v1451 = vpop.xlane.xlu0 %1450
        %v1452 = vsel %vm1436, %v1448, 0.0
        %1453 = vadd.xlane.f32.xlu0 %v1452
        %v1454 = vpop.xlane.xlu0 %1453
        %v1455 = vrcp.pop %v1451
        %v1456 = vrcp.pop %v1454
        %v1457 = vmul.f32 %v1446, %v1455
        %v1458 = vmul.f32 %v1448, %v1456
        %v1460 = vsel %vm1436, %v1457, 0
        %1462 = vmatprep.subr.mxu0 0.0
        %1463 = vmatpush1.msra.mxu0 %v1277
        %1464 = vmatprep.subr.mxu0 0.0
        %1465 = vmatpush1.msra.mxu0 0.0
        %1466 = vmatprep.subr.mxu0 0.0
        %1467 = vmatpush1.msra.mxu0 0.0
        %1468 = vmatprep.subr.mxu0 0.0
        %1469 = vmatpush1.msra.mxu0 0.0
        %1470 = vmatprep.subr.mxu0 0.0
        %1471 = vmatpush1.msra.mxu0 0.0
        %1472 = vmatprep.subr.mxu0 0.0
        %1473 = vmatpush1.msra.mxu0 0.0
        %1474 = vmatprep.subr.mxu0 0.0
        %1475 = vmatpush1.msra.mxu0 0.0
        %1476 = vmatprep.subr.mxu0 0.0
        %1477 = vmatpush1.msra.mxu0 0.0
        %1478 = vmatprep.subr.mxu0 0.0
        %1479 = vmatpush1.msra.mxu0 0.0
        %1480 = vmatprep.subr.mxu0 0.0
        %1481 = vmatpush1.msra.mxu0 0.0
        %1482 = vmatprep.subr.mxu0 0.0
        %1483 = vmatpush1.msra.mxu0 0.0
        %1484 = vmatprep.subr.mxu0 0.0
        %1485 = vmatpush1.msra.mxu0 0.0
        %1486 = vmatprep.subr.mxu0 0.0
        %1487 = vmatpush1.msra.mxu0 0.0
        %1488 = vmatprep.subr.mxu0 0.0
        %1489 = vmatpush1.msra.mxu0 0.0
        %1490 = vmatprep.subr.mxu0 0.0
        %1491 = vmatpush1.msra.mxu0 0.0
        %1492 = vmatprep.subr.mxu0 0.0
        %1493 = vmatpush1.msra.mxu0 0.0
        %1494 = vmatprep.subr.mxu0 0.0
        %1495 = vmatpush1.msra.mxu0 0.0
        %1496 = vmatprep.subr.mxu0 0.0
        %1497 = vmatpush1.msra.mxu0 0.0
        %1498 = vmatprep.subr.mxu0 0.0
        %1499 = vmatpush1.msra.mxu0 0.0
        %1500 = vmatprep.subr.mxu0 0.0
        %1501 = vmatpush1.msra.mxu0 0.0
        %1502 = vmatprep.subr.mxu0 0.0
        %1503 = vmatpush1.msra.mxu0 0.0
        %1504 = vmatprep.subr.mxu0 0.0
        %1505 = vmatpush1.msra.mxu0 0.0
        %1506 = vmatprep.subr.mxu0 0.0
        %1507 = vmatpush1.msra.mxu0 0.0
        %1508 = vmatprep.subr.mxu0 0.0
        %1509 = vmatpush1.msra.mxu0 0.0
        %1510 = vmatprep.subr.mxu0 0.0
        %1511 = vmatpush1.msra.mxu0 0.0
        %1512 = vmatprep.subr.mxu0 0.0
        %1513 = vmatpush1.msra.mxu0 0.0
        %1514 = vmatprep.subr.mxu0 0.0
        %1515 = vmatpush1.msra.mxu0 0.0
        %1516 = vmatprep.subr.mxu0 0.0
        %1517 = vmatpush1.msra.mxu0 0.0
        %1518 = vmatprep.subr.mxu0 0.0
        %1519 = vmatpush1.msra.mxu0 0.0
        %1520 = vmatprep.subr.mxu0 0.0
        %1521 = vmatpush1.msra.mxu0 0.0
        %1522 = vmatprep.subr.mxu0 0.0
        %1523 = vmatpush1.msra.mxu0 0.0
        %1524 = vmatprep.subr.mxu0 0.0
        %1525 = vmatpush1.msra.mxu0 0.0
        %1526 = vmatprep.mubr.f32.mxu0 0.0
        %1527 = vmatmul.mubr.f32.gmra.mrb[0].mxu0 %v1460
        %v1528 = vpop.f32.mrb[0].mxu0
        %v1529 = vadd.f32 0.0, %v1528
        %v1530 = vpop.f32.mrb[0].mxu0
        %1531 = vdwg.mxu0
        %v1533 = vsel %vm1436, %v1458, 0
        %1535 = vmatprep.subr.mxu0 0.0
        %1536 = vmatpush1.msra.mxu0 %v1280
        %1537 = vmatprep.subr.mxu0 0.0
        %1538 = vmatpush1.msra.mxu0 0.0
        %1539 = vmatprep.subr.mxu0 0.0
        %1540 = vmatpush1.msra.mxu0 0.0
        %1541 = vmatprep.subr.mxu0 0.0
        %1542 = vmatpush1.msra.mxu0 0.0
        %1543 = vmatprep.subr.mxu0 0.0
        %1544 = vmatpush1.msra.mxu0 0.0
        %1545 = vmatprep.subr.mxu0 0.0
        %1546 = vmatpush1.msra.mxu0 0.0
        %1547 = vmatprep.subr.mxu0 0.0
        %1548 = vmatpush1.msra.mxu0 0.0
        %1549 = vmatprep.subr.mxu0 0.0
        %1550 = vmatpush1.msra.mxu0 0.0
        %1551 = vmatprep.subr.mxu0 0.0
        %1552 = vmatpush1.msra.mxu0 0.0
        %1553 = vmatprep.subr.mxu0 0.0
        %1554 = vmatpush1.msra.mxu0 0.0
        %1555 = vmatprep.subr.mxu0 0.0
        %1556 = vmatpush1.msra.mxu0 0.0
        %1557 = vmatprep.subr.mxu0 0.0
        %1558 = vmatpush1.msra.mxu0 0.0
        %1559 = vmatprep.subr.mxu0 0.0
        %1560 = vmatpush1.msra.mxu0 0.0
        %1561 = vmatprep.subr.mxu0 0.0
        %1562 = vmatpush1.msra.mxu0 0.0
        %1563 = vmatprep.subr.mxu0 0.0
        %1564 = vmatpush1.msra.mxu0 0.0
        %1565 = vmatprep.subr.mxu0 0.0
        %1566 = vmatpush1.msra.mxu0 0.0
        %1567 = vmatprep.subr.mxu0 0.0
        %1568 = vmatpush1.msra.mxu0 0.0
        %1569 = vmatprep.subr.mxu0 0.0
        %1570 = vmatpush1.msra.mxu0 0.0
        %1571 = vmatprep.subr.mxu0 0.0
        %1572 = vmatpush1.msra.mxu0 0.0
        %1573 = vmatprep.subr.mxu0 0.0
        %1574 = vmatpush1.msra.mxu0 0.0
        %1575 = vmatprep.subr.mxu0 0.0
        %1576 = vmatpush1.msra.mxu0 0.0
        %1577 = vmatprep.subr.mxu0 0.0
        %1578 = vmatpush1.msra.mxu0 0.0
        %1579 = vmatprep.subr.mxu0 0.0
        %1580 = vmatpush1.msra.mxu0 0.0
        %1581 = vmatprep.subr.mxu0 0.0
        %1582 = vmatpush1.msra.mxu0 0.0
        %1583 = vmatprep.subr.mxu0 0.0
        %1584 = vmatpush1.msra.mxu0 0.0
        %1585 = vmatprep.subr.mxu0 0.0
        %1586 = vmatpush1.msra.mxu0 0.0
        %1587 = vmatprep.subr.mxu0 0.0
        %1588 = vmatpush1.msra.mxu0 0.0
        %1589 = vmatprep.subr.mxu0 0.0
        %1590 = vmatpush1.msra.mxu0 0.0
        %1591 = vmatprep.subr.mxu0 0.0
        %1592 = vmatpush1.msra.mxu0 0.0
        %1593 = vmatprep.subr.mxu0 0.0
        %1594 = vmatpush1.msra.mxu0 0.0
        %1595 = vmatprep.subr.mxu0 0.0
        %1596 = vmatpush1.msra.mxu0 0.0
        %1597 = vmatprep.subr.mxu0 0.0
        %1598 = vmatpush1.msra.mxu0 0.0
        %1599 = vmatprep.mubr.f32.mxu0 0.0
        %1600 = vmatmul.mubr.f32.gmra.mrb[0].mxu0 %v1533
        %v1601 = vpop.f32.mrb[0].mxu0
        %v1602 = vadd.f32 0.0, %v1601
        %v1603 = vpop.f32.mrb[0].mxu0
        %1604 = vdwg.mxu0
        %v1605 = vpack.c.bf16 %v1602, %v1529
        %v1606 = vld [vmem:[%s827] sm:$0x3]
        %s1607 = scalar_lea.vmem %s987, 2
        %v1608 = vld [vmem:[%s1607] sm:$0x3]
        %v1609 = vlaneseq
        %v1610 = vshrl.u32 %v1609, 7
        %v1611 = vsub.s32 1, %v1610
        %v1612 = vrot.slane %v1129, %v1611
        %v1614 = vsel %vm1137, %v1608, 0
        %1616 = vmatprep.subr.bf16.mxu0 0
        %1617 = vmatpush1.bf16.xpose.msra.mxu0 %v1614
        %1618 = vmatprep.subr.bf16.mxu0 0
        %1619 = vmatpush1.bf16.xpose.msra.mxu0 0
        %1620 = vmatprep.subr.bf16.mxu0 0
        %1621 = vmatpush1.bf16.xpose.msra.mxu0 0
        %1622 = vmatprep.subr.bf16.mxu0 0
        %1623 = vmatpush1.bf16.xpose.msra.mxu0 0
        %1624 = vmatprep.subr.bf16.mxu0 0
        %1625 = vmatpush1.bf16.xpose.msra.mxu0 0
        %1626 = vmatprep.subr.bf16.mxu0 0
        %1627 = vmatpush1.bf16.xpose.msra.mxu0 0
        %1628 = vmatprep.subr.bf16.mxu0 0
        %1629 = vmatpush1.bf16.xpose.msra.mxu0 0
        %1630 = vmatprep.subr.bf16.mxu0 0
        %1631 = vmatpush1.bf16.xpose.msra.mxu0 0
        %1632 = vmatprep.subr.bf16.mxu0 0
        %1633 = vmatpush1.bf16.xpose.msra.mxu0 0
        %1634 = vmatprep.subr.bf16.mxu0 0
        %1635 = vmatpush1.bf16.xpose.msra.mxu0 0
        %1636 = vmatprep.subr.bf16.mxu0 0
        %1637 = vmatpush1.bf16.xpose.msra.mxu0 0
        %1638 = vmatprep.subr.bf16.mxu0 0
        %1639 = vmatpush1.bf16.xpose.msra.mxu0 0
        %1640 = vmatprep.subr.bf16.mxu0 0
        %1641 = vmatpush1.bf16.xpose.msra.mxu0 0
        %1642 = vmatprep.subr.bf16.mxu0 0
        %1643 = vmatpush1.bf16.xpose.msra.mxu0 0
        %1644 = vmatprep.subr.bf16.mxu0 0
        %1645 = vmatpush1.bf16.xpose.msra.mxu0 0
        %1646 = vmatprep.subr.bf16.mxu0 0
        %1647 = vmatpush1.bf16.xpose.msra.mxu0 0
        %1648 = vmatprep.mubr.bf16.mxu0 0
        %1649 = vmatmul.mubr.bf16.gmra.mrb[0].mxu0 %v1139
        %v1650 = vpop.f32.mrb[0].mxu0
        %v1651 = vadd.f32 %v1612, %v1650
        %v1652 = vpop.f32.mrb[0].mxu0
        %v1653 = vpop.f32.mrb[0].mxu0
        %v1654 = vadd.f32 %v1612, %v1653
        %v1655 = vpop.f32.mrb[0].mxu0
        %1656 = vdwg.mxu0
        %s1657 = scalar_lea.vmem %s996, 2
        %v1658 = vld [vmem:[%s1657] sm:$0x3]
        %v1659 = vlaneseq
        %v1660 = vshrl.u32 %v1659, 7
        %v1661 = vsub.s32 1, %v1660
        %v1662 = vrot.slane %v1130, %v1661
        %v1664 = vsel %vm1137, %v1658, 0
        %1666 = vmatprep.subr.bf16.mxu0 0
        %1667 = vmatpush1.bf16.xpose.msra.mxu0 %v1664
        %1668 = vmatprep.subr.bf16.mxu0 0
        %1669 = vmatpush1.bf16.xpose.msra.mxu0 0
        %1670 = vmatprep.subr.bf16.mxu0 0
        %1671 = vmatpush1.bf16.xpose.msra.mxu0 0
        %1672 = vmatprep.subr.bf16.mxu0 0
        %1673 = vmatpush1.bf16.xpose.msra.mxu0 0
        %1674 = vmatprep.subr.bf16.mxu0 0
        %1675 = vmatpush1.bf16.xpose.msra.mxu0 0
        %1676 = vmatprep.subr.bf16.mxu0 0
        %1677 = vmatpush1.bf16.xpose.msra.mxu0 0
        %1678 = vmatprep.subr.bf16.mxu0 0
        %1679 = vmatpush1.bf16.xpose.msra.mxu0 0
        %1680 = vmatprep.subr.bf16.mxu0 0
        %1681 = vmatpush1.bf16.xpose.msra.mxu0 0
        %1682 = vmatprep.subr.bf16.mxu0 0
        %1683 = vmatpush1.bf16.xpose.msra.mxu0 0
        %1684 = vmatprep.subr.bf16.mxu0 0
        %1685 = vmatpush1.bf16.xpose.msra.mxu0 0
        %1686 = vmatprep.subr.bf16.mxu0 0
        %1687 = vmatpush1.bf16.xpose.msra.mxu0 0
        %1688 = vmatprep.subr.bf16.mxu0 0
        %1689 = vmatpush1.bf16.xpose.msra.mxu0 0
        %1690 = vmatprep.subr.bf16.mxu0 0
        %1691 = vmatpush1.bf16.xpose.msra.mxu0 0
        %1692 = vmatprep.subr.bf16.mxu0 0
        %1693 = vmatpush1.bf16.xpose.msra.mxu0 0
        %1694 = vmatprep.subr.bf16.mxu0 0
        %1695 = vmatpush1.bf16.xpose.msra.mxu0 0
        %1696 = vmatprep.subr.bf16.mxu0 0
        %1697 = vmatpush1.bf16.xpose.msra.mxu0 0
        %1698 = vmatprep.mubr.bf16.mxu0 0
        %1699 = vmatmul.mubr.bf16.gmra.mrb[0].mxu0 %v1139
        %v1700 = vpop.f32.mrb[0].mxu0
        %v1701 = vadd.f32 %v1662, %v1700
        %v1702 = vpop.f32.mrb[0].mxu0
        %v1703 = vpop.f32.mrb[0].mxu0
        %v1704 = vadd.f32 %v1662, %v1703
        %v1705 = vpop.f32.mrb[0].mxu0
        %1706 = vdwg.mxu0
        %s1707 = scalar_lea.vmem %s1005, 2
        %v1708 = vld [vmem:[%s1707] sm:$0x3]
        %v1709 = vlaneseq
        %v1710 = vshrl.u32 %v1709, 7
        %v1711 = vsub.s32 1, %v1710
        %v1712 = vrot.slane %v1131, %v1711
        %v1714 = vsel %vm1137, %v1708, 0
        %1716 = vmatprep.subr.bf16.mxu0 0
        %1717 = vmatpush1.bf16.xpose.msra.mxu0 %v1714
        %1718 = vmatprep.subr.bf16.mxu0 0
        %1719 = vmatpush1.bf16.xpose.msra.mxu0 0
        %1720 = vmatprep.subr.bf16.mxu0 0
        %1721 = vmatpush1.bf16.xpose.msra.mxu0 0
        %1722 = vmatprep.subr.bf16.mxu0 0
        %1723 = vmatpush1.bf16.xpose.msra.mxu0 0
        %1724 = vmatprep.subr.bf16.mxu0 0
        %1725 = vmatpush1.bf16.xpose.msra.mxu0 0
        %1726 = vmatprep.subr.bf16.mxu0 0
        %1727 = vmatpush1.bf16.xpose.msra.mxu0 0
        %1728 = vmatprep.subr.bf16.mxu0 0
        %1729 = vmatpush1.bf16.xpose.msra.mxu0 0
        %1730 = vmatprep.subr.bf16.mxu0 0
        %1731 = vmatpush1.bf16.xpose.msra.mxu0 0
        %1732 = vmatprep.subr.bf16.mxu0 0
        %1733 = vmatpush1.bf16.xpose.msra.mxu0 0
        %1734 = vmatprep.subr.bf16.mxu0 0
        %1735 = vmatpush1.bf16.xpose.msra.mxu0 0
        %1736 = vmatprep.subr.bf16.mxu0 0
        %1737 = vmatpush1.bf16.xpose.msra.mxu0 0
        %1738 = vmatprep.subr.bf16.mxu0 0
        %1739 = vmatpush1.bf16.xpose.msra.mxu0 0
        %1740 = vmatprep.subr.bf16.mxu0 0
        %1741 = vmatpush1.bf16.xpose.msra.mxu0 0
        %1742 = vmatprep.subr.bf16.mxu0 0
        %1743 = vmatpush1.bf16.xpose.msra.mxu0 0
        %1744 = vmatprep.subr.bf16.mxu0 0
        %1745 = vmatpush1.bf16.xpose.msra.mxu0 0
        %1746 = vmatprep.subr.bf16.mxu0 0
        %1747 = vmatpush1.bf16.xpose.msra.mxu0 0
        %1748 = vmatprep.mubr.bf16.mxu0 0
        %1749 = vmatmul.mubr.bf16.gmra.mrb[0].mxu0 %v1139
        %v1750 = vpop.f32.mrb[0].mxu0
        %v1751 = vadd.f32 %v1712, %v1750
        %v1752 = vpop.f32.mrb[0].mxu0
        %v1753 = vpop.f32.mrb[0].mxu0
        %v1754 = vadd.f32 %v1712, %v1753
        %v1755 = vpop.f32.mrb[0].mxu0
        %1756 = vdwg.mxu0
        %v1758 = vsel %vm1283, %v1651, 0
        %v1761 = vsel %vm1283, %v1701, 0
        %1763 = vmatprep.subr.mxu0 0.0
        %1764 = vmatpush1.xpose.msra.mxu0 %v1761
        %1765 = vmatprep.subr.mxu0 0.0
        %1766 = vmatpush1.xpose.msra.mxu0 0.0
        %1767 = vmatprep.subr.mxu0 0.0
        %1768 = vmatpush1.xpose.msra.mxu0 0.0
        %1769 = vmatprep.subr.mxu0 0.0
        %1770 = vmatpush1.xpose.msra.mxu0 0.0
        %1771 = vmatprep.subr.mxu0 0.0
        %1772 = vmatpush1.xpose.msra.mxu0 0.0
        %1773 = vmatprep.subr.mxu0 0.0
        %1774 = vmatpush1.xpose.msra.mxu0 0.0
        %1775 = vmatprep.subr.mxu0 0.0
        %1776 = vmatpush1.xpose.msra.mxu0 0.0
        %1777 = vmatprep.subr.mxu0 0.0
        %1778 = vmatpush1.xpose.msra.mxu0 0.0
        %1779 = vmatprep.subr.mxu0 0.0
        %1780 = vmatpush1.xpose.msra.mxu0 0.0
        %1781 = vmatprep.subr.mxu0 0.0
        %1782 = vmatpush1.xpose.msra.mxu0 0.0
        %1783 = vmatprep.subr.mxu0 0.0
        %1784 = vmatpush1.xpose.msra.mxu0 0.0
        %1785 = vmatprep.subr.mxu0 0.0
        %1786 = vmatpush1.xpose.msra.mxu0 0.0
        %1787 = vmatprep.subr.mxu0 0.0
        %1788 = vmatpush1.xpose.msra.mxu0 0.0
        %1789 = vmatprep.subr.mxu0 0.0
        %1790 = vmatpush1.xpose.msra.mxu0 0.0
        %1791 = vmatprep.subr.mxu0 0.0
        %1792 = vmatpush1.xpose.msra.mxu0 0.0
        %1793 = vmatprep.subr.mxu0 0.0
        %1794 = vmatpush1.xpose.msra.mxu0 0.0
        %1795 = vmatprep.subr.mxu0 0.0
        %1796 = vmatpush1.xpose.msra.mxu0 0.0
        %1797 = vmatprep.subr.mxu0 0.0
        %1798 = vmatpush1.xpose.msra.mxu0 0.0
        %1799 = vmatprep.subr.mxu0 0.0
        %1800 = vmatpush1.xpose.msra.mxu0 0.0
        %1801 = vmatprep.subr.mxu0 0.0
        %1802 = vmatpush1.xpose.msra.mxu0 0.0
        %1803 = vmatprep.subr.mxu0 0.0
        %1804 = vmatpush1.xpose.msra.mxu0 0.0
        %1805 = vmatprep.subr.mxu0 0.0
        %1806 = vmatpush1.xpose.msra.mxu0 0.0
        %1807 = vmatprep.subr.mxu0 0.0
        %1808 = vmatpush1.xpose.msra.mxu0 0.0
        %1809 = vmatprep.subr.mxu0 0.0
        %1810 = vmatpush1.xpose.msra.mxu0 0.0
        %1811 = vmatprep.subr.mxu0 0.0
        %1812 = vmatpush1.xpose.msra.mxu0 0.0
        %1813 = vmatprep.subr.mxu0 0.0
        %1814 = vmatpush1.xpose.msra.mxu0 0.0
        %1815 = vmatprep.subr.mxu0 0.0
        %1816 = vmatpush1.xpose.msra.mxu0 0.0
        %1817 = vmatprep.subr.mxu0 0.0
        %1818 = vmatpush1.xpose.msra.mxu0 0.0
        %1819 = vmatprep.subr.mxu0 0.0
        %1820 = vmatpush1.xpose.msra.mxu0 0.0
        %1821 = vmatprep.subr.mxu0 0.0
        %1822 = vmatpush1.xpose.msra.mxu0 0.0
        %1823 = vmatprep.subr.mxu0 0.0
        %1824 = vmatpush1.xpose.msra.mxu0 0.0
        %1825 = vmatprep.subr.mxu0 0.0
        %1826 = vmatpush1.xpose.msra.mxu0 0.0
        %1827 = vmatprep.mubr.f32.mxu0 0.0
        %1828 = vmatmul.mubr.f32.gmra.mrb[0].mxu0 %v1758
        %v1829 = vpop.f32.mrb[0].mxu0
        %v1830 = vadd.f32 0.0, %v1829
        %v1831 = vpop.f32.mrb[0].mxu0
        %1832 = vdwg.mxu0
        %v1834 = vsel %vm1283, %v1654, 0
        %v1837 = vsel %vm1283, %v1704, 0
        %1839 = vmatprep.subr.mxu0 0.0
        %1840 = vmatpush1.xpose.msra.mxu0 %v1837
        %1841 = vmatprep.subr.mxu0 0.0
        %1842 = vmatpush1.xpose.msra.mxu0 0.0
        %1843 = vmatprep.subr.mxu0 0.0
        %1844 = vmatpush1.xpose.msra.mxu0 0.0
        %1845 = vmatprep.subr.mxu0 0.0
        %1846 = vmatpush1.xpose.msra.mxu0 0.0
        %1847 = vmatprep.subr.mxu0 0.0
        %1848 = vmatpush1.xpose.msra.mxu0 0.0
        %1849 = vmatprep.subr.mxu0 0.0
        %1850 = vmatpush1.xpose.msra.mxu0 0.0
        %1851 = vmatprep.subr.mxu0 0.0
        %1852 = vmatpush1.xpose.msra.mxu0 0.0
        %1853 = vmatprep.subr.mxu0 0.0
        %1854 = vmatpush1.xpose.msra.mxu0 0.0
        %1855 = vmatprep.subr.mxu0 0.0
        %1856 = vmatpush1.xpose.msra.mxu0 0.0
        %1857 = vmatprep.subr.mxu0 0.0
        %1858 = vmatpush1.xpose.msra.mxu0 0.0
        %1859 = vmatprep.subr.mxu0 0.0
        %1860 = vmatpush1.xpose.msra.mxu0 0.0
        %1861 = vmatprep.subr.mxu0 0.0
        %1862 = vmatpush1.xpose.msra.mxu0 0.0
        %1863 = vmatprep.subr.mxu0 0.0
        %1864 = vmatpush1.xpose.msra.mxu0 0.0
        %1865 = vmatprep.subr.mxu0 0.0
        %1866 = vmatpush1.xpose.msra.mxu0 0.0
        %1867 = vmatprep.subr.mxu0 0.0
        %1868 = vmatpush1.xpose.msra.mxu0 0.0
        %1869 = vmatprep.subr.mxu0 0.0
        %1870 = vmatpush1.xpose.msra.mxu0 0.0
        %1871 = vmatprep.subr.mxu0 0.0
        %1872 = vmatpush1.xpose.msra.mxu0 0.0
        %1873 = vmatprep.subr.mxu0 0.0
        %1874 = vmatpush1.xpose.msra.mxu0 0.0
        %1875 = vmatprep.subr.mxu0 0.0
        %1876 = vmatpush1.xpose.msra.mxu0 0.0
        %1877 = vmatprep.subr.mxu0 0.0
        %1878 = vmatpush1.xpose.msra.mxu0 0.0
        %1879 = vmatprep.subr.mxu0 0.0
        %1880 = vmatpush1.xpose.msra.mxu0 0.0
        %1881 = vmatprep.subr.mxu0 0.0
        %1882 = vmatpush1.xpose.msra.mxu0 0.0
        %1883 = vmatprep.subr.mxu0 0.0
        %1884 = vmatpush1.xpose.msra.mxu0 0.0
        %1885 = vmatprep.subr.mxu0 0.0
        %1886 = vmatpush1.xpose.msra.mxu0 0.0
        %1887 = vmatprep.subr.mxu0 0.0
        %1888 = vmatpush1.xpose.msra.mxu0 0.0
        %1889 = vmatprep.subr.mxu0 0.0
        %1890 = vmatpush1.xpose.msra.mxu0 0.0
        %1891 = vmatprep.subr.mxu0 0.0
        %1892 = vmatpush1.xpose.msra.mxu0 0.0
        %1893 = vmatprep.subr.mxu0 0.0
        %1894 = vmatpush1.xpose.msra.mxu0 0.0
        %1895 = vmatprep.subr.mxu0 0.0
        %1896 = vmatpush1.xpose.msra.mxu0 0.0
        %1897 = vmatprep.subr.mxu0 0.0
        %1898 = vmatpush1.xpose.msra.mxu0 0.0
        %1899 = vmatprep.subr.mxu0 0.0
        %1900 = vmatpush1.xpose.msra.mxu0 0.0
        %1901 = vmatprep.subr.mxu0 0.0
        %1902 = vmatpush1.xpose.msra.mxu0 0.0
        %1903 = vmatprep.mubr.f32.mxu0 0.0
        %1904 = vmatmul.mubr.f32.gmra.mrb[0].mxu0 %v1834
        %v1905 = vpop.f32.mrb[0].mxu0
        %v1906 = vadd.f32 0.0, %v1905
        %v1907 = vpop.f32.mrb[0].mxu0
        %1908 = vdwg.mxu0
        %v1909 = vsel %vm1436, %v1830, -inf
        %1910 = vmax.xlane.f32.xlu0 %v1909
        %v1911 = vpop.xlane.xlu0 %1910
        %v1912 = vsel %vm1436, %v1906, -inf
        %1913 = vmax.xlane.f32.xlu0 %v1912
        %v1914 = vpop.xlane.xlu0 %1913
        %v1915 = vsub.f32 %v1830, %v1911
        %v1916 = vsub.f32 %v1906, %v1914
        %v1917 = vmul.f32 %v1915, 1.442695
        %v1918 = vpow.pop %v1917
        %v1919 = vmul.f32 %v1916, 1.442695
        %v1920 = vpow.pop %v1919
        %v1921 = vsel %vm1436, %v1918, 0.0
        %1922 = vadd.xlane.f32.xlu0 %v1921
        %v1923 = vpop.xlane.xlu0 %1922
        %v1924 = vsel %vm1436, %v1920, 0.0
        %1925 = vadd.xlane.f32.xlu0 %v1924
        %v1926 = vpop.xlane.xlu0 %1925
        %v1927 = vrcp.pop %v1923
        %v1928 = vrcp.pop %v1926
        %v1929 = vmul.f32 %v1918, %v1927
        %v1930 = vmul.f32 %v1920, %v1928
        %v1932 = vsel %vm1436, %v1929, 0
        %1934 = vmatprep.subr.mxu0 0.0
        %1935 = vmatpush1.msra.mxu0 %v1751
        %1936 = vmatprep.subr.mxu0 0.0
        %1937 = vmatpush1.msra.mxu0 0.0
        %1938 = vmatprep.subr.mxu0 0.0
        %1939 = vmatpush1.msra.mxu0 0.0
        %1940 = vmatprep.subr.mxu0 0.0
        %1941 = vmatpush1.msra.mxu0 0.0
        %1942 = vmatprep.subr.mxu0 0.0
        %1943 = vmatpush1.msra.mxu0 0.0
        %1944 = vmatprep.subr.mxu0 0.0
        %1945 = vmatpush1.msra.mxu0 0.0
        %1946 = vmatprep.subr.mxu0 0.0
        %1947 = vmatpush1.msra.mxu0 0.0
        %1948 = vmatprep.subr.mxu0 0.0
        %1949 = vmatpush1.msra.mxu0 0.0
        %1950 = vmatprep.subr.mxu0 0.0
        %1951 = vmatpush1.msra.mxu0 0.0
        %1952 = vmatprep.subr.mxu0 0.0
        %1953 = vmatpush1.msra.mxu0 0.0
        %1954 = vmatprep.subr.mxu0 0.0
        %1955 = vmatpush1.msra.mxu0 0.0
        %1956 = vmatprep.subr.mxu0 0.0
        %1957 = vmatpush1.msra.mxu0 0.0
        %1958 = vmatprep.subr.mxu0 0.0
        %1959 = vmatpush1.msra.mxu0 0.0
        %1960 = vmatprep.subr.mxu0 0.0
        %1961 = vmatpush1.msra.mxu0 0.0
        %1962 = vmatprep.subr.mxu0 0.0
        %1963 = vmatpush1.msra.mxu0 0.0
        %1964 = vmatprep.subr.mxu0 0.0
        %1965 = vmatpush1.msra.mxu0 0.0
        %1966 = vmatprep.subr.mxu0 0.0
        %1967 = vmatpush1.msra.mxu0 0.0
        %1968 = vmatprep.subr.mxu0 0.0
        %1969 = vmatpush1.msra.mxu0 0.0
        %1970 = vmatprep.subr.mxu0 0.0
        %1971 = vmatpush1.msra.mxu0 0.0
        %1972 = vmatprep.subr.mxu0 0.0
        %1973 = vmatpush1.msra.mxu0 0.0
        %1974 = vmatprep.subr.mxu0 0.0
        %1975 = vmatpush1.msra.mxu0 0.0
        %1976 = vmatprep.subr.mxu0 0.0
        %1977 = vmatpush1.msra.mxu0 0.0
        %1978 = vmatprep.subr.mxu0 0.0
        %1979 = vmatpush1.msra.mxu0 0.0
        %1980 = vmatprep.subr.mxu0 0.0
        %1981 = vmatpush1.msra.mxu0 0.0
        %1982 = vmatprep.subr.mxu0 0.0
        %1983 = vmatpush1.msra.mxu0 0.0
        %1984 = vmatprep.subr.mxu0 0.0
        %1985 = vmatpush1.msra.mxu0 0.0
        %1986 = vmatprep.subr.mxu0 0.0
        %1987 = vmatpush1.msra.mxu0 0.0
        %1988 = vmatprep.subr.mxu0 0.0
        %1989 = vmatpush1.msra.mxu0 0.0
        %1990 = vmatprep.subr.mxu0 0.0
        %1991 = vmatpush1.msra.mxu0 0.0
        %1992 = vmatprep.subr.mxu0 0.0
        %1993 = vmatpush1.msra.mxu0 0.0
        %1994 = vmatprep.subr.mxu0 0.0
        %1995 = vmatpush1.msra.mxu0 0.0
        %1996 = vmatprep.subr.mxu0 0.0
        %1997 = vmatpush1.msra.mxu0 0.0
        %1998 = vmatprep.mubr.f32.mxu0 0.0
        %1999 = vmatmul.mubr.f32.gmra.mrb[0].mxu0 %v1932
        %v2000 = vpop.f32.mrb[0].mxu0
        %v2001 = vadd.f32 0.0, %v2000
        %v2002 = vpop.f32.mrb[0].mxu0
        %2003 = vdwg.mxu0
        %v2005 = vsel %vm1436, %v1930, 0
        %2007 = vmatprep.subr.mxu0 0.0
        %2008 = vmatpush1.msra.mxu0 %v1754
        %2009 = vmatprep.subr.mxu0 0.0
        %2010 = vmatpush1.msra.mxu0 0.0
        %2011 = vmatprep.subr.mxu0 0.0
        %2012 = vmatpush1.msra.mxu0 0.0
        %2013 = vmatprep.subr.mxu0 0.0
        %2014 = vmatpush1.msra.mxu0 0.0
        %2015 = vmatprep.subr.mxu0 0.0
        %2016 = vmatpush1.msra.mxu0 0.0
        %2017 = vmatprep.subr.mxu0 0.0
        %2018 = vmatpush1.msra.mxu0 0.0
        %2019 = vmatprep.subr.mxu0 0.0
        %2020 = vmatpush1.msra.mxu0 0.0
        %2021 = vmatprep.subr.mxu0 0.0
        %2022 = vmatpush1.msra.mxu0 0.0
        %2023 = vmatprep.subr.mxu0 0.0
        %2024 = vmatpush1.msra.mxu0 0.0
        %2025 = vmatprep.subr.mxu0 0.0
        %2026 = vmatpush1.msra.mxu0 0.0
        %2027 = vmatprep.subr.mxu0 0.0
        %2028 = vmatpush1.msra.mxu0 0.0
        %2029 = vmatprep.subr.mxu0 0.0
        %2030 = vmatpush1.msra.mxu0 0.0
        %2031 = vmatprep.subr.mxu0 0.0
        %2032 = vmatpush1.msra.mxu0 0.0
        %2033 = vmatprep.subr.mxu0 0.0
        %2034 = vmatpush1.msra.mxu0 0.0
        %2035 = vmatprep.subr.mxu0 0.0
        %2036 = vmatpush1.msra.mxu0 0.0
        %2037 = vmatprep.subr.mxu0 0.0
        %2038 = vmatpush1.msra.mxu0 0.0
        %2039 = vmatprep.subr.mxu0 0.0
        %2040 = vmatpush1.msra.mxu0 0.0
        %2041 = vmatprep.subr.mxu0 0.0
        %2042 = vmatpush1.msra.mxu0 0.0
        %2043 = vmatprep.subr.mxu0 0.0
        %2044 = vmatpush1.msra.mxu0 0.0
        %2045 = vmatprep.subr.mxu0 0.0
        %2046 = vmatpush1.msra.mxu0 0.0
        %2047 = vmatprep.subr.mxu0 0.0
        %2048 = vmatpush1.msra.mxu0 0.0
        %2049 = vmatprep.subr.mxu0 0.0
        %2050 = vmatpush1.msra.mxu0 0.0
        %2051 = vmatprep.subr.mxu0 0.0
        %2052 = vmatpush1.msra.mxu0 0.0
        %2053 = vmatprep.subr.mxu0 0.0
        %2054 = vmatpush1.msra.mxu0 0.0
        %2055 = vmatprep.subr.mxu0 0.0
        %2056 = vmatpush1.msra.mxu0 0.0
        %2057 = vmatprep.subr.mxu0 0.0
        %2058 = vmatpush1.msra.mxu0 0.0
        %2059 = vmatprep.subr.mxu0 0.0
        %2060 = vmatpush1.msra.mxu0 0.0
        %2061 = vmatprep.subr.mxu0 0.0
        %2062 = vmatpush1.msra.mxu0 0.0
        %2063 = vmatprep.subr.mxu0 0.0
        %2064 = vmatpush1.msra.mxu0 0.0
        %2065 = vmatprep.subr.mxu0 0.0
        %2066 = vmatpush1.msra.mxu0 0.0
        %2067 = vmatprep.subr.mxu0 0.0
        %2068 = vmatpush1.msra.mxu0 0.0
        %2069 = vmatprep.subr.mxu0 0.0
        %2070 = vmatpush1.msra.mxu0 0.0
        %2071 = vmatprep.mubr.f32.mxu0 0.0
        %2072 = vmatmul.mubr.f32.gmra.mrb[0].mxu0 %v2005
        %v2073 = vpop.f32.mrb[0].mxu0
        %v2074 = vadd.f32 0.0, %v2073
        %v2075 = vpop.f32.mrb[0].mxu0
        %2076 = vdwg.mxu0
        %v2077 = vpack.c.bf16 %v2074, %v2001
        %s2078 = scalar_lea.vmem %s827, 2 [#allocation11]
        %v2079 = vld [vmem:[%s2078] sm:$0x3]
        %v2081 = vsel %vm1283, %v2077, 0
        %vm2083 = vcmask 1041408
        %v2085 = vsel %vm2083, %v2079, 0
        %2087 = vmatprep.subr.bf16.mxu0 0
        %2088 = vmatpush1.bf16.msra.mxu0 %v2085
        %2089 = vmatprep.subr.bf16.mxu0 0
        %2090 = vmatpush1.bf16.msra.mxu0 0
        %2091 = vmatprep.subr.bf16.mxu0 0
        %2092 = vmatpush1.bf16.msra.mxu0 0
        %2093 = vmatprep.subr.bf16.mxu0 0
        %2094 = vmatpush1.bf16.msra.mxu0 0
        %2095 = vmatprep.subr.bf16.mxu0 0
        %2096 = vmatpush1.bf16.msra.mxu0 0
        %2097 = vmatprep.subr.bf16.mxu0 0
        %2098 = vmatpush1.bf16.msra.mxu0 0
        %2099 = vmatprep.subr.bf16.mxu0 0
        %2100 = vmatpush1.bf16.msra.mxu0 0
        %2101 = vmatprep.subr.bf16.mxu0 0
        %2102 = vmatpush1.bf16.msra.mxu0 0
        %2103 = vmatprep.subr.bf16.mxu0 0
        %2104 = vmatpush1.bf16.msra.mxu0 0
        %2105 = vmatprep.subr.bf16.mxu0 0
        %2106 = vmatpush1.bf16.msra.mxu0 0
        %2107 = vmatprep.subr.bf16.mxu0 0
        %2108 = vmatpush1.bf16.msra.mxu0 0
        %2109 = vmatprep.subr.bf16.mxu0 0
        %2110 = vmatpush1.bf16.msra.mxu0 0
        %2111 = vmatprep.subr.bf16.mxu0 0
        %2112 = vmatpush1.bf16.msra.mxu0 0
        %2113 = vmatprep.subr.bf16.mxu0 0
        %2114 = vmatpush1.bf16.msra.mxu0 0
        %2115 = vmatprep.subr.bf16.mxu0 0
        %2116 = vmatpush1.bf16.msra.mxu0 0
        %2117 = vmatprep.subr.bf16.mxu0 0
        %2118 = vmatpush1.bf16.msra.mxu0 0
        %2119 = vmatprep.mubr.bf16.mxu0 0
        %2120 = vmatmul.mubr.bf16.gmra.mrb[0].mxu0 %v2081
        %v2121 = vpop.f32.mrb[0].mxu0
        %v2122 = vadd.f32 0.0, %v2121
        %v2123 = vpop.f32.mrb[0].mxu0
        %v2124 = vpop.f32.mrb[0].mxu0
        %v2125 = vadd.f32 0.0, %v2124
        %v2126 = vpop.f32.mrb[0].mxu0
        %2127 = vdwg.mxu0
        %v2129 = vsel %vm1283, %v1605, 0
        %v2132 = vsel %vm2083, %v1606, 0
        %2134 = vmatprep.subr.bf16.mxu0 0
        %2135 = vmatpush1.bf16.msra.mxu0 %v2132
        %2136 = vmatprep.subr.bf16.mxu0 0
        %2137 = vmatpush1.bf16.msra.mxu0 0
        %2138 = vmatprep.subr.bf16.mxu0 0
        %2139 = vmatpush1.bf16.msra.mxu0 0
        %2140 = vmatprep.subr.bf16.mxu0 0
        %2141 = vmatpush1.bf16.msra.mxu0 0
        %2142 = vmatprep.subr.bf16.mxu0 0
        %2143 = vmatpush1.bf16.msra.mxu0 0
        %2144 = vmatprep.subr.bf16.mxu0 0
        %2145 = vmatpush1.bf16.msra.mxu0 0
        %2146 = vmatprep.subr.bf16.mxu0 0
        %2147 = vmatpush1.bf16.msra.mxu0 0
        %2148 = vmatprep.subr.bf16.mxu0 0
        %2149 = vmatpush1.bf16.msra.mxu0 0
        %2150 = vmatprep.subr.bf16.mxu0 0
        %2151 = vmatpush1.bf16.msra.mxu0 0
        %2152 = vmatprep.subr.bf16.mxu0 0
        %2153 = vmatpush1.bf16.msra.mxu0 0
        %2154 = vmatprep.subr.bf16.mxu0 0
        %2155 = vmatpush1.bf16.msra.mxu0 0
        %2156 = vmatprep.subr.bf16.mxu0 0
        %2157 = vmatpush1.bf16.msra.mxu0 0
        %2158 = vmatprep.subr.bf16.mxu0 0
        %2159 = vmatpush1.bf16.msra.mxu0 0
        %2160 = vmatprep.subr.bf16.mxu0 0
        %2161 = vmatpush1.bf16.msra.mxu0 0
        %2162 = vmatprep.subr.bf16.mxu0 0
        %2163 = vmatpush1.bf16.msra.mxu0 0
        %2164 = vmatprep.subr.bf16.mxu0 0
        %2165 = vmatpush1.bf16.msra.mxu0 0
        %2166 = vmatprep.mubr.bf16.mxu0 0
        %2167 = vmatmul.mubr.bf16.gmra.mrb[0].mxu0 %v2129
        %v2168 = vpop.f32.mrb[0].mxu0
        %v2169 = vadd.f32 %v2122, %v2168
        %v2170 = vpop.f32.mrb[0].mxu0
        %v2171 = vpop.f32.mrb[0].mxu0
        %v2172 = vadd.f32 %v2125, %v2171
        %v2173 = vpop.f32.mrb[0].mxu0
        %2174 = vdwg.mxu0
        %s2175 = scalar_lea.vmem %s987, 4
        %v2176 = vld [vmem:[%s2175] sm:$0x3]
        %v2177 = vlaneseq
        %v2178 = vshrl.u32 %v2177, 7
        %v2179 = vsub.s32 2, %v2178
        %v2180 = vrot.slane %v1129, %v2179
        %v2182 = vsel %vm1137, %v2176, 0
        %2184 = vmatprep.subr.bf16.mxu0 0
        %2185 = vmatpush1.bf16.xpose.msra.mxu0 %v2182
        %2186 = vmatprep.subr.bf16.mxu0 0
        %2187 = vmatpush1.bf16.xpose.msra.mxu0 0
        %2188 = vmatprep.subr.bf16.mxu0 0
        %2189 = vmatpush1.bf16.xpose.msra.mxu0 0
        %2190 = vmatprep.subr.bf16.mxu0 0
        %2191 = vmatpush1.bf16.xpose.msra.mxu0 0
        %2192 = vmatprep.subr.bf16.mxu0 0
        %2193 = vmatpush1.bf16.xpose.msra.mxu0 0
        %2194 = vmatprep.subr.bf16.mxu0 0
        %2195 = vmatpush1.bf16.xpose.msra.mxu0 0
        %2196 = vmatprep.subr.bf16.mxu0 0
        %2197 = vmatpush1.bf16.xpose.msra.mxu0 0
        %2198 = vmatprep.subr.bf16.mxu0 0
        %2199 = vmatpush1.bf16.xpose.msra.mxu0 0
        %2200 = vmatprep.subr.bf16.mxu0 0
        %2201 = vmatpush1.bf16.xpose.msra.mxu0 0
        %2202 = vmatprep.subr.bf16.mxu0 0
        %2203 = vmatpush1.bf16.xpose.msra.mxu0 0
        %2204 = vmatprep.subr.bf16.mxu0 0
        %2205 = vmatpush1.bf16.xpose.msra.mxu0 0
        %2206 = vmatprep.subr.bf16.mxu0 0
        %2207 = vmatpush1.bf16.xpose.msra.mxu0 0
        %2208 = vmatprep.subr.bf16.mxu0 0
        %2209 = vmatpush1.bf16.xpose.msra.mxu0 0
        %2210 = vmatprep.subr.bf16.mxu0 0
        %2211 = vmatpush1.bf16.xpose.msra.mxu0 0
        %2212 = vmatprep.subr.bf16.mxu0 0
        %2213 = vmatpush1.bf16.xpose.msra.mxu0 0
        %2214 = vmatprep.subr.bf16.mxu0 0
        %2215 = vmatpush1.bf16.xpose.msra.mxu0 0
        %2216 = vmatprep.mubr.bf16.mxu0 0
        %2217 = vmatmul.mubr.bf16.gmra.mrb[0].mxu0 %v1139
        %v2218 = vpop.f32.mrb[0].mxu0
        %v2219 = vadd.f32 %v2180, %v2218
        %v2220 = vpop.f32.mrb[0].mxu0
        %v2221 = vpop.f32.mrb[0].mxu0
        %v2222 = vadd.f32 %v2180, %v2221
        %v2223 = vpop.f32.mrb[0].mxu0
        %2224 = vdwg.mxu0
        %s2225 = scalar_lea.vmem %s996, 4
        %v2226 = vld [vmem:[%s2225] sm:$0x3]
        %v2227 = vlaneseq
        %v2228 = vshrl.u32 %v2227, 7
        %v2229 = vsub.s32 2, %v2228
        %v2230 = vrot.slane %v1130, %v2229
        %v2232 = vsel %vm1137, %v2226, 0
        %2234 = vmatprep.subr.bf16.mxu0 0
        %2235 = vmatpush1.bf16.xpose.msra.mxu0 %v2232
        %2236 = vmatprep.subr.bf16.mxu0 0
        %2237 = vmatpush1.bf16.xpose.msra.mxu0 0
        %2238 = vmatprep.subr.bf16.mxu0 0
        %2239 = vmatpush1.bf16.xpose.msra.mxu0 0
        %2240 = vmatprep.subr.bf16.mxu0 0
        %2241 = vmatpush1.bf16.xpose.msra.mxu0 0
        %2242 = vmatprep.subr.bf16.mxu0 0
        %2243 = vmatpush1.bf16.xpose.msra.mxu0 0
        %2244 = vmatprep.subr.bf16.mxu0 0
        %2245 = vmatpush1.bf16.xpose.msra.mxu0 0
        %2246 = vmatprep.subr.bf16.mxu0 0
        %2247 = vmatpush1.bf16.xpose.msra.mxu0 0
        %2248 = vmatprep.subr.bf16.mxu0 0
        %2249 = vmatpush1.bf16.xpose.msra.mxu0 0
        %2250 = vmatprep.subr.bf16.mxu0 0
        %2251 = vmatpush1.bf16.xpose.msra.mxu0 0
        %2252 = vmatprep.subr.bf16.mxu0 0
        %2253 = vmatpush1.bf16.xpose.msra.mxu0 0
        %2254 = vmatprep.subr.bf16.mxu0 0
        %2255 = vmatpush1.bf16.xpose.msra.mxu0 0
        %2256 = vmatprep.subr.bf16.mxu0 0
        %2257 = vmatpush1.bf16.xpose.msra.mxu0 0
        %2258 = vmatprep.subr.bf16.mxu0 0
        %2259 = vmatpush1.bf16.xpose.msra.mxu0 0
        %2260 = vmatprep.subr.bf16.mxu0 0
        %2261 = vmatpush1.bf16.xpose.msra.mxu0 0
        %2262 = vmatprep.subr.bf16.mxu0 0
        %2263 = vmatpush1.bf16.xpose.msra.mxu0 0
        %2264 = vmatprep.subr.bf16.mxu0 0
        %2265 = vmatpush1.bf16.xpose.msra.mxu0 0
        %2266 = vmatprep.mubr.bf16.mxu0 0
        %2267 = vmatmul.mubr.bf16.gmra.mrb[0].mxu0 %v1139
        %v2268 = vpop.f32.mrb[0].mxu0
        %v2269 = vadd.f32 %v2230, %v2268
        %v2270 = vpop.f32.mrb[0].mxu0
        %v2271 = vpop.f32.mrb[0].mxu0
        %v2272 = vadd.f32 %v2230, %v2271
        %v2273 = vpop.f32.mrb[0].mxu0
        %2274 = vdwg.mxu0
        %s2275 = scalar_lea.vmem %s1005, 4
        %v2276 = vld [vmem:[%s2275] sm:$0x3]
        %v2277 = vlaneseq
        %v2278 = vshrl.u32 %v2277, 7
        %v2279 = vsub.s32 2, %v2278
        %v2280 = vrot.slane %v1131, %v2279
        %v2282 = vsel %vm1137, %v2276, 0
        %2284 = vmatprep.subr.bf16.mxu0 0
        %2285 = vmatpush1.bf16.xpose.msra.mxu0 %v2282
        %2286 = vmatprep.subr.bf16.mxu0 0
        %2287 = vmatpush1.bf16.xpose.msra.mxu0 0
        %2288 = vmatprep.subr.bf16.mxu0 0
        %2289 = vmatpush1.bf16.xpose.msra.mxu0 0
        %2290 = vmatprep.subr.bf16.mxu0 0
        %2291 = vmatpush1.bf16.xpose.msra.mxu0 0
        %2292 = vmatprep.subr.bf16.mxu0 0
        %2293 = vmatpush1.bf16.xpose.msra.mxu0 0
        %2294 = vmatprep.subr.bf16.mxu0 0
        %2295 = vmatpush1.bf16.xpose.msra.mxu0 0
        %2296 = vmatprep.subr.bf16.mxu0 0
        %2297 = vmatpush1.bf16.xpose.msra.mxu0 0
        %2298 = vmatprep.subr.bf16.mxu0 0
        %2299 = vmatpush1.bf16.xpose.msra.mxu0 0
        %2300 = vmatprep.subr.bf16.mxu0 0
        %2301 = vmatpush1.bf16.xpose.msra.mxu0 0
        %2302 = vmatprep.subr.bf16.mxu0 0
        %2303 = vmatpush1.bf16.xpose.msra.mxu0 0
        %2304 = vmatprep.subr.bf16.mxu0 0
        %2305 = vmatpush1.bf16.xpose.msra.mxu0 0
        %2306 = vmatprep.subr.bf16.mxu0 0
        %2307 = vmatpush1.bf16.xpose.msra.mxu0 0
        %2308 = vmatprep.subr.bf16.mxu0 0
        %2309 = vmatpush1.bf16.xpose.msra.mxu0 0
        %2310 = vmatprep.subr.bf16.mxu0 0
        %2311 = vmatpush1.bf16.xpose.msra.mxu0 0
        %2312 = vmatprep.subr.bf16.mxu0 0
        %2313 = vmatpush1.bf16.xpose.msra.mxu0 0
        %2314 = vmatprep.subr.bf16.mxu0 0
        %2315 = vmatpush1.bf16.xpose.msra.mxu0 0
        %2316 = vmatprep.mubr.bf16.mxu0 0
        %2317 = vmatmul.mubr.bf16.gmra.mrb[0].mxu0 %v1139
        %v2318 = vpop.f32.mrb[0].mxu0
        %v2319 = vadd.f32 %v2280, %v2318
        %v2320 = vpop.f32.mrb[0].mxu0
        %v2321 = vpop.f32.mrb[0].mxu0
        %v2322 = vadd.f32 %v2280, %v2321
        %v2323 = vpop.f32.mrb[0].mxu0
        %2324 = vdwg.mxu0
        %v2326 = vsel %vm1283, %v2219, 0
        %v2329 = vsel %vm1283, %v2269, 0
        %2331 = vmatprep.subr.mxu0 0.0
        %2332 = vmatpush1.xpose.msra.mxu0 %v2329
        %2333 = vmatprep.subr.mxu0 0.0
        %2334 = vmatpush1.xpose.msra.mxu0 0.0
        %2335 = vmatprep.subr.mxu0 0.0
        %2336 = vmatpush1.xpose.msra.mxu0 0.0
        %2337 = vmatprep.subr.mxu0 0.0
        %2338 = vmatpush1.xpose.msra.mxu0 0.0
        %2339 = vmatprep.subr.mxu0 0.0
        %2340 = vmatpush1.xpose.msra.mxu0 0.0
        %2341 = vmatprep.subr.mxu0 0.0
        %2342 = vmatpush1.xpose.msra.mxu0 0.0
        %2343 = vmatprep.subr.mxu0 0.0
        %2344 = vmatpush1.xpose.msra.mxu0 0.0
        %2345 = vmatprep.subr.mxu0 0.0
        %2346 = vmatpush1.xpose.msra.mxu0 0.0
        %2347 = vmatprep.subr.mxu0 0.0
        %2348 = vmatpush1.xpose.msra.mxu0 0.0
        %2349 = vmatprep.subr.mxu0 0.0
        %2350 = vmatpush1.xpose.msra.mxu0 0.0
        %2351 = vmatprep.subr.mxu0 0.0
        %2352 = vmatpush1.xpose.msra.mxu0 0.0
        %2353 = vmatprep.subr.mxu0 0.0
        %2354 = vmatpush1.xpose.msra.mxu0 0.0
        %2355 = vmatprep.subr.mxu0 0.0
        %2356 = vmatpush1.xpose.msra.mxu0 0.0
        %2357 = vmatprep.subr.mxu0 0.0
        %2358 = vmatpush1.xpose.msra.mxu0 0.0
        %2359 = vmatprep.subr.mxu0 0.0
        %2360 = vmatpush1.xpose.msra.mxu0 0.0
        %2361 = vmatprep.subr.mxu0 0.0
        %2362 = vmatpush1.xpose.msra.mxu0 0.0
        %2363 = vmatprep.subr.mxu0 0.0
        %2364 = vmatpush1.xpose.msra.mxu0 0.0
        %2365 = vmatprep.subr.mxu0 0.0
        %2366 = vmatpush1.xpose.msra.mxu0 0.0
        %2367 = vmatprep.subr.mxu0 0.0
        %2368 = vmatpush1.xpose.msra.mxu0 0.0
        %2369 = vmatprep.subr.mxu0 0.0
        %2370 = vmatpush1.xpose.msra.mxu0 0.0
        %2371 = vmatprep.subr.mxu0 0.0
        %2372 = vmatpush1.xpose.msra.mxu0 0.0
        %2373 = vmatprep.subr.mxu0 0.0
        %2374 = vmatpush1.xpose.msra.mxu0 0.0
        %2375 = vmatprep.subr.mxu0 0.0
        %2376 = vmatpush1.xpose.msra.mxu0 0.0
        %2377 = vmatprep.subr.mxu0 0.0
        %2378 = vmatpush1.xpose.msra.mxu0 0.0
        %2379 = vmatprep.subr.mxu0 0.0
        %2380 = vmatpush1.xpose.msra.mxu0 0.0
        %2381 = vmatprep.subr.mxu0 0.0
        %2382 = vmatpush1.xpose.msra.mxu0 0.0
        %2383 = vmatprep.subr.mxu0 0.0
        %2384 = vmatpush1.xpose.msra.mxu0 0.0
        %2385 = vmatprep.subr.mxu0 0.0
        %2386 = vmatpush1.xpose.msra.mxu0 0.0
        %2387 = vmatprep.subr.mxu0 0.0
        %2388 = vmatpush1.xpose.msra.mxu0 0.0
        %2389 = vmatprep.subr.mxu0 0.0
        %2390 = vmatpush1.xpose.msra.mxu0 0.0
        %2391 = vmatprep.subr.mxu0 0.0
        %2392 = vmatpush1.xpose.msra.mxu0 0.0
        %2393 = vmatprep.subr.mxu0 0.0
        %2394 = vmatpush1.xpose.msra.mxu0 0.0
        %2395 = vmatprep.mubr.f32.mxu0 0.0
        %2396 = vmatmul.mubr.f32.gmra.mrb[0].mxu0 %v2326
        %v2397 = vpop.f32.mrb[0].mxu0
        %v2398 = vadd.f32 0.0, %v2397
        %v2399 = vpop.f32.mrb[0].mxu0
        %2400 = vdwg.mxu0
        %v2402 = vsel %vm1283, %v2222, 0
        %v2405 = vsel %vm1283, %v2272, 0
        %2407 = vmatprep.subr.mxu0 0.0
        %2408 = vmatpush1.xpose.msra.mxu0 %v2405
        %2409 = vmatprep.subr.mxu0 0.0
        %2410 = vmatpush1.xpose.msra.mxu0 0.0
        %2411 = vmatprep.subr.mxu0 0.0
        %2412 = vmatpush1.xpose.msra.mxu0 0.0
        %2413 = vmatprep.subr.mxu0 0.0
        %2414 = vmatpush1.xpose.msra.mxu0 0.0
        %2415 = vmatprep.subr.mxu0 0.0
        %2416 = vmatpush1.xpose.msra.mxu0 0.0
        %2417 = vmatprep.subr.mxu0 0.0
        %2418 = vmatpush1.xpose.msra.mxu0 0.0
        %2419 = vmatprep.subr.mxu0 0.0
        %2420 = vmatpush1.xpose.msra.mxu0 0.0
        %2421 = vmatprep.subr.mxu0 0.0
        %2422 = vmatpush1.xpose.msra.mxu0 0.0
        %2423 = vmatprep.subr.mxu0 0.0
        %2424 = vmatpush1.xpose.msra.mxu0 0.0
        %2425 = vmatprep.subr.mxu0 0.0
        %2426 = vmatpush1.xpose.msra.mxu0 0.0
        %2427 = vmatprep.subr.mxu0 0.0
        %2428 = vmatpush1.xpose.msra.mxu0 0.0
        %2429 = vmatprep.subr.mxu0 0.0
        %2430 = vmatpush1.xpose.msra.mxu0 0.0
        %2431 = vmatprep.subr.mxu0 0.0
        %2432 = vmatpush1.xpose.msra.mxu0 0.0
        %2433 = vmatprep.subr.mxu0 0.0
        %2434 = vmatpush1.xpose.msra.mxu0 0.0
        %2435 = vmatprep.subr.mxu0 0.0
        %2436 = vmatpush1.xpose.msra.mxu0 0.0
        %2437 = vmatprep.subr.mxu0 0.0
        %2438 = vmatpush1.xpose.msra.mxu0 0.0
        %2439 = vmatprep.subr.mxu0 0.0
        %2440 = vmatpush1.xpose.msra.mxu0 0.0
        %2441 = vmatprep.subr.mxu0 0.0
        %2442 = vmatpush1.xpose.msra.mxu0 0.0
        %2443 = vmatprep.subr.mxu0 0.0
        %2444 = vmatpush1.xpose.msra.mxu0 0.0
        %2445 = vmatprep.subr.mxu0 0.0
        %2446 = vmatpush1.xpose.msra.mxu0 0.0
        %2447 = vmatprep.subr.mxu0 0.0
        %2448 = vmatpush1.xpose.msra.mxu0 0.0
        %2449 = vmatprep.subr.mxu0 0.0
        %2450 = vmatpush1.xpose.msra.mxu0 0.0
        %2451 = vmatprep.subr.mxu0 0.0
        %2452 = vmatpush1.xpose.msra.mxu0 0.0
        %2453 = vmatprep.subr.mxu0 0.0
        %2454 = vmatpush1.xpose.msra.mxu0 0.0
        %2455 = vmatprep.subr.mxu0 0.0
        %2456 = vmatpush1.xpose.msra.mxu0 0.0
        %2457 = vmatprep.subr.mxu0 0.0
        %2458 = vmatpush1.xpose.msra.mxu0 0.0
        %2459 = vmatprep.subr.mxu0 0.0
        %2460 = vmatpush1.xpose.msra.mxu0 0.0
        %2461 = vmatprep.subr.mxu0 0.0
        %2462 = vmatpush1.xpose.msra.mxu0 0.0
        %2463 = vmatprep.subr.mxu0 0.0
        %2464 = vmatpush1.xpose.msra.mxu0 0.0
        %2465 = vmatprep.subr.mxu0 0.0
        %2466 = vmatpush1.xpose.msra.mxu0 0.0
        %2467 = vmatprep.subr.mxu0 0.0
        %2468 = vmatpush1.xpose.msra.mxu0 0.0
        %2469 = vmatprep.subr.mxu0 0.0
        %2470 = vmatpush1.xpose.msra.mxu0 0.0
        %2471 = vmatprep.mubr.f32.mxu0 0.0
        %2472 = vmatmul.mubr.f32.gmra.mrb[0].mxu0 %v2402
        %v2473 = vpop.f32.mrb[0].mxu0
        %v2474 = vadd.f32 0.0, %v2473
        %v2475 = vpop.f32.mrb[0].mxu0
        %2476 = vdwg.mxu0
        %v2477 = vsel %vm1436, %v2398, -inf
        %2478 = vmax.xlane.f32.xlu0 %v2477
        %v2479 = vpop.xlane.xlu0 %2478
        %v2480 = vsel %vm1436, %v2474, -inf
        %2481 = vmax.xlane.f32.xlu0 %v2480
        %v2482 = vpop.xlane.xlu0 %2481
        %v2483 = vsub.f32 %v2398, %v2479
        %v2484 = vsub.f32 %v2474, %v2482
        %v2485 = vmul.f32 %v2483, 1.442695
        %v2486 = vpow.pop %v2485
        %v2487 = vmul.f32 %v2484, 1.442695
        %v2488 = vpow.pop %v2487
        %v2489 = vsel %vm1436, %v2486, 0.0
        %2490 = vadd.xlane.f32.xlu0 %v2489
        %v2491 = vpop.xlane.xlu0 %2490
        %v2492 = vsel %vm1436, %v2488, 0.0
        %2493 = vadd.xlane.f32.xlu0 %v2492
        %v2494 = vpop.xlane.xlu0 %2493
        %v2495 = vrcp.pop %v2491
        %v2496 = vrcp.pop %v2494
        %v2497 = vmul.f32 %v2486, %v2495
        %v2498 = vmul.f32 %v2488, %v2496
        %v2500 = vsel %vm1436, %v2497, 0
        %2502 = vmatprep.subr.mxu0 0.0
        %2503 = vmatpush1.msra.mxu0 %v2319
        %2504 = vmatprep.subr.mxu0 0.0
        %2505 = vmatpush1.msra.mxu0 0.0
        %2506 = vmatprep.subr.mxu0 0.0
        %2507 = vmatpush1.msra.mxu0 0.0
        %2508 = vmatprep.subr.mxu0 0.0
        %2509 = vmatpush1.msra.mxu0 0.0
        %2510 = vmatprep.subr.mxu0 0.0
        %2511 = vmatpush1.msra.mxu0 0.0
        %2512 = vmatprep.subr.mxu0 0.0
        %2513 = vmatpush1.msra.mxu0 0.0
        %2514 = vmatprep.subr.mxu0 0.0
        %2515 = vmatpush1.msra.mxu0 0.0
        %2516 = vmatprep.subr.mxu0 0.0
        %2517 = vmatpush1.msra.mxu0 0.0
        %2518 = vmatprep.subr.mxu0 0.0
        %2519 = vmatpush1.msra.mxu0 0.0
        %2520 = vmatprep.subr.mxu0 0.0
        %2521 = vmatpush1.msra.mxu0 0.0
        %2522 = vmatprep.subr.mxu0 0.0
        %2523 = vmatpush1.msra.mxu0 0.0
        %2524 = vmatprep.subr.mxu0 0.0
        %2525 = vmatpush1.msra.mxu0 0.0
        %2526 = vmatprep.subr.mxu0 0.0
        %2527 = vmatpush1.msra.mxu0 0.0
        %2528 = vmatprep.subr.mxu0 0.0
        %2529 = vmatpush1.msra.mxu0 0.0
        %2530 = vmatprep.subr.mxu0 0.0
        %2531 = vmatpush1.msra.mxu0 0.0
        %2532 = vmatprep.subr.mxu0 0.0
        %2533 = vmatpush1.msra.mxu0 0.0
        %2534 = vmatprep.subr.mxu0 0.0
        %2535 = vmatpush1.msra.mxu0 0.0
        %2536 = vmatprep.subr.mxu0 0.0
        %2537 = vmatpush1.msra.mxu0 0.0
        %2538 = vmatprep.subr.mxu0 0.0
        %2539 = vmatpush1.msra.mxu0 0.0
        %2540 = vmatprep.subr.mxu0 0.0
        %2541 = vmatpush1.msra.mxu0 0.0
        %2542 = vmatprep.subr.mxu0 0.0
        %2543 = vmatpush1.msra.mxu0 0.0
        %2544 = vmatprep.subr.mxu0 0.0
        %2545 = vmatpush1.msra.mxu0 0.0
        %2546 = vmatprep.subr.mxu0 0.0
        %2547 = vmatpush1.msra.mxu0 0.0
        %2548 = vmatprep.subr.mxu0 0.0
        %2549 = vmatpush1.msra.mxu0 0.0
        %2550 = vmatprep.subr.mxu0 0.0
        %2551 = vmatpush1.msra.mxu0 0.0
        %2552 = vmatprep.subr.mxu0 0.0
        %2553 = vmatpush1.msra.mxu0 0.0
        %2554 = vmatprep.subr.mxu0 0.0
        %2555 = vmatpush1.msra.mxu0 0.0
        %2556 = vmatprep.subr.mxu0 0.0
        %2557 = vmatpush1.msra.mxu0 0.0
        %2558 = vmatprep.subr.mxu0 0.0
        %2559 = vmatpush1.msra.mxu0 0.0
        %2560 = vmatprep.subr.mxu0 0.0
        %2561 = vmatpush1.msra.mxu0 0.0
        %2562 = vmatprep.subr.mxu0 0.0
        %2563 = vmatpush1.msra.mxu0 0.0
        %2564 = vmatprep.subr.mxu0 0.0
        %2565 = vmatpush1.msra.mxu0 0.0
        %2566 = vmatprep.mubr.f32.mxu0 0.0
        %2567 = vmatmul.mubr.f32.gmra.mrb[0].mxu0 %v2500
        %v2568 = vpop.f32.mrb[0].mxu0
        %v2569 = vadd.f32 0.0, %v2568
        %v2570 = vpop.f32.mrb[0].mxu0
        %2571 = vdwg.mxu0
        %v2573 = vsel %vm1436, %v2498, 0
        %2575 = vmatprep.subr.mxu0 0.0
        %2576 = vmatpush1.msra.mxu0 %v2322
        %2577 = vmatprep.subr.mxu0 0.0
        %2578 = vmatpush1.msra.mxu0 0.0
        %2579 = vmatprep.subr.mxu0 0.0
        %2580 = vmatpush1.msra.mxu0 0.0
        %2581 = vmatprep.subr.mxu0 0.0
        %2582 = vmatpush1.msra.mxu0 0.0
        %2583 = vmatprep.subr.mxu0 0.0
        %2584 = vmatpush1.msra.mxu0 0.0
        %2585 = vmatprep.subr.mxu0 0.0
        %2586 = vmatpush1.msra.mxu0 0.0
        %2587 = vmatprep.subr.mxu0 0.0
        %2588 = vmatpush1.msra.mxu0 0.0
        %2589 = vmatprep.subr.mxu0 0.0
        %2590 = vmatpush1.msra.mxu0 0.0
        %2591 = vmatprep.subr.mxu0 0.0
        %2592 = vmatpush1.msra.mxu0 0.0
        %2593 = vmatprep.subr.mxu0 0.0
        %2594 = vmatpush1.msra.mxu0 0.0
        %2595 = vmatprep.subr.mxu0 0.0
        %2596 = vmatpush1.msra.mxu0 0.0
        %2597 = vmatprep.subr.mxu0 0.0
        %2598 = vmatpush1.msra.mxu0 0.0
        %2599 = vmatprep.subr.mxu0 0.0
        %2600 = vmatpush1.msra.mxu0 0.0
        %2601 = vmatprep.subr.mxu0 0.0
        %2602 = vmatpush1.msra.mxu0 0.0
        %2603 = vmatprep.subr.mxu0 0.0
        %2604 = vmatpush1.msra.mxu0 0.0
        %2605 = vmatprep.subr.mxu0 0.0
        %2606 = vmatpush1.msra.mxu0 0.0
        %2607 = vmatprep.subr.mxu0 0.0
        %2608 = vmatpush1.msra.mxu0 0.0
        %2609 = vmatprep.subr.mxu0 0.0
        %2610 = vmatpush1.msra.mxu0 0.0
        %2611 = vmatprep.subr.mxu0 0.0
        %2612 = vmatpush1.msra.mxu0 0.0
        %2613 = vmatprep.subr.mxu0 0.0
        %2614 = vmatpush1.msra.mxu0 0.0
        %2615 = vmatprep.subr.mxu0 0.0
        %2616 = vmatpush1.msra.mxu0 0.0
        %2617 = vmatprep.subr.mxu0 0.0
        %2618 = vmatpush1.msra.mxu0 0.0
        %2619 = vmatprep.subr.mxu0 0.0
        %2620 = vmatpush1.msra.mxu0 0.0
        %2621 = vmatprep.subr.mxu0 0.0
        %2622 = vmatpush1.msra.mxu0 0.0
        %2623 = vmatprep.subr.mxu0 0.0
        %2624 = vmatpush1.msra.mxu0 0.0
        %2625 = vmatprep.subr.mxu0 0.0
        %2626 = vmatpush1.msra.mxu0 0.0
        %2627 = vmatprep.subr.mxu0 0.0
        %2628 = vmatpush1.msra.mxu0 0.0
        %2629 = vmatprep.subr.mxu0 0.0
        %2630 = vmatpush1.msra.mxu0 0.0
        %2631 = vmatprep.subr.mxu0 0.0
        %2632 = vmatpush1.msra.mxu0 0.0
        %2633 = vmatprep.subr.mxu0 0.0
        %2634 = vmatpush1.msra.mxu0 0.0
        %2635 = vmatprep.subr.mxu0 0.0
        %2636 = vmatpush1.msra.mxu0 0.0
        %2637 = vmatprep.subr.mxu0 0.0
        %2638 = vmatpush1.msra.mxu0 0.0
        %2639 = vmatprep.mubr.f32.mxu0 0.0
        %2640 = vmatmul.mubr.f32.gmra.mrb[0].mxu0 %v2573
        %v2641 = vpop.f32.mrb[0].mxu0
        %v2642 = vadd.f32 0.0, %v2641
        %v2643 = vpop.f32.mrb[0].mxu0
        %2644 = vdwg.mxu0
        %v2645 = vpack.c.bf16 %v2642, %v2569
        %s2646 = scalar_lea.vmem %s827, 4 [#allocation11]
        %v2647 = vld [vmem:[%s2646] sm:$0x3]
        %v2649 = vsel %vm1283, %v2645, 0
        %v2652 = vsel %vm2083, %v2647, 0
        %2654 = vmatprep.subr.bf16.mxu0 0
        %2655 = vmatpush1.bf16.msra.mxu0 %v2652
        %2656 = vmatprep.subr.bf16.mxu0 0
        %2657 = vmatpush1.bf16.msra.mxu0 0
        %2658 = vmatprep.subr.bf16.mxu0 0
        %2659 = vmatpush1.bf16.msra.mxu0 0
        %2660 = vmatprep.subr.bf16.mxu0 0
        %2661 = vmatpush1.bf16.msra.mxu0 0
        %2662 = vmatprep.subr.bf16.mxu0 0
        %2663 = vmatpush1.bf16.msra.mxu0 0
        %2664 = vmatprep.subr.bf16.mxu0 0
        %2665 = vmatpush1.bf16.msra.mxu0 0
        %2666 = vmatprep.subr.bf16.mxu0 0
        %2667 = vmatpush1.bf16.msra.mxu0 0
        %2668 = vmatprep.subr.bf16.mxu0 0
        %2669 = vmatpush1.bf16.msra.mxu0 0
        %2670 = vmatprep.subr.bf16.mxu0 0
        %2671 = vmatpush1.bf16.msra.mxu0 0
        %2672 = vmatprep.subr.bf16.mxu0 0
        %2673 = vmatpush1.bf16.msra.mxu0 0
        %2674 = vmatprep.subr.bf16.mxu0 0
        %2675 = vmatpush1.bf16.msra.mxu0 0
        %2676 = vmatprep.subr.bf16.mxu0 0
        %2677 = vmatpush1.bf16.msra.mxu0 0
        %2678 = vmatprep.subr.bf16.mxu0 0
        %2679 = vmatpush1.bf16.msra.mxu0 0
        %2680 = vmatprep.subr.bf16.mxu0 0
        %2681 = vmatpush1.bf16.msra.mxu0 0
        %2682 = vmatprep.subr.bf16.mxu0 0
        %2683 = vmatpush1.bf16.msra.mxu0 0
        %2684 = vmatprep.subr.bf16.mxu0 0
        %2685 = vmatpush1.bf16.msra.mxu0 0
        %2686 = vmatprep.mubr.bf16.mxu0 0
        %2687 = vmatmul.mubr.bf16.gmra.mrb[0].mxu0 %v2649
        %v2688 = vpop.f32.mrb[0].mxu0
        %v2689 = vadd.f32 0.0, %v2688
        %v2690 = vpop.f32.mrb[0].mxu0
        %v2691 = vpop.f32.mrb[0].mxu0
        %v2692 = vadd.f32 0.0, %v2691
        %v2693 = vpop.f32.mrb[0].mxu0
        %2694 = vdwg.mxu0
        %v2695 = vadd.f32 %v2169, %v2689
        %v2696 = vadd.f32 %v2172, %v2692
        %s2697 = scalar_lea.vmem %s987, 6
        %v2698 = vld [vmem:[%s2697] sm:$0x3]
        %v2699 = vlaneseq
        %v2700 = vshrl.u32 %v2699, 7
        %v2701 = vsub.s32 3, %v2700
        %v2702 = vrot.slane %v1129, %v2701
        %v2704 = vsel %vm1137, %v2698, 0
        %2706 = vmatprep.subr.bf16.mxu0 0
        %2707 = vmatpush1.bf16.xpose.msra.mxu0 %v2704
        %2708 = vmatprep.subr.bf16.mxu0 0
        %2709 = vmatpush1.bf16.xpose.msra.mxu0 0
        %2710 = vmatprep.subr.bf16.mxu0 0
        %2711 = vmatpush1.bf16.xpose.msra.mxu0 0
        %2712 = vmatprep.subr.bf16.mxu0 0
        %2713 = vmatpush1.bf16.xpose.msra.mxu0 0
        %2714 = vmatprep.subr.bf16.mxu0 0
        %2715 = vmatpush1.bf16.xpose.msra.mxu0 0
        %2716 = vmatprep.subr.bf16.mxu0 0
        %2717 = vmatpush1.bf16.xpose.msra.mxu0 0
        %2718 = vmatprep.subr.bf16.mxu0 0
        %2719 = vmatpush1.bf16.xpose.msra.mxu0 0
        %2720 = vmatprep.subr.bf16.mxu0 0
        %2721 = vmatpush1.bf16.xpose.msra.mxu0 0
        %2722 = vmatprep.subr.bf16.mxu0 0
        %2723 = vmatpush1.bf16.xpose.msra.mxu0 0
        %2724 = vmatprep.subr.bf16.mxu0 0
        %2725 = vmatpush1.bf16.xpose.msra.mxu0 0
        %2726 = vmatprep.subr.bf16.mxu0 0
        %2727 = vmatpush1.bf16.xpose.msra.mxu0 0
        %2728 = vmatprep.subr.bf16.mxu0 0
        %2729 = vmatpush1.bf16.xpose.msra.mxu0 0
        %2730 = vmatprep.subr.bf16.mxu0 0
        %2731 = vmatpush1.bf16.xpose.msra.mxu0 0
        %2732 = vmatprep.subr.bf16.mxu0 0
        %2733 = vmatpush1.bf16.xpose.msra.mxu0 0
        %2734 = vmatprep.subr.bf16.mxu0 0
        %2735 = vmatpush1.bf16.xpose.msra.mxu0 0
        %2736 = vmatprep.subr.bf16.mxu0 0
        %2737 = vmatpush1.bf16.xpose.msra.mxu0 0
        %2738 = vmatprep.mubr.bf16.mxu0 0
        %2739 = vmatmul.mubr.bf16.gmra.mrb[0].mxu0 %v1139
        %v2740 = vpop.f32.mrb[0].mxu0
        %v2741 = vadd.f32 %v2702, %v2740
        %v2742 = vpop.f32.mrb[0].mxu0
        %v2743 = vpop.f32.mrb[0].mxu0
        %v2744 = vadd.f32 %v2702, %v2743
        %v2745 = vpop.f32.mrb[0].mxu0
        %2746 = vdwg.mxu0
        %s2747 = scalar_lea.vmem %s996, 6
        %v2748 = vld [vmem:[%s2747] sm:$0x3]
        %v2749 = vlaneseq
        %v2750 = vshrl.u32 %v2749, 7
        %v2751 = vsub.s32 3, %v2750
        %v2752 = vrot.slane %v1130, %v2751
        %v2754 = vsel %vm1137, %v2748, 0
        %2756 = vmatprep.subr.bf16.mxu0 0
        %2757 = vmatpush1.bf16.xpose.msra.mxu0 %v2754
        %2758 = vmatprep.subr.bf16.mxu0 0
        %2759 = vmatpush1.bf16.xpose.msra.mxu0 0
        %2760 = vmatprep.subr.bf16.mxu0 0
        %2761 = vmatpush1.bf16.xpose.msra.mxu0 0
        %2762 = vmatprep.subr.bf16.mxu0 0
        %2763 = vmatpush1.bf16.xpose.msra.mxu0 0
        %2764 = vmatprep.subr.bf16.mxu0 0
        %2765 = vmatpush1.bf16.xpose.msra.mxu0 0
        %2766 = vmatprep.subr.bf16.mxu0 0
        %2767 = vmatpush1.bf16.xpose.msra.mxu0 0
        %2768 = vmatprep.subr.bf16.mxu0 0
        %2769 = vmatpush1.bf16.xpose.msra.mxu0 0
        %2770 = vmatprep.subr.bf16.mxu0 0
        %2771 = vmatpush1.bf16.xpose.msra.mxu0 0
        %2772 = vmatprep.subr.bf16.mxu0 0
        %2773 = vmatpush1.bf16.xpose.msra.mxu0 0
        %2774 = vmatprep.subr.bf16.mxu0 0
        %2775 = vmatpush1.bf16.xpose.msra.mxu0 0
        %2776 = vmatprep.subr.bf16.mxu0 0
        %2777 = vmatpush1.bf16.xpose.msra.mxu0 0
        %2778 = vmatprep.subr.bf16.mxu0 0
        %2779 = vmatpush1.bf16.xpose.msra.mxu0 0
        %2780 = vmatprep.subr.bf16.mxu0 0
        %2781 = vmatpush1.bf16.xpose.msra.mxu0 0
        %2782 = vmatprep.subr.bf16.mxu0 0
        %2783 = vmatpush1.bf16.xpose.msra.mxu0 0
        %2784 = vmatprep.subr.bf16.mxu0 0
        %2785 = vmatpush1.bf16.xpose.msra.mxu0 0
        %2786 = vmatprep.subr.bf16.mxu0 0
        %2787 = vmatpush1.bf16.xpose.msra.mxu0 0
        %2788 = vmatprep.mubr.bf16.mxu0 0
        %2789 = vmatmul.mubr.bf16.gmra.mrb[0].mxu0 %v1139
        %v2790 = vpop.f32.mrb[0].mxu0
        %v2791 = vadd.f32 %v2752, %v2790
        %v2792 = vpop.f32.mrb[0].mxu0
        %v2793 = vpop.f32.mrb[0].mxu0
        %v2794 = vadd.f32 %v2752, %v2793
        %v2795 = vpop.f32.mrb[0].mxu0
        %2796 = vdwg.mxu0
        %s2797 = scalar_lea.vmem %s1005, 6
        %v2798 = vld [vmem:[%s2797] sm:$0x3]
        %v2799 = vlaneseq
        %v2800 = vshrl.u32 %v2799, 7
        %v2801 = vsub.s32 3, %v2800
        %v2802 = vrot.slane %v1131, %v2801
        %v2804 = vsel %vm1137, %v2798, 0
        %2806 = vmatprep.subr.bf16.mxu0 0
        %2807 = vmatpush1.bf16.xpose.msra.mxu0 %v2804
        %2808 = vmatprep.subr.bf16.mxu0 0
        %2809 = vmatpush1.bf16.xpose.msra.mxu0 0
        %2810 = vmatprep.subr.bf16.mxu0 0
        %2811 = vmatpush1.bf16.xpose.msra.mxu0 0
        %2812 = vmatprep.subr.bf16.mxu0 0
        %2813 = vmatpush1.bf16.xpose.msra.mxu0 0
        %2814 = vmatprep.subr.bf16.mxu0 0
        %2815 = vmatpush1.bf16.xpose.msra.mxu0 0
        %2816 = vmatprep.subr.bf16.mxu0 0
        %2817 = vmatpush1.bf16.xpose.msra.mxu0 0
        %2818 = vmatprep.subr.bf16.mxu0 0
        %2819 = vmatpush1.bf16.xpose.msra.mxu0 0
        %2820 = vmatprep.subr.bf16.mxu0 0
        %2821 = vmatpush1.bf16.xpose.msra.mxu0 0
        %2822 = vmatprep.subr.bf16.mxu0 0
        %2823 = vmatpush1.bf16.xpose.msra.mxu0 0
        %2824 = vmatprep.subr.bf16.mxu0 0
        %2825 = vmatpush1.bf16.xpose.msra.mxu0 0
        %2826 = vmatprep.subr.bf16.mxu0 0
        %2827 = vmatpush1.bf16.xpose.msra.mxu0 0
        %2828 = vmatprep.subr.bf16.mxu0 0
        %2829 = vmatpush1.bf16.xpose.msra.mxu0 0
        %2830 = vmatprep.subr.bf16.mxu0 0
        %2831 = vmatpush1.bf16.xpose.msra.mxu0 0
        %2832 = vmatprep.subr.bf16.mxu0 0
        %2833 = vmatpush1.bf16.xpose.msra.mxu0 0
        %2834 = vmatprep.subr.bf16.mxu0 0
        %2835 = vmatpush1.bf16.xpose.msra.mxu0 0
        %2836 = vmatprep.subr.bf16.mxu0 0
        %2837 = vmatpush1.bf16.xpose.msra.mxu0 0
        %2838 = vmatprep.mubr.bf16.mxu0 0
        %2839 = vmatmul.mubr.bf16.gmra.mrb[0].mxu0 %v1139
        %v2840 = vpop.f32.mrb[0].mxu0
        %v2841 = vadd.f32 %v2802, %v2840
        %v2842 = vpop.f32.mrb[0].mxu0
        %v2843 = vpop.f32.mrb[0].mxu0
        %v2844 = vadd.f32 %v2802, %v2843
        %v2845 = vpop.f32.mrb[0].mxu0
        %2846 = vdwg.mxu0
        %v2848 = vsel %vm1283, %v2741, 0
        %v2851 = vsel %vm1283, %v2791, 0
        %2853 = vmatprep.subr.mxu0 0.0
        %2854 = vmatpush1.xpose.msra.mxu0 %v2851
        %2855 = vmatprep.subr.mxu0 0.0
        %2856 = vmatpush1.xpose.msra.mxu0 0.0
        %2857 = vmatprep.subr.mxu0 0.0
        %2858 = vmatpush1.xpose.msra.mxu0 0.0
        %2859 = vmatprep.subr.mxu0 0.0
        %2860 = vmatpush1.xpose.msra.mxu0 0.0
        %2861 = vmatprep.subr.mxu0 0.0
        %2862 = vmatpush1.xpose.msra.mxu0 0.0
        %2863 = vmatprep.subr.mxu0 0.0
        %2864 = vmatpush1.xpose.msra.mxu0 0.0
        %2865 = vmatprep.subr.mxu0 0.0
        %2866 = vmatpush1.xpose.msra.mxu0 0.0
        %2867 = vmatprep.subr.mxu0 0.0
        %2868 = vmatpush1.xpose.msra.mxu0 0.0
        %2869 = vmatprep.subr.mxu0 0.0
        %2870 = vmatpush1.xpose.msra.mxu0 0.0
        %2871 = vmatprep.subr.mxu0 0.0
        %2872 = vmatpush1.xpose.msra.mxu0 0.0
        %2873 = vmatprep.subr.mxu0 0.0
        %2874 = vmatpush1.xpose.msra.mxu0 0.0
        %2875 = vmatprep.subr.mxu0 0.0
        %2876 = vmatpush1.xpose.msra.mxu0 0.0
        %2877 = vmatprep.subr.mxu0 0.0
        %2878 = vmatpush1.xpose.msra.mxu0 0.0
        %2879 = vmatprep.subr.mxu0 0.0
        %2880 = vmatpush1.xpose.msra.mxu0 0.0
        %2881 = vmatprep.subr.mxu0 0.0
        %2882 = vmatpush1.xpose.msra.mxu0 0.0
        %2883 = vmatprep.subr.mxu0 0.0
        %2884 = vmatpush1.xpose.msra.mxu0 0.0
        %2885 = vmatprep.subr.mxu0 0.0
        %2886 = vmatpush1.xpose.msra.mxu0 0.0
        %2887 = vmatprep.subr.mxu0 0.0
        %2888 = vmatpush1.xpose.msra.mxu0 0.0
        %2889 = vmatprep.subr.mxu0 0.0
        %2890 = vmatpush1.xpose.msra.mxu0 0.0
        %2891 = vmatprep.subr.mxu0 0.0
        %2892 = vmatpush1.xpose.msra.mxu0 0.0
        %2893 = vmatprep.subr.mxu0 0.0
        %2894 = vmatpush1.xpose.msra.mxu0 0.0
        %2895 = vmatprep.subr.mxu0 0.0
        %2896 = vmatpush1.xpose.msra.mxu0 0.0
        %2897 = vmatprep.subr.mxu0 0.0
        %2898 = vmatpush1.xpose.msra.mxu0 0.0
        %2899 = vmatprep.subr.mxu0 0.0
        %2900 = vmatpush1.xpose.msra.mxu0 0.0
        %2901 = vmatprep.subr.mxu0 0.0
        %2902 = vmatpush1.xpose.msra.mxu0 0.0
        %2903 = vmatprep.subr.mxu0 0.0
        %2904 = vmatpush1.xpose.msra.mxu0 0.0
        %2905 = vmatprep.subr.mxu0 0.0
        %2906 = vmatpush1.xpose.msra.mxu0 0.0
        %2907 = vmatprep.subr.mxu0 0.0
        %2908 = vmatpush1.xpose.msra.mxu0 0.0
        %2909 = vmatprep.subr.mxu0 0.0
        %2910 = vmatpush1.xpose.msra.mxu0 0.0
        %2911 = vmatprep.subr.mxu0 0.0
        %2912 = vmatpush1.xpose.msra.mxu0 0.0
        %2913 = vmatprep.subr.mxu0 0.0
        %2914 = vmatpush1.xpose.msra.mxu0 0.0
        %2915 = vmatprep.subr.mxu0 0.0
        %2916 = vmatpush1.xpose.msra.mxu0 0.0
        %2917 = vmatprep.mubr.f32.mxu0 0.0
        %2918 = vmatmul.mubr.f32.gmra.mrb[0].mxu0 %v2848
        %v2919 = vpop.f32.mrb[0].mxu0
        %v2920 = vadd.f32 0.0, %v2919
        %v2921 = vpop.f32.mrb[0].mxu0
        %2922 = vdwg.mxu0
        %v2924 = vsel %vm1283, %v2744, 0
        %v2927 = vsel %vm1283, %v2794, 0
        %2929 = vmatprep.subr.mxu0 0.0
        %2930 = vmatpush1.xpose.msra.mxu0 %v2927
        %2931 = vmatprep.subr.mxu0 0.0
        %2932 = vmatpush1.xpose.msra.mxu0 0.0
        %2933 = vmatprep.subr.mxu0 0.0
        %2934 = vmatpush1.xpose.msra.mxu0 0.0
        %2935 = vmatprep.subr.mxu0 0.0
        %2936 = vmatpush1.xpose.msra.mxu0 0.0
        %2937 = vmatprep.subr.mxu0 0.0
        %2938 = vmatpush1.xpose.msra.mxu0 0.0
        %2939 = vmatprep.subr.mxu0 0.0
        %2940 = vmatpush1.xpose.msra.mxu0 0.0
        %2941 = vmatprep.subr.mxu0 0.0
        %2942 = vmatpush1.xpose.msra.mxu0 0.0
        %2943 = vmatprep.subr.mxu0 0.0
        %2944 = vmatpush1.xpose.msra.mxu0 0.0
        %2945 = vmatprep.subr.mxu0 0.0
        %2946 = vmatpush1.xpose.msra.mxu0 0.0
        %2947 = vmatprep.subr.mxu0 0.0
        %2948 = vmatpush1.xpose.msra.mxu0 0.0
        %2949 = vmatprep.subr.mxu0 0.0
        %2950 = vmatpush1.xpose.msra.mxu0 0.0
        %2951 = vmatprep.subr.mxu0 0.0
        %2952 = vmatpush1.xpose.msra.mxu0 0.0
        %2953 = vmatprep.subr.mxu0 0.0
        %2954 = vmatpush1.xpose.msra.mxu0 0.0
        %2955 = vmatprep.subr.mxu0 0.0
        %2956 = vmatpush1.xpose.msra.mxu0 0.0
        %2957 = vmatprep.subr.mxu0 0.0
        %2958 = vmatpush1.xpose.msra.mxu0 0.0
        %2959 = vmatprep.subr.mxu0 0.0
        %2960 = vmatpush1.xpose.msra.mxu0 0.0
        %2961 = vmatprep.subr.mxu0 0.0
        %2962 = vmatpush1.xpose.msra.mxu0 0.0
        %2963 = vmatprep.subr.mxu0 0.0
        %2964 = vmatpush1.xpose.msra.mxu0 0.0
        %2965 = vmatprep.subr.mxu0 0.0
        %2966 = vmatpush1.xpose.msra.mxu0 0.0
        %2967 = vmatprep.subr.mxu0 0.0
        %2968 = vmatpush1.xpose.msra.mxu0 0.0
        %2969 = vmatprep.subr.mxu0 0.0
        %2970 = vmatpush1.xpose.msra.mxu0 0.0
        %2971 = vmatprep.subr.mxu0 0.0
        %2972 = vmatpush1.xpose.msra.mxu0 0.0
        %2973 = vmatprep.subr.mxu0 0.0
        %2974 = vmatpush1.xpose.msra.mxu0 0.0
        %2975 = vmatprep.subr.mxu0 0.0
        %2976 = vmatpush1.xpose.msra.mxu0 0.0
        %2977 = vmatprep.subr.mxu0 0.0
        %2978 = vmatpush1.xpose.msra.mxu0 0.0
        %2979 = vmatprep.subr.mxu0 0.0
        %2980 = vmatpush1.xpose.msra.mxu0 0.0
        %2981 = vmatprep.subr.mxu0 0.0
        %2982 = vmatpush1.xpose.msra.mxu0 0.0
        %2983 = vmatprep.subr.mxu0 0.0
        %2984 = vmatpush1.xpose.msra.mxu0 0.0
        %2985 = vmatprep.subr.mxu0 0.0
        %2986 = vmatpush1.xpose.msra.mxu0 0.0
        %2987 = vmatprep.subr.mxu0 0.0
        %2988 = vmatpush1.xpose.msra.mxu0 0.0
        %2989 = vmatprep.subr.mxu0 0.0
        %2990 = vmatpush1.xpose.msra.mxu0 0.0
        %2991 = vmatprep.subr.mxu0 0.0
        %2992 = vmatpush1.xpose.msra.mxu0 0.0
        %2993 = vmatprep.mubr.f32.mxu0 0.0
        %2994 = vmatmul.mubr.f32.gmra.mrb[0].mxu0 %v2924
        %v2995 = vpop.f32.mrb[0].mxu0
        %v2996 = vadd.f32 0.0, %v2995
        %v2997 = vpop.f32.mrb[0].mxu0
        %2998 = vdwg.mxu0
        %v2999 = vsel %vm1436, %v2920, -inf
        %3000 = vmax.xlane.f32.xlu0 %v2999
        %v3001 = vpop.xlane.xlu0 %3000
        %v3002 = vsel %vm1436, %v2996, -inf
        %3003 = vmax.xlane.f32.xlu0 %v3002
        %v3004 = vpop.xlane.xlu0 %3003
        %v3005 = vsub.f32 %v2920, %v3001
        %v3006 = vsub.f32 %v2996, %v3004
        %v3007 = vmul.f32 %v3005, 1.442695
        %v3008 = vpow.pop %v3007
        %v3009 = vmul.f32 %v3006, 1.442695
        %v3010 = vpow.pop %v3009
        %v3011 = vsel %vm1436, %v3008, 0.0
        %3012 = vadd.xlane.f32.xlu0 %v3011
        %v3013 = vpop.xlane.xlu0 %3012
        %v3014 = vsel %vm1436, %v3010, 0.0
        %3015 = vadd.xlane.f32.xlu0 %v3014
        %v3016 = vpop.xlane.xlu0 %3015
        %v3017 = vrcp.pop %v3013
        %v3018 = vrcp.pop %v3016
        %v3019 = vmul.f32 %v3008, %v3017
        %v3020 = vmul.f32 %v3010, %v3018
        %v3022 = vsel %vm1436, %v3019, 0
        %3024 = vmatprep.subr.mxu0 0.0
        %3025 = vmatpush1.msra.mxu0 %v2841
        %3026 = vmatprep.subr.mxu0 0.0
        %3027 = vmatpush1.msra.mxu0 0.0
        %3028 = vmatprep.subr.mxu0 0.0
        %3029 = vmatpush1.msra.mxu0 0.0
        %3030 = vmatprep.subr.mxu0 0.0
        %3031 = vmatpush1.msra.mxu0 0.0
        %3032 = vmatprep.subr.mxu0 0.0
        %3033 = vmatpush1.msra.mxu0 0.0
        %3034 = vmatprep.subr.mxu0 0.0
        %3035 = vmatpush1.msra.mxu0 0.0
        %3036 = vmatprep.subr.mxu0 0.0
        %3037 = vmatpush1.msra.mxu0 0.0
        %3038 = vmatprep.subr.mxu0 0.0
        %3039 = vmatpush1.msra.mxu0 0.0
        %3040 = vmatprep.subr.mxu0 0.0
        %3041 = vmatpush1.msra.mxu0 0.0
        %3042 = vmatprep.subr.mxu0 0.0
        %3043 = vmatpush1.msra.mxu0 0.0
        %3044 = vmatprep.subr.mxu0 0.0
        %3045 = vmatpush1.msra.mxu0 0.0
        %3046 = vmatprep.subr.mxu0 0.0
        %3047 = vmatpush1.msra.mxu0 0.0
        %3048 = vmatprep.subr.mxu0 0.0
        %3049 = vmatpush1.msra.mxu0 0.0
        %3050 = vmatprep.subr.mxu0 0.0
        %3051 = vmatpush1.msra.mxu0 0.0
        %3052 = vmatprep.subr.mxu0 0.0
        %3053 = vmatpush1.msra.mxu0 0.0
        %3054 = vmatprep.subr.mxu0 0.0
        %3055 = vmatpush1.msra.mxu0 0.0
        %3056 = vmatprep.subr.mxu0 0.0
        %3057 = vmatpush1.msra.mxu0 0.0
        %3058 = vmatprep.subr.mxu0 0.0
        %3059 = vmatpush1.msra.mxu0 0.0
        %3060 = vmatprep.subr.mxu0 0.0
        %3061 = vmatpush1.msra.mxu0 0.0
        %3062 = vmatprep.subr.mxu0 0.0
        %3063 = vmatpush1.msra.mxu0 0.0
        %3064 = vmatprep.subr.mxu0 0.0
        %3065 = vmatpush1.msra.mxu0 0.0
        %3066 = vmatprep.subr.mxu0 0.0
        %3067 = vmatpush1.msra.mxu0 0.0
        %3068 = vmatprep.subr.mxu0 0.0
        %3069 = vmatpush1.msra.mxu0 0.0
        %3070 = vmatprep.subr.mxu0 0.0
        %3071 = vmatpush1.msra.mxu0 0.0
        %3072 = vmatprep.subr.mxu0 0.0
        %3073 = vmatpush1.msra.mxu0 0.0
        %3074 = vmatprep.subr.mxu0 0.0
        %3075 = vmatpush1.msra.mxu0 0.0
        %3076 = vmatprep.subr.mxu0 0.0
        %3077 = vmatpush1.msra.mxu0 0.0
        %3078 = vmatprep.subr.mxu0 0.0
        %3079 = vmatpush1.msra.mxu0 0.0
        %3080 = vmatprep.subr.mxu0 0.0
        %3081 = vmatpush1.msra.mxu0 0.0
        %3082 = vmatprep.subr.mxu0 0.0
        %3083 = vmatpush1.msra.mxu0 0.0
        %3084 = vmatprep.subr.mxu0 0.0
        %3085 = vmatpush1.msra.mxu0 0.0
        %3086 = vmatprep.subr.mxu0 0.0
        %3087 = vmatpush1.msra.mxu0 0.0
        %3088 = vmatprep.mubr.f32.mxu0 0.0
        %3089 = vmatmul.mubr.f32.gmra.mrb[0].mxu0 %v3022
        %v3090 = vpop.f32.mrb[0].mxu0
        %v3091 = vadd.f32 0.0, %v3090
        %v3092 = vpop.f32.mrb[0].mxu0
        %3093 = vdwg.mxu0
        %v3095 = vsel %vm1436, %v3020, 0
        %3097 = vmatprep.subr.mxu0 0.0
        %3098 = vmatpush1.msra.mxu0 %v2844
        %3099 = vmatprep.subr.mxu0 0.0
        %3100 = vmatpush1.msra.mxu0 0.0
        %3101 = vmatprep.subr.mxu0 0.0
        %3102 = vmatpush1.msra.mxu0 0.0
        %3103 = vmatprep.subr.mxu0 0.0
        %3104 = vmatpush1.msra.mxu0 0.0
        %3105 = vmatprep.subr.mxu0 0.0
        %3106 = vmatpush1.msra.mxu0 0.0
        %3107 = vmatprep.subr.mxu0 0.0
        %3108 = vmatpush1.msra.mxu0 0.0
        %3109 = vmatprep.subr.mxu0 0.0
        %3110 = vmatpush1.msra.mxu0 0.0
        %3111 = vmatprep.subr.mxu0 0.0
        %3112 = vmatpush1.msra.mxu0 0.0
        %3113 = vmatprep.subr.mxu0 0.0
        %3114 = vmatpush1.msra.mxu0 0.0
        %3115 = vmatprep.subr.mxu0 0.0
        %3116 = vmatpush1.msra.mxu0 0.0
        %3117 = vmatprep.subr.mxu0 0.0
        %3118 = vmatpush1.msra.mxu0 0.0
        %3119 = vmatprep.subr.mxu0 0.0
        %3120 = vmatpush1.msra.mxu0 0.0
        %3121 = vmatprep.subr.mxu0 0.0
        %3122 = vmatpush1.msra.mxu0 0.0
        %3123 = vmatprep.subr.mxu0 0.0
        %3124 = vmatpush1.msra.mxu0 0.0
        %3125 = vmatprep.subr.mxu0 0.0
        %3126 = vmatpush1.msra.mxu0 0.0
        %3127 = vmatprep.subr.mxu0 0.0
        %3128 = vmatpush1.msra.mxu0 0.0
        %3129 = vmatprep.subr.mxu0 0.0
        %3130 = vmatpush1.msra.mxu0 0.0
        %3131 = vmatprep.subr.mxu0 0.0
        %3132 = vmatpush1.msra.mxu0 0.0
        %3133 = vmatprep.subr.mxu0 0.0
        %3134 = vmatpush1.msra.mxu0 0.0
        %3135 = vmatprep.subr.mxu0 0.0
        %3136 = vmatpush1.msra.mxu0 0.0
        %3137 = vmatprep.subr.mxu0 0.0
        %3138 = vmatpush1.msra.mxu0 0.0
        %3139 = vmatprep.subr.mxu0 0.0
        %3140 = vmatpush1.msra.mxu0 0.0
        %3141 = vmatprep.subr.mxu0 0.0
        %3142 = vmatpush1.msra.mxu0 0.0
        %3143 = vmatprep.subr.mxu0 0.0
        %3144 = vmatpush1.msra.mxu0 0.0
        %3145 = vmatprep.subr.mxu0 0.0
        %3146 = vmatpush1.msra.mxu0 0.0
        %3147 = vmatprep.subr.mxu0 0.0
        %3148 = vmatpush1.msra.mxu0 0.0
        %3149 = vmatprep.subr.mxu0 0.0
        %3150 = vmatpush1.msra.mxu0 0.0
        %3151 = vmatprep.subr.mxu0 0.0
        %3152 = vmatpush1.msra.mxu0 0.0
        %3153 = vmatprep.subr.mxu0 0.0
        %3154 = vmatpush1.msra.mxu0 0.0
        %3155 = vmatprep.subr.mxu0 0.0
        %3156 = vmatpush1.msra.mxu0 0.0
        %3157 = vmatprep.subr.mxu0 0.0
        %3158 = vmatpush1.msra.mxu0 0.0
        %3159 = vmatprep.subr.mxu0 0.0
        %3160 = vmatpush1.msra.mxu0 0.0
        %3161 = vmatprep.mubr.f32.mxu0 0.0
        %3162 = vmatmul.mubr.f32.gmra.mrb[0].mxu0 %v3095
        %v3163 = vpop.f32.mrb[0].mxu0
        %v3164 = vadd.f32 0.0, %v3163
        %v3165 = vpop.f32.mrb[0].mxu0
        %3166 = vdwg.mxu0
        %v3167 = vpack.c.bf16 %v3164, %v3091
        %s3168 = scalar_lea.vmem %s827, 6 [#allocation11]
        %v3169 = vld [vmem:[%s3168] sm:$0x3]
        %v3171 = vsel %vm1283, %v3167, 0
        %v3174 = vsel %vm2083, %v3169, 0
        %3176 = vmatprep.subr.bf16.mxu0 0
        %3177 = vmatpush1.bf16.msra.mxu0 %v3174
        %3178 = vmatprep.subr.bf16.mxu0 0
        %3179 = vmatpush1.bf16.msra.mxu0 0
        %3180 = vmatprep.subr.bf16.mxu0 0
        %3181 = vmatpush1.bf16.msra.mxu0 0
        %3182 = vmatprep.subr.bf16.mxu0 0
        %3183 = vmatpush1.bf16.msra.mxu0 0
        %3184 = vmatprep.subr.bf16.mxu0 0
        %3185 = vmatpush1.bf16.msra.mxu0 0
        %3186 = vmatprep.subr.bf16.mxu0 0
        %3187 = vmatpush1.bf16.msra.mxu0 0
        %3188 = vmatprep.subr.bf16.mxu0 0
        %3189 = vmatpush1.bf16.msra.mxu0 0
        %3190 = vmatprep.subr.bf16.mxu0 0
        %3191 = vmatpush1.bf16.msra.mxu0 0
        %3192 = vmatprep.subr.bf16.mxu0 0
        %3193 = vmatpush1.bf16.msra.mxu0 0
        %3194 = vmatprep.subr.bf16.mxu0 0
        %3195 = vmatpush1.bf16.msra.mxu0 0
        %3196 = vmatprep.subr.bf16.mxu0 0
        %3197 = vmatpush1.bf16.msra.mxu0 0
        %3198 = vmatprep.subr.bf16.mxu0 0
        %3199 = vmatpush1.bf16.msra.mxu0 0
        %3200 = vmatprep.subr.bf16.mxu0 0
        %3201 = vmatpush1.bf16.msra.mxu0 0
        %3202 = vmatprep.subr.bf16.mxu0 0
        %3203 = vmatpush1.bf16.msra.mxu0 0
        %3204 = vmatprep.subr.bf16.mxu0 0
        %3205 = vmatpush1.bf16.msra.mxu0 0
        %3206 = vmatprep.subr.bf16.mxu0 0
        %3207 = vmatpush1.bf16.msra.mxu0 0
        %3208 = vmatprep.mubr.bf16.mxu0 0
        %3209 = vmatmul.mubr.bf16.gmra.mrb[0].mxu0 %v3171
        %v3210 = vpop.f32.mrb[0].mxu0
        %v3211 = vadd.f32 0.0, %v3210
        %v3212 = vpop.f32.mrb[0].mxu0
        %v3213 = vpop.f32.mrb[0].mxu0
        %v3214 = vadd.f32 0.0, %v3213
        %v3215 = vpop.f32.mrb[0].mxu0
        %3216 = vdwg.mxu0
        %v3217 = vadd.f32 %v2695, %v3211
        %v3218 = vadd.f32 %v2696, %v3214
        %s3219 = scalar_lea.vmem %s987, 8
        %v3220 = vld [vmem:[%s3219] sm:$0x3]
        %v3221 = vlaneseq
        %v3222 = vshrl.u32 %v3221, 7
        %v3223 = vsub.s32 4, %v3222
        %v3224 = vrot.slane %v1129, %v3223
        %v3226 = vsel %vm1137, %v3220, 0
        %3228 = vmatprep.subr.bf16.mxu0 0
        %3229 = vmatpush1.bf16.xpose.msra.mxu0 %v3226
        %3230 = vmatprep.subr.bf16.mxu0 0
        %3231 = vmatpush1.bf16.xpose.msra.mxu0 0
        %3232 = vmatprep.subr.bf16.mxu0 0
        %3233 = vmatpush1.bf16.xpose.msra.mxu0 0
        %3234 = vmatprep.subr.bf16.mxu0 0
        %3235 = vmatpush1.bf16.xpose.msra.mxu0 0
        %3236 = vmatprep.subr.bf16.mxu0 0
        %3237 = vmatpush1.bf16.xpose.msra.mxu0 0
        %3238 = vmatprep.subr.bf16.mxu0 0
        %3239 = vmatpush1.bf16.xpose.msra.mxu0 0
        %3240 = vmatprep.subr.bf16.mxu0 0
        %3241 = vmatpush1.bf16.xpose.msra.mxu0 0
        %3242 = vmatprep.subr.bf16.mxu0 0
        %3243 = vmatpush1.bf16.xpose.msra.mxu0 0
        %3244 = vmatprep.subr.bf16.mxu0 0
        %3245 = vmatpush1.bf16.xpose.msra.mxu0 0
        %3246 = vmatprep.subr.bf16.mxu0 0
        %3247 = vmatpush1.bf16.xpose.msra.mxu0 0
        %3248 = vmatprep.subr.bf16.mxu0 0
        %3249 = vmatpush1.bf16.xpose.msra.mxu0 0
        %3250 = vmatprep.subr.bf16.mxu0 0
        %3251 = vmatpush1.bf16.xpose.msra.mxu0 0
        %3252 = vmatprep.subr.bf16.mxu0 0
        %3253 = vmatpush1.bf16.xpose.msra.mxu0 0
        %3254 = vmatprep.subr.bf16.mxu0 0
        %3255 = vmatpush1.bf16.xpose.msra.mxu0 0
        %3256 = vmatprep.subr.bf16.mxu0 0
        %3257 = vmatpush1.bf16.xpose.msra.mxu0 0
        %3258 = vmatprep.subr.bf16.mxu0 0
        %3259 = vmatpush1.bf16.xpose.msra.mxu0 0
        %3260 = vmatprep.mubr.bf16.mxu0 0
        %3261 = vmatmul.mubr.bf16.gmra.mrb[0].mxu0 %v1139
        %v3262 = vpop.f32.mrb[0].mxu0
        %v3263 = vadd.f32 %v3224, %v3262
        %v3264 = vpop.f32.mrb[0].mxu0
        %v3265 = vpop.f32.mrb[0].mxu0
        %v3266 = vadd.f32 %v3224, %v3265
        %v3267 = vpop.f32.mrb[0].mxu0
        %3268 = vdwg.mxu0
        %s3269 = scalar_lea.vmem %s996, 8
        %v3270 = vld [vmem:[%s3269] sm:$0x3]
        %v3271 = vlaneseq
        %v3272 = vshrl.u32 %v3271, 7
        %v3273 = vsub.s32 4, %v3272
        %v3274 = vrot.slane %v1130, %v3273
        %v3276 = vsel %vm1137, %v3270, 0
        %3278 = vmatprep.subr.bf16.mxu0 0
        %3279 = vmatpush1.bf16.xpose.msra.mxu0 %v3276
        %3280 = vmatprep.subr.bf16.mxu0 0
        %3281 = vmatpush1.bf16.xpose.msra.mxu0 0
        %3282 = vmatprep.subr.bf16.mxu0 0
        %3283 = vmatpush1.bf16.xpose.msra.mxu0 0
        %3284 = vmatprep.subr.bf16.mxu0 0
        %3285 = vmatpush1.bf16.xpose.msra.mxu0 0
        %3286 = vmatprep.subr.bf16.mxu0 0
        %3287 = vmatpush1.bf16.xpose.msra.mxu0 0
        %3288 = vmatprep.subr.bf16.mxu0 0
        %3289 = vmatpush1.bf16.xpose.msra.mxu0 0
        %3290 = vmatprep.subr.bf16.mxu0 0
        %3291 = vmatpush1.bf16.xpose.msra.mxu0 0
        %3292 = vmatprep.subr.bf16.mxu0 0
        %3293 = vmatpush1.bf16.xpose.msra.mxu0 0
        %3294 = vmatprep.subr.bf16.mxu0 0
        %3295 = vmatpush1.bf16.xpose.msra.mxu0 0
        %3296 = vmatprep.subr.bf16.mxu0 0
        %3297 = vmatpush1.bf16.xpose.msra.mxu0 0
        %3298 = vmatprep.subr.bf16.mxu0 0
        %3299 = vmatpush1.bf16.xpose.msra.mxu0 0
        %3300 = vmatprep.subr.bf16.mxu0 0
        %3301 = vmatpush1.bf16.xpose.msra.mxu0 0
        %3302 = vmatprep.subr.bf16.mxu0 0
        %3303 = vmatpush1.bf16.xpose.msra.mxu0 0
        %3304 = vmatprep.subr.bf16.mxu0 0
        %3305 = vmatpush1.bf16.xpose.msra.mxu0 0
        %3306 = vmatprep.subr.bf16.mxu0 0
        %3307 = vmatpush1.bf16.xpose.msra.mxu0 0
        %3308 = vmatprep.subr.bf16.mxu0 0
        %3309 = vmatpush1.bf16.xpose.msra.mxu0 0
        %3310 = vmatprep.mubr.bf16.mxu0 0
        %3311 = vmatmul.mubr.bf16.gmra.mrb[0].mxu0 %v1139
        %v3312 = vpop.f32.mrb[0].mxu0
        %v3313 = vadd.f32 %v3274, %v3312
        %v3314 = vpop.f32.mrb[0].mxu0
        %v3315 = vpop.f32.mrb[0].mxu0
        %v3316 = vadd.f32 %v3274, %v3315
        %v3317 = vpop.f32.mrb[0].mxu0
        %3318 = vdwg.mxu0
        %s3319 = scalar_lea.vmem %s1005, 8
        %v3320 = vld [vmem:[%s3319] sm:$0x3]
        %v3321 = vlaneseq
        %v3322 = vshrl.u32 %v3321, 7
        %v3323 = vsub.s32 4, %v3322
        %v3324 = vrot.slane %v1131, %v3323
        %v3326 = vsel %vm1137, %v3320, 0
        %3328 = vmatprep.subr.bf16.mxu0 0
        %3329 = vmatpush1.bf16.xpose.msra.mxu0 %v3326
        %3330 = vmatprep.subr.bf16.mxu0 0
        %3331 = vmatpush1.bf16.xpose.msra.mxu0 0
        %3332 = vmatprep.subr.bf16.mxu0 0
        %3333 = vmatpush1.bf16.xpose.msra.mxu0 0
        %3334 = vmatprep.subr.bf16.mxu0 0
        %3335 = vmatpush1.bf16.xpose.msra.mxu0 0
        %3336 = vmatprep.subr.bf16.mxu0 0
        %3337 = vmatpush1.bf16.xpose.msra.mxu0 0
        %3338 = vmatprep.subr.bf16.mxu0 0
        %3339 = vmatpush1.bf16.xpose.msra.mxu0 0
        %3340 = vmatprep.subr.bf16.mxu0 0
        %3341 = vmatpush1.bf16.xpose.msra.mxu0 0
        %3342 = vmatprep.subr.bf16.mxu0 0
        %3343 = vmatpush1.bf16.xpose.msra.mxu0 0
        %3344 = vmatprep.subr.bf16.mxu0 0
        %3345 = vmatpush1.bf16.xpose.msra.mxu0 0
        %3346 = vmatprep.subr.bf16.mxu0 0
        %3347 = vmatpush1.bf16.xpose.msra.mxu0 0
        %3348 = vmatprep.subr.bf16.mxu0 0
        %3349 = vmatpush1.bf16.xpose.msra.mxu0 0
        %3350 = vmatprep.subr.bf16.mxu0 0
        %3351 = vmatpush1.bf16.xpose.msra.mxu0 0
        %3352 = vmatprep.subr.bf16.mxu0 0
        %3353 = vmatpush1.bf16.xpose.msra.mxu0 0
        %3354 = vmatprep.subr.bf16.mxu0 0
        %3355 = vmatpush1.bf16.xpose.msra.mxu0 0
        %3356 = vmatprep.subr.bf16.mxu0 0
        %3357 = vmatpush1.bf16.xpose.msra.mxu0 0
        %3358 = vmatprep.subr.bf16.mxu0 0
        %3359 = vmatpush1.bf16.xpose.msra.mxu0 0
        %3360 = vmatprep.mubr.bf16.mxu0 0
        %3361 = vmatmul.mubr.bf16.gmra.mrb[0].mxu0 %v1139
        %v3362 = vpop.f32.mrb[0].mxu0
        %v3363 = vadd.f32 %v3324, %v3362
        %v3364 = vpop.f32.mrb[0].mxu0
        %v3365 = vpop.f32.mrb[0].mxu0
        %v3366 = vadd.f32 %v3324, %v3365
        %v3367 = vpop.f32.mrb[0].mxu0
        %3368 = vdwg.mxu0
        %v3370 = vsel %vm1283, %v3263, 0
        %v3373 = vsel %vm1283, %v3313, 0
        %3375 = vmatprep.subr.mxu0 0.0
        %3376 = vmatpush1.xpose.msra.mxu0 %v3373
        %3377 = vmatprep.subr.mxu0 0.0
        %3378 = vmatpush1.xpose.msra.mxu0 0.0
        %3379 = vmatprep.subr.mxu0 0.0
        %3380 = vmatpush1.xpose.msra.mxu0 0.0
        %3381 = vmatprep.subr.mxu0 0.0
        %3382 = vmatpush1.xpose.msra.mxu0 0.0
        %3383 = vmatprep.subr.mxu0 0.0
        %3384 = vmatpush1.xpose.msra.mxu0 0.0
        %3385 = vmatprep.subr.mxu0 0.0
        %3386 = vmatpush1.xpose.msra.mxu0 0.0
        %3387 = vmatprep.subr.mxu0 0.0
        %3388 = vmatpush1.xpose.msra.mxu0 0.0
        %3389 = vmatprep.subr.mxu0 0.0
        %3390 = vmatpush1.xpose.msra.mxu0 0.0
        %3391 = vmatprep.subr.mxu0 0.0
        %3392 = vmatpush1.xpose.msra.mxu0 0.0
        %3393 = vmatprep.subr.mxu0 0.0
        %3394 = vmatpush1.xpose.msra.mxu0 0.0
        %3395 = vmatprep.subr.mxu0 0.0
        %3396 = vmatpush1.xpose.msra.mxu0 0.0
        %3397 = vmatprep.subr.mxu0 0.0
        %3398 = vmatpush1.xpose.msra.mxu0 0.0
        %3399 = vmatprep.subr.mxu0 0.0
        %3400 = vmatpush1.xpose.msra.mxu0 0.0
        %3401 = vmatprep.subr.mxu0 0.0
        %3402 = vmatpush1.xpose.msra.mxu0 0.0
        %3403 = vmatprep.subr.mxu0 0.0
        %3404 = vmatpush1.xpose.msra.mxu0 0.0
        %3405 = vmatprep.subr.mxu0 0.0
        %3406 = vmatpush1.xpose.msra.mxu0 0.0
        %3407 = vmatprep.subr.mxu0 0.0
        %3408 = vmatpush1.xpose.msra.mxu0 0.0
        %3409 = vmatprep.subr.mxu0 0.0
        %3410 = vmatpush1.xpose.msra.mxu0 0.0
        %3411 = vmatprep.subr.mxu0 0.0
        %3412 = vmatpush1.xpose.msra.mxu0 0.0
        %3413 = vmatprep.subr.mxu0 0.0
        %3414 = vmatpush1.xpose.msra.mxu0 0.0
        %3415 = vmatprep.subr.mxu0 0.0
        %3416 = vmatpush1.xpose.msra.mxu0 0.0
        %3417 = vmatprep.subr.mxu0 0.0
        %3418 = vmatpush1.xpose.msra.mxu0 0.0
        %3419 = vmatprep.subr.mxu0 0.0
        %3420 = vmatpush1.xpose.msra.mxu0 0.0
        %3421 = vmatprep.subr.mxu0 0.0
        %3422 = vmatpush1.xpose.msra.mxu0 0.0
        %3423 = vmatprep.subr.mxu0 0.0
        %3424 = vmatpush1.xpose.msra.mxu0 0.0
        %3425 = vmatprep.subr.mxu0 0.0
        %3426 = vmatpush1.xpose.msra.mxu0 0.0
        %3427 = vmatprep.subr.mxu0 0.0
        %3428 = vmatpush1.xpose.msra.mxu0 0.0
        %3429 = vmatprep.subr.mxu0 0.0
        %3430 = vmatpush1.xpose.msra.mxu0 0.0
        %3431 = vmatprep.subr.mxu0 0.0
        %3432 = vmatpush1.xpose.msra.mxu0 0.0
        %3433 = vmatprep.subr.mxu0 0.0
        %3434 = vmatpush1.xpose.msra.mxu0 0.0
        %3435 = vmatprep.subr.mxu0 0.0
        %3436 = vmatpush1.xpose.msra.mxu0 0.0
        %3437 = vmatprep.subr.mxu0 0.0
        %3438 = vmatpush1.xpose.msra.mxu0 0.0
        %3439 = vmatprep.mubr.f32.mxu0 0.0
        %3440 = vmatmul.mubr.f32.gmra.mrb[0].mxu0 %v3370
        %v3441 = vpop.f32.mrb[0].mxu0
        %v3442 = vadd.f32 0.0, %v3441
        %v3443 = vpop.f32.mrb[0].mxu0
        %3444 = vdwg.mxu0
        %v3446 = vsel %vm1283, %v3266, 0
        %v3449 = vsel %vm1283, %v3316, 0
        %3451 = vmatprep.subr.mxu0 0.0
        %3452 = vmatpush1.xpose.msra.mxu0 %v3449
        %3453 = vmatprep.subr.mxu0 0.0
        %3454 = vmatpush1.xpose.msra.mxu0 0.0
        %3455 = vmatprep.subr.mxu0 0.0
        %3456 = vmatpush1.xpose.msra.mxu0 0.0
        %3457 = vmatprep.subr.mxu0 0.0
        %3458 = vmatpush1.xpose.msra.mxu0 0.0
        %3459 = vmatprep.subr.mxu0 0.0
        %3460 = vmatpush1.xpose.msra.mxu0 0.0
        %3461 = vmatprep.subr.mxu0 0.0
        %3462 = vmatpush1.xpose.msra.mxu0 0.0
        %3463 = vmatprep.subr.mxu0 0.0
        %3464 = vmatpush1.xpose.msra.mxu0 0.0
        %3465 = vmatprep.subr.mxu0 0.0
        %3466 = vmatpush1.xpose.msra.mxu0 0.0
        %3467 = vmatprep.subr.mxu0 0.0
        %3468 = vmatpush1.xpose.msra.mxu0 0.0
        %3469 = vmatprep.subr.mxu0 0.0
        %3470 = vmatpush1.xpose.msra.mxu0 0.0
        %3471 = vmatprep.subr.mxu0 0.0
        %3472 = vmatpush1.xpose.msra.mxu0 0.0
        %3473 = vmatprep.subr.mxu0 0.0
        %3474 = vmatpush1.xpose.msra.mxu0 0.0
        %3475 = vmatprep.subr.mxu0 0.0
        %3476 = vmatpush1.xpose.msra.mxu0 0.0
        %3477 = vmatprep.subr.mxu0 0.0
        %3478 = vmatpush1.xpose.msra.mxu0 0.0
        %3479 = vmatprep.subr.mxu0 0.0
        %3480 = vmatpush1.xpose.msra.mxu0 0.0
        %3481 = vmatprep.subr.mxu0 0.0
        %3482 = vmatpush1.xpose.msra.mxu0 0.0
        %3483 = vmatprep.subr.mxu0 0.0
        %3484 = vmatpush1.xpose.msra.mxu0 0.0
        %3485 = vmatprep.subr.mxu0 0.0
        %3486 = vmatpush1.xpose.msra.mxu0 0.0
        %3487 = vmatprep.subr.mxu0 0.0
        %3488 = vmatpush1.xpose.msra.mxu0 0.0
        %3489 = vmatprep.subr.mxu0 0.0
        %3490 = vmatpush1.xpose.msra.mxu0 0.0
        %3491 = vmatprep.subr.mxu0 0.0
        %3492 = vmatpush1.xpose.msra.mxu0 0.0
        %3493 = vmatprep.subr.mxu0 0.0
        %3494 = vmatpush1.xpose.msra.mxu0 0.0
        %3495 = vmatprep.subr.mxu0 0.0
        %3496 = vmatpush1.xpose.msra.mxu0 0.0
        %3497 = vmatprep.subr.mxu0 0.0
        %3498 = vmatpush1.xpose.msra.mxu0 0.0
        %3499 = vmatprep.subr.mxu0 0.0
        %3500 = vmatpush1.xpose.msra.mxu0 0.0
        %3501 = vmatprep.subr.mxu0 0.0
        %3502 = vmatpush1.xpose.msra.mxu0 0.0
        %3503 = vmatprep.subr.mxu0 0.0
        %3504 = vmatpush1.xpose.msra.mxu0 0.0
        %3505 = vmatprep.subr.mxu0 0.0
        %3506 = vmatpush1.xpose.msra.mxu0 0.0
        %3507 = vmatprep.subr.mxu0 0.0
        %3508 = vmatpush1.xpose.msra.mxu0 0.0
        %3509 = vmatprep.subr.mxu0 0.0
        %3510 = vmatpush1.xpose.msra.mxu0 0.0
        %3511 = vmatprep.subr.mxu0 0.0
        %3512 = vmatpush1.xpose.msra.mxu0 0.0
        %3513 = vmatprep.subr.mxu0 0.0
        %3514 = vmatpush1.xpose.msra.mxu0 0.0
        %3515 = vmatprep.mubr.f32.mxu0 0.0
        %3516 = vmatmul.mubr.f32.gmra.mrb[0].mxu0 %v3446
        %v3517 = vpop.f32.mrb[0].mxu0
        %v3518 = vadd.f32 0.0, %v3517
        %v3519 = vpop.f32.mrb[0].mxu0
        %3520 = vdwg.mxu0
        %v3521 = vsel %vm1436, %v3442, -inf
        %3522 = vmax.xlane.f32.xlu0 %v3521
        %v3523 = vpop.xlane.xlu0 %3522
        %v3524 = vsel %vm1436, %v3518, -inf
        %3525 = vmax.xlane.f32.xlu0 %v3524
        %v3526 = vpop.xlane.xlu0 %3525
        %v3527 = vsub.f32 %v3442, %v3523
        %v3528 = vsub.f32 %v3518, %v3526
        %v3529 = vmul.f32 %v3527, 1.442695
        %v3530 = vpow.pop %v3529
        %v3531 = vmul.f32 %v3528, 1.442695
        %v3532 = vpow.pop %v3531
        %v3533 = vsel %vm1436, %v3530, 0.0
        %3534 = vadd.xlane.f32.xlu0 %v3533
        %v3535 = vpop.xlane.xlu0 %3534
        %v3536 = vsel %vm1436, %v3532, 0.0
        %3537 = vadd.xlane.f32.xlu0 %v3536
        %v3538 = vpop.xlane.xlu0 %3537
        %v3539 = vrcp.pop %v3535
        %v3540 = vrcp.pop %v3538
        %v3541 = vmul.f32 %v3530, %v3539
        %v3542 = vmul.f32 %v3532, %v3540
        %v3544 = vsel %vm1436, %v3541, 0
        %3546 = vmatprep.subr.mxu0 0.0
        %3547 = vmatpush1.msra.mxu0 %v3363
        %3548 = vmatprep.subr.mxu0 0.0
        %3549 = vmatpush1.msra.mxu0 0.0
        %3550 = vmatprep.subr.mxu0 0.0
        %3551 = vmatpush1.msra.mxu0 0.0
        %3552 = vmatprep.subr.mxu0 0.0
        %3553 = vmatpush1.msra.mxu0 0.0
        %3554 = vmatprep.subr.mxu0 0.0
        %3555 = vmatpush1.msra.mxu0 0.0
        %3556 = vmatprep.subr.mxu0 0.0
        %3557 = vmatpush1.msra.mxu0 0.0
        %3558 = vmatprep.subr.mxu0 0.0
        %3559 = vmatpush1.msra.mxu0 0.0
        %3560 = vmatprep.subr.mxu0 0.0
        %3561 = vmatpush1.msra.mxu0 0.0
        %3562 = vmatprep.subr.mxu0 0.0
        %3563 = vmatpush1.msra.mxu0 0.0
        %3564 = vmatprep.subr.mxu0 0.0
        %3565 = vmatpush1.msra.mxu0 0.0
        %3566 = vmatprep.subr.mxu0 0.0
        %3567 = vmatpush1.msra.mxu0 0.0
        %3568 = vmatprep.subr.mxu0 0.0
        %3569 = vmatpush1.msra.mxu0 0.0
        %3570 = vmatprep.subr.mxu0 0.0
        %3571 = vmatpush1.msra.mxu0 0.0
        %3572 = vmatprep.subr.mxu0 0.0
        %3573 = vmatpush1.msra.mxu0 0.0
        %3574 = vmatprep.subr.mxu0 0.0
        %3575 = vmatpush1.msra.mxu0 0.0
        %3576 = vmatprep.subr.mxu0 0.0
        %3577 = vmatpush1.msra.mxu0 0.0
        %3578 = vmatprep.subr.mxu0 0.0
        %3579 = vmatpush1.msra.mxu0 0.0
        %3580 = vmatprep.subr.mxu0 0.0
        %3581 = vmatpush1.msra.mxu0 0.0
        %3582 = vmatprep.subr.mxu0 0.0
        %3583 = vmatpush1.msra.mxu0 0.0
        %3584 = vmatprep.subr.mxu0 0.0
        %3585 = vmatpush1.msra.mxu0 0.0
        %3586 = vmatprep.subr.mxu0 0.0
        %3587 = vmatpush1.msra.mxu0 0.0
        %3588 = vmatprep.subr.mxu0 0.0
        %3589 = vmatpush1.msra.mxu0 0.0
        %3590 = vmatprep.subr.mxu0 0.0
        %3591 = vmatpush1.msra.mxu0 0.0
        %3592 = vmatprep.subr.mxu0 0.0
        %3593 = vmatpush1.msra.mxu0 0.0
        %3594 = vmatprep.subr.mxu0 0.0
        %3595 = vmatpush1.msra.mxu0 0.0
        %3596 = vmatprep.subr.mxu0 0.0
        %3597 = vmatpush1.msra.mxu0 0.0
        %3598 = vmatprep.subr.mxu0 0.0
        %3599 = vmatpush1.msra.mxu0 0.0
        %3600 = vmatprep.subr.mxu0 0.0
        %3601 = vmatpush1.msra.mxu0 0.0
        %3602 = vmatprep.subr.mxu0 0.0
        %3603 = vmatpush1.msra.mxu0 0.0
        %3604 = vmatprep.subr.mxu0 0.0
        %3605 = vmatpush1.msra.mxu0 0.0
        %3606 = vmatprep.subr.mxu0 0.0
        %3607 = vmatpush1.msra.mxu0 0.0
        %3608 = vmatprep.subr.mxu0 0.0
        %3609 = vmatpush1.msra.mxu0 0.0
        %3610 = vmatprep.mubr.f32.mxu0 0.0
        %3611 = vmatmul.mubr.f32.gmra.mrb[0].mxu0 %v3544
        %v3612 = vpop.f32.mrb[0].mxu0
        %v3613 = vadd.f32 0.0, %v3612
        %v3614 = vpop.f32.mrb[0].mxu0
        %3615 = vdwg.mxu0
        %v3617 = vsel %vm1436, %v3542, 0
        %3619 = vmatprep.subr.mxu0 0.0
        %3620 = vmatpush1.msra.mxu0 %v3366
        %3621 = vmatprep.subr.mxu0 0.0
        %3622 = vmatpush1.msra.mxu0 0.0
        %3623 = vmatprep.subr.mxu0 0.0
        %3624 = vmatpush1.msra.mxu0 0.0
        %3625 = vmatprep.subr.mxu0 0.0
        %3626 = vmatpush1.msra.mxu0 0.0
        %3627 = vmatprep.subr.mxu0 0.0
        %3628 = vmatpush1.msra.mxu0 0.0
        %3629 = vmatprep.subr.mxu0 0.0
        %3630 = vmatpush1.msra.mxu0 0.0
        %3631 = vmatprep.subr.mxu0 0.0
        %3632 = vmatpush1.msra.mxu0 0.0
        %3633 = vmatprep.subr.mxu0 0.0
        %3634 = vmatpush1.msra.mxu0 0.0
        %3635 = vmatprep.subr.mxu0 0.0
        %3636 = vmatpush1.msra.mxu0 0.0
        %3637 = vmatprep.subr.mxu0 0.0
        %3638 = vmatpush1.msra.mxu0 0.0
        %3639 = vmatprep.subr.mxu0 0.0
        %3640 = vmatpush1.msra.mxu0 0.0
        %3641 = vmatprep.subr.mxu0 0.0
        %3642 = vmatpush1.msra.mxu0 0.0
        %3643 = vmatprep.subr.mxu0 0.0
        %3644 = vmatpush1.msra.mxu0 0.0
        %3645 = vmatprep.subr.mxu0 0.0
        %3646 = vmatpush1.msra.mxu0 0.0
        %3647 = vmatprep.subr.mxu0 0.0
        %3648 = vmatpush1.msra.mxu0 0.0
        %3649 = vmatprep.subr.mxu0 0.0
        %3650 = vmatpush1.msra.mxu0 0.0
        %3651 = vmatprep.subr.mxu0 0.0
        %3652 = vmatpush1.msra.mxu0 0.0
        %3653 = vmatprep.subr.mxu0 0.0
        %3654 = vmatpush1.msra.mxu0 0.0
        %3655 = vmatprep.subr.mxu0 0.0
        %3656 = vmatpush1.msra.mxu0 0.0
        %3657 = vmatprep.subr.mxu0 0.0
        %3658 = vmatpush1.msra.mxu0 0.0
        %3659 = vmatprep.subr.mxu0 0.0
        %3660 = vmatpush1.msra.mxu0 0.0
        %3661 = vmatprep.subr.mxu0 0.0
        %3662 = vmatpush1.msra.mxu0 0.0
        %3663 = vmatprep.subr.mxu0 0.0
        %3664 = vmatpush1.msra.mxu0 0.0
        %3665 = vmatprep.subr.mxu0 0.0
        %3666 = vmatpush1.msra.mxu0 0.0
        %3667 = vmatprep.subr.mxu0 0.0
        %3668 = vmatpush1.msra.mxu0 0.0
        %3669 = vmatprep.subr.mxu0 0.0
        %3670 = vmatpush1.msra.mxu0 0.0
        %3671 = vmatprep.subr.mxu0 0.0
        %3672 = vmatpush1.msra.mxu0 0.0
        %3673 = vmatprep.subr.mxu0 0.0
        %3674 = vmatpush1.msra.mxu0 0.0
        %3675 = vmatprep.subr.mxu0 0.0
        %3676 = vmatpush1.msra.mxu0 0.0
        %3677 = vmatprep.subr.mxu0 0.0
        %3678 = vmatpush1.msra.mxu0 0.0
        %3679 = vmatprep.subr.mxu0 0.0
        %3680 = vmatpush1.msra.mxu0 0.0
        %3681 = vmatprep.subr.mxu0 0.0
        %3682 = vmatpush1.msra.mxu0 0.0
        %3683 = vmatprep.mubr.f32.mxu0 0.0
        %3684 = vmatmul.mubr.f32.gmra.mrb[0].mxu0 %v3617
        %v3685 = vpop.f32.mrb[0].mxu0
        %v3686 = vadd.f32 0.0, %v3685
        %v3687 = vpop.f32.mrb[0].mxu0
        %3688 = vdwg.mxu0
        %v3689 = vpack.c.bf16 %v3686, %v3613
        %s3690 = scalar_lea.vmem %s827, 8 [#allocation11]
        %v3691 = vld [vmem:[%s3690] sm:$0x3]
        %v3693 = vsel %vm1283, %v3689, 0
        %v3696 = vsel %vm2083, %v3691, 0
        %3698 = vmatprep.subr.bf16.mxu0 0
        %3699 = vmatpush1.bf16.msra.mxu0 %v3696
        %3700 = vmatprep.subr.bf16.mxu0 0
        %3701 = vmatpush1.bf16.msra.mxu0 0
        %3702 = vmatprep.subr.bf16.mxu0 0
        %3703 = vmatpush1.bf16.msra.mxu0 0
        %3704 = vmatprep.subr.bf16.mxu0 0
        %3705 = vmatpush1.bf16.msra.mxu0 0
        %3706 = vmatprep.subr.bf16.mxu0 0
        %3707 = vmatpush1.bf16.msra.mxu0 0
        %3708 = vmatprep.subr.bf16.mxu0 0
        %3709 = vmatpush1.bf16.msra.mxu0 0
        %3710 = vmatprep.subr.bf16.mxu0 0
        %3711 = vmatpush1.bf16.msra.mxu0 0
        %3712 = vmatprep.subr.bf16.mxu0 0
        %3713 = vmatpush1.bf16.msra.mxu0 0
        %3714 = vmatprep.subr.bf16.mxu0 0
        %3715 = vmatpush1.bf16.msra.mxu0 0
        %3716 = vmatprep.subr.bf16.mxu0 0
        %3717 = vmatpush1.bf16.msra.mxu0 0
        %3718 = vmatprep.subr.bf16.mxu0 0
        %3719 = vmatpush1.bf16.msra.mxu0 0
        %3720 = vmatprep.subr.bf16.mxu0 0
        %3721 = vmatpush1.bf16.msra.mxu0 0
        %3722 = vmatprep.subr.bf16.mxu0 0
        %3723 = vmatpush1.bf16.msra.mxu0 0
        %3724 = vmatprep.subr.bf16.mxu0 0
        %3725 = vmatpush1.bf16.msra.mxu0 0
        %3726 = vmatprep.subr.bf16.mxu0 0
        %3727 = vmatpush1.bf16.msra.mxu0 0
        %3728 = vmatprep.subr.bf16.mxu0 0
        %3729 = vmatpush1.bf16.msra.mxu0 0
        %3730 = vmatprep.mubr.bf16.mxu0 0
        %3731 = vmatmul.mubr.bf16.gmra.mrb[0].mxu0 %v3693
        %v3732 = vpop.f32.mrb[0].mxu0
        %v3733 = vadd.f32 0.0, %v3732
        %v3734 = vpop.f32.mrb[0].mxu0
        %v3735 = vpop.f32.mrb[0].mxu0
        %v3736 = vadd.f32 0.0, %v3735
        %v3737 = vpop.f32.mrb[0].mxu0
        %3738 = vdwg.mxu0
        %v3739 = vadd.f32 %v3217, %v3733
        %v3740 = vadd.f32 %v3218, %v3736
        %s3741 = scalar_lea.vmem %s987, 10
        %v3742 = vld [vmem:[%s3741] sm:$0x3]
        %v3743 = vlaneseq
        %v3744 = vshrl.u32 %v3743, 7
        %v3745 = vsub.s32 5, %v3744
        %v3746 = vrot.slane %v1129, %v3745
        %v3748 = vsel %vm1137, %v3742, 0
        %3750 = vmatprep.subr.bf16.mxu0 0
        %3751 = vmatpush1.bf16.xpose.msra.mxu0 %v3748
        %3752 = vmatprep.subr.bf16.mxu0 0
        %3753 = vmatpush1.bf16.xpose.msra.mxu0 0
        %3754 = vmatprep.subr.bf16.mxu0 0
        %3755 = vmatpush1.bf16.xpose.msra.mxu0 0
        %3756 = vmatprep.subr.bf16.mxu0 0
        %3757 = vmatpush1.bf16.xpose.msra.mxu0 0
        %3758 = vmatprep.subr.bf16.mxu0 0
        %3759 = vmatpush1.bf16.xpose.msra.mxu0 0
        %3760 = vmatprep.subr.bf16.mxu0 0
        %3761 = vmatpush1.bf16.xpose.msra.mxu0 0
        %3762 = vmatprep.subr.bf16.mxu0 0
        %3763 = vmatpush1.bf16.xpose.msra.mxu0 0
        %3764 = vmatprep.subr.bf16.mxu0 0
        %3765 = vmatpush1.bf16.xpose.msra.mxu0 0
        %3766 = vmatprep.subr.bf16.mxu0 0
        %3767 = vmatpush1.bf16.xpose.msra.mxu0 0
        %3768 = vmatprep.subr.bf16.mxu0 0
        %3769 = vmatpush1.bf16.xpose.msra.mxu0 0
        %3770 = vmatprep.subr.bf16.mxu0 0
        %3771 = vmatpush1.bf16.xpose.msra.mxu0 0
        %3772 = vmatprep.subr.bf16.mxu0 0
        %3773 = vmatpush1.bf16.xpose.msra.mxu0 0
        %3774 = vmatprep.subr.bf16.mxu0 0
        %3775 = vmatpush1.bf16.xpose.msra.mxu0 0
        %3776 = vmatprep.subr.bf16.mxu0 0
        %3777 = vmatpush1.bf16.xpose.msra.mxu0 0
        %3778 = vmatprep.subr.bf16.mxu0 0
        %3779 = vmatpush1.bf16.xpose.msra.mxu0 0
        %3780 = vmatprep.subr.bf16.mxu0 0
        %3781 = vmatpush1.bf16.xpose.msra.mxu0 0
        %3782 = vmatprep.mubr.bf16.mxu0 0
        %3783 = vmatmul.mubr.bf16.gmra.mrb[0].mxu0 %v1139
        %v3784 = vpop.f32.mrb[0].mxu0
        %v3785 = vadd.f32 %v3746, %v3784
        %v3786 = vpop.f32.mrb[0].mxu0
        %v3787 = vpop.f32.mrb[0].mxu0
        %v3788 = vadd.f32 %v3746, %v3787
        %v3789 = vpop.f32.mrb[0].mxu0
        %3790 = vdwg.mxu0
        %s3791 = scalar_lea.vmem %s996, 10
        %v3792 = vld [vmem:[%s3791] sm:$0x3]
        %v3793 = vlaneseq
        %v3794 = vshrl.u32 %v3793, 7
        %v3795 = vsub.s32 5, %v3794
        %v3796 = vrot.slane %v1130, %v3795
        %v3798 = vsel %vm1137, %v3792, 0
        %3800 = vmatprep.subr.bf16.mxu0 0
        %3801 = vmatpush1.bf16.xpose.msra.mxu0 %v3798
        %3802 = vmatprep.subr.bf16.mxu0 0
        %3803 = vmatpush1.bf16.xpose.msra.mxu0 0
        %3804 = vmatprep.subr.bf16.mxu0 0
        %3805 = vmatpush1.bf16.xpose.msra.mxu0 0
        %3806 = vmatprep.subr.bf16.mxu0 0
        %3807 = vmatpush1.bf16.xpose.msra.mxu0 0
        %3808 = vmatprep.subr.bf16.mxu0 0
        %3809 = vmatpush1.bf16.xpose.msra.mxu0 0
        %3810 = vmatprep.subr.bf16.mxu0 0
        %3811 = vmatpush1.bf16.xpose.msra.mxu0 0
        %3812 = vmatprep.subr.bf16.mxu0 0
        %3813 = vmatpush1.bf16.xpose.msra.mxu0 0
        %3814 = vmatprep.subr.bf16.mxu0 0
        %3815 = vmatpush1.bf16.xpose.msra.mxu0 0
        %3816 = vmatprep.subr.bf16.mxu0 0
        %3817 = vmatpush1.bf16.xpose.msra.mxu0 0
        %3818 = vmatprep.subr.bf16.mxu0 0
        %3819 = vmatpush1.bf16.xpose.msra.mxu0 0
        %3820 = vmatprep.subr.bf16.mxu0 0
        %3821 = vmatpush1.bf16.xpose.msra.mxu0 0
        %3822 = vmatprep.subr.bf16.mxu0 0
        %3823 = vmatpush1.bf16.xpose.msra.mxu0 0
        %3824 = vmatprep.subr.bf16.mxu0 0
        %3825 = vmatpush1.bf16.xpose.msra.mxu0 0
        %3826 = vmatprep.subr.bf16.mxu0 0
        %3827 = vmatpush1.bf16.xpose.msra.mxu0 0
        %3828 = vmatprep.subr.bf16.mxu0 0
        %3829 = vmatpush1.bf16.xpose.msra.mxu0 0
        %3830 = vmatprep.subr.bf16.mxu0 0
        %3831 = vmatpush1.bf16.xpose.msra.mxu0 0
        %3832 = vmatprep.mubr.bf16.mxu0 0
        %3833 = vmatmul.mubr.bf16.gmra.mrb[0].mxu0 %v1139
        %v3834 = vpop.f32.mrb[0].mxu0
        %v3835 = vadd.f32 %v3796, %v3834
        %v3836 = vpop.f32.mrb[0].mxu0
        %v3837 = vpop.f32.mrb[0].mxu0
        %v3838 = vadd.f32 %v3796, %v3837
        %v3839 = vpop.f32.mrb[0].mxu0
        %3840 = vdwg.mxu0
        %s3841 = scalar_lea.vmem %s1005, 10
        %v3842 = vld [vmem:[%s3841] sm:$0x3]
        %v3843 = vlaneseq
        %v3844 = vshrl.u32 %v3843, 7
        %v3845 = vsub.s32 5, %v3844
        %v3846 = vrot.slane %v1131, %v3845
        %v3848 = vsel %vm1137, %v3842, 0
        %3850 = vmatprep.subr.bf16.mxu0 0
        %3851 = vmatpush1.bf16.xpose.msra.mxu0 %v3848
        %3852 = vmatprep.subr.bf16.mxu0 0
        %3853 = vmatpush1.bf16.xpose.msra.mxu0 0
        %3854 = vmatprep.subr.bf16.mxu0 0
        %3855 = vmatpush1.bf16.xpose.msra.mxu0 0
        %3856 = vmatprep.subr.bf16.mxu0 0
        %3857 = vmatpush1.bf16.xpose.msra.mxu0 0
        %3858 = vmatprep.subr.bf16.mxu0 0
        %3859 = vmatpush1.bf16.xpose.msra.mxu0 0
        %3860 = vmatprep.subr.bf16.mxu0 0
        %3861 = vmatpush1.bf16.xpose.msra.mxu0 0
        %3862 = vmatprep.subr.bf16.mxu0 0
        %3863 = vmatpush1.bf16.xpose.msra.mxu0 0
        %3864 = vmatprep.subr.bf16.mxu0 0
        %3865 = vmatpush1.bf16.xpose.msra.mxu0 0
        %3866 = vmatprep.subr.bf16.mxu0 0
        %3867 = vmatpush1.bf16.xpose.msra.mxu0 0
        %3868 = vmatprep.subr.bf16.mxu0 0
        %3869 = vmatpush1.bf16.xpose.msra.mxu0 0
        %3870 = vmatprep.subr.bf16.mxu0 0
        %3871 = vmatpush1.bf16.xpose.msra.mxu0 0
        %3872 = vmatprep.subr.bf16.mxu0 0
        %3873 = vmatpush1.bf16.xpose.msra.mxu0 0
        %3874 = vmatprep.subr.bf16.mxu0 0
        %3875 = vmatpush1.bf16.xpose.msra.mxu0 0
        %3876 = vmatprep.subr.bf16.mxu0 0
        %3877 = vmatpush1.bf16.xpose.msra.mxu0 0
        %3878 = vmatprep.subr.bf16.mxu0 0
        %3879 = vmatpush1.bf16.xpose.msra.mxu0 0
        %3880 = vmatprep.subr.bf16.mxu0 0
        %3881 = vmatpush1.bf16.xpose.msra.mxu0 0
        %3882 = vmatprep.mubr.bf16.mxu0 0
        %3883 = vmatmul.mubr.bf16.gmra.mrb[0].mxu0 %v1139
        %v3884 = vpop.f32.mrb[0].mxu0
        %v3885 = vadd.f32 %v3846, %v3884
        %v3886 = vpop.f32.mrb[0].mxu0
        %v3887 = vpop.f32.mrb[0].mxu0
        %v3888 = vadd.f32 %v3846, %v3887
        %v3889 = vpop.f32.mrb[0].mxu0
        %3890 = vdwg.mxu0
        %v3892 = vsel %vm1283, %v3785, 0
        %v3895 = vsel %vm1283, %v3835, 0
        %3897 = vmatprep.subr.mxu0 0.0
        %3898 = vmatpush1.xpose.msra.mxu0 %v3895
        %3899 = vmatprep.subr.mxu0 0.0
        %3900 = vmatpush1.xpose.msra.mxu0 0.0
        %3901 = vmatprep.subr.mxu0 0.0
        %3902 = vmatpush1.xpose.msra.mxu0 0.0
        %3903 = vmatprep.subr.mxu0 0.0
        %3904 = vmatpush1.xpose.msra.mxu0 0.0
        %3905 = vmatprep.subr.mxu0 0.0
        %3906 = vmatpush1.xpose.msra.mxu0 0.0
        %3907 = vmatprep.subr.mxu0 0.0
        %3908 = vmatpush1.xpose.msra.mxu0 0.0
        %3909 = vmatprep.subr.mxu0 0.0
        %3910 = vmatpush1.xpose.msra.mxu0 0.0
        %3911 = vmatprep.subr.mxu0 0.0
        %3912 = vmatpush1.xpose.msra.mxu0 0.0
        %3913 = vmatprep.subr.mxu0 0.0
        %3914 = vmatpush1.xpose.msra.mxu0 0.0
        %3915 = vmatprep.subr.mxu0 0.0
        %3916 = vmatpush1.xpose.msra.mxu0 0.0
        %3917 = vmatprep.subr.mxu0 0.0
        %3918 = vmatpush1.xpose.msra.mxu0 0.0
        %3919 = vmatprep.subr.mxu0 0.0
        %3920 = vmatpush1.xpose.msra.mxu0 0.0
        %3921 = vmatprep.subr.mxu0 0.0
        %3922 = vmatpush1.xpose.msra.mxu0 0.0
        %3923 = vmatprep.subr.mxu0 0.0
        %3924 = vmatpush1.xpose.msra.mxu0 0.0
        %3925 = vmatprep.subr.mxu0 0.0
        %3926 = vmatpush1.xpose.msra.mxu0 0.0
        %3927 = vmatprep.subr.mxu0 0.0
        %3928 = vmatpush1.xpose.msra.mxu0 0.0
        %3929 = vmatprep.subr.mxu0 0.0
        %3930 = vmatpush1.xpose.msra.mxu0 0.0
        %3931 = vmatprep.subr.mxu0 0.0
        %3932 = vmatpush1.xpose.msra.mxu0 0.0
        %3933 = vmatprep.subr.mxu0 0.0
        %3934 = vmatpush1.xpose.msra.mxu0 0.0
        %3935 = vmatprep.subr.mxu0 0.0
        %3936 = vmatpush1.xpose.msra.mxu0 0.0
        %3937 = vmatprep.subr.mxu0 0.0
        %3938 = vmatpush1.xpose.msra.mxu0 0.0
        %3939 = vmatprep.subr.mxu0 0.0
        %3940 = vmatpush1.xpose.msra.mxu0 0.0
        %3941 = vmatprep.subr.mxu0 0.0
        %3942 = vmatpush1.xpose.msra.mxu0 0.0
        %3943 = vmatprep.subr.mxu0 0.0
        %3944 = vmatpush1.xpose.msra.mxu0 0.0
        %3945 = vmatprep.subr.mxu0 0.0
        %3946 = vmatpush1.xpose.msra.mxu0 0.0
        %3947 = vmatprep.subr.mxu0 0.0
        %3948 = vmatpush1.xpose.msra.mxu0 0.0
        %3949 = vmatprep.subr.mxu0 0.0
        %3950 = vmatpush1.xpose.msra.mxu0 0.0
        %3951 = vmatprep.subr.mxu0 0.0
        %3952 = vmatpush1.xpose.msra.mxu0 0.0
        %3953 = vmatprep.subr.mxu0 0.0
        %3954 = vmatpush1.xpose.msra.mxu0 0.0
        %3955 = vmatprep.subr.mxu0 0.0
        %3956 = vmatpush1.xpose.msra.mxu0 0.0
        %3957 = vmatprep.subr.mxu0 0.0
        %3958 = vmatpush1.xpose.msra.mxu0 0.0
        %3959 = vmatprep.subr.mxu0 0.0
        %3960 = vmatpush1.xpose.msra.mxu0 0.0
        %3961 = vmatprep.mubr.f32.mxu0 0.0
        %3962 = vmatmul.mubr.f32.gmra.mrb[0].mxu0 %v3892
        %v3963 = vpop.f32.mrb[0].mxu0
        %v3964 = vadd.f32 0.0, %v3963
        %v3965 = vpop.f32.mrb[0].mxu0
        %3966 = vdwg.mxu0
        %v3968 = vsel %vm1283, %v3788, 0
        %v3971 = vsel %vm1283, %v3838, 0
        %3973 = vmatprep.subr.mxu0 0.0
        %3974 = vmatpush1.xpose.msra.mxu0 %v3971
        %3975 = vmatprep.subr.mxu0 0.0
        %3976 = vmatpush1.xpose.msra.mxu0 0.0
        %3977 = vmatprep.subr.mxu0 0.0
        %3978 = vmatpush1.xpose.msra.mxu0 0.0
        %3979 = vmatprep.subr.mxu0 0.0
        %3980 = vmatpush1.xpose.msra.mxu0 0.0
        %3981 = vmatprep.subr.mxu0 0.0
        %3982 = vmatpush1.xpose.msra.mxu0 0.0
        %3983 = vmatprep.subr.mxu0 0.0
        %3984 = vmatpush1.xpose.msra.mxu0 0.0
        %3985 = vmatprep.subr.mxu0 0.0
        %3986 = vmatpush1.xpose.msra.mxu0 0.0
        %3987 = vmatprep.subr.mxu0 0.0
        %3988 = vmatpush1.xpose.msra.mxu0 0.0
        %3989 = vmatprep.subr.mxu0 0.0
        %3990 = vmatpush1.xpose.msra.mxu0 0.0
        %3991 = vmatprep.subr.mxu0 0.0
        %3992 = vmatpush1.xpose.msra.mxu0 0.0
        %3993 = vmatprep.subr.mxu0 0.0
        %3994 = vmatpush1.xpose.msra.mxu0 0.0
        %3995 = vmatprep.subr.mxu0 0.0
        %3996 = vmatpush1.xpose.msra.mxu0 0.0
        %3997 = vmatprep.subr.mxu0 0.0
        %3998 = vmatpush1.xpose.msra.mxu0 0.0
        %3999 = vmatprep.subr.mxu0 0.0
        %4000 = vmatpush1.xpose.msra.mxu0 0.0
        %4001 = vmatprep.subr.mxu0 0.0
        %4002 = vmatpush1.xpose.msra.mxu0 0.0
        %4003 = vmatprep.subr.mxu0 0.0
        %4004 = vmatpush1.xpose.msra.mxu0 0.0
        %4005 = vmatprep.subr.mxu0 0.0
        %4006 = vmatpush1.xpose.msra.mxu0 0.0
        %4007 = vmatprep.subr.mxu0 0.0
        %4008 = vmatpush1.xpose.msra.mxu0 0.0
        %4009 = vmatprep.subr.mxu0 0.0
        %4010 = vmatpush1.xpose.msra.mxu0 0.0
        %4011 = vmatprep.subr.mxu0 0.0
        %4012 = vmatpush1.xpose.msra.mxu0 0.0
        %4013 = vmatprep.subr.mxu0 0.0
        %4014 = vmatpush1.xpose.msra.mxu0 0.0
        %4015 = vmatprep.subr.mxu0 0.0
        %4016 = vmatpush1.xpose.msra.mxu0 0.0
        %4017 = vmatprep.subr.mxu0 0.0
        %4018 = vmatpush1.xpose.msra.mxu0 0.0
        %4019 = vmatprep.subr.mxu0 0.0
        %4020 = vmatpush1.xpose.msra.mxu0 0.0
        %4021 = vmatprep.subr.mxu0 0.0
        %4022 = vmatpush1.xpose.msra.mxu0 0.0
        %4023 = vmatprep.subr.mxu0 0.0
        %4024 = vmatpush1.xpose.msra.mxu0 0.0
        %4025 = vmatprep.subr.mxu0 0.0
        %4026 = vmatpush1.xpose.msra.mxu0 0.0
        %4027 = vmatprep.subr.mxu0 0.0
        %4028 = vmatpush1.xpose.msra.mxu0 0.0
        %4029 = vmatprep.subr.mxu0 0.0
        %4030 = vmatpush1.xpose.msra.mxu0 0.0
        %4031 = vmatprep.subr.mxu0 0.0
        %4032 = vmatpush1.xpose.msra.mxu0 0.0
        %4033 = vmatprep.subr.mxu0 0.0
        %4034 = vmatpush1.xpose.msra.mxu0 0.0
        %4035 = vmatprep.subr.mxu0 0.0
        %4036 = vmatpush1.xpose.msra.mxu0 0.0
        %4037 = vmatprep.mubr.f32.mxu0 0.0
        %4038 = vmatmul.mubr.f32.gmra.mrb[0].mxu0 %v3968
        %v4039 = vpop.f32.mrb[0].mxu0
        %v4040 = vadd.f32 0.0, %v4039
        %v4041 = vpop.f32.mrb[0].mxu0
        %4042 = vdwg.mxu0
        %v4043 = vsel %vm1436, %v3964, -inf
        %4044 = vmax.xlane.f32.xlu0 %v4043
        %v4045 = vpop.xlane.xlu0 %4044
        %v4046 = vsel %vm1436, %v4040, -inf
        %4047 = vmax.xlane.f32.xlu0 %v4046
        %v4048 = vpop.xlane.xlu0 %4047
        %v4049 = vsub.f32 %v3964, %v4045
        %v4050 = vsub.f32 %v4040, %v4048
        %v4051 = vmul.f32 %v4049, 1.442695
        %v4052 = vpow.pop %v4051
        %v4053 = vmul.f32 %v4050, 1.442695
        %v4054 = vpow.pop %v4053
        %v4055 = vsel %vm1436, %v4052, 0.0
        %4056 = vadd.xlane.f32.xlu0 %v4055
        %v4057 = vpop.xlane.xlu0 %4056
        %v4058 = vsel %vm1436, %v4054, 0.0
        %4059 = vadd.xlane.f32.xlu0 %v4058
        %v4060 = vpop.xlane.xlu0 %4059
        %v4061 = vrcp.pop %v4057
        %v4062 = vrcp.pop %v4060
        %v4063 = vmul.f32 %v4052, %v4061
        %v4064 = vmul.f32 %v4054, %v4062
        %v4066 = vsel %vm1436, %v4063, 0
        %4068 = vmatprep.subr.mxu0 0.0
        %4069 = vmatpush1.msra.mxu0 %v3885
        %4070 = vmatprep.subr.mxu0 0.0
        %4071 = vmatpush1.msra.mxu0 0.0
        %4072 = vmatprep.subr.mxu0 0.0
        %4073 = vmatpush1.msra.mxu0 0.0
        %4074 = vmatprep.subr.mxu0 0.0
        %4075 = vmatpush1.msra.mxu0 0.0
        %4076 = vmatprep.subr.mxu0 0.0
        %4077 = vmatpush1.msra.mxu0 0.0
        %4078 = vmatprep.subr.mxu0 0.0
        %4079 = vmatpush1.msra.mxu0 0.0
        %4080 = vmatprep.subr.mxu0 0.0
        %4081 = vmatpush1.msra.mxu0 0.0
        %4082 = vmatprep.subr.mxu0 0.0
        %4083 = vmatpush1.msra.mxu0 0.0
        %4084 = vmatprep.subr.mxu0 0.0
        %4085 = vmatpush1.msra.mxu0 0.0
        %4086 = vmatprep.subr.mxu0 0.0
        %4087 = vmatpush1.msra.mxu0 0.0
        %4088 = vmatprep.subr.mxu0 0.0
        %4089 = vmatpush1.msra.mxu0 0.0
        %4090 = vmatprep.subr.mxu0 0.0
        %4091 = vmatpush1.msra.mxu0 0.0
        %4092 = vmatprep.subr.mxu0 0.0
        %4093 = vmatpush1.msra.mxu0 0.0
        %4094 = vmatprep.subr.mxu0 0.0
        %4095 = vmatpush1.msra.mxu0 0.0
        %4096 = vmatprep.subr.mxu0 0.0
        %4097 = vmatpush1.msra.mxu0 0.0
        %4098 = vmatprep.subr.mxu0 0.0
        %4099 = vmatpush1.msra.mxu0 0.0
        %4100 = vmatprep.subr.mxu0 0.0
        %4101 = vmatpush1.msra.mxu0 0.0
        %4102 = vmatprep.subr.mxu0 0.0
        %4103 = vmatpush1.msra.mxu0 0.0
        %4104 = vmatprep.subr.mxu0 0.0
        %4105 = vmatpush1.msra.mxu0 0.0
        %4106 = vmatprep.subr.mxu0 0.0
        %4107 = vmatpush1.msra.mxu0 0.0
        %4108 = vmatprep.subr.mxu0 0.0
        %4109 = vmatpush1.msra.mxu0 0.0
        %4110 = vmatprep.subr.mxu0 0.0
        %4111 = vmatpush1.msra.mxu0 0.0
        %4112 = vmatprep.subr.mxu0 0.0
        %4113 = vmatpush1.msra.mxu0 0.0
        %4114 = vmatprep.subr.mxu0 0.0
        %4115 = vmatpush1.msra.mxu0 0.0
        %4116 = vmatprep.subr.mxu0 0.0
        %4117 = vmatpush1.msra.mxu0 0.0
        %4118 = vmatprep.subr.mxu0 0.0
        %4119 = vmatpush1.msra.mxu0 0.0
        %4120 = vmatprep.subr.mxu0 0.0
        %4121 = vmatpush1.msra.mxu0 0.0
        %4122 = vmatprep.subr.mxu0 0.0
        %4123 = vmatpush1.msra.mxu0 0.0
        %4124 = vmatprep.subr.mxu0 0.0
        %4125 = vmatpush1.msra.mxu0 0.0
        %4126 = vmatprep.subr.mxu0 0.0
        %4127 = vmatpush1.msra.mxu0 0.0
        %4128 = vmatprep.subr.mxu0 0.0
        %4129 = vmatpush1.msra.mxu0 0.0
        %4130 = vmatprep.subr.mxu0 0.0
        %4131 = vmatpush1.msra.mxu0 0.0
        %4132 = vmatprep.mubr.f32.mxu0 0.0
        %4133 = vmatmul.mubr.f32.gmra.mrb[0].mxu0 %v4066
        %v4134 = vpop.f32.mrb[0].mxu0
        %v4135 = vadd.f32 0.0, %v4134
        %v4136 = vpop.f32.mrb[0].mxu0
        %4137 = vdwg.mxu0
        %v4139 = vsel %vm1436, %v4064, 0
        %4141 = vmatprep.subr.mxu0 0.0
        %4142 = vmatpush1.msra.mxu0 %v3888
        %4143 = vmatprep.subr.mxu0 0.0
        %4144 = vmatpush1.msra.mxu0 0.0
        %4145 = vmatprep.subr.mxu0 0.0
        %4146 = vmatpush1.msra.mxu0 0.0
        %4147 = vmatprep.subr.mxu0 0.0
        %4148 = vmatpush1.msra.mxu0 0.0
        %4149 = vmatprep.subr.mxu0 0.0
        %4150 = vmatpush1.msra.mxu0 0.0
        %4151 = vmatprep.subr.mxu0 0.0
        %4152 = vmatpush1.msra.mxu0 0.0
        %4153 = vmatprep.subr.mxu0 0.0
        %4154 = vmatpush1.msra.mxu0 0.0
        %4155 = vmatprep.subr.mxu0 0.0
        %4156 = vmatpush1.msra.mxu0 0.0
        %4157 = vmatprep.subr.mxu0 0.0
        %4158 = vmatpush1.msra.mxu0 0.0
        %4159 = vmatprep.subr.mxu0 0.0
        %4160 = vmatpush1.msra.mxu0 0.0
        %4161 = vmatprep.subr.mxu0 0.0
        %4162 = vmatpush1.msra.mxu0 0.0
        %4163 = vmatprep.subr.mxu0 0.0
        %4164 = vmatpush1.msra.mxu0 0.0
        %4165 = vmatprep.subr.mxu0 0.0
        %4166 = vmatpush1.msra.mxu0 0.0
        %4167 = vmatprep.subr.mxu0 0.0
        %4168 = vmatpush1.msra.mxu0 0.0
        %4169 = vmatprep.subr.mxu0 0.0
        %4170 = vmatpush1.msra.mxu0 0.0
        %4171 = vmatprep.subr.mxu0 0.0
        %4172 = vmatpush1.msra.mxu0 0.0
        %4173 = vmatprep.subr.mxu0 0.0
        %4174 = vmatpush1.msra.mxu0 0.0
        %4175 = vmatprep.subr.mxu0 0.0
        %4176 = vmatpush1.msra.mxu0 0.0
        %4177 = vmatprep.subr.mxu0 0.0
        %4178 = vmatpush1.msra.mxu0 0.0
        %4179 = vmatprep.subr.mxu0 0.0
        %4180 = vmatpush1.msra.mxu0 0.0
        %4181 = vmatprep.subr.mxu0 0.0
        %4182 = vmatpush1.msra.mxu0 0.0
        %4183 = vmatprep.subr.mxu0 0.0
        %4184 = vmatpush1.msra.mxu0 0.0
        %4185 = vmatprep.subr.mxu0 0.0
        %4186 = vmatpush1.msra.mxu0 0.0
        %4187 = vmatprep.subr.mxu0 0.0
        %4188 = vmatpush1.msra.mxu0 0.0
        %4189 = vmatprep.subr.mxu0 0.0
        %4190 = vmatpush1.msra.mxu0 0.0
        %4191 = vmatprep.subr.mxu0 0.0
        %4192 = vmatpush1.msra.mxu0 0.0
        %4193 = vmatprep.subr.mxu0 0.0
        %4194 = vmatpush1.msra.mxu0 0.0
        %4195 = vmatprep.subr.mxu0 0.0
        %4196 = vmatpush1.msra.mxu0 0.0
        %4197 = vmatprep.subr.mxu0 0.0
        %4198 = vmatpush1.msra.mxu0 0.0
        %4199 = vmatprep.subr.mxu0 0.0
        %4200 = vmatpush1.msra.mxu0 0.0
        %4201 = vmatprep.subr.mxu0 0.0
        %4202 = vmatpush1.msra.mxu0 0.0
        %4203 = vmatprep.subr.mxu0 0.0
        %4204 = vmatpush1.msra.mxu0 0.0
        %4205 = vmatprep.mubr.f32.mxu0 0.0
        %4206 = vmatmul.mubr.f32.gmra.mrb[0].mxu0 %v4139
        %v4207 = vpop.f32.mrb[0].mxu0
        %v4208 = vadd.f32 0.0, %v4207
        %v4209 = vpop.f32.mrb[0].mxu0
        %4210 = vdwg.mxu0
        %v4211 = vpack.c.bf16 %v4208, %v4135
        %s4212 = scalar_lea.vmem %s827, 10 [#allocation11]
        %v4213 = vld [vmem:[%s4212] sm:$0x3]
        %v4215 = vsel %vm1283, %v4211, 0
        %v4218 = vsel %vm2083, %v4213, 0
        %4220 = vmatprep.subr.bf16.mxu0 0
        %4221 = vmatpush1.bf16.msra.mxu0 %v4218
        %4222 = vmatprep.subr.bf16.mxu0 0
        %4223 = vmatpush1.bf16.msra.mxu0 0
        %4224 = vmatprep.subr.bf16.mxu0 0
        %4225 = vmatpush1.bf16.msra.mxu0 0
        %4226 = vmatprep.subr.bf16.mxu0 0
        %4227 = vmatpush1.bf16.msra.mxu0 0
        %4228 = vmatprep.subr.bf16.mxu0 0
        %4229 = vmatpush1.bf16.msra.mxu0 0
        %4230 = vmatprep.subr.bf16.mxu0 0
        %4231 = vmatpush1.bf16.msra.mxu0 0
        %4232 = vmatprep.subr.bf16.mxu0 0
        %4233 = vmatpush1.bf16.msra.mxu0 0
        %4234 = vmatprep.subr.bf16.mxu0 0
        %4235 = vmatpush1.bf16.msra.mxu0 0
        %4236 = vmatprep.subr.bf16.mxu0 0
        %4237 = vmatpush1.bf16.msra.mxu0 0
        %4238 = vmatprep.subr.bf16.mxu0 0
        %4239 = vmatpush1.bf16.msra.mxu0 0
        %4240 = vmatprep.subr.bf16.mxu0 0
        %4241 = vmatpush1.bf16.msra.mxu0 0
        %4242 = vmatprep.subr.bf16.mxu0 0
        %4243 = vmatpush1.bf16.msra.mxu0 0
        %4244 = vmatprep.subr.bf16.mxu0 0
        %4245 = vmatpush1.bf16.msra.mxu0 0
        %4246 = vmatprep.subr.bf16.mxu0 0
        %4247 = vmatpush1.bf16.msra.mxu0 0
        %4248 = vmatprep.subr.bf16.mxu0 0
        %4249 = vmatpush1.bf16.msra.mxu0 0
        %4250 = vmatprep.subr.bf16.mxu0 0
        %4251 = vmatpush1.bf16.msra.mxu0 0
        %4252 = vmatprep.mubr.bf16.mxu0 0
        %4253 = vmatmul.mubr.bf16.gmra.mrb[0].mxu0 %v4215
        %v4254 = vpop.f32.mrb[0].mxu0
        %v4255 = vadd.f32 0.0, %v4254
        %v4256 = vpop.f32.mrb[0].mxu0
        %v4257 = vpop.f32.mrb[0].mxu0
        %v4258 = vadd.f32 0.0, %v4257
        %v4259 = vpop.f32.mrb[0].mxu0
        %4260 = vdwg.mxu0
        %v4261 = vadd.f32 %v3739, %v4255
        %v4262 = vadd.f32 %v3740, %v4258
        %s4263 = scalar_lea.vmem %s987, 12
        %v4264 = vld [vmem:[%s4263] sm:$0x3]
        %v4265 = vlaneseq
        %v4266 = vshrl.u32 %v4265, 7
        %v4267 = vsub.s32 6, %v4266
        %v4268 = vrot.slane %v1129, %v4267
        %v4270 = vsel %vm1137, %v4264, 0
        %4272 = vmatprep.subr.bf16.mxu0 0
        %4273 = vmatpush1.bf16.xpose.msra.mxu0 %v4270
        %4274 = vmatprep.subr.bf16.mxu0 0
        %4275 = vmatpush1.bf16.xpose.msra.mxu0 0
        %4276 = vmatprep.subr.bf16.mxu0 0
        %4277 = vmatpush1.bf16.xpose.msra.mxu0 0
        %4278 = vmatprep.subr.bf16.mxu0 0
        %4279 = vmatpush1.bf16.xpose.msra.mxu0 0
        %4280 = vmatprep.subr.bf16.mxu0 0
        %4281 = vmatpush1.bf16.xpose.msra.mxu0 0
        %4282 = vmatprep.subr.bf16.mxu0 0
        %4283 = vmatpush1.bf16.xpose.msra.mxu0 0
        %4284 = vmatprep.subr.bf16.mxu0 0
        %4285 = vmatpush1.bf16.xpose.msra.mxu0 0
        %4286 = vmatprep.subr.bf16.mxu0 0
        %4287 = vmatpush1.bf16.xpose.msra.mxu0 0
        %4288 = vmatprep.subr.bf16.mxu0 0
        %4289 = vmatpush1.bf16.xpose.msra.mxu0 0
        %4290 = vmatprep.subr.bf16.mxu0 0
        %4291 = vmatpush1.bf16.xpose.msra.mxu0 0
        %4292 = vmatprep.subr.bf16.mxu0 0
        %4293 = vmatpush1.bf16.xpose.msra.mxu0 0
        %4294 = vmatprep.subr.bf16.mxu0 0
        %4295 = vmatpush1.bf16.xpose.msra.mxu0 0
        %4296 = vmatprep.subr.bf16.mxu0 0
        %4297 = vmatpush1.bf16.xpose.msra.mxu0 0
        %4298 = vmatprep.subr.bf16.mxu0 0
        %4299 = vmatpush1.bf16.xpose.msra.mxu0 0
        %4300 = vmatprep.subr.bf16.mxu0 0
        %4301 = vmatpush1.bf16.xpose.msra.mxu0 0
        %4302 = vmatprep.subr.bf16.mxu0 0
        %4303 = vmatpush1.bf16.xpose.msra.mxu0 0
        %4304 = vmatprep.mubr.bf16.mxu0 0
        %4305 = vmatmul.mubr.bf16.gmra.mrb[0].mxu0 %v1139
        %v4306 = vpop.f32.mrb[0].mxu0
        %v4307 = vadd.f32 %v4268, %v4306
        %v4308 = vpop.f32.mrb[0].mxu0
        %v4309 = vpop.f32.mrb[0].mxu0
        %v4310 = vadd.f32 %v4268, %v4309
        %v4311 = vpop.f32.mrb[0].mxu0
        %4312 = vdwg.mxu0
        %s4313 = scalar_lea.vmem %s996, 12
        %v4314 = vld [vmem:[%s4313] sm:$0x3]
        %v4315 = vlaneseq
        %v4316 = vshrl.u32 %v4315, 7
        %v4317 = vsub.s32 6, %v4316
        %v4318 = vrot.slane %v1130, %v4317
        %v4320 = vsel %vm1137, %v4314, 0
        %4322 = vmatprep.subr.bf16.mxu0 0
        %4323 = vmatpush1.bf16.xpose.msra.mxu0 %v4320
        %4324 = vmatprep.subr.bf16.mxu0 0
        %4325 = vmatpush1.bf16.xpose.msra.mxu0 0
        %4326 = vmatprep.subr.bf16.mxu0 0
        %4327 = vmatpush1.bf16.xpose.msra.mxu0 0
        %4328 = vmatprep.subr.bf16.mxu0 0
        %4329 = vmatpush1.bf16.xpose.msra.mxu0 0
        %4330 = vmatprep.subr.bf16.mxu0 0
        %4331 = vmatpush1.bf16.xpose.msra.mxu0 0
        %4332 = vmatprep.subr.bf16.mxu0 0
        %4333 = vmatpush1.bf16.xpose.msra.mxu0 0
        %4334 = vmatprep.subr.bf16.mxu0 0
        %4335 = vmatpush1.bf16.xpose.msra.mxu0 0
        %4336 = vmatprep.subr.bf16.mxu0 0
        %4337 = vmatpush1.bf16.xpose.msra.mxu0 0
        %4338 = vmatprep.subr.bf16.mxu0 0
        %4339 = vmatpush1.bf16.xpose.msra.mxu0 0
        %4340 = vmatprep.subr.bf16.mxu0 0
        %4341 = vmatpush1.bf16.xpose.msra.mxu0 0
        %4342 = vmatprep.subr.bf16.mxu0 0
        %4343 = vmatpush1.bf16.xpose.msra.mxu0 0
        %4344 = vmatprep.subr.bf16.mxu0 0
        %4345 = vmatpush1.bf16.xpose.msra.mxu0 0
        %4346 = vmatprep.subr.bf16.mxu0 0
        %4347 = vmatpush1.bf16.xpose.msra.mxu0 0
        %4348 = vmatprep.subr.bf16.mxu0 0
        %4349 = vmatpush1.bf16.xpose.msra.mxu0 0
        %4350 = vmatprep.subr.bf16.mxu0 0
        %4351 = vmatpush1.bf16.xpose.msra.mxu0 0
        %4352 = vmatprep.subr.bf16.mxu0 0
        %4353 = vmatpush1.bf16.xpose.msra.mxu0 0
        %4354 = vmatprep.mubr.bf16.mxu0 0
        %4355 = vmatmul.mubr.bf16.gmra.mrb[0].mxu0 %v1139
        %v4356 = vpop.f32.mrb[0].mxu0
        %v4357 = vadd.f32 %v4318, %v4356
        %v4358 = vpop.f32.mrb[0].mxu0
        %v4359 = vpop.f32.mrb[0].mxu0
        %v4360 = vadd.f32 %v4318, %v4359
        %v4361 = vpop.f32.mrb[0].mxu0
        %4362 = vdwg.mxu0
        %s4363 = scalar_lea.vmem %s1005, 12
        %v4364 = vld [vmem:[%s4363] sm:$0x3]
        %v4365 = vlaneseq
        %v4366 = vshrl.u32 %v4365, 7
        %v4367 = vsub.s32 6, %v4366
        %v4368 = vrot.slane %v1131, %v4367
        %v4370 = vsel %vm1137, %v4364, 0
        %4372 = vmatprep.subr.bf16.mxu0 0
        %4373 = vmatpush1.bf16.xpose.msra.mxu0 %v4370
        %4374 = vmatprep.subr.bf16.mxu0 0
        %4375 = vmatpush1.bf16.xpose.msra.mxu0 0
        %4376 = vmatprep.subr.bf16.mxu0 0
        %4377 = vmatpush1.bf16.xpose.msra.mxu0 0
        %4378 = vmatprep.subr.bf16.mxu0 0
        %4379 = vmatpush1.bf16.xpose.msra.mxu0 0
        %4380 = vmatprep.subr.bf16.mxu0 0
        %4381 = vmatpush1.bf16.xpose.msra.mxu0 0
        %4382 = vmatprep.subr.bf16.mxu0 0
        %4383 = vmatpush1.bf16.xpose.msra.mxu0 0
        %4384 = vmatprep.subr.bf16.mxu0 0
        %4385 = vmatpush1.bf16.xpose.msra.mxu0 0
        %4386 = vmatprep.subr.bf16.mxu0 0
        %4387 = vmatpush1.bf16.xpose.msra.mxu0 0
        %4388 = vmatprep.subr.bf16.mxu0 0
        %4389 = vmatpush1.bf16.xpose.msra.mxu0 0
        %4390 = vmatprep.subr.bf16.mxu0 0
        %4391 = vmatpush1.bf16.xpose.msra.mxu0 0
        %4392 = vmatprep.subr.bf16.mxu0 0
        %4393 = vmatpush1.bf16.xpose.msra.mxu0 0
        %4394 = vmatprep.subr.bf16.mxu0 0
        %4395 = vmatpush1.bf16.xpose.msra.mxu0 0
        %4396 = vmatprep.subr.bf16.mxu0 0
        %4397 = vmatpush1.bf16.xpose.msra.mxu0 0
        %4398 = vmatprep.subr.bf16.mxu0 0
        %4399 = vmatpush1.bf16.xpose.msra.mxu0 0
        %4400 = vmatprep.subr.bf16.mxu0 0
        %4401 = vmatpush1.bf16.xpose.msra.mxu0 0
        %4402 = vmatprep.subr.bf16.mxu0 0
        %4403 = vmatpush1.bf16.xpose.msra.mxu0 0
        %4404 = vmatprep.mubr.bf16.mxu0 0
        %4405 = vmatmul.mubr.bf16.gmra.mrb[0].mxu0 %v1139
        %v4406 = vpop.f32.mrb[0].mxu0
        %v4407 = vadd.f32 %v4368, %v4406
        %v4408 = vpop.f32.mrb[0].mxu0
        %v4409 = vpop.f32.mrb[0].mxu0
        %v4410 = vadd.f32 %v4368, %v4409
        %v4411 = vpop.f32.mrb[0].mxu0
        %4412 = vdwg.mxu0
        %v4414 = vsel %vm1283, %v4307, 0
        %v4417 = vsel %vm1283, %v4357, 0
        %4419 = vmatprep.subr.mxu0 0.0
        %4420 = vmatpush1.xpose.msra.mxu0 %v4417
        %4421 = vmatprep.subr.mxu0 0.0
        %4422 = vmatpush1.xpose.msra.mxu0 0.0
        %4423 = vmatprep.subr.mxu0 0.0
        %4424 = vmatpush1.xpose.msra.mxu0 0.0
        %4425 = vmatprep.subr.mxu0 0.0
        %4426 = vmatpush1.xpose.msra.mxu0 0.0
        %4427 = vmatprep.subr.mxu0 0.0
        %4428 = vmatpush1.xpose.msra.mxu0 0.0
        %4429 = vmatprep.subr.mxu0 0.0
        %4430 = vmatpush1.xpose.msra.mxu0 0.0
        %4431 = vmatprep.subr.mxu0 0.0
        %4432 = vmatpush1.xpose.msra.mxu0 0.0
        %4433 = vmatprep.subr.mxu0 0.0
        %4434 = vmatpush1.xpose.msra.mxu0 0.0
        %4435 = vmatprep.subr.mxu0 0.0
        %4436 = vmatpush1.xpose.msra.mxu0 0.0
        %4437 = vmatprep.subr.mxu0 0.0
        %4438 = vmatpush1.xpose.msra.mxu0 0.0
        %4439 = vmatprep.subr.mxu0 0.0
        %4440 = vmatpush1.xpose.msra.mxu0 0.0
        %4441 = vmatprep.subr.mxu0 0.0
        %4442 = vmatpush1.xpose.msra.mxu0 0.0
        %4443 = vmatprep.subr.mxu0 0.0
        %4444 = vmatpush1.xpose.msra.mxu0 0.0
        %4445 = vmatprep.subr.mxu0 0.0
        %4446 = vmatpush1.xpose.msra.mxu0 0.0
        %4447 = vmatprep.subr.mxu0 0.0
        %4448 = vmatpush1.xpose.msra.mxu0 0.0
        %4449 = vmatprep.subr.mxu0 0.0
        %4450 = vmatpush1.xpose.msra.mxu0 0.0
        %4451 = vmatprep.subr.mxu0 0.0
        %4452 = vmatpush1.xpose.msra.mxu0 0.0
        %4453 = vmatprep.subr.mxu0 0.0
        %4454 = vmatpush1.xpose.msra.mxu0 0.0
        %4455 = vmatprep.subr.mxu0 0.0
        %4456 = vmatpush1.xpose.msra.mxu0 0.0
        %4457 = vmatprep.subr.mxu0 0.0
        %4458 = vmatpush1.xpose.msra.mxu0 0.0
        %4459 = vmatprep.subr.mxu0 0.0
        %4460 = vmatpush1.xpose.msra.mxu0 0.0
        %4461 = vmatprep.subr.mxu0 0.0
        %4462 = vmatpush1.xpose.msra.mxu0 0.0
        %4463 = vmatprep.subr.mxu0 0.0
        %4464 = vmatpush1.xpose.msra.mxu0 0.0
        %4465 = vmatprep.subr.mxu0 0.0
        %4466 = vmatpush1.xpose.msra.mxu0 0.0
        %4467 = vmatprep.subr.mxu0 0.0
        %4468 = vmatpush1.xpose.msra.mxu0 0.0
        %4469 = vmatprep.subr.mxu0 0.0
        %4470 = vmatpush1.xpose.msra.mxu0 0.0
        %4471 = vmatprep.subr.mxu0 0.0
        %4472 = vmatpush1.xpose.msra.mxu0 0.0
        %4473 = vmatprep.subr.mxu0 0.0
        %4474 = vmatpush1.xpose.msra.mxu0 0.0
        %4475 = vmatprep.subr.mxu0 0.0
        %4476 = vmatpush1.xpose.msra.mxu0 0.0
        %4477 = vmatprep.subr.mxu0 0.0
        %4478 = vmatpush1.xpose.msra.mxu0 0.0
        %4479 = vmatprep.subr.mxu0 0.0
        %4480 = vmatpush1.xpose.msra.mxu0 0.0
        %4481 = vmatprep.subr.mxu0 0.0
        %4482 = vmatpush1.xpose.msra.mxu0 0.0
        %4483 = vmatprep.mubr.f32.mxu0 0.0
        %4484 = vmatmul.mubr.f32.gmra.mrb[0].mxu0 %v4414
        %v4485 = vpop.f32.mrb[0].mxu0
        %v4486 = vadd.f32 0.0, %v4485
        %v4487 = vpop.f32.mrb[0].mxu0
        %4488 = vdwg.mxu0
        %v4490 = vsel %vm1283, %v4310, 0
        %v4493 = vsel %vm1283, %v4360, 0
        %4495 = vmatprep.subr.mxu0 0.0
        %4496 = vmatpush1.xpose.msra.mxu0 %v4493
        %4497 = vmatprep.subr.mxu0 0.0
        %4498 = vmatpush1.xpose.msra.mxu0 0.0
        %4499 = vmatprep.subr.mxu0 0.0
        %4500 = vmatpush1.xpose.msra.mxu0 0.0
        %4501 = vmatprep.subr.mxu0 0.0
        %4502 = vmatpush1.xpose.msra.mxu0 0.0
        %4503 = vmatprep.subr.mxu0 0.0
        %4504 = vmatpush1.xpose.msra.mxu0 0.0
        %4505 = vmatprep.subr.mxu0 0.0
        %4506 = vmatpush1.xpose.msra.mxu0 0.0
        %4507 = vmatprep.subr.mxu0 0.0
        %4508 = vmatpush1.xpose.msra.mxu0 0.0
        %4509 = vmatprep.subr.mxu0 0.0
        %4510 = vmatpush1.xpose.msra.mxu0 0.0
        %4511 = vmatprep.subr.mxu0 0.0
        %4512 = vmatpush1.xpose.msra.mxu0 0.0
        %4513 = vmatprep.subr.mxu0 0.0
        %4514 = vmatpush1.xpose.msra.mxu0 0.0
        %4515 = vmatprep.subr.mxu0 0.0
        %4516 = vmatpush1.xpose.msra.mxu0 0.0
        %4517 = vmatprep.subr.mxu0 0.0
        %4518 = vmatpush1.xpose.msra.mxu0 0.0
        %4519 = vmatprep.subr.mxu0 0.0
        %4520 = vmatpush1.xpose.msra.mxu0 0.0
        %4521 = vmatprep.subr.mxu0 0.0
        %4522 = vmatpush1.xpose.msra.mxu0 0.0
        %4523 = vmatprep.subr.mxu0 0.0
        %4524 = vmatpush1.xpose.msra.mxu0 0.0
        %4525 = vmatprep.subr.mxu0 0.0
        %4526 = vmatpush1.xpose.msra.mxu0 0.0
        %4527 = vmatprep.subr.mxu0 0.0
        %4528 = vmatpush1.xpose.msra.mxu0 0.0
        %4529 = vmatprep.subr.mxu0 0.0
        %4530 = vmatpush1.xpose.msra.mxu0 0.0
        %4531 = vmatprep.subr.mxu0 0.0
        %4532 = vmatpush1.xpose.msra.mxu0 0.0
        %4533 = vmatprep.subr.mxu0 0.0
        %4534 = vmatpush1.xpose.msra.mxu0 0.0
        %4535 = vmatprep.subr.mxu0 0.0
        %4536 = vmatpush1.xpose.msra.mxu0 0.0
        %4537 = vmatprep.subr.mxu0 0.0
        %4538 = vmatpush1.xpose.msra.mxu0 0.0
        %4539 = vmatprep.subr.mxu0 0.0
        %4540 = vmatpush1.xpose.msra.mxu0 0.0
        %4541 = vmatprep.subr.mxu0 0.0
        %4542 = vmatpush1.xpose.msra.mxu0 0.0
        %4543 = vmatprep.subr.mxu0 0.0
        %4544 = vmatpush1.xpose.msra.mxu0 0.0
        %4545 = vmatprep.subr.mxu0 0.0
        %4546 = vmatpush1.xpose.msra.mxu0 0.0
        %4547 = vmatprep.subr.mxu0 0.0
        %4548 = vmatpush1.xpose.msra.mxu0 0.0
        %4549 = vmatprep.subr.mxu0 0.0
        %4550 = vmatpush1.xpose.msra.mxu0 0.0
        %4551 = vmatprep.subr.mxu0 0.0
        %4552 = vmatpush1.xpose.msra.mxu0 0.0
        %4553 = vmatprep.subr.mxu0 0.0
        %4554 = vmatpush1.xpose.msra.mxu0 0.0
        %4555 = vmatprep.subr.mxu0 0.0
        %4556 = vmatpush1.xpose.msra.mxu0 0.0
        %4557 = vmatprep.subr.mxu0 0.0
        %4558 = vmatpush1.xpose.msra.mxu0 0.0
        %4559 = vmatprep.mubr.f32.mxu0 0.0
        %4560 = vmatmul.mubr.f32.gmra.mrb[0].mxu0 %v4490
        %v4561 = vpop.f32.mrb[0].mxu0
        %v4562 = vadd.f32 0.0, %v4561
        %v4563 = vpop.f32.mrb[0].mxu0
        %4564 = vdwg.mxu0
        %v4565 = vsel %vm1436, %v4486, -inf
        %4566 = vmax.xlane.f32.xlu0 %v4565
        %v4567 = vpop.xlane.xlu0 %4566
        %v4568 = vsel %vm1436, %v4562, -inf
        %4569 = vmax.xlane.f32.xlu0 %v4568
        %v4570 = vpop.xlane.xlu0 %4569
        %v4571 = vsub.f32 %v4486, %v4567
        %v4572 = vsub.f32 %v4562, %v4570
        %v4573 = vmul.f32 %v4571, 1.442695
        %v4574 = vpow.pop %v4573
        %v4575 = vmul.f32 %v4572, 1.442695
        %v4576 = vpow.pop %v4575
        %v4577 = vsel %vm1436, %v4574, 0.0
        %4578 = vadd.xlane.f32.xlu0 %v4577
        %v4579 = vpop.xlane.xlu0 %4578
        %v4580 = vsel %vm1436, %v4576, 0.0
        %4581 = vadd.xlane.f32.xlu0 %v4580
        %v4582 = vpop.xlane.xlu0 %4581
        %v4583 = vrcp.pop %v4579
        %v4584 = vrcp.pop %v4582
        %v4585 = vmul.f32 %v4574, %v4583
        %v4586 = vmul.f32 %v4576, %v4584
        %v4588 = vsel %vm1436, %v4585, 0
        %4590 = vmatprep.subr.mxu0 0.0
        %4591 = vmatpush1.msra.mxu0 %v4407
        %4592 = vmatprep.subr.mxu0 0.0
        %4593 = vmatpush1.msra.mxu0 0.0
        %4594 = vmatprep.subr.mxu0 0.0
        %4595 = vmatpush1.msra.mxu0 0.0
        %4596 = vmatprep.subr.mxu0 0.0
        %4597 = vmatpush1.msra.mxu0 0.0
        %4598 = vmatprep.subr.mxu0 0.0
        %4599 = vmatpush1.msra.mxu0 0.0
        %4600 = vmatprep.subr.mxu0 0.0
        %4601 = vmatpush1.msra.mxu0 0.0
        %4602 = vmatprep.subr.mxu0 0.0
        %4603 = vmatpush1.msra.mxu0 0.0
        %4604 = vmatprep.subr.mxu0 0.0
        %4605 = vmatpush1.msra.mxu0 0.0
        %4606 = vmatprep.subr.mxu0 0.0
        %4607 = vmatpush1.msra.mxu0 0.0
        %4608 = vmatprep.subr.mxu0 0.0
        %4609 = vmatpush1.msra.mxu0 0.0
        %4610 = vmatprep.subr.mxu0 0.0
        %4611 = vmatpush1.msra.mxu0 0.0
        %4612 = vmatprep.subr.mxu0 0.0
        %4613 = vmatpush1.msra.mxu0 0.0
        %4614 = vmatprep.subr.mxu0 0.0
        %4615 = vmatpush1.msra.mxu0 0.0
        %4616 = vmatprep.subr.mxu0 0.0
        %4617 = vmatpush1.msra.mxu0 0.0
        %4618 = vmatprep.subr.mxu0 0.0
        %4619 = vmatpush1.msra.mxu0 0.0
        %4620 = vmatprep.subr.mxu0 0.0
        %4621 = vmatpush1.msra.mxu0 0.0
        %4622 = vmatprep.subr.mxu0 0.0
        %4623 = vmatpush1.msra.mxu0 0.0
        %4624 = vmatprep.subr.mxu0 0.0
        %4625 = vmatpush1.msra.mxu0 0.0
        %4626 = vmatprep.subr.mxu0 0.0
        %4627 = vmatpush1.msra.mxu0 0.0
        %4628 = vmatprep.subr.mxu0 0.0
        %4629 = vmatpush1.msra.mxu0 0.0
        %4630 = vmatprep.subr.mxu0 0.0
        %4631 = vmatpush1.msra.mxu0 0.0
        %4632 = vmatprep.subr.mxu0 0.0
        %4633 = vmatpush1.msra.mxu0 0.0
        %4634 = vmatprep.subr.mxu0 0.0
        %4635 = vmatpush1.msra.mxu0 0.0
        %4636 = vmatprep.subr.mxu0 0.0
        %4637 = vmatpush1.msra.mxu0 0.0
        %4638 = vmatprep.subr.mxu0 0.0
        %4639 = vmatpush1.msra.mxu0 0.0
        %4640 = vmatprep.subr.mxu0 0.0
        %4641 = vmatpush1.msra.mxu0 0.0
        %4642 = vmatprep.subr.mxu0 0.0
        %4643 = vmatpush1.msra.mxu0 0.0
        %4644 = vmatprep.subr.mxu0 0.0
        %4645 = vmatpush1.msra.mxu0 0.0
        %4646 = vmatprep.subr.mxu0 0.0
        %4647 = vmatpush1.msra.mxu0 0.0
        %4648 = vmatprep.subr.mxu0 0.0
        %4649 = vmatpush1.msra.mxu0 0.0
        %4650 = vmatprep.subr.mxu0 0.0
        %4651 = vmatpush1.msra.mxu0 0.0
        %4652 = vmatprep.subr.mxu0 0.0
        %4653 = vmatpush1.msra.mxu0 0.0
        %4654 = vmatprep.mubr.f32.mxu0 0.0
        %4655 = vmatmul.mubr.f32.gmra.mrb[0].mxu0 %v4588
        %v4656 = vpop.f32.mrb[0].mxu0
        %v4657 = vadd.f32 0.0, %v4656
        %v4658 = vpop.f32.mrb[0].mxu0
        %4659 = vdwg.mxu0
        %v4661 = vsel %vm1436, %v4586, 0
        %4663 = vmatprep.subr.mxu0 0.0
        %4664 = vmatpush1.msra.mxu0 %v4410
        %4665 = vmatprep.subr.mxu0 0.0
        %4666 = vmatpush1.msra.mxu0 0.0
        %4667 = vmatprep.subr.mxu0 0.0
        %4668 = vmatpush1.msra.mxu0 0.0
        %4669 = vmatprep.subr.mxu0 0.0
        %4670 = vmatpush1.msra.mxu0 0.0
        %4671 = vmatprep.subr.mxu0 0.0
        %4672 = vmatpush1.msra.mxu0 0.0
        %4673 = vmatprep.subr.mxu0 0.0
        %4674 = vmatpush1.msra.mxu0 0.0
        %4675 = vmatprep.subr.mxu0 0.0
        %4676 = vmatpush1.msra.mxu0 0.0
        %4677 = vmatprep.subr.mxu0 0.0
        %4678 = vmatpush1.msra.mxu0 0.0
        %4679 = vmatprep.subr.mxu0 0.0
        %4680 = vmatpush1.msra.mxu0 0.0
        %4681 = vmatprep.subr.mxu0 0.0
        %4682 = vmatpush1.msra.mxu0 0.0
        %4683 = vmatprep.subr.mxu0 0.0
        %4684 = vmatpush1.msra.mxu0 0.0
        %4685 = vmatprep.subr.mxu0 0.0
        %4686 = vmatpush1.msra.mxu0 0.0
        %4687 = vmatprep.subr.mxu0 0.0
        %4688 = vmatpush1.msra.mxu0 0.0
        %4689 = vmatprep.subr.mxu0 0.0
        %4690 = vmatpush1.msra.mxu0 0.0
        %4691 = vmatprep.subr.mxu0 0.0
        %4692 = vmatpush1.msra.mxu0 0.0
        %4693 = vmatprep.subr.mxu0 0.0
        %4694 = vmatpush1.msra.mxu0 0.0
        %4695 = vmatprep.subr.mxu0 0.0
        %4696 = vmatpush1.msra.mxu0 0.0
        %4697 = vmatprep.subr.mxu0 0.0
        %4698 = vmatpush1.msra.mxu0 0.0
        %4699 = vmatprep.subr.mxu0 0.0
        %4700 = vmatpush1.msra.mxu0 0.0
        %4701 = vmatprep.subr.mxu0 0.0
        %4702 = vmatpush1.msra.mxu0 0.0
        %4703 = vmatprep.subr.mxu0 0.0
        %4704 = vmatpush1.msra.mxu0 0.0
        %4705 = vmatprep.subr.mxu0 0.0
        %4706 = vmatpush1.msra.mxu0 0.0
        %4707 = vmatprep.subr.mxu0 0.0
        %4708 = vmatpush1.msra.mxu0 0.0
        %4709 = vmatprep.subr.mxu0 0.0
        %4710 = vmatpush1.msra.mxu0 0.0
        %4711 = vmatprep.subr.mxu0 0.0
        %4712 = vmatpush1.msra.mxu0 0.0
        %4713 = vmatprep.subr.mxu0 0.0
        %4714 = vmatpush1.msra.mxu0 0.0
        %4715 = vmatprep.subr.mxu0 0.0
        %4716 = vmatpush1.msra.mxu0 0.0
        %4717 = vmatprep.subr.mxu0 0.0
        %4718 = vmatpush1.msra.mxu0 0.0
        %4719 = vmatprep.subr.mxu0 0.0
        %4720 = vmatpush1.msra.mxu0 0.0
        %4721 = vmatprep.subr.mxu0 0.0
        %4722 = vmatpush1.msra.mxu0 0.0
        %4723 = vmatprep.subr.mxu0 0.0
        %4724 = vmatpush1.msra.mxu0 0.0
        %4725 = vmatprep.subr.mxu0 0.0
        %4726 = vmatpush1.msra.mxu0 0.0
        %4727 = vmatprep.mubr.f32.mxu0 0.0
        %4728 = vmatmul.mubr.f32.gmra.mrb[0].mxu0 %v4661
        %v4729 = vpop.f32.mrb[0].mxu0
        %v4730 = vadd.f32 0.0, %v4729
        %v4731 = vpop.f32.mrb[0].mxu0
        %4732 = vdwg.mxu0
        %v4733 = vpack.c.bf16 %v4730, %v4657
        %s4734 = scalar_lea.vmem %s827, 12 [#allocation11]
        %v4735 = vld [vmem:[%s4734] sm:$0x3]
        %v4737 = vsel %vm1283, %v4733, 0
        %v4740 = vsel %vm2083, %v4735, 0
        %4742 = vmatprep.subr.bf16.mxu0 0
        %4743 = vmatpush1.bf16.msra.mxu0 %v4740
        %4744 = vmatprep.subr.bf16.mxu0 0
        %4745 = vmatpush1.bf16.msra.mxu0 0
        %4746 = vmatprep.subr.bf16.mxu0 0
        %4747 = vmatpush1.bf16.msra.mxu0 0
        %4748 = vmatprep.subr.bf16.mxu0 0
        %4749 = vmatpush1.bf16.msra.mxu0 0
        %4750 = vmatprep.subr.bf16.mxu0 0
        %4751 = vmatpush1.bf16.msra.mxu0 0
        %4752 = vmatprep.subr.bf16.mxu0 0
        %4753 = vmatpush1.bf16.msra.mxu0 0
        %4754 = vmatprep.subr.bf16.mxu0 0
        %4755 = vmatpush1.bf16.msra.mxu0 0
        %4756 = vmatprep.subr.bf16.mxu0 0
        %4757 = vmatpush1.bf16.msra.mxu0 0
        %4758 = vmatprep.subr.bf16.mxu0 0
        %4759 = vmatpush1.bf16.msra.mxu0 0
        %4760 = vmatprep.subr.bf16.mxu0 0
        %4761 = vmatpush1.bf16.msra.mxu0 0
        %4762 = vmatprep.subr.bf16.mxu0 0
        %4763 = vmatpush1.bf16.msra.mxu0 0
        %4764 = vmatprep.subr.bf16.mxu0 0
        %4765 = vmatpush1.bf16.msra.mxu0 0
        %4766 = vmatprep.subr.bf16.mxu0 0
        %4767 = vmatpush1.bf16.msra.mxu0 0
        %4768 = vmatprep.subr.bf16.mxu0 0
        %4769 = vmatpush1.bf16.msra.mxu0 0
        %4770 = vmatprep.subr.bf16.mxu0 0
        %4771 = vmatpush1.bf16.msra.mxu0 0
        %4772 = vmatprep.subr.bf16.mxu0 0
        %4773 = vmatpush1.bf16.msra.mxu0 0
        %4774 = vmatprep.mubr.bf16.mxu0 0
        %4775 = vmatmul.mubr.bf16.gmra.mrb[0].mxu0 %v4737
        %v4776 = vpop.f32.mrb[0].mxu0
        %v4777 = vadd.f32 0.0, %v4776
        %v4778 = vpop.f32.mrb[0].mxu0
        %v4779 = vpop.f32.mrb[0].mxu0
        %v4780 = vadd.f32 0.0, %v4779
        %v4781 = vpop.f32.mrb[0].mxu0
        %4782 = vdwg.mxu0
        %v4783 = vadd.f32 %v4261, %v4777
        %v4784 = vadd.f32 %v4262, %v4780
        %s4785 = scalar_lea.vmem %s987, 14
        %v4786 = vld [vmem:[%s4785] sm:$0x3]
        %v4787 = vlaneseq
        %v4788 = vshrl.u32 %v4787, 7
        %v4789 = vsub.s32 7, %v4788
        %v4790 = vrot.slane %v1129, %v4789
        %v4792 = vsel %vm1137, %v4786, 0
        %4794 = vmatprep.subr.bf16.mxu0 0
        %4795 = vmatpush1.bf16.xpose.msra.mxu0 %v4792
        %4796 = vmatprep.subr.bf16.mxu0 0
        %4797 = vmatpush1.bf16.xpose.msra.mxu0 0
        %4798 = vmatprep.subr.bf16.mxu0 0
        %4799 = vmatpush1.bf16.xpose.msra.mxu0 0
        %4800 = vmatprep.subr.bf16.mxu0 0
        %4801 = vmatpush1.bf16.xpose.msra.mxu0 0
        %4802 = vmatprep.subr.bf16.mxu0 0
        %4803 = vmatpush1.bf16.xpose.msra.mxu0 0
        %4804 = vmatprep.subr.bf16.mxu0 0
        %4805 = vmatpush1.bf16.xpose.msra.mxu0 0
        %4806 = vmatprep.subr.bf16.mxu0 0
        %4807 = vmatpush1.bf16.xpose.msra.mxu0 0
        %4808 = vmatprep.subr.bf16.mxu0 0
        %4809 = vmatpush1.bf16.xpose.msra.mxu0 0
        %4810 = vmatprep.subr.bf16.mxu0 0
        %4811 = vmatpush1.bf16.xpose.msra.mxu0 0
        %4812 = vmatprep.subr.bf16.mxu0 0
        %4813 = vmatpush1.bf16.xpose.msra.mxu0 0
        %4814 = vmatprep.subr.bf16.mxu0 0
        %4815 = vmatpush1.bf16.xpose.msra.mxu0 0
        %4816 = vmatprep.subr.bf16.mxu0 0
        %4817 = vmatpush1.bf16.xpose.msra.mxu0 0
        %4818 = vmatprep.subr.bf16.mxu0 0
        %4819 = vmatpush1.bf16.xpose.msra.mxu0 0
        %4820 = vmatprep.subr.bf16.mxu0 0
        %4821 = vmatpush1.bf16.xpose.msra.mxu0 0
        %4822 = vmatprep.subr.bf16.mxu0 0
        %4823 = vmatpush1.bf16.xpose.msra.mxu0 0
        %4824 = vmatprep.subr.bf16.mxu0 0
        %4825 = vmatpush1.bf16.xpose.msra.mxu0 0
        %4826 = vmatprep.mubr.bf16.mxu0 0
        %4827 = vmatmul.mubr.bf16.gmra.mrb[0].mxu0 %v1139
        %v4828 = vpop.f32.mrb[0].mxu0
        %v4829 = vadd.f32 %v4790, %v4828
        %v4830 = vpop.f32.mrb[0].mxu0
        %v4831 = vpop.f32.mrb[0].mxu0
        %v4832 = vadd.f32 %v4790, %v4831
        %v4833 = vpop.f32.mrb[0].mxu0
        %4834 = vdwg.mxu0
        %s4835 = scalar_lea.vmem %s996, 14
        %v4836 = vld [vmem:[%s4835] sm:$0x3]
        %v4837 = vlaneseq
        %v4838 = vshrl.u32 %v4837, 7
        %v4839 = vsub.s32 7, %v4838
        %v4840 = vrot.slane %v1130, %v4839
        %v4842 = vsel %vm1137, %v4836, 0
        %4844 = vmatprep.subr.bf16.mxu0 0
        %4845 = vmatpush1.bf16.xpose.msra.mxu0 %v4842
        %4846 = vmatprep.subr.bf16.mxu0 0
        %4847 = vmatpush1.bf16.xpose.msra.mxu0 0
        %4848 = vmatprep.subr.bf16.mxu0 0
        %4849 = vmatpush1.bf16.xpose.msra.mxu0 0
        %4850 = vmatprep.subr.bf16.mxu0 0
        %4851 = vmatpush1.bf16.xpose.msra.mxu0 0
        %4852 = vmatprep.subr.bf16.mxu0 0
        %4853 = vmatpush1.bf16.xpose.msra.mxu0 0
        %4854 = vmatprep.subr.bf16.mxu0 0
        %4855 = vmatpush1.bf16.xpose.msra.mxu0 0
        %4856 = vmatprep.subr.bf16.mxu0 0
        %4857 = vmatpush1.bf16.xpose.msra.mxu0 0
        %4858 = vmatprep.subr.bf16.mxu0 0
        %4859 = vmatpush1.bf16.xpose.msra.mxu0 0
        %4860 = vmatprep.subr.bf16.mxu0 0
        %4861 = vmatpush1.bf16.xpose.msra.mxu0 0
        %4862 = vmatprep.subr.bf16.mxu0 0
        %4863 = vmatpush1.bf16.xpose.msra.mxu0 0
        %4864 = vmatprep.subr.bf16.mxu0 0
        %4865 = vmatpush1.bf16.xpose.msra.mxu0 0
        %4866 = vmatprep.subr.bf16.mxu0 0
        %4867 = vmatpush1.bf16.xpose.msra.mxu0 0
        %4868 = vmatprep.subr.bf16.mxu0 0
        %4869 = vmatpush1.bf16.xpose.msra.mxu0 0
        %4870 = vmatprep.subr.bf16.mxu0 0
        %4871 = vmatpush1.bf16.xpose.msra.mxu0 0
        %4872 = vmatprep.subr.bf16.mxu0 0
        %4873 = vmatpush1.bf16.xpose.msra.mxu0 0
        %4874 = vmatprep.subr.bf16.mxu0 0
        %4875 = vmatpush1.bf16.xpose.msra.mxu0 0
        %4876 = vmatprep.mubr.bf16.mxu0 0
        %4877 = vmatmul.mubr.bf16.gmra.mrb[0].mxu0 %v1139
        %v4878 = vpop.f32.mrb[0].mxu0
        %v4879 = vadd.f32 %v4840, %v4878
        %v4880 = vpop.f32.mrb[0].mxu0
        %v4881 = vpop.f32.mrb[0].mxu0
        %v4882 = vadd.f32 %v4840, %v4881
        %v4883 = vpop.f32.mrb[0].mxu0
        %4884 = vdwg.mxu0
        %s4885 = scalar_lea.vmem %s1005, 14
        %v4886 = vld [vmem:[%s4885] sm:$0x3]
        %v4887 = vlaneseq
        %v4888 = vshrl.u32 %v4887, 7
        %v4889 = vsub.s32 7, %v4888
        %v4890 = vrot.slane %v1131, %v4889
        %v4892 = vsel %vm1137, %v4886, 0
        %4894 = vmatprep.subr.bf16.mxu0 0
        %4895 = vmatpush1.bf16.xpose.msra.mxu0 %v4892
        %4896 = vmatprep.subr.bf16.mxu0 0
        %4897 = vmatpush1.bf16.xpose.msra.mxu0 0
        %4898 = vmatprep.subr.bf16.mxu0 0
        %4899 = vmatpush1.bf16.xpose.msra.mxu0 0
        %4900 = vmatprep.subr.bf16.mxu0 0
        %4901 = vmatpush1.bf16.xpose.msra.mxu0 0
        %4902 = vmatprep.subr.bf16.mxu0 0
        %4903 = vmatpush1.bf16.xpose.msra.mxu0 0
        %4904 = vmatprep.subr.bf16.mxu0 0
        %4905 = vmatpush1.bf16.xpose.msra.mxu0 0
        %4906 = vmatprep.subr.bf16.mxu0 0
        %4907 = vmatpush1.bf16.xpose.msra.mxu0 0
        %4908 = vmatprep.subr.bf16.mxu0 0
        %4909 = vmatpush1.bf16.xpose.msra.mxu0 0
        %4910 = vmatprep.subr.bf16.mxu0 0
        %4911 = vmatpush1.bf16.xpose.msra.mxu0 0
        %4912 = vmatprep.subr.bf16.mxu0 0
        %4913 = vmatpush1.bf16.xpose.msra.mxu0 0
        %4914 = vmatprep.subr.bf16.mxu0 0
        %4915 = vmatpush1.bf16.xpose.msra.mxu0 0
        %4916 = vmatprep.subr.bf16.mxu0 0
        %4917 = vmatpush1.bf16.xpose.msra.mxu0 0
        %4918 = vmatprep.subr.bf16.mxu0 0
        %4919 = vmatpush1.bf16.xpose.msra.mxu0 0
        %4920 = vmatprep.subr.bf16.mxu0 0
        %4921 = vmatpush1.bf16.xpose.msra.mxu0 0
        %4922 = vmatprep.subr.bf16.mxu0 0
        %4923 = vmatpush1.bf16.xpose.msra.mxu0 0
        %4924 = vmatprep.subr.bf16.mxu0 0
        %4925 = vmatpush1.bf16.xpose.msra.mxu0 0
        %4926 = vmatprep.mubr.bf16.mxu0 0
        %4927 = vmatmul.mubr.bf16.gmra.mrb[0].mxu0 %v1139
        %v4928 = vpop.f32.mrb[0].mxu0
        %v4929 = vadd.f32 %v4890, %v4928
        %v4930 = vpop.f32.mrb[0].mxu0
        %v4931 = vpop.f32.mrb[0].mxu0
        %v4932 = vadd.f32 %v4890, %v4931
        %v4933 = vpop.f32.mrb[0].mxu0
        %4934 = vdwg.mxu0
        %v4936 = vsel %vm1283, %v4829, 0
        %v4939 = vsel %vm1283, %v4879, 0
        %4941 = vmatprep.subr.mxu0 0.0
        %4942 = vmatpush1.xpose.msra.mxu0 %v4939
        %4943 = vmatprep.subr.mxu0 0.0
        %4944 = vmatpush1.xpose.msra.mxu0 0.0
        %4945 = vmatprep.subr.mxu0 0.0
        %4946 = vmatpush1.xpose.msra.mxu0 0.0
        %4947 = vmatprep.subr.mxu0 0.0
        %4948 = vmatpush1.xpose.msra.mxu0 0.0
        %4949 = vmatprep.subr.mxu0 0.0
        %4950 = vmatpush1.xpose.msra.mxu0 0.0
        %4951 = vmatprep.subr.mxu0 0.0
        %4952 = vmatpush1.xpose.msra.mxu0 0.0
        %4953 = vmatprep.subr.mxu0 0.0
        %4954 = vmatpush1.xpose.msra.mxu0 0.0
        %4955 = vmatprep.subr.mxu0 0.0
        %4956 = vmatpush1.xpose.msra.mxu0 0.0
        %4957 = vmatprep.subr.mxu0 0.0
        %4958 = vmatpush1.xpose.msra.mxu0 0.0
        %4959 = vmatprep.subr.mxu0 0.0
        %4960 = vmatpush1.xpose.msra.mxu0 0.0
        %4961 = vmatprep.subr.mxu0 0.0
        %4962 = vmatpush1.xpose.msra.mxu0 0.0
        %4963 = vmatprep.subr.mxu0 0.0
        %4964 = vmatpush1.xpose.msra.mxu0 0.0
        %4965 = vmatprep.subr.mxu0 0.0
        %4966 = vmatpush1.xpose.msra.mxu0 0.0
        %4967 = vmatprep.subr.mxu0 0.0
        %4968 = vmatpush1.xpose.msra.mxu0 0.0
        %4969 = vmatprep.subr.mxu0 0.0
        %4970 = vmatpush1.xpose.msra.mxu0 0.0
        %4971 = vmatprep.subr.mxu0 0.0
        %4972 = vmatpush1.xpose.msra.mxu0 0.0
        %4973 = vmatprep.subr.mxu0 0.0
        %4974 = vmatpush1.xpose.msra.mxu0 0.0
        %4975 = vmatprep.subr.mxu0 0.0
        %4976 = vmatpush1.xpose.msra.mxu0 0.0
        %4977 = vmatprep.subr.mxu0 0.0
        %4978 = vmatpush1.xpose.msra.mxu0 0.0
        %4979 = vmatprep.subr.mxu0 0.0
        %4980 = vmatpush1.xpose.msra.mxu0 0.0
        %4981 = vmatprep.subr.mxu0 0.0
        %4982 = vmatpush1.xpose.msra.mxu0 0.0
        %4983 = vmatprep.subr.mxu0 0.0
        %4984 = vmatpush1.xpose.msra.mxu0 0.0
        %4985 = vmatprep.subr.mxu0 0.0
        %4986 = vmatpush1.xpose.msra.mxu0 0.0
        %4987 = vmatprep.subr.mxu0 0.0
        %4988 = vmatpush1.xpose.msra.mxu0 0.0
        %4989 = vmatprep.subr.mxu0 0.0
        %4990 = vmatpush1.xpose.msra.mxu0 0.0
        %4991 = vmatprep.subr.mxu0 0.0
        %4992 = vmatpush1.xpose.msra.mxu0 0.0
        %4993 = vmatprep.subr.mxu0 0.0
        %4994 = vmatpush1.xpose.msra.mxu0 0.0
        %4995 = vmatprep.subr.mxu0 0.0
        %4996 = vmatpush1.xpose.msra.mxu0 0.0
        %4997 = vmatprep.subr.mxu0 0.0
        %4998 = vmatpush1.xpose.msra.mxu0 0.0
        %4999 = vmatprep.subr.mxu0 0.0
        %5000 = vmatpush1.xpose.msra.mxu0 0.0
        %5001 = vmatprep.subr.mxu0 0.0
        %5002 = vmatpush1.xpose.msra.mxu0 0.0
        %5003 = vmatprep.subr.mxu0 0.0
        %5004 = vmatpush1.xpose.msra.mxu0 0.0
        %5005 = vmatprep.mubr.f32.mxu0 0.0
        %5006 = vmatmul.mubr.f32.gmra.mrb[0].mxu0 %v4936
        %v5007 = vpop.f32.mrb[0].mxu0
        %v5008 = vadd.f32 0.0, %v5007
        %v5009 = vpop.f32.mrb[0].mxu0
        %5010 = vdwg.mxu0
        %v5012 = vsel %vm1283, %v4832, 0
        %v5015 = vsel %vm1283, %v4882, 0
        %5017 = vmatprep.subr.mxu0 0.0
        %5018 = vmatpush1.xpose.msra.mxu0 %v5015
        %5019 = vmatprep.subr.mxu0 0.0
        %5020 = vmatpush1.xpose.msra.mxu0 0.0
        %5021 = vmatprep.subr.mxu0 0.0
        %5022 = vmatpush1.xpose.msra.mxu0 0.0
        %5023 = vmatprep.subr.mxu0 0.0
        %5024 = vmatpush1.xpose.msra.mxu0 0.0
        %5025 = vmatprep.subr.mxu0 0.0
        %5026 = vmatpush1.xpose.msra.mxu0 0.0
        %5027 = vmatprep.subr.mxu0 0.0
        %5028 = vmatpush1.xpose.msra.mxu0 0.0
        %5029 = vmatprep.subr.mxu0 0.0
        %5030 = vmatpush1.xpose.msra.mxu0 0.0
        %5031 = vmatprep.subr.mxu0 0.0
        %5032 = vmatpush1.xpose.msra.mxu0 0.0
        %5033 = vmatprep.subr.mxu0 0.0
        %5034 = vmatpush1.xpose.msra.mxu0 0.0
        %5035 = vmatprep.subr.mxu0 0.0
        %5036 = vmatpush1.xpose.msra.mxu0 0.0
        %5037 = vmatprep.subr.mxu0 0.0
        %5038 = vmatpush1.xpose.msra.mxu0 0.0
        %5039 = vmatprep.subr.mxu0 0.0
        %5040 = vmatpush1.xpose.msra.mxu0 0.0
        %5041 = vmatprep.subr.mxu0 0.0
        %5042 = vmatpush1.xpose.msra.mxu0 0.0
        %5043 = vmatprep.subr.mxu0 0.0
        %5044 = vmatpush1.xpose.msra.mxu0 0.0
        %5045 = vmatprep.subr.mxu0 0.0
        %5046 = vmatpush1.xpose.msra.mxu0 0.0
        %5047 = vmatprep.subr.mxu0 0.0
        %5048 = vmatpush1.xpose.msra.mxu0 0.0
        %5049 = vmatprep.subr.mxu0 0.0
        %5050 = vmatpush1.xpose.msra.mxu0 0.0
        %5051 = vmatprep.subr.mxu0 0.0
        %5052 = vmatpush1.xpose.msra.mxu0 0.0
        %5053 = vmatprep.subr.mxu0 0.0
        %5054 = vmatpush1.xpose.msra.mxu0 0.0
        %5055 = vmatprep.subr.mxu0 0.0
        %5056 = vmatpush1.xpose.msra.mxu0 0.0
        %5057 = vmatprep.subr.mxu0 0.0
        %5058 = vmatpush1.xpose.msra.mxu0 0.0
        %5059 = vmatprep.subr.mxu0 0.0
        %5060 = vmatpush1.xpose.msra.mxu0 0.0
        %5061 = vmatprep.subr.mxu0 0.0
        %5062 = vmatpush1.xpose.msra.mxu0 0.0
        %5063 = vmatprep.subr.mxu0 0.0
        %5064 = vmatpush1.xpose.msra.mxu0 0.0
        %5065 = vmatprep.subr.mxu0 0.0
        %5066 = vmatpush1.xpose.msra.mxu0 0.0
        %5067 = vmatprep.subr.mxu0 0.0
        %5068 = vmatpush1.xpose.msra.mxu0 0.0
        %5069 = vmatprep.subr.mxu0 0.0
        %5070 = vmatpush1.xpose.msra.mxu0 0.0
        %5071 = vmatprep.subr.mxu0 0.0
        %5072 = vmatpush1.xpose.msra.mxu0 0.0
        %5073 = vmatprep.subr.mxu0 0.0
        %5074 = vmatpush1.xpose.msra.mxu0 0.0
        %5075 = vmatprep.subr.mxu0 0.0
        %5076 = vmatpush1.xpose.msra.mxu0 0.0
        %5077 = vmatprep.subr.mxu0 0.0
        %5078 = vmatpush1.xpose.msra.mxu0 0.0
        %5079 = vmatprep.subr.mxu0 0.0
        %5080 = vmatpush1.xpose.msra.mxu0 0.0
        %5081 = vmatprep.mubr.f32.mxu0 0.0
        %5082 = vmatmul.mubr.f32.gmra.mrb[0].mxu0 %v5012
        %v5083 = vpop.f32.mrb[0].mxu0
        %v5084 = vadd.f32 0.0, %v5083
        %v5085 = vpop.f32.mrb[0].mxu0
        %5086 = vdwg.mxu0
        %v5087 = vsel %vm1436, %v5008, -inf
        %5088 = vmax.xlane.f32.xlu0 %v5087
        %v5089 = vpop.xlane.xlu0 %5088
        %v5090 = vsel %vm1436, %v5084, -inf
        %5091 = vmax.xlane.f32.xlu0 %v5090
        %v5092 = vpop.xlane.xlu0 %5091
        %v5093 = vsub.f32 %v5008, %v5089
        %v5094 = vsub.f32 %v5084, %v5092
        %v5095 = vmul.f32 %v5093, 1.442695
        %v5096 = vpow.pop %v5095
        %v5097 = vmul.f32 %v5094, 1.442695
        %v5098 = vpow.pop %v5097
        %v5099 = vsel %vm1436, %v5096, 0.0
        %5100 = vadd.xlane.f32.xlu0 %v5099
        %v5101 = vpop.xlane.xlu0 %5100
        %v5102 = vsel %vm1436, %v5098, 0.0
        %5103 = vadd.xlane.f32.xlu0 %v5102
        %v5104 = vpop.xlane.xlu0 %5103
        %v5105 = vrcp.pop %v5101
        %v5106 = vrcp.pop %v5104
        %v5107 = vmul.f32 %v5096, %v5105
        %v5108 = vmul.f32 %v5098, %v5106
        %v5110 = vsel %vm1436, %v5107, 0
        %5112 = vmatprep.subr.mxu0 0.0
        %5113 = vmatpush1.msra.mxu0 %v4929
        %5114 = vmatprep.subr.mxu0 0.0
        %5115 = vmatpush1.msra.mxu0 0.0
        %5116 = vmatprep.subr.mxu0 0.0
        %5117 = vmatpush1.msra.mxu0 0.0
        %5118 = vmatprep.subr.mxu0 0.0
        %5119 = vmatpush1.msra.mxu0 0.0
        %5120 = vmatprep.subr.mxu0 0.0
        %5121 = vmatpush1.msra.mxu0 0.0
        %5122 = vmatprep.subr.mxu0 0.0
        %5123 = vmatpush1.msra.mxu0 0.0
        %5124 = vmatprep.subr.mxu0 0.0
        %5125 = vmatpush1.msra.mxu0 0.0
        %5126 = vmatprep.subr.mxu0 0.0
        %5127 = vmatpush1.msra.mxu0 0.0
        %5128 = vmatprep.subr.mxu0 0.0
        %5129 = vmatpush1.msra.mxu0 0.0
        %5130 = vmatprep.subr.mxu0 0.0
        %5131 = vmatpush1.msra.mxu0 0.0
        %5132 = vmatprep.subr.mxu0 0.0
        %5133 = vmatpush1.msra.mxu0 0.0
        %5134 = vmatprep.subr.mxu0 0.0
        %5135 = vmatpush1.msra.mxu0 0.0
        %5136 = vmatprep.subr.mxu0 0.0
        %5137 = vmatpush1.msra.mxu0 0.0
        %5138 = vmatprep.subr.mxu0 0.0
        %5139 = vmatpush1.msra.mxu0 0.0
        %5140 = vmatprep.subr.mxu0 0.0
        %5141 = vmatpush1.msra.mxu0 0.0
        %5142 = vmatprep.subr.mxu0 0.0
        %5143 = vmatpush1.msra.mxu0 0.0
        %5144 = vmatprep.subr.mxu0 0.0
        %5145 = vmatpush1.msra.mxu0 0.0
        %5146 = vmatprep.subr.mxu0 0.0
        %5147 = vmatpush1.msra.mxu0 0.0
        %5148 = vmatprep.subr.mxu0 0.0
        %5149 = vmatpush1.msra.mxu0 0.0
        %5150 = vmatprep.subr.mxu0 0.0
        %5151 = vmatpush1.msra.mxu0 0.0
        %5152 = vmatprep.subr.mxu0 0.0
        %5153 = vmatpush1.msra.mxu0 0.0
        %5154 = vmatprep.subr.mxu0 0.0
        %5155 = vmatpush1.msra.mxu0 0.0
        %5156 = vmatprep.subr.mxu0 0.0
        %5157 = vmatpush1.msra.mxu0 0.0
        %5158 = vmatprep.subr.mxu0 0.0
        %5159 = vmatpush1.msra.mxu0 0.0
        %5160 = vmatprep.subr.mxu0 0.0
        %5161 = vmatpush1.msra.mxu0 0.0
        %5162 = vmatprep.subr.mxu0 0.0
        %5163 = vmatpush1.msra.mxu0 0.0
        %5164 = vmatprep.subr.mxu0 0.0
        %5165 = vmatpush1.msra.mxu0 0.0
        %5166 = vmatprep.subr.mxu0 0.0
        %5167 = vmatpush1.msra.mxu0 0.0
        %5168 = vmatprep.subr.mxu0 0.0
        %5169 = vmatpush1.msra.mxu0 0.0
        %5170 = vmatprep.subr.mxu0 0.0
        %5171 = vmatpush1.msra.mxu0 0.0
        %5172 = vmatprep.subr.mxu0 0.0
        %5173 = vmatpush1.msra.mxu0 0.0
        %5174 = vmatprep.subr.mxu0 0.0
        %5175 = vmatpush1.msra.mxu0 0.0
        %5176 = vmatprep.mubr.f32.mxu0 0.0
        %5177 = vmatmul.mubr.f32.gmra.mrb[0].mxu0 %v5110
        %v5178 = vpop.f32.mrb[0].mxu0
        %v5179 = vadd.f32 0.0, %v5178
        %v5180 = vpop.f32.mrb[0].mxu0
        %5181 = vdwg.mxu0
        %v5183 = vsel %vm1436, %v5108, 0
        %5185 = vmatprep.subr.mxu0 0.0
        %5186 = vmatpush1.msra.mxu0 %v4932
        %5187 = vmatprep.subr.mxu0 0.0
        %5188 = vmatpush1.msra.mxu0 0.0
        %5189 = vmatprep.subr.mxu0 0.0
        %5190 = vmatpush1.msra.mxu0 0.0
        %5191 = vmatprep.subr.mxu0 0.0
        %5192 = vmatpush1.msra.mxu0 0.0
        %5193 = vmatprep.subr.mxu0 0.0
        %5194 = vmatpush1.msra.mxu0 0.0
        %5195 = vmatprep.subr.mxu0 0.0
        %5196 = vmatpush1.msra.mxu0 0.0
        %5197 = vmatprep.subr.mxu0 0.0
        %5198 = vmatpush1.msra.mxu0 0.0
        %5199 = vmatprep.subr.mxu0 0.0
        %5200 = vmatpush1.msra.mxu0 0.0
        %5201 = vmatprep.subr.mxu0 0.0
        %5202 = vmatpush1.msra.mxu0 0.0
        %5203 = vmatprep.subr.mxu0 0.0
        %5204 = vmatpush1.msra.mxu0 0.0
        %5205 = vmatprep.subr.mxu0 0.0
        %5206 = vmatpush1.msra.mxu0 0.0
        %5207 = vmatprep.subr.mxu0 0.0
        %5208 = vmatpush1.msra.mxu0 0.0
        %5209 = vmatprep.subr.mxu0 0.0
        %5210 = vmatpush1.msra.mxu0 0.0
        %5211 = vmatprep.subr.mxu0 0.0
        %5212 = vmatpush1.msra.mxu0 0.0
        %5213 = vmatprep.subr.mxu0 0.0
        %5214 = vmatpush1.msra.mxu0 0.0
        %5215 = vmatprep.subr.mxu0 0.0
        %5216 = vmatpush1.msra.mxu0 0.0
        %5217 = vmatprep.subr.mxu0 0.0
        %5218 = vmatpush1.msra.mxu0 0.0
        %5219 = vmatprep.subr.mxu0 0.0
        %5220 = vmatpush1.msra.mxu0 0.0
        %5221 = vmatprep.subr.mxu0 0.0
        %5222 = vmatpush1.msra.mxu0 0.0
        %5223 = vmatprep.subr.mxu0 0.0
        %5224 = vmatpush1.msra.mxu0 0.0
        %5225 = vmatprep.subr.mxu0 0.0
        %5226 = vmatpush1.msra.mxu0 0.0
        %5227 = vmatprep.subr.mxu0 0.0
        %5228 = vmatpush1.msra.mxu0 0.0
        %5229 = vmatprep.subr.mxu0 0.0
        %5230 = vmatpush1.msra.mxu0 0.0
        %5231 = vmatprep.subr.mxu0 0.0
        %5232 = vmatpush1.msra.mxu0 0.0
        %5233 = vmatprep.subr.mxu0 0.0
        %5234 = vmatpush1.msra.mxu0 0.0
        %5235 = vmatprep.subr.mxu0 0.0
        %5236 = vmatpush1.msra.mxu0 0.0
        %5237 = vmatprep.subr.mxu0 0.0
        %5238 = vmatpush1.msra.mxu0 0.0
        %5239 = vmatprep.subr.mxu0 0.0
        %5240 = vmatpush1.msra.mxu0 0.0
        %5241 = vmatprep.subr.mxu0 0.0
        %5242 = vmatpush1.msra.mxu0 0.0
        %5243 = vmatprep.subr.mxu0 0.0
        %5244 = vmatpush1.msra.mxu0 0.0
        %5245 = vmatprep.subr.mxu0 0.0
        %5246 = vmatpush1.msra.mxu0 0.0
        %5247 = vmatprep.subr.mxu0 0.0
        %5248 = vmatpush1.msra.mxu0 0.0
        %5249 = vmatprep.mubr.f32.mxu0 0.0
        %5250 = vmatmul.mubr.f32.gmra.mrb[0].mxu0 %v5183
        %v5251 = vpop.f32.mrb[0].mxu0
        %v5252 = vadd.f32 0.0, %v5251
        %v5253 = vpop.f32.mrb[0].mxu0
        %5254 = vdwg.mxu0
        %v5255 = vpack.c.bf16 %v5252, %v5179
        %s5256 = scalar_lea.vmem %s827, 14 [#allocation11]
        %v5257 = vld [vmem:[%s5256] sm:$0x3]
        %v5259 = vsel %vm1283, %v5255, 0
        %v5262 = vsel %vm2083, %v5257, 0
        %5264 = vmatprep.subr.bf16.mxu0 0
        %5265 = vmatpush1.bf16.msra.mxu0 %v5262
        %5266 = vmatprep.subr.bf16.mxu0 0
        %5267 = vmatpush1.bf16.msra.mxu0 0
        %5268 = vmatprep.subr.bf16.mxu0 0
        %5269 = vmatpush1.bf16.msra.mxu0 0
        %5270 = vmatprep.subr.bf16.mxu0 0
        %5271 = vmatpush1.bf16.msra.mxu0 0
        %5272 = vmatprep.subr.bf16.mxu0 0
        %5273 = vmatpush1.bf16.msra.mxu0 0
        %5274 = vmatprep.subr.bf16.mxu0 0
        %5275 = vmatpush1.bf16.msra.mxu0 0
        %5276 = vmatprep.subr.bf16.mxu0 0
        %5277 = vmatpush1.bf16.msra.mxu0 0
        %5278 = vmatprep.subr.bf16.mxu0 0
        %5279 = vmatpush1.bf16.msra.mxu0 0
        %5280 = vmatprep.subr.bf16.mxu0 0
        %5281 = vmatpush1.bf16.msra.mxu0 0
        %5282 = vmatprep.subr.bf16.mxu0 0
        %5283 = vmatpush1.bf16.msra.mxu0 0
        %5284 = vmatprep.subr.bf16.mxu0 0
        %5285 = vmatpush1.bf16.msra.mxu0 0
        %5286 = vmatprep.subr.bf16.mxu0 0
        %5287 = vmatpush1.bf16.msra.mxu0 0
        %5288 = vmatprep.subr.bf16.mxu0 0
        %5289 = vmatpush1.bf16.msra.mxu0 0
        %5290 = vmatprep.subr.bf16.mxu0 0
        %5291 = vmatpush1.bf16.msra.mxu0 0
        %5292 = vmatprep.subr.bf16.mxu0 0
        %5293 = vmatpush1.bf16.msra.mxu0 0
        %5294 = vmatprep.subr.bf16.mxu0 0
        %5295 = vmatpush1.bf16.msra.mxu0 0
        %5296 = vmatprep.mubr.bf16.mxu0 0
        %5297 = vmatmul.mubr.bf16.gmra.mrb[0].mxu0 %v5259
        %v5298 = vpop.f32.mrb[0].mxu0
        %v5299 = vadd.f32 0.0, %v5298
        %v5300 = vpop.f32.mrb[0].mxu0
        %v5301 = vpop.f32.mrb[0].mxu0
        %v5302 = vadd.f32 0.0, %v5301
        %v5303 = vpop.f32.mrb[0].mxu0
        %5304 = vdwg.mxu0
        %v5305 = vadd.f32 %v4783, %v5299
        %v5306 = vadd.f32 %v4784, %v5302
        %v5307 = vld [vmem:[%s835] sm:$0x1]
        %v5309 = vlaneseq
        %v5310 = vshrl.u32 %v5309, 7
        %v5311 = vsub.s32 0, %v5310
        %v5312 = vrot.slane %v5307, %v5311
        %v5314 = vadd.f32 %v5305, %v5312
        %v5315 = vadd.f32 %v5306, %v5312
        %v5316 = vadd.f32 %v1126, %v5314
        %v5317 = vadd.f32 %v1127, %v5315
        %v5318 = vld [vmem:[%s843] sm:$0x1]
        %v5319 = vld [vmem:[%s851] sm:$0x1]
        %v5320 = vsel %vm1137, %v5316, 0.0
        %5321 = vadd.xlane.f32.xlu0 %v5320
        %v5322 = vpop.xlane.xlu0 %5321
        %v5323 = vsel %vm1137, %v5317, 0.0
        %5324 = vadd.xlane.f32.xlu0 %v5323
        %v5325 = vpop.xlane.xlu0 %5324
        %v5326 = vrcp.pop 32.0
        %v5327 = vmul.f32 %v5322, %v5326
        %v5328 = vmul.f32 %v5325, %v5326
        %v5329 = vsub.f32 %v5316, %v5327
        %v5330 = vsub.f32 %v5317, %v5328
        %v5331 = vmul.f32 %v5329, %v5329
        %v5332 = vmul.f32 %v5330, %v5330
        %v5333 = vsel %vm1137, %v5331, 0.0
        %5334 = vadd.xlane.f32.xlu0 %v5333
        %v5335 = vpop.xlane.xlu0 %5334
        %v5336 = vsel %vm1137, %v5332, 0.0
        %5337 = vadd.xlane.f32.xlu0 %v5336
        %v5338 = vpop.xlane.xlu0 %5337
        %v5339 = vmul.f32 %v5335, %v5326
        %v5340 = vmul.f32 %v5338, %v5326
        %v5341 = vadd.f32 %v5339, 1e-05
        %v5342 = vadd.f32 %v5340, 1e-05
        %v5343 = vrsqrt.pop %v5341
        %v5344 = vrsqrt.pop %v5342
        %v5345 = vmul.f32 %v5329, %v5343
        %v5346 = vmul.f32 %v5330, %v5344
        %v5348 = vlaneseq
        %v5349 = vshrl.u32 %v5348, 7
        %v5350 = vsub.s32 0, %v5349
        %v5351 = vrot.slane %v5318, %v5350
        %v5353 = vmul.f32 %v5345, %v5351
        %v5354 = vmul.f32 %v5346, %v5351
        %v5356 = vlaneseq
        %v5357 = vshrl.u32 %v5356, 7
        %v5358 = vsub.s32 0, %v5357
        %v5359 = vrot.slane %v5319, %v5358
        %v5361 = vadd.f32 %v5353, %v5359
        %v5362 = vadd.f32 %v5354, %v5359
        %v5363 = vpack.c.bf16 %v5362, %v5361
        %v5364 = vld [vmem:[%s860] sm:$0xff]
        %v5365 = vld [vmem:[%s860 + $0x8] sm:$0xff]
        %v5366 = vld [vmem:[%s860 + $0x10] sm:$0xff]
        %v5367 = vld [vmem:[%s860 + $0x18] sm:$0xff]
        %v5368 = vld [vmem:[%s860 + $0x20] sm:$0xff]
        %v5369 = vld [vmem:[%s860 + $0x28] sm:$0xff]
        %v5370 = vld [vmem:[%s860 + $0x30] sm:$0xff]
        %v5371 = vld [vmem:[%s860 + $0x38] sm:$0xff]
        %v5372 = vld [vmem:[%s860 + $0x40] sm:$0xff]
        %v5373 = vld [vmem:[%s860 + $0x48] sm:$0xff]
        %v5374 = vld [vmem:[%s860 + $0x50] sm:$0xff]
        %v5375 = vld [vmem:[%s860 + $0x58] sm:$0xff]
        %v5376 = vld [vmem:[%s860 + $0x60] sm:$0xff]
        %v5377 = vld [vmem:[%s860 + $0x68] sm:$0xff]
        %v5378 = vld [vmem:[%s860 + $0x70] sm:$0xff]
        %v5379 = vld [vmem:[%s860 + $0x78] sm:$0xff]
        %v5380 = vld [vmem:[%s860 + $0x80] sm:$0xff]
        %v5381 = vld [vmem:[%s860 + $0x88] sm:$0xff]
        %v5382 = vld [vmem:[%s860 + $0x90] sm:$0xff]
        %v5383 = vld [vmem:[%s860 + $0x98] sm:$0xff]
        %v5384 = vld [vmem:[%s860 + $0xa0] sm:$0xff]
        %v5385 = vld [vmem:[%s860 + $0xa8] sm:$0xff]
        %v5386 = vld [vmem:[%s860 + $0xb0] sm:$0xff]
        %v5387 = vld [vmem:[%s860 + $0xb8] sm:$0xff]
        %v5388 = vld [vmem:[%s860 + $0xc0] sm:$0xff]
        %v5389 = vld [vmem:[%s860 + $0xc8] sm:$0xff]
        %v5390 = vld [vmem:[%s860 + $0xd0] sm:$0xff]
        %v5391 = vld [vmem:[%s860 + $0xd8] sm:$0xff]
        %v5392 = vld [vmem:[%s860 + $0xe0] sm:$0xff]
        %v5393 = vld [vmem:[%s860 + $0xe8] sm:$0xff]
        %v5394 = vld [vmem:[%s860 + $0xf0] sm:$0xff]
        %v5395 = vld [vmem:[%s860 + $0xf8] sm:$0xff]
        %v5396 = vld [vmem:[%s1013] sm:$0xff]
        %v5397 = vld [vmem:[%s1013 + $0x8] sm:$0xff]
        %v5400 = vlaneseq
        %v5401 = vshrl.u32 %v5400, 7
        %v5402 = vsub.s32 0, %v5401
        %v5403 = vrot.slane %v5396, %v5402
        %v5404 = vlaneseq
        %v5405 = vshrl.u32 %v5404, 7
        %v5406 = vsub.s32 1, %v5405
        %v5407 = vrot.slane %v5396, %v5406
        %v5408 = vlaneseq
        %v5409 = vshrl.u32 %v5408, 7
        %v5410 = vsub.s32 2, %v5409
        %v5411 = vrot.slane %v5396, %v5410
        %v5412 = vlaneseq
        %v5413 = vshrl.u32 %v5412, 7
        %v5414 = vsub.s32 3, %v5413
        %v5415 = vrot.slane %v5396, %v5414
        %v5416 = vlaneseq
        %v5417 = vshrl.u32 %v5416, 7
        %v5418 = vsub.s32 4, %v5417
        %v5419 = vrot.slane %v5396, %v5418
        %v5420 = vlaneseq
        %v5421 = vshrl.u32 %v5420, 7
        %v5422 = vsub.s32 5, %v5421
        %v5423 = vrot.slane %v5396, %v5422
        %v5424 = vlaneseq
        %v5425 = vshrl.u32 %v5424, 7
        %v5426 = vsub.s32 6, %v5425
        %v5427 = vrot.slane %v5396, %v5426
        %v5428 = vlaneseq
        %v5429 = vshrl.u32 %v5428, 7
        %v5430 = vsub.s32 7, %v5429
        %v5431 = vrot.slane %v5396, %v5430
        %v5432 = vlaneseq
        %v5433 = vshrl.u32 %v5432, 7
        %v5434 = vsub.s32 0, %v5433
        %v5435 = vrot.slane %v5397, %v5434
        %v5436 = vlaneseq
        %v5437 = vshrl.u32 %v5436, 7
        %v5438 = vsub.s32 1, %v5437
        %v5439 = vrot.slane %v5397, %v5438
        %v5440 = vlaneseq
        %v5441 = vshrl.u32 %v5440, 7
        %v5442 = vsub.s32 2, %v5441
        %v5443 = vrot.slane %v5397, %v5442
        %v5444 = vlaneseq
        %v5445 = vshrl.u32 %v5444, 7
        %v5446 = vsub.s32 3, %v5445
        %v5447 = vrot.slane %v5397, %v5446
        %v5448 = vlaneseq
        %v5449 = vshrl.u32 %v5448, 7
        %v5450 = vsub.s32 4, %v5449
        %v5451 = vrot.slane %v5397, %v5450
        %v5452 = vlaneseq
        %v5453 = vshrl.u32 %v5452, 7
        %v5454 = vsub.s32 5, %v5453
        %v5455 = vrot.slane %v5397, %v5454
        %v5456 = vlaneseq
        %v5457 = vshrl.u32 %v5456, 7
        %v5458 = vsub.s32 6, %v5457
        %v5459 = vrot.slane %v5397, %v5458
        %v5460 = vlaneseq
        %v5461 = vshrl.u32 %v5460, 7
        %v5462 = vsub.s32 7, %v5461
        %v5463 = vrot.slane %v5397, %v5462
        %v5512 = vunpack.c.l.b16 %v5364
        %v5513 = vunpack.c.h.b16 %v5364
        %v5514 = vunpack.c.l.b16 %v5365
        %v5515 = vunpack.c.h.b16 %v5365
        %v5516 = vunpack.c.l.b16 %v5366
        %v5517 = vunpack.c.h.b16 %v5366
        %v5518 = vunpack.c.l.b16 %v5367
        %v5519 = vunpack.c.h.b16 %v5367
        %v5520 = vunpack.c.l.b16 %v5368
        %v5521 = vunpack.c.h.b16 %v5368
        %v5522 = vunpack.c.l.b16 %v5369
        %v5523 = vunpack.c.h.b16 %v5369
        %v5524 = vunpack.c.l.b16 %v5370
        %v5525 = vunpack.c.h.b16 %v5370
        %v5526 = vunpack.c.l.b16 %v5371
        %v5527 = vunpack.c.h.b16 %v5371
        %v5528 = vunpack.c.l.b16 %v5372
        %v5529 = vunpack.c.h.b16 %v5372
        %v5530 = vunpack.c.l.b16 %v5373
        %v5531 = vunpack.c.h.b16 %v5373
        %v5532 = vunpack.c.l.b16 %v5374
        %v5533 = vunpack.c.h.b16 %v5374
        %v5534 = vunpack.c.l.b16 %v5375
        %v5535 = vunpack.c.h.b16 %v5375
        %v5536 = vunpack.c.l.b16 %v5376
        %v5537 = vunpack.c.h.b16 %v5376
        %v5538 = vunpack.c.l.b16 %v5377
        %v5539 = vunpack.c.h.b16 %v5377
        %v5540 = vunpack.c.l.b16 %v5378
        %v5541 = vunpack.c.h.b16 %v5378
        %v5542 = vunpack.c.l.b16 %v5379
        %v5543 = vunpack.c.h.b16 %v5379
        %v5544 = vunpack.c.l.b16 %v5380
        %v5545 = vunpack.c.h.b16 %v5380
        %v5546 = vunpack.c.l.b16 %v5381
        %v5547 = vunpack.c.h.b16 %v5381
        %v5548 = vunpack.c.l.b16 %v5382
        %v5549 = vunpack.c.h.b16 %v5382
        %v5550 = vunpack.c.l.b16 %v5383
        %v5551 = vunpack.c.h.b16 %v5383
        %v5552 = vunpack.c.l.b16 %v5384
        %v5553 = vunpack.c.h.b16 %v5384
        %v5554 = vunpack.c.l.b16 %v5385
        %v5555 = vunpack.c.h.b16 %v5385
        %v5556 = vunpack.c.l.b16 %v5386
        %v5557 = vunpack.c.h.b16 %v5386
        %v5558 = vunpack.c.l.b16 %v5387
        %v5559 = vunpack.c.h.b16 %v5387
        %v5560 = vunpack.c.l.b16 %v5388
        %v5561 = vunpack.c.h.b16 %v5388
        %v5562 = vunpack.c.l.b16 %v5389
        %v5563 = vunpack.c.h.b16 %v5389
        %v5564 = vunpack.c.l.b16 %v5390
        %v5565 = vunpack.c.h.b16 %v5390
        %v5566 = vunpack.c.l.b16 %v5391
        %v5567 = vunpack.c.h.b16 %v5391
        %v5568 = vunpack.c.l.b16 %v5392
        %v5569 = vunpack.c.h.b16 %v5392
        %v5570 = vunpack.c.l.b16 %v5393
        %v5571 = vunpack.c.h.b16 %v5393
        %v5572 = vunpack.c.l.b16 %v5394
        %v5573 = vunpack.c.h.b16 %v5394
        %v5574 = vunpack.c.l.b16 %v5395
        %v5575 = vunpack.c.h.b16 %v5395
        %v5576 = vpack.c.b16 %v5528, %v5512
        %v5577 = vpack.c.b16 %v5529, %v5513
        %v5578 = vpack.c.b16 %v5530, %v5514
        %v5579 = vpack.c.b16 %v5531, %v5515
        %v5580 = vpack.c.b16 %v5532, %v5516
        %v5581 = vpack.c.b16 %v5533, %v5517
        %v5582 = vpack.c.b16 %v5534, %v5518
        %v5583 = vpack.c.b16 %v5535, %v5519
        %v5584 = vpack.c.b16 %v5536, %v5520
        %v5585 = vpack.c.b16 %v5537, %v5521
        %v5586 = vpack.c.b16 %v5538, %v5522
        %v5587 = vpack.c.b16 %v5539, %v5523
        %v5588 = vpack.c.b16 %v5540, %v5524
        %v5589 = vpack.c.b16 %v5541, %v5525
        %v5590 = vpack.c.b16 %v5542, %v5526
        %v5591 = vpack.c.b16 %v5543, %v5527
        %v5592 = vpack.c.b16 %v5560, %v5544
        %v5593 = vpack.c.b16 %v5561, %v5545
        %v5594 = vpack.c.b16 %v5562, %v5546
        %v5595 = vpack.c.b16 %v5563, %v5547
        %v5596 = vpack.c.b16 %v5564, %v5548
        %v5597 = vpack.c.b16 %v5565, %v5549
        %v5598 = vpack.c.b16 %v5566, %v5550
        %v5599 = vpack.c.b16 %v5567, %v5551
        %v5600 = vpack.c.b16 %v5568, %v5552
        %v5601 = vpack.c.b16 %v5569, %v5553
        %v5602 = vpack.c.b16 %v5570, %v5554
        %v5603 = vpack.c.b16 %v5571, %v5555
        %v5604 = vpack.c.b16 %v5572, %v5556
        %v5605 = vpack.c.b16 %v5573, %v5557
        %v5606 = vpack.c.b16 %v5574, %v5558
        %v5607 = vpack.c.b16 %v5575, %v5559
        %v5641 = vsel %vm1137, %v5363, 0
        %5643 = vmatprep.subr.bf16.mxu0 %v5577
        %5644 = vmatpush1.bf16.msra.mxu0 %v5576
        %5645 = vmatprep.subr.bf16.mxu0 %v5593
        %5646 = vmatpush1.bf16.msra.mxu0 %v5592
        %5647 = vmatprep.subr.bf16.mxu0 0
        %5648 = vmatpush1.bf16.msra.mxu0 0
        %5649 = vmatprep.subr.bf16.mxu0 0
        %5650 = vmatpush1.bf16.msra.mxu0 0
        %5651 = vmatprep.subr.bf16.mxu0 0
        %5652 = vmatpush1.bf16.msra.mxu0 0
        %5653 = vmatprep.subr.bf16.mxu0 0
        %5654 = vmatpush1.bf16.msra.mxu0 0
        %5655 = vmatprep.subr.bf16.mxu0 0
        %5656 = vmatpush1.bf16.msra.mxu0 0
        %5657 = vmatprep.subr.bf16.mxu0 0
        %5658 = vmatpush1.bf16.msra.mxu0 0
        %5659 = vmatprep.subr.bf16.mxu0 0
        %5660 = vmatpush1.bf16.msra.mxu0 0
        %5661 = vmatprep.subr.bf16.mxu0 0
        %5662 = vmatpush1.bf16.msra.mxu0 0
        %5663 = vmatprep.subr.bf16.mxu0 0
        %5664 = vmatpush1.bf16.msra.mxu0 0
        %5665 = vmatprep.subr.bf16.mxu0 0
        %5666 = vmatpush1.bf16.msra.mxu0 0
        %5667 = vmatprep.subr.bf16.mxu0 0
        %5668 = vmatpush1.bf16.msra.mxu0 0
        %5669 = vmatprep.subr.bf16.mxu0 0
        %5670 = vmatpush1.bf16.msra.mxu0 0
        %5671 = vmatprep.subr.bf16.mxu0 0
        %5672 = vmatpush1.bf16.msra.mxu0 0
        %5673 = vmatprep.subr.bf16.mxu0 0
        %5674 = vmatpush1.bf16.msra.mxu0 0
        %5675 = vmatprep.mubr.bf16.mxu0 0
        %5676 = vmatmul.mubr.bf16.gmra.mrb[0].mxu0 %v5641
        %v5677 = vpop.f32.mrb[0].mxu0
        %v5678 = vadd.f32 %v5403, %v5677
        %v5679 = vpop.f32.mrb[0].mxu0
        %v5680 = vadd.f32 %v5407, %v5679
        %v5681 = vpop.f32.mrb[0].mxu0
        %v5682 = vadd.f32 %v5403, %v5681
        %v5683 = vpop.f32.mrb[0].mxu0
        %v5684 = vadd.f32 %v5407, %v5683
        %5685 = vdwg.mxu0
        %5686 = vmatprep.subr.bf16.mxu0 %v5579
        %5687 = vmatpush1.bf16.msra.mxu0 %v5578
        %5688 = vmatprep.subr.bf16.mxu0 %v5595
        %5689 = vmatpush1.bf16.msra.mxu0 %v5594
        %5690 = vmatprep.subr.bf16.mxu0 0
        %5691 = vmatpush1.bf16.msra.mxu0 0
        %5692 = vmatprep.subr.bf16.mxu0 0
        %5693 = vmatpush1.bf16.msra.mxu0 0
        %5694 = vmatprep.subr.bf16.mxu0 0
        %5695 = vmatpush1.bf16.msra.mxu0 0
        %5696 = vmatprep.subr.bf16.mxu0 0
        %5697 = vmatpush1.bf16.msra.mxu0 0
        %5698 = vmatprep.subr.bf16.mxu0 0
        %5699 = vmatpush1.bf16.msra.mxu0 0
        %5700 = vmatprep.subr.bf16.mxu0 0
        %5701 = vmatpush1.bf16.msra.mxu0 0
        %5702 = vmatprep.subr.bf16.mxu0 0
        %5703 = vmatpush1.bf16.msra.mxu0 0
        %5704 = vmatprep.subr.bf16.mxu0 0
        %5705 = vmatpush1.bf16.msra.mxu0 0
        %5706 = vmatprep.subr.bf16.mxu0 0
        %5707 = vmatpush1.bf16.msra.mxu0 0
        %5708 = vmatprep.subr.bf16.mxu0 0
        %5709 = vmatpush1.bf16.msra.mxu0 0
        %5710 = vmatprep.subr.bf16.mxu0 0
        %5711 = vmatpush1.bf16.msra.mxu0 0
        %5712 = vmatprep.subr.bf16.mxu0 0
        %5713 = vmatpush1.bf16.msra.mxu0 0
        %5714 = vmatprep.subr.bf16.mxu0 0
        %5715 = vmatpush1.bf16.msra.mxu0 0
        %5716 = vmatprep.subr.bf16.mxu0 0
        %5717 = vmatpush1.bf16.msra.mxu0 0
        %5718 = vmatprep.mubr.bf16.mxu0 0
        %5719 = vmatmul.mubr.bf16.gmra.mrb[0].mxu0 %v5641
        %v5720 = vpop.f32.mrb[0].mxu0
        %v5721 = vadd.f32 %v5411, %v5720
        %v5722 = vpop.f32.mrb[0].mxu0
        %v5723 = vadd.f32 %v5415, %v5722
        %v5724 = vpop.f32.mrb[0].mxu0
        %v5725 = vadd.f32 %v5411, %v5724
        %v5726 = vpop.f32.mrb[0].mxu0
        %v5727 = vadd.f32 %v5415, %v5726
        %5728 = vdwg.mxu0
        %5729 = vmatprep.subr.bf16.mxu0 %v5581
        %5730 = vmatpush1.bf16.msra.mxu0 %v5580
        %5731 = vmatprep.subr.bf16.mxu0 %v5597
        %5732 = vmatpush1.bf16.msra.mxu0 %v5596
        %5733 = vmatprep.subr.bf16.mxu0 0
        %5734 = vmatpush1.bf16.msra.mxu0 0
        %5735 = vmatprep.subr.bf16.mxu0 0
        %5736 = vmatpush1.bf16.msra.mxu0 0
        %5737 = vmatprep.subr.bf16.mxu0 0
        %5738 = vmatpush1.bf16.msra.mxu0 0
        %5739 = vmatprep.subr.bf16.mxu0 0
        %5740 = vmatpush1.bf16.msra.mxu0 0
        %5741 = vmatprep.subr.bf16.mxu0 0
        %5742 = vmatpush1.bf16.msra.mxu0 0
        %5743 = vmatprep.subr.bf16.mxu0 0
        %5744 = vmatpush1.bf16.msra.mxu0 0
        %5745 = vmatprep.subr.bf16.mxu0 0
        %5746 = vmatpush1.bf16.msra.mxu0 0
        %5747 = vmatprep.subr.bf16.mxu0 0
        %5748 = vmatpush1.bf16.msra.mxu0 0
        %5749 = vmatprep.subr.bf16.mxu0 0
        %5750 = vmatpush1.bf16.msra.mxu0 0
        %5751 = vmatprep.subr.bf16.mxu0 0
        %5752 = vmatpush1.bf16.msra.mxu0 0
        %5753 = vmatprep.subr.bf16.mxu0 0
        %5754 = vmatpush1.bf16.msra.mxu0 0
        %5755 = vmatprep.subr.bf16.mxu0 0
        %5756 = vmatpush1.bf16.msra.mxu0 0
        %5757 = vmatprep.subr.bf16.mxu0 0
        %5758 = vmatpush1.bf16.msra.mxu0 0
        %5759 = vmatprep.subr.bf16.mxu0 0
        %5760 = vmatpush1.bf16.msra.mxu0 0
        %5761 = vmatprep.mubr.bf16.mxu0 0
        %5762 = vmatmul.mubr.bf16.gmra.mrb[0].mxu0 %v5641
        %v5763 = vpop.f32.mrb[0].mxu0
        %v5764 = vadd.f32 %v5419, %v5763
        %v5765 = vpop.f32.mrb[0].mxu0
        %v5766 = vadd.f32 %v5423, %v5765
        %v5767 = vpop.f32.mrb[0].mxu0
        %v5768 = vadd.f32 %v5419, %v5767
        %v5769 = vpop.f32.mrb[0].mxu0
        %v5770 = vadd.f32 %v5423, %v5769
        %5771 = vdwg.mxu0
        %5772 = vmatprep.subr.bf16.mxu0 %v5583
        %5773 = vmatpush1.bf16.msra.mxu0 %v5582
        %5774 = vmatprep.subr.bf16.mxu0 %v5599
        %5775 = vmatpush1.bf16.msra.mxu0 %v5598
        %5776 = vmatprep.subr.bf16.mxu0 0
        %5777 = vmatpush1.bf16.msra.mxu0 0
        %5778 = vmatprep.subr.bf16.mxu0 0
        %5779 = vmatpush1.bf16.msra.mxu0 0
        %5780 = vmatprep.subr.bf16.mxu0 0
        %5781 = vmatpush1.bf16.msra.mxu0 0
        %5782 = vmatprep.subr.bf16.mxu0 0
        %5783 = vmatpush1.bf16.msra.mxu0 0
        %5784 = vmatprep.subr.bf16.mxu0 0
        %5785 = vmatpush1.bf16.msra.mxu0 0
        %5786 = vmatprep.subr.bf16.mxu0 0
        %5787 = vmatpush1.bf16.msra.mxu0 0
        %5788 = vmatprep.subr.bf16.mxu0 0
        %5789 = vmatpush1.bf16.msra.mxu0 0
        %5790 = vmatprep.subr.bf16.mxu0 0
        %5791 = vmatpush1.bf16.msra.mxu0 0
        %5792 = vmatprep.subr.bf16.mxu0 0
        %5793 = vmatpush1.bf16.msra.mxu0 0
        %5794 = vmatprep.subr.bf16.mxu0 0
        %5795 = vmatpush1.bf16.msra.mxu0 0
        %5796 = vmatprep.subr.bf16.mxu0 0
        %5797 = vmatpush1.bf16.msra.mxu0 0
        %5798 = vmatprep.subr.bf16.mxu0 0
        %5799 = vmatpush1.bf16.msra.mxu0 0
        %5800 = vmatprep.subr.bf16.mxu0 0
        %5801 = vmatpush1.bf16.msra.mxu0 0
        %5802 = vmatprep.subr.bf16.mxu0 0
        %5803 = vmatpush1.bf16.msra.mxu0 0
        %5804 = vmatprep.mubr.bf16.mxu0 0
        %5805 = vmatmul.mubr.bf16.gmra.mrb[0].mxu0 %v5641
        %v5806 = vpop.f32.mrb[0].mxu0
        %v5807 = vadd.f32 %v5427, %v5806
        %v5808 = vpop.f32.mrb[0].mxu0
        %v5809 = vadd.f32 %v5431, %v5808
        %v5810 = vpop.f32.mrb[0].mxu0
        %v5811 = vadd.f32 %v5427, %v5810
        %v5812 = vpop.f32.mrb[0].mxu0
        %v5813 = vadd.f32 %v5431, %v5812
        %5814 = vdwg.mxu0
        %5815 = vmatprep.subr.bf16.mxu0 %v5585
        %5816 = vmatpush1.bf16.msra.mxu0 %v5584
        %5817 = vmatprep.subr.bf16.mxu0 %v5601
        %5818 = vmatpush1.bf16.msra.mxu0 %v5600
        %5819 = vmatprep.subr.bf16.mxu0 0
        %5820 = vmatpush1.bf16.msra.mxu0 0
        %5821 = vmatprep.subr.bf16.mxu0 0
        %5822 = vmatpush1.bf16.msra.mxu0 0
        %5823 = vmatprep.subr.bf16.mxu0 0
        %5824 = vmatpush1.bf16.msra.mxu0 0
        %5825 = vmatprep.subr.bf16.mxu0 0
        %5826 = vmatpush1.bf16.msra.mxu0 0
        %5827 = vmatprep.subr.bf16.mxu0 0
        %5828 = vmatpush1.bf16.msra.mxu0 0
        %5829 = vmatprep.subr.bf16.mxu0 0
        %5830 = vmatpush1.bf16.msra.mxu0 0
        %5831 = vmatprep.subr.bf16.mxu0 0
        %5832 = vmatpush1.bf16.msra.mxu0 0
        %5833 = vmatprep.subr.bf16.mxu0 0
        %5834 = vmatpush1.bf16.msra.mxu0 0
        %5835 = vmatprep.subr.bf16.mxu0 0
        %5836 = vmatpush1.bf16.msra.mxu0 0
        %5837 = vmatprep.subr.bf16.mxu0 0
        %5838 = vmatpush1.bf16.msra.mxu0 0
        %5839 = vmatprep.subr.bf16.mxu0 0
        %5840 = vmatpush1.bf16.msra.mxu0 0
        %5841 = vmatprep.subr.bf16.mxu0 0
        %5842 = vmatpush1.bf16.msra.mxu0 0
        %5843 = vmatprep.subr.bf16.mxu0 0
        %5844 = vmatpush1.bf16.msra.mxu0 0
        %5845 = vmatprep.subr.bf16.mxu0 0
        %5846 = vmatpush1.bf16.msra.mxu0 0
        %5847 = vmatprep.mubr.bf16.mxu0 0
        %5848 = vmatmul.mubr.bf16.gmra.mrb[0].mxu0 %v5641
        %v5849 = vpop.f32.mrb[0].mxu0
        %v5850 = vadd.f32 %v5435, %v5849
        %v5851 = vpop.f32.mrb[0].mxu0
        %v5852 = vadd.f32 %v5439, %v5851
        %v5853 = vpop.f32.mrb[0].mxu0
        %v5854 = vadd.f32 %v5435, %v5853
        %v5855 = vpop.f32.mrb[0].mxu0
        %v5856 = vadd.f32 %v5439, %v5855
        %5857 = vdwg.mxu0
        %5858 = vmatprep.subr.bf16.mxu0 %v5587
        %5859 = vmatpush1.bf16.msra.mxu0 %v5586
        %5860 = vmatprep.subr.bf16.mxu0 %v5603
        %5861 = vmatpush1.bf16.msra.mxu0 %v5602
        %5862 = vmatprep.subr.bf16.mxu0 0
        %5863 = vmatpush1.bf16.msra.mxu0 0
        %5864 = vmatprep.subr.bf16.mxu0 0
        %5865 = vmatpush1.bf16.msra.mxu0 0
        %5866 = vmatprep.subr.bf16.mxu0 0
        %5867 = vmatpush1.bf16.msra.mxu0 0
        %5868 = vmatprep.subr.bf16.mxu0 0
        %5869 = vmatpush1.bf16.msra.mxu0 0
        %5870 = vmatprep.subr.bf16.mxu0 0
        %5871 = vmatpush1.bf16.msra.mxu0 0
        %5872 = vmatprep.subr.bf16.mxu0 0
        %5873 = vmatpush1.bf16.msra.mxu0 0
        %5874 = vmatprep.subr.bf16.mxu0 0
        %5875 = vmatpush1.bf16.msra.mxu0 0
        %5876 = vmatprep.subr.bf16.mxu0 0
        %5877 = vmatpush1.bf16.msra.mxu0 0
        %5878 = vmatprep.subr.bf16.mxu0 0
        %5879 = vmatpush1.bf16.msra.mxu0 0
        %5880 = vmatprep.subr.bf16.mxu0 0
        %5881 = vmatpush1.bf16.msra.mxu0 0
        %5882 = vmatprep.subr.bf16.mxu0 0
        %5883 = vmatpush1.bf16.msra.mxu0 0
        %5884 = vmatprep.subr.bf16.mxu0 0
        %5885 = vmatpush1.bf16.msra.mxu0 0
        %5886 = vmatprep.subr.bf16.mxu0 0
        %5887 = vmatpush1.bf16.msra.mxu0 0
        %5888 = vmatprep.subr.bf16.mxu0 0
        %5889 = vmatpush1.bf16.msra.mxu0 0
        %5890 = vmatprep.mubr.bf16.mxu0 0
        %5891 = vmatmul.mubr.bf16.gmra.mrb[0].mxu0 %v5641
        %v5892 = vpop.f32.mrb[0].mxu0
        %v5893 = vadd.f32 %v5443, %v5892
        %v5894 = vpop.f32.mrb[0].mxu0
        %v5895 = vadd.f32 %v5447, %v5894
        %v5896 = vpop.f32.mrb[0].mxu0
        %v5897 = vadd.f32 %v5443, %v5896
        %v5898 = vpop.f32.mrb[0].mxu0
        %v5899 = vadd.f32 %v5447, %v5898
        %5900 = vdwg.mxu0
        %5901 = vmatprep.subr.bf16.mxu0 %v5589
        %5902 = vmatpush1.bf16.msra.mxu0 %v5588
        %5903 = vmatprep.subr.bf16.mxu0 %v5605
        %5904 = vmatpush1.bf16.msra.mxu0 %v5604
        %5905 = vmatprep.subr.bf16.mxu0 0
        %5906 = vmatpush1.bf16.msra.mxu0 0
        %5907 = vmatprep.subr.bf16.mxu0 0
        %5908 = vmatpush1.bf16.msra.mxu0 0
        %5909 = vmatprep.subr.bf16.mxu0 0
        %5910 = vmatpush1.bf16.msra.mxu0 0
        %5911 = vmatprep.subr.bf16.mxu0 0
        %5912 = vmatpush1.bf16.msra.mxu0 0
        %5913 = vmatprep.subr.bf16.mxu0 0
        %5914 = vmatpush1.bf16.msra.mxu0 0
        %5915 = vmatprep.subr.bf16.mxu0 0
        %5916 = vmatpush1.bf16.msra.mxu0 0
        %5917 = vmatprep.subr.bf16.mxu0 0
        %5918 = vmatpush1.bf16.msra.mxu0 0
        %5919 = vmatprep.subr.bf16.mxu0 0
        %5920 = vmatpush1.bf16.msra.mxu0 0
        %5921 = vmatprep.subr.bf16.mxu0 0
        %5922 = vmatpush1.bf16.msra.mxu0 0
        %5923 = vmatprep.subr.bf16.mxu0 0
        %5924 = vmatpush1.bf16.msra.mxu0 0
        %5925 = vmatprep.subr.bf16.mxu0 0
        %5926 = vmatpush1.bf16.msra.mxu0 0
        %5927 = vmatprep.subr.bf16.mxu0 0
        %5928 = vmatpush1.bf16.msra.mxu0 0
        %5929 = vmatprep.subr.bf16.mxu0 0
        %5930 = vmatpush1.bf16.msra.mxu0 0
        %5931 = vmatprep.subr.bf16.mxu0 0
        %5932 = vmatpush1.bf16.msra.mxu0 0
        %5933 = vmatprep.mubr.bf16.mxu0 0
        %5934 = vmatmul.mubr.bf16.gmra.mrb[0].mxu0 %v5641
        %v5935 = vpop.f32.mrb[0].mxu0
        %v5936 = vadd.f32 %v5451, %v5935
        %v5937 = vpop.f32.mrb[0].mxu0
        %v5938 = vadd.f32 %v5455, %v5937
        %v5939 = vpop.f32.mrb[0].mxu0
        %v5940 = vadd.f32 %v5451, %v5939
        %v5941 = vpop.f32.mrb[0].mxu0
        %v5942 = vadd.f32 %v5455, %v5941
        %5943 = vdwg.mxu0
        %5944 = vmatprep.subr.bf16.mxu0 %v5591
        %5945 = vmatpush1.bf16.msra.mxu0 %v5590
        %5946 = vmatprep.subr.bf16.mxu0 %v5607
        %5947 = vmatpush1.bf16.msra.mxu0 %v5606
        %5948 = vmatprep.subr.bf16.mxu0 0
        %5949 = vmatpush1.bf16.msra.mxu0 0
        %5950 = vmatprep.subr.bf16.mxu0 0
        %5951 = vmatpush1.bf16.msra.mxu0 0
        %5952 = vmatprep.subr.bf16.mxu0 0
        %5953 = vmatpush1.bf16.msra.mxu0 0
        %5954 = vmatprep.subr.bf16.mxu0 0
        %5955 = vmatpush1.bf16.msra.mxu0 0
        %5956 = vmatprep.subr.bf16.mxu0 0
        %5957 = vmatpush1.bf16.msra.mxu0 0
        %5958 = vmatprep.subr.bf16.mxu0 0
        %5959 = vmatpush1.bf16.msra.mxu0 0
        %5960 = vmatprep.subr.bf16.mxu0 0
        %5961 = vmatpush1.bf16.msra.mxu0 0
        %5962 = vmatprep.subr.bf16.mxu0 0
        %5963 = vmatpush1.bf16.msra.mxu0 0
        %5964 = vmatprep.subr.bf16.mxu0 0
        %5965 = vmatpush1.bf16.msra.mxu0 0
        %5966 = vmatprep.subr.bf16.mxu0 0
        %5967 = vmatpush1.bf16.msra.mxu0 0
        %5968 = vmatprep.subr.bf16.mxu0 0
        %5969 = vmatpush1.bf16.msra.mxu0 0
        %5970 = vmatprep.subr.bf16.mxu0 0
        %5971 = vmatpush1.bf16.msra.mxu0 0
        %5972 = vmatprep.subr.bf16.mxu0 0
        %5973 = vmatpush1.bf16.msra.mxu0 0
        %5974 = vmatprep.subr.bf16.mxu0 0
        %5975 = vmatpush1.bf16.msra.mxu0 0
        %5976 = vmatprep.mubr.bf16.mxu0 0
        %5977 = vmatmul.mubr.bf16.gmra.mrb[0].mxu0 %v5641
        %v5978 = vpop.f32.mrb[0].mxu0
        %v5979 = vadd.f32 %v5459, %v5978
        %v5980 = vpop.f32.mrb[0].mxu0
        %v5981 = vadd.f32 %v5463, %v5980
        %v5982 = vpop.f32.mrb[0].mxu0
        %v5983 = vadd.f32 %v5459, %v5982
        %v5984 = vpop.f32.mrb[0].mxu0
        %v5985 = vadd.f32 %v5463, %v5984
        %5986 = vdwg.mxu0
        %v5987 = vmax.f32 %v5678, 0.0
        %v5988 = vmax.f32 %v5680, 0.0
        %v5989 = vmax.f32 %v5721, 0.0
        %v5990 = vmax.f32 %v5723, 0.0
        %v5991 = vmax.f32 %v5764, 0.0
        %v5992 = vmax.f32 %v5766, 0.0
        %v5993 = vmax.f32 %v5807, 0.0
        %v5994 = vmax.f32 %v5809, 0.0
        %v5995 = vmax.f32 %v5850, 0.0
        %v5996 = vmax.f32 %v5852, 0.0
        %v5997 = vmax.f32 %v5893, 0.0
        %v5998 = vmax.f32 %v5895, 0.0
        %v5999 = vmax.f32 %v5936, 0.0
        %v6000 = vmax.f32 %v5938, 0.0
        %v6001 = vmax.f32 %v5979, 0.0
        %v6002 = vmax.f32 %v5981, 0.0
        %v6003 = vmax.f32 %v5682, 0.0
        %v6004 = vmax.f32 %v5684, 0.0
        %v6005 = vmax.f32 %v5725, 0.0
        %v6006 = vmax.f32 %v5727, 0.0
        %v6007 = vmax.f32 %v5768, 0.0
        %v6008 = vmax.f32 %v5770, 0.0
        %v6009 = vmax.f32 %v5811, 0.0
        %v6010 = vmax.f32 %v5813, 0.0
        %v6011 = vmax.f32 %v5854, 0.0
        %v6012 = vmax.f32 %v5856, 0.0
        %v6013 = vmax.f32 %v5897, 0.0
        %v6014 = vmax.f32 %v5899, 0.0
        %v6015 = vmax.f32 %v5940, 0.0
        %v6016 = vmax.f32 %v5942, 0.0
        %v6017 = vmax.f32 %v5983, 0.0
        %v6018 = vmax.f32 %v5985, 0.0
        %v6019 = vpack.c.bf16 %v6003, %v5987
        %v6020 = vpack.c.bf16 %v6004, %v5988
        %v6021 = vpack.c.bf16 %v6005, %v5989
        %v6022 = vpack.c.bf16 %v6006, %v5990
        %v6023 = vpack.c.bf16 %v6007, %v5991
        %v6024 = vpack.c.bf16 %v6008, %v5992
        %v6025 = vpack.c.bf16 %v6009, %v5993
        %v6026 = vpack.c.bf16 %v6010, %v5994
        %v6027 = vpack.c.bf16 %v6011, %v5995
        %v6028 = vpack.c.bf16 %v6012, %v5996
        %v6029 = vpack.c.bf16 %v6013, %v5997
        %v6030 = vpack.c.bf16 %v6014, %v5998
        %v6031 = vpack.c.bf16 %v6015, %v5999
        %v6032 = vpack.c.bf16 %v6016, %v6000
        %v6033 = vpack.c.bf16 %v6017, %v6001
        %v6034 = vpack.c.bf16 %v6018, %v6002
        %v6035 = vld [vmem:[%s869] sm:$0xff]
        %v6036 = vld [vmem:[%s869 + $0x8] sm:$0xff]
        %v6037 = vld [vmem:[%s869 + $0x10] sm:$0xff]
        %v6038 = vld [vmem:[%s869 + $0x18] sm:$0xff]
        %v6039 = vld [vmem:[%s869 + $0x20] sm:$0xff]
        %v6040 = vld [vmem:[%s869 + $0x28] sm:$0xff]
        %v6041 = vld [vmem:[%s869 + $0x30] sm:$0xff]
        %v6042 = vld [vmem:[%s869 + $0x38] sm:$0xff]
        %v6043 = vld [vmem:[%s869 + $0x40] sm:$0xff]
        %v6044 = vld [vmem:[%s869 + $0x48] sm:$0xff]
        %v6045 = vld [vmem:[%s869 + $0x50] sm:$0xff]
        %v6046 = vld [vmem:[%s869 + $0x58] sm:$0xff]
        %v6047 = vld [vmem:[%s869 + $0x60] sm:$0xff]
        %v6048 = vld [vmem:[%s869 + $0x68] sm:$0xff]
        %v6049 = vld [vmem:[%s869 + $0x70] sm:$0xff]
        %v6050 = vld [vmem:[%s869 + $0x78] sm:$0xff]
        %v6051 = vld [vmem:[%s869 + $0x80] sm:$0xff]
        %v6052 = vld [vmem:[%s869 + $0x88] sm:$0xff]
        %v6053 = vld [vmem:[%s869 + $0x90] sm:$0xff]
        %v6054 = vld [vmem:[%s869 + $0x98] sm:$0xff]
        %v6055 = vld [vmem:[%s869 + $0xa0] sm:$0xff]
        %v6056 = vld [vmem:[%s869 + $0xa8] sm:$0xff]
        %v6057 = vld [vmem:[%s869 + $0xb0] sm:$0xff]
        %v6058 = vld [vmem:[%s869 + $0xb8] sm:$0xff]
        %v6059 = vld [vmem:[%s869 + $0xc0] sm:$0xff]
        %v6060 = vld [vmem:[%s869 + $0xc8] sm:$0xff]
        %v6061 = vld [vmem:[%s869 + $0xd0] sm:$0xff]
        %v6062 = vld [vmem:[%s869 + $0xd8] sm:$0xff]
        %v6063 = vld [vmem:[%s869 + $0xe0] sm:$0xff]
        %v6064 = vld [vmem:[%s869 + $0xe8] sm:$0xff]
        %v6065 = vld [vmem:[%s869 + $0xf0] sm:$0xff]
        %v6066 = vld [vmem:[%s869 + $0xf8] sm:$0xff]
        %v6067 = vld [vmem:[%s1016] sm:$0x1]
        %v6069 = vlaneseq
        %v6070 = vshrl.u32 %v6069, 7
        %v6071 = vsub.s32 0, %v6070
        %v6072 = vrot.slane %v6067, %v6071
        %v6106 = vunpack.c.l.b16 %v6035
        %v6107 = vunpack.c.h.b16 %v6035
        %v6108 = vunpack.c.l.b16 %v6036
        %v6109 = vunpack.c.h.b16 %v6036
        %v6110 = vunpack.c.l.b16 %v6037
        %v6111 = vunpack.c.h.b16 %v6037
        %v6112 = vunpack.c.l.b16 %v6038
        %v6113 = vunpack.c.h.b16 %v6038
        %v6114 = vunpack.c.l.b16 %v6039
        %v6115 = vunpack.c.h.b16 %v6039
        %v6116 = vunpack.c.l.b16 %v6040
        %v6117 = vunpack.c.h.b16 %v6040
        %v6118 = vunpack.c.l.b16 %v6041
        %v6119 = vunpack.c.h.b16 %v6041
        %v6120 = vunpack.c.l.b16 %v6042
        %v6121 = vunpack.c.h.b16 %v6042
        %v6122 = vunpack.c.l.b16 %v6043
        %v6123 = vunpack.c.h.b16 %v6043
        %v6124 = vunpack.c.l.b16 %v6044
        %v6125 = vunpack.c.h.b16 %v6044
        %v6126 = vunpack.c.l.b16 %v6045
        %v6127 = vunpack.c.h.b16 %v6045
        %v6128 = vunpack.c.l.b16 %v6046
        %v6129 = vunpack.c.h.b16 %v6046
        %v6130 = vunpack.c.l.b16 %v6047
        %v6131 = vunpack.c.h.b16 %v6047
        %v6132 = vunpack.c.l.b16 %v6048
        %v6133 = vunpack.c.h.b16 %v6048
        %v6134 = vunpack.c.l.b16 %v6049
        %v6135 = vunpack.c.h.b16 %v6049
        %v6136 = vunpack.c.l.b16 %v6050
        %v6137 = vunpack.c.h.b16 %v6050
        %v6138 = vunpack.c.l.b16 %v6051
        %v6139 = vunpack.c.h.b16 %v6051
        %v6140 = vunpack.c.l.b16 %v6052
        %v6141 = vunpack.c.h.b16 %v6052
        %v6142 = vunpack.c.l.b16 %v6053
        %v6143 = vunpack.c.h.b16 %v6053
        %v6144 = vunpack.c.l.b16 %v6054
        %v6145 = vunpack.c.h.b16 %v6054
        %v6146 = vunpack.c.l.b16 %v6055
        %v6147 = vunpack.c.h.b16 %v6055
        %v6148 = vunpack.c.l.b16 %v6056
        %v6149 = vunpack.c.h.b16 %v6056
        %v6150 = vunpack.c.l.b16 %v6057
        %v6151 = vunpack.c.h.b16 %v6057
        %v6152 = vunpack.c.l.b16 %v6058
        %v6153 = vunpack.c.h.b16 %v6058
        %v6154 = vunpack.c.l.b16 %v6059
        %v6155 = vunpack.c.h.b16 %v6059
        %v6156 = vunpack.c.l.b16 %v6060
        %v6157 = vunpack.c.h.b16 %v6060
        %v6158 = vunpack.c.l.b16 %v6061
        %v6159 = vunpack.c.h.b16 %v6061
        %v6160 = vunpack.c.l.b16 %v6062
        %v6161 = vunpack.c.h.b16 %v6062
        %v6162 = vunpack.c.l.b16 %v6063
        %v6163 = vunpack.c.h.b16 %v6063
        %v6164 = vunpack.c.l.b16 %v6064
        %v6165 = vunpack.c.h.b16 %v6064
        %v6166 = vunpack.c.l.b16 %v6065
        %v6167 = vunpack.c.h.b16 %v6065
        %v6168 = vunpack.c.l.b16 %v6066
        %v6169 = vunpack.c.h.b16 %v6066
        %v6170 = vpack.c.b16 %v6122, %v6106
        %v6171 = vpack.c.b16 %v6123, %v6107
        %v6172 = vpack.c.b16 %v6124, %v6108
        %v6173 = vpack.c.b16 %v6125, %v6109
        %v6174 = vpack.c.b16 %v6126, %v6110
        %v6175 = vpack.c.b16 %v6127, %v6111
        %v6176 = vpack.c.b16 %v6128, %v6112
        %v6177 = vpack.c.b16 %v6129, %v6113
        %v6178 = vpack.c.b16 %v6130, %v6114
        %v6179 = vpack.c.b16 %v6131, %v6115
        %v6180 = vpack.c.b16 %v6132, %v6116
        %v6181 = vpack.c.b16 %v6133, %v6117
        %v6182 = vpack.c.b16 %v6134, %v6118
        %v6183 = vpack.c.b16 %v6135, %v6119
        %v6184 = vpack.c.b16 %v6136, %v6120
        %v6185 = vpack.c.b16 %v6137, %v6121
        %v6186 = vpack.c.b16 %v6154, %v6138
        %v6187 = vpack.c.b16 %v6155, %v6139
        %v6188 = vpack.c.b16 %v6156, %v6140
        %v6189 = vpack.c.b16 %v6157, %v6141
        %v6190 = vpack.c.b16 %v6158, %v6142
        %v6191 = vpack.c.b16 %v6159, %v6143
        %v6192 = vpack.c.b16 %v6160, %v6144
        %v6193 = vpack.c.b16 %v6161, %v6145
        %v6194 = vpack.c.b16 %v6162, %v6146
        %v6195 = vpack.c.b16 %v6163, %v6147
        %v6196 = vpack.c.b16 %v6164, %v6148
        %v6197 = vpack.c.b16 %v6165, %v6149
        %v6198 = vpack.c.b16 %v6166, %v6150
        %v6199 = vpack.c.b16 %v6167, %v6151
        %v6200 = vpack.c.b16 %v6168, %v6152
        %v6201 = vpack.c.b16 %v6169, %v6153
        %6234 = vmatprep.subr.bf16.mxu0 %v6171
        %6235 = vmatpush1.bf16.xpose.msra.mxu0 %v6170
        %6236 = vmatprep.subr.bf16.mxu0 %v6187
        %6237 = vmatpush1.bf16.xpose.msra.mxu0 %v6186
        %6238 = vmatprep.subr.bf16.mxu0 0
        %6239 = vmatpush1.bf16.xpose.msra.mxu0 0
        %6240 = vmatprep.subr.bf16.mxu0 0
        %6241 = vmatpush1.bf16.xpose.msra.mxu0 0
        %6242 = vmatprep.subr.bf16.mxu0 0
        %6243 = vmatpush1.bf16.xpose.msra.mxu0 0
        %6244 = vmatprep.subr.bf16.mxu0 0
        %6245 = vmatpush1.bf16.xpose.msra.mxu0 0
        %6246 = vmatprep.subr.bf16.mxu0 0
        %6247 = vmatpush1.bf16.xpose.msra.mxu0 0
        %6248 = vmatprep.subr.bf16.mxu0 0
        %6249 = vmatpush1.bf16.xpose.msra.mxu0 0
        %6250 = vmatprep.subr.bf16.mxu0 0
        %6251 = vmatpush1.bf16.xpose.msra.mxu0 0
        %6252 = vmatprep.subr.bf16.mxu0 0
        %6253 = vmatpush1.bf16.xpose.msra.mxu0 0
        %6254 = vmatprep.subr.bf16.mxu0 0
        %6255 = vmatpush1.bf16.xpose.msra.mxu0 0
        %6256 = vmatprep.subr.bf16.mxu0 0
        %6257 = vmatpush1.bf16.xpose.msra.mxu0 0
        %6258 = vmatprep.subr.bf16.mxu0 0
        %6259 = vmatpush1.bf16.xpose.msra.mxu0 0
        %6260 = vmatprep.subr.bf16.mxu0 0
        %6261 = vmatpush1.bf16.xpose.msra.mxu0 0
        %6262 = vmatprep.subr.bf16.mxu0 0
        %6263 = vmatpush1.bf16.xpose.msra.mxu0 0
        %6264 = vmatprep.subr.bf16.mxu0 0
        %6265 = vmatpush1.bf16.xpose.msra.mxu0 0
        %6266 = vmatprep.mubr.bf16.mxu0 %v6020
        %6267 = vmatmul.mubr.bf16.gmra.mrb[0].mxu0 %v6019
        %v6268 = vpop.f32.mrb[0].mxu0
        %v6269 = vadd.f32 %v6072, %v6268
        %v6270 = vpop.f32.mrb[0].mxu0
        %v6271 = vpop.f32.mrb[0].mxu0
        %v6272 = vadd.f32 %v6072, %v6271
        %v6273 = vpop.f32.mrb[0].mxu0
        %6274 = vdwg.mxu0
        %6275 = vmatprep.subr.bf16.mxu0 %v6173
        %6276 = vmatpush1.bf16.xpose.msra.mxu0 %v6172
        %6277 = vmatprep.subr.bf16.mxu0 %v6189
        %6278 = vmatpush1.bf16.xpose.msra.mxu0 %v6188
        %6279 = vmatprep.subr.bf16.mxu0 0
        %6280 = vmatpush1.bf16.xpose.msra.mxu0 0
        %6281 = vmatprep.subr.bf16.mxu0 0
        %6282 = vmatpush1.bf16.xpose.msra.mxu0 0
        %6283 = vmatprep.subr.bf16.mxu0 0
        %6284 = vmatpush1.bf16.xpose.msra.mxu0 0
        %6285 = vmatprep.subr.bf16.mxu0 0
        %6286 = vmatpush1.bf16.xpose.msra.mxu0 0
        %6287 = vmatprep.subr.bf16.mxu0 0
        %6288 = vmatpush1.bf16.xpose.msra.mxu0 0
        %6289 = vmatprep.subr.bf16.mxu0 0
        %6290 = vmatpush1.bf16.xpose.msra.mxu0 0
        %6291 = vmatprep.subr.bf16.mxu0 0
        %6292 = vmatpush1.bf16.xpose.msra.mxu0 0
        %6293 = vmatprep.subr.bf16.mxu0 0
        %6294 = vmatpush1.bf16.xpose.msra.mxu0 0
        %6295 = vmatprep.subr.bf16.mxu0 0
        %6296 = vmatpush1.bf16.xpose.msra.mxu0 0
        %6297 = vmatprep.subr.bf16.mxu0 0
        %6298 = vmatpush1.bf16.xpose.msra.mxu0 0
        %6299 = vmatprep.subr.bf16.mxu0 0
        %6300 = vmatpush1.bf16.xpose.msra.mxu0 0
        %6301 = vmatprep.subr.bf16.mxu0 0
        %6302 = vmatpush1.bf16.xpose.msra.mxu0 0
        %6303 = vmatprep.subr.bf16.mxu0 0
        %6304 = vmatpush1.bf16.xpose.msra.mxu0 0
        %6305 = vmatprep.subr.bf16.mxu0 0
        %6306 = vmatpush1.bf16.xpose.msra.mxu0 0
        %6307 = vmatprep.mubr.bf16.mxu0 %v6022
        %6308 = vmatmul.mubr.bf16.gmra.mrb[0].mxu0 %v6021
        %v6309 = vpop.f32.mrb[0].mxu0
        %v6310 = vadd.f32 %v6269, %v6309
        %v6311 = vpop.f32.mrb[0].mxu0
        %v6312 = vpop.f32.mrb[0].mxu0
        %v6313 = vadd.f32 %v6272, %v6312
        %v6314 = vpop.f32.mrb[0].mxu0
        %6315 = vdwg.mxu0
        %6316 = vmatprep.subr.bf16.mxu0 %v6175
        %6317 = vmatpush1.bf16.xpose.msra.mxu0 %v6174
        %6318 = vmatprep.subr.bf16.mxu0 %v6191
        %6319 = vmatpush1.bf16.xpose.msra.mxu0 %v6190
        %6320 = vmatprep.subr.bf16.mxu0 0
        %6321 = vmatpush1.bf16.xpose.msra.mxu0 0
        %6322 = vmatprep.subr.bf16.mxu0 0
        %6323 = vmatpush1.bf16.xpose.msra.mxu0 0
        %6324 = vmatprep.subr.bf16.mxu0 0
        %6325 = vmatpush1.bf16.xpose.msra.mxu0 0
        %6326 = vmatprep.subr.bf16.mxu0 0
        %6327 = vmatpush1.bf16.xpose.msra.mxu0 0
        %6328 = vmatprep.subr.bf16.mxu0 0
        %6329 = vmatpush1.bf16.xpose.msra.mxu0 0
        %6330 = vmatprep.subr.bf16.mxu0 0
        %6331 = vmatpush1.bf16.xpose.msra.mxu0 0
        %6332 = vmatprep.subr.bf16.mxu0 0
        %6333 = vmatpush1.bf16.xpose.msra.mxu0 0
        %6334 = vmatprep.subr.bf16.mxu0 0
        %6335 = vmatpush1.bf16.xpose.msra.mxu0 0
        %6336 = vmatprep.subr.bf16.mxu0 0
        %6337 = vmatpush1.bf16.xpose.msra.mxu0 0
        %6338 = vmatprep.subr.bf16.mxu0 0
        %6339 = vmatpush1.bf16.xpose.msra.mxu0 0
        %6340 = vmatprep.subr.bf16.mxu0 0
        %6341 = vmatpush1.bf16.xpose.msra.mxu0 0
        %6342 = vmatprep.subr.bf16.mxu0 0
        %6343 = vmatpush1.bf16.xpose.msra.mxu0 0
        %6344 = vmatprep.subr.bf16.mxu0 0
        %6345 = vmatpush1.bf16.xpose.msra.mxu0 0
        %6346 = vmatprep.subr.bf16.mxu0 0
        %6347 = vmatpush1.bf16.xpose.msra.mxu0 0
        %6348 = vmatprep.mubr.bf16.mxu0 %v6024
        %6349 = vmatmul.mubr.bf16.gmra.mrb[0].mxu0 %v6023
        %v6350 = vpop.f32.mrb[0].mxu0
        %v6351 = vadd.f32 %v6310, %v6350
        %v6352 = vpop.f32.mrb[0].mxu0
        %v6353 = vpop.f32.mrb[0].mxu0
        %v6354 = vadd.f32 %v6313, %v6353
        %v6355 = vpop.f32.mrb[0].mxu0
        %6356 = vdwg.mxu0
        %6357 = vmatprep.subr.bf16.mxu0 %v6177
        %6358 = vmatpush1.bf16.xpose.msra.mxu0 %v6176
        %6359 = vmatprep.subr.bf16.mxu0 %v6193
        %6360 = vmatpush1.bf16.xpose.msra.mxu0 %v6192
        %6361 = vmatprep.subr.bf16.mxu0 0
        %6362 = vmatpush1.bf16.xpose.msra.mxu0 0
        %6363 = vmatprep.subr.bf16.mxu0 0
        %6364 = vmatpush1.bf16.xpose.msra.mxu0 0
        %6365 = vmatprep.subr.bf16.mxu0 0
        %6366 = vmatpush1.bf16.xpose.msra.mxu0 0
        %6367 = vmatprep.subr.bf16.mxu0 0
        %6368 = vmatpush1.bf16.xpose.msra.mxu0 0
        %6369 = vmatprep.subr.bf16.mxu0 0
        %6370 = vmatpush1.bf16.xpose.msra.mxu0 0
        %6371 = vmatprep.subr.bf16.mxu0 0
        %6372 = vmatpush1.bf16.xpose.msra.mxu0 0
        %6373 = vmatprep.subr.bf16.mxu0 0
        %6374 = vmatpush1.bf16.xpose.msra.mxu0 0
        %6375 = vmatprep.subr.bf16.mxu0 0
        %6376 = vmatpush1.bf16.xpose.msra.mxu0 0
        %6377 = vmatprep.subr.bf16.mxu0 0
        %6378 = vmatpush1.bf16.xpose.msra.mxu0 0
        %6379 = vmatprep.subr.bf16.mxu0 0
        %6380 = vmatpush1.bf16.xpose.msra.mxu0 0
        %6381 = vmatprep.subr.bf16.mxu0 0
        %6382 = vmatpush1.bf16.xpose.msra.mxu0 0
        %6383 = vmatprep.subr.bf16.mxu0 0
        %6384 = vmatpush1.bf16.xpose.msra.mxu0 0
        %6385 = vmatprep.subr.bf16.mxu0 0
        %6386 = vmatpush1.bf16.xpose.msra.mxu0 0
        %6387 = vmatprep.subr.bf16.mxu0 0
        %6388 = vmatpush1.bf16.xpose.msra.mxu0 0
        %6389 = vmatprep.mubr.bf16.mxu0 %v6026
        %6390 = vmatmul.mubr.bf16.gmra.mrb[0].mxu0 %v6025
        %v6391 = vpop.f32.mrb[0].mxu0
        %v6392 = vadd.f32 %v6351, %v6391
        %v6393 = vpop.f32.mrb[0].mxu0
        %v6394 = vpop.f32.mrb[0].mxu0
        %v6395 = vadd.f32 %v6354, %v6394
        %v6396 = vpop.f32.mrb[0].mxu0
        %6397 = vdwg.mxu0
        %6398 = vmatprep.subr.bf16.mxu0 %v6179
        %6399 = vmatpush1.bf16.xpose.msra.mxu0 %v6178
        %6400 = vmatprep.subr.bf16.mxu0 %v6195
        %6401 = vmatpush1.bf16.xpose.msra.mxu0 %v6194
        %6402 = vmatprep.subr.bf16.mxu0 0
        %6403 = vmatpush1.bf16.xpose.msra.mxu0 0
        %6404 = vmatprep.subr.bf16.mxu0 0
        %6405 = vmatpush1.bf16.xpose.msra.mxu0 0
        %6406 = vmatprep.subr.bf16.mxu0 0
        %6407 = vmatpush1.bf16.xpose.msra.mxu0 0
        %6408 = vmatprep.subr.bf16.mxu0 0
        %6409 = vmatpush1.bf16.xpose.msra.mxu0 0
        %6410 = vmatprep.subr.bf16.mxu0 0
        %6411 = vmatpush1.bf16.xpose.msra.mxu0 0
        %6412 = vmatprep.subr.bf16.mxu0 0
        %6413 = vmatpush1.bf16.xpose.msra.mxu0 0
        %6414 = vmatprep.subr.bf16.mxu0 0
        %6415 = vmatpush1.bf16.xpose.msra.mxu0 0
        %6416 = vmatprep.subr.bf16.mxu0 0
        %6417 = vmatpush1.bf16.xpose.msra.mxu0 0
        %6418 = vmatprep.subr.bf16.mxu0 0
        %6419 = vmatpush1.bf16.xpose.msra.mxu0 0
        %6420 = vmatprep.subr.bf16.mxu0 0
        %6421 = vmatpush1.bf16.xpose.msra.mxu0 0
        %6422 = vmatprep.subr.bf16.mxu0 0
        %6423 = vmatpush1.bf16.xpose.msra.mxu0 0
        %6424 = vmatprep.subr.bf16.mxu0 0
        %6425 = vmatpush1.bf16.xpose.msra.mxu0 0
        %6426 = vmatprep.subr.bf16.mxu0 0
        %6427 = vmatpush1.bf16.xpose.msra.mxu0 0
        %6428 = vmatprep.subr.bf16.mxu0 0
        %6429 = vmatpush1.bf16.xpose.msra.mxu0 0
        %6430 = vmatprep.mubr.bf16.mxu0 %v6028
        %6431 = vmatmul.mubr.bf16.gmra.mrb[0].mxu0 %v6027
        %v6432 = vpop.f32.mrb[0].mxu0
        %v6433 = vadd.f32 %v6392, %v6432
        %v6434 = vpop.f32.mrb[0].mxu0
        %v6435 = vpop.f32.mrb[0].mxu0
        %v6436 = vadd.f32 %v6395, %v6435
        %v6437 = vpop.f32.mrb[0].mxu0
        %6438 = vdwg.mxu0
        %6439 = vmatprep.subr.bf16.mxu0 %v6181
        %6440 = vmatpush1.bf16.xpose.msra.mxu0 %v6180
        %6441 = vmatprep.subr.bf16.mxu0 %v6197
        %6442 = vmatpush1.bf16.xpose.msra.mxu0 %v6196
        %6443 = vmatprep.subr.bf16.mxu0 0
        %6444 = vmatpush1.bf16.xpose.msra.mxu0 0
        %6445 = vmatprep.subr.bf16.mxu0 0
        %6446 = vmatpush1.bf16.xpose.msra.mxu0 0
        %6447 = vmatprep.subr.bf16.mxu0 0
        %6448 = vmatpush1.bf16.xpose.msra.mxu0 0
        %6449 = vmatprep.subr.bf16.mxu0 0
        %6450 = vmatpush1.bf16.xpose.msra.mxu0 0
        %6451 = vmatprep.subr.bf16.mxu0 0
        %6452 = vmatpush1.bf16.xpose.msra.mxu0 0
        %6453 = vmatprep.subr.bf16.mxu0 0
        %6454 = vmatpush1.bf16.xpose.msra.mxu0 0
        %6455 = vmatprep.subr.bf16.mxu0 0
        %6456 = vmatpush1.bf16.xpose.msra.mxu0 0
        %6457 = vmatprep.subr.bf16.mxu0 0
        %6458 = vmatpush1.bf16.xpose.msra.mxu0 0
        %6459 = vmatprep.subr.bf16.mxu0 0
        %6460 = vmatpush1.bf16.xpose.msra.mxu0 0
        %6461 = vmatprep.subr.bf16.mxu0 0
        %6462 = vmatpush1.bf16.xpose.msra.mxu0 0
        %6463 = vmatprep.subr.bf16.mxu0 0
        %6464 = vmatpush1.bf16.xpose.msra.mxu0 0
        %6465 = vmatprep.subr.bf16.mxu0 0
        %6466 = vmatpush1.bf16.xpose.msra.mxu0 0
        %6467 = vmatprep.subr.bf16.mxu0 0
        %6468 = vmatpush1.bf16.xpose.msra.mxu0 0
        %6469 = vmatprep.subr.bf16.mxu0 0
        %6470 = vmatpush1.bf16.xpose.msra.mxu0 0
        %6471 = vmatprep.mubr.bf16.mxu0 %v6030
        %6472 = vmatmul.mubr.bf16.gmra.mrb[0].mxu0 %v6029
        %v6473 = vpop.f32.mrb[0].mxu0
        %v6474 = vadd.f32 %v6433, %v6473
        %v6475 = vpop.f32.mrb[0].mxu0
        %v6476 = vpop.f32.mrb[0].mxu0
        %v6477 = vadd.f32 %v6436, %v6476
        %v6478 = vpop.f32.mrb[0].mxu0
        %6479 = vdwg.mxu0
        %6480 = vmatprep.subr.bf16.mxu0 %v6183
        %6481 = vmatpush1.bf16.xpose.msra.mxu0 %v6182
        %6482 = vmatprep.subr.bf16.mxu0 %v6199
        %6483 = vmatpush1.bf16.xpose.msra.mxu0 %v6198
        %6484 = vmatprep.subr.bf16.mxu0 0
        %6485 = vmatpush1.bf16.xpose.msra.mxu0 0
        %6486 = vmatprep.subr.bf16.mxu0 0
        %6487 = vmatpush1.bf16.xpose.msra.mxu0 0
        %6488 = vmatprep.subr.bf16.mxu0 0
        %6489 = vmatpush1.bf16.xpose.msra.mxu0 0
        %6490 = vmatprep.subr.bf16.mxu0 0
        %6491 = vmatpush1.bf16.xpose.msra.mxu0 0
        %6492 = vmatprep.subr.bf16.mxu0 0
        %6493 = vmatpush1.bf16.xpose.msra.mxu0 0
        %6494 = vmatprep.subr.bf16.mxu0 0
        %6495 = vmatpush1.bf16.xpose.msra.mxu0 0
        %6496 = vmatprep.subr.bf16.mxu0 0
        %6497 = vmatpush1.bf16.xpose.msra.mxu0 0
        %6498 = vmatprep.subr.bf16.mxu0 0
        %6499 = vmatpush1.bf16.xpose.msra.mxu0 0
        %6500 = vmatprep.subr.bf16.mxu0 0
        %6501 = vmatpush1.bf16.xpose.msra.mxu0 0
        %6502 = vmatprep.subr.bf16.mxu0 0
        %6503 = vmatpush1.bf16.xpose.msra.mxu0 0
        %6504 = vmatprep.subr.bf16.mxu0 0
        %6505 = vmatpush1.bf16.xpose.msra.mxu0 0
        %6506 = vmatprep.subr.bf16.mxu0 0
        %6507 = vmatpush1.bf16.xpose.msra.mxu0 0
        %6508 = vmatprep.subr.bf16.mxu0 0
        %6509 = vmatpush1.bf16.xpose.msra.mxu0 0
        %6510 = vmatprep.subr.bf16.mxu0 0
        %6511 = vmatpush1.bf16.xpose.msra.mxu0 0
        %6512 = vmatprep.mubr.bf16.mxu0 %v6032
        %6513 = vmatmul.mubr.bf16.gmra.mrb[0].mxu0 %v6031
        %v6514 = vpop.f32.mrb[0].mxu0
        %v6515 = vadd.f32 %v6474, %v6514
        %v6516 = vpop.f32.mrb[0].mxu0
        %v6517 = vpop.f32.mrb[0].mxu0
        %v6518 = vadd.f32 %v6477, %v6517
        %v6519 = vpop.f32.mrb[0].mxu0
        %6520 = vdwg.mxu0
        %6521 = vmatprep.subr.bf16.mxu0 %v6185
        %6522 = vmatpush1.bf16.xpose.msra.mxu0 %v6184
        %6523 = vmatprep.subr.bf16.mxu0 %v6201
        %6524 = vmatpush1.bf16.xpose.msra.mxu0 %v6200
        %6525 = vmatprep.subr.bf16.mxu0 0
        %6526 = vmatpush1.bf16.xpose.msra.mxu0 0
        %6527 = vmatprep.subr.bf16.mxu0 0
        %6528 = vmatpush1.bf16.xpose.msra.mxu0 0
        %6529 = vmatprep.subr.bf16.mxu0 0
        %6530 = vmatpush1.bf16.xpose.msra.mxu0 0
        %6531 = vmatprep.subr.bf16.mxu0 0
        %6532 = vmatpush1.bf16.xpose.msra.mxu0 0
        %6533 = vmatprep.subr.bf16.mxu0 0
        %6534 = vmatpush1.bf16.xpose.msra.mxu0 0
        %6535 = vmatprep.subr.bf16.mxu0 0
        %6536 = vmatpush1.bf16.xpose.msra.mxu0 0
        %6537 = vmatprep.subr.bf16.mxu0 0
        %6538 = vmatpush1.bf16.xpose.msra.mxu0 0
        %6539 = vmatprep.subr.bf16.mxu0 0
        %6540 = vmatpush1.bf16.xpose.msra.mxu0 0
        %6541 = vmatprep.subr.bf16.mxu0 0
        %6542 = vmatpush1.bf16.xpose.msra.mxu0 0
        %6543 = vmatprep.subr.bf16.mxu0 0
        %6544 = vmatpush1.bf16.xpose.msra.mxu0 0
        %6545 = vmatprep.subr.bf16.mxu0 0
        %6546 = vmatpush1.bf16.xpose.msra.mxu0 0
        %6547 = vmatprep.subr.bf16.mxu0 0
        %6548 = vmatpush1.bf16.xpose.msra.mxu0 0
        %6549 = vmatprep.subr.bf16.mxu0 0
        %6550 = vmatpush1.bf16.xpose.msra.mxu0 0
        %6551 = vmatprep.subr.bf16.mxu0 0
        %6552 = vmatpush1.bf16.xpose.msra.mxu0 0
        %6553 = vmatprep.mubr.bf16.mxu0 %v6034
        %6554 = vmatmul.mubr.bf16.gmra.mrb[0].mxu0 %v6033
        %v6555 = vpop.f32.mrb[0].mxu0
        %v6556 = vadd.f32 %v6515, %v6555
        %v6557 = vpop.f32.mrb[0].mxu0
        %v6558 = vpop.f32.mrb[0].mxu0
        %v6559 = vadd.f32 %v6518, %v6558
        %v6560 = vpop.f32.mrb[0].mxu0
        %6561 = vdwg.mxu0
        %v6562 = vadd.f32 %v5361, %v6556
        %v6563 = vadd.f32 %v5362, %v6559
        %v6564 = vld [vmem:[%s1019] sm:$0x1]
        %v6565 = vld [vmem:[%s1022] sm:$0x1]
        %v6566 = vsel %vm1137, %v6562, 0.0
        %6567 = vadd.xlane.f32.xlu0 %v6566
        %v6568 = vpop.xlane.xlu0 %6567
        %v6569 = vsel %vm1137, %v6563, 0.0
        %6570 = vadd.xlane.f32.xlu0 %v6569
        %v6571 = vpop.xlane.xlu0 %6570
        %v6572 = vmul.f32 %v6568, %v5326
        %v6573 = vmul.f32 %v6571, %v5326
        %v6574 = vsub.f32 %v6562, %v6572
        %v6575 = vsub.f32 %v6563, %v6573
        %v6576 = vmul.f32 %v6574, %v6574
        %v6577 = vmul.f32 %v6575, %v6575
        %v6578 = vsel %vm1137, %v6576, 0.0
        %6579 = vadd.xlane.f32.xlu0 %v6578
        %v6580 = vpop.xlane.xlu0 %6579
        %v6581 = vsel %vm1137, %v6577, 0.0
        %6582 = vadd.xlane.f32.xlu0 %v6581
        %v6583 = vpop.xlane.xlu0 %6582
        %v6584 = vmul.f32 %v6580, %v5326
        %v6585 = vmul.f32 %v6583, %v5326
        %v6586 = vadd.f32 %v6584, 1e-05
        %v6587 = vadd.f32 %v6585, 1e-05
        %v6588 = vrsqrt.pop %v6586
        %v6589 = vrsqrt.pop %v6587
        %v6590 = vmul.f32 %v6574, %v6588
        %v6591 = vmul.f32 %v6575, %v6589
        %v6593 = vlaneseq
        %v6594 = vshrl.u32 %v6593, 7
        %v6595 = vsub.s32 0, %v6594
        %v6596 = vrot.slane %v6564, %v6595
        %v6598 = vmul.f32 %v6590, %v6596
        %v6599 = vmul.f32 %v6591, %v6596
        %v6601 = vlaneseq
        %v6602 = vshrl.u32 %v6601, 7
        %v6603 = vsub.s32 0, %v6602
        %v6604 = vrot.slane %v6565, %v6603
        %v6606 = vadd.f32 %v6598, %v6604
        %v6607 = vadd.f32 %v6599, %v6604
        %6608 = vst.msk [vmem:[#allocation2] sm:$0xff] %vm1137, %v6606
        %6609 = vst.msk [vmem:[#allocation2 + $0x8] sm:$0xff] %vm1137, %v6607
        %p6610 = scmp.eq.s32.totalorder %s35, 1
        // Predicated region
        $region145: #{tpu_custom_call.1} parent=99 // pred_check
          %p6611 = pneg %p6610
        $region146: #{tpu_custom_call.1} parent=99 // pred_check_branch
          %6613 = sbr.rel (%p6611) target = $region148
        $region147: #{tpu_custom_call.1} parent=99 // pred_region
          %6614 = vst.msk [vmem:[#allocation17] sm:$0xff] %vm1137, %v6606
          %6615 = vst.msk [vmem:[#allocation17 + $0x8] sm:$0xff] %vm1137, %v6607
        $region148: #{tpu_custom_call.1} parent=99 // pred_fallthru
          _
        // Predicated region
        $region149: #{tpu_custom_call.1} parent=99 // pred_check
          %p6616 = pneg %p548
        $region150: #{tpu_custom_call.1} parent=99 // pred_check_branch
          %6618 = sbr.rel (%p6616) target = $region152
        $region151: #{tpu_custom_call.1} parent=99 // pred_region
          %s6620 = ssub.s32 256, 256
          %6621 = vsyncadd [#allocation5], %s6620
          %s6622 = sshll.u32 [#allocation17], 4
          %s6623 = int_to_ptr.vmem [resolvable:$true] %s6622
          %6628 = dma.vmem_to_hbm [thread:$0]  %s6623, 256, %s20, [#allocation5], 128, 128, 8
        $region152: #{tpu_custom_call.1} parent=99 // pred_fallthru
          _
        // Predicated region
        $region153: #{tpu_custom_call.1} parent=99 // pred_check
          %p6629 = pneg %p548
        $region154: #{tpu_custom_call.1} parent=99 // pred_check_branch
          %6631 = sbr.rel (%p6629) target = $region156
        $region155: #{tpu_custom_call.1} parent=99 // pred_region
          %6632 = dma.done [#allocation5], 256
        $region156: #{tpu_custom_call.1} parent=99 // pred_fallthru
          _
      $region100: #{tpu_custom_call.1} parent=5 // pred_fallthru
        _
      %p6633 = scmp.le.s32.totalorder 2, %s30
      // Predicated region
      $region157: #{tpu_custom_call.1} parent=5 // pred_check
        %p6634 = pneg %p6633
      $region158: #{tpu_custom_call.1} parent=5 // pred_check_branch
        %6636 = sbr.rel (%p6634) target = $region160
      $region159: #{tpu_custom_call.1} parent=5 // pred_region
        %s6637 = ssub.s32 %s30, 2
      $region160: #{tpu_custom_call.1} parent=5 // pred_fallthru
        _
    $region6: #{tpu_custom_call.1} parent=1 // loop_footer
      %s34 = sadd.s32 1, %s30
    $region7: #{tpu_custom_call.1} parent=1 // loop_footer_branch
      %29 = sbr.rel target = $region3
    $region8: #{tpu_custom_call.1} parent=1 // loop_exit
      _
    %6638 = vsyncpa [#allocation4], 1
    %s6639 = scalar_lea.sflag [#allocation4], 1
    %6640 = vsyncpa %s6639, 1
    %6641 = vsyncpa [#allocation7], 1
    %6642 = vsyncpa [#allocation10], 1
    %6643 = vsyncpa [#allocation5], 1
    %s6644 = scalar_lea.sflag [#allocation5], 1
    %6645 = vsyncpa %s6644, 1

</llo_original>
